<compile_context>
chip_gen: v5e
topology: v5e:2x2
jax: 0.10.0
libtpu: 0.0.40
codegen_flags: <defaults>
</compile_context>

<pallas_src>
import functools

import jax
import jax.numpy as jnp
from jax.experimental import pallas as pl
from jax.experimental.pallas import tpu as pltpu


# ----------------------------------------------------------------------------
# Fused kernel: conv1 -> conv1 -> add/relu -> conv2 -> two add/relu outputs.
# All refs are whole-array VMEM blocks (no grid).
# ----------------------------------------------------------------------------
def _fused_kernel(x1_ref, x2_ref, x3_ref, x4_ref,
                  w1_ref, b1_ref, w2_ref, b2_ref,
                  o1_ref, o2_ref,
                  pad1_ref, pad2_ref,
                  *, N, H, W, C, K1, P1, K2, P2):
    WC = W * C

    # Zero the padded scratch buffers once; only the interior is rewritten
    # per conv application, the zero border is reused.
    pad1_ref[...] = jnp.zeros_like(pad1_ref)
    pad2_ref[...] = jnp.zeros_like(pad2_ref)

    def conv(src, pad_ref, wt_ref, bt_ref, KH, pad):
        # src: (N*H, W*C) value, channel-minor lanes.
        WpC = (W + 2 * pad) * C
        # Write interior of the zero-padded buffer: (N, Hp, Wp*C).
        pad_ref[:, pad:pad + H, pad * C:(pad + W) * C] = src.reshape(N, H, WC)
        acc = jnp.zeros((N * H, WC), jnp.float32)
        for kh in range(KH):  # static unroll: KH row-window matmuls on the MXU
            rows = pad_ref[:, kh:kh + H, :].reshape(N * H, WpC)
            acc = acc + jnp.dot(rows, wt_ref[kh],
                                preferred_element_type=jnp.float32)
        return acc + bt_ref[...]          # bias pre-tiled to (1, W*C)

    t1 = conv(x1_ref[...], pad1_ref, w1_ref, b1_ref, K1, P1)   # conv1(x1)
    t2 = conv(t1,          pad1_ref, w1_ref, b1_ref, K1, P1)   # conv1(t1)
    t4 = jnp.maximum(t1 + x2_ref[...], 0.0)                    # relu(t1 + x2)
    t6 = jnp.maximum(t2 + t4, 0.0)                             # relu(t2 + t4)
    t7 = conv(t6,          pad2_ref, w2_ref, b2_ref, K2, P2)   # conv2(t6)
    o1_ref[...] = jnp.maximum(t7 + x3_ref[...], 0.0).astype(o1_ref.dtype)
    o2_ref[...] = jnp.maximum(t7 + x4_ref[...], 0.0).astype(o2_ref.dtype)


# ----------------------------------------------------------------------------
# Block-Toeplitz weight expansion (built once in the wrapper, tiny):
#   Wt[kh, wp*Cin + ci, w*Cout + co] = w_hwio[kh, wp - w, ci, co]  (0 elsewhere)
# so that  out_rows = sum_kh  xpad_rows(kh) @ Wt[kh].
# ----------------------------------------------------------------------------
def _toeplitz_weight(w_hwio, W_out, pad):
    KH, KW, Cin, Cout = w_hwio.shape
    Wp = W_out + 2 * pad
    p = jnp.arange(Wp)
    wv = jnp.arange(W_out)
    kv = jnp.arange(KW)
    # E[kw, w, p] = 1 where p == w + kw
    E = (p[None, None, :] == (wv[None, :, None] + kv[:, None, None])
         ).astype(w_hwio.dtype)
    Wt = jnp.einsum('kwp,hkio->hpiwo', E, w_hwio)
    return Wt.reshape(KH, Wp * Cin, W_out * Cout)


# ----------------------------------------------------------------------------
# Model forward (NCHW in / NCHW out; internal lane-dense (N*H, W*C) layout).
# ----------------------------------------------------------------------------
@jax.jit
def model_forward(x1, x2, x3, x4, w1, b1, w2, b2):
    N, C, H, W = x1.shape
    WC = W * C
    K1, P1 = w1.shape[0], 3
    K2, P2 = w2.shape[0], 1

    def to_rows(x):   # NCHW -> (N*H, W*C), channel-minor lanes
        return jnp.transpose(x, (0, 2, 3, 1)).reshape(N * H, WC)

    def from_rows(y):  # (N*H, W*C) -> NCHW
        return jnp.transpose(y.reshape(N, H, W, C), (0, 3, 1, 2))

    x1f, x2f, x3f, x4f = map(to_rows, (x1, x2, x3, x4))

    w1t = _toeplitz_weight(w1, W, P1)            # (K1, (W+2*P1)*C, W*C)
    w2t = _toeplitz_weight(w2, W, P2)            # (K2, (W+2*P2)*C, W*C)
    b1t = jnp.tile(b1.reshape(1, C), (1, W))     # (1, W*C)
    b2t = jnp.tile(b2.reshape(1, C), (1, W))

    kernel = functools.partial(_fused_kernel, N=N, H=H, W=W, C=C,
                               K1=K1, P1=P1, K2=K2, P2=P2)

    o1, o2 = pl.pallas_call(
        kernel,
        out_shape=(jax.ShapeDtypeStruct((N * H, WC), x1.dtype),
                   jax.ShapeDtypeStruct((N * H, WC), x1.dtype)),
        scratch_shapes=[
            pltpu.VMEM((N, H + 2 * P1, (W + 2 * P1) * C), jnp.float32),
            pltpu.VMEM((N, H + 2 * P2, (W + 2 * P2) * C), jnp.float32),
        ],
        compiler_params=pltpu.CompilerParams(
            vmem_limit_bytes=32 * 1024 * 1024),
    )(x1f, x2f, x3f, x4f, w1t, b1t, w2t, b2t)

    return from_rows(o1), from_rows(o2)


# ----------------------------------------------------------------------------
# Pure-JAX reference (for a correctness sanity check)
# ----------------------------------------------------------------------------
def ref_forward(x1, x2, x3, x4, w1, b1, w2, b2):
    def conv(x, w_hwio, b, pad):
        w_oihw = jnp.transpose(w_hwio, (3, 2, 0, 1))
        y = jax.lax.conv_general_dilated(
            x, w_oihw, (1, 1), [(pad, pad), (pad, pad)],
            dimension_numbers=('NCHW', 'OIHW', 'NCHW'))
        return y + b.reshape(1, -1, 1, 1)

    t1 = conv(x1, w1, b1, 3)
    t2 = conv(t1, w1, b1, 3)
    t4 = jnp.maximum(t1 + x2, 0.0)
    t6 = jnp.maximum(t2 + t4, 0.0)
    t7 = conv(t6, w2, b2, 1)
    return jnp.maximum(t7 + x3, 0.0), jnp.maximum(t7 + x4, 0.0)


if __name__ == "__main__":
    key = jax.random.PRNGKey(0)
    k = jax.random.split(key, 8)

    N, C, H, W = 2, 16, 16, 16   # small shapes; channels fixed at 16 by the module
    x1 = jax.random.normal(k[0], (N, C, H, W), jnp.float32)
    x2 = jax.random.normal(k[1], (N, C, H, W), jnp.float32)
    x3 = jax.random.normal(k[2], (N, C, H, W), jnp.float32)
    x4 = jax.random.normal(k[3], (N, C, H, W), jnp.float32)

    # Conv2d(16,16,7,pad=3) and Conv2d(16,16,3,pad=1) params, HWIO layout.
    fan1 = 16 * 7 * 7
    w1 = jax.random.uniform(k[4], (7, 7, 16, 16), jnp.float32,
                            -1.0 / fan1 ** 0.5, 1.0 / fan1 ** 0.5)
    b1 = jax.random.uniform(k[5], (16,), jnp.float32,
                            -1.0 / fan1 ** 0.5, 1.0 / fan1 ** 0.5)
    fan2 = 16 * 3 * 3
    w2 = jax.random.uniform(k[6], (3, 3, 16, 16), jnp.float32,
                            -1.0 / fan2 ** 0.5, 1.0 / fan2 ** 0.5)
    b2 = jax.random.uniform(k[7], (16,), jnp.float32,
                            -1.0 / fan2 ** 0.5, 1.0 / fan2 ** 0.5)

    t9, t11 = model_forward(x1, x2, x3, x4, w1, b1, w2, b2)
    jax.block_until_ready((t9, t11))

    r9, r11 = ref_forward(x1, x2, x3, x4, w1, b1, w2, b2)
    assert t9.shape == (N, C, H, W) and t11.shape == (N, C, H, W)
    assert jnp.allclose(t9, r9, atol=1e-3, rtol=1e-3)
    assert jnp.allclose(t11, r11, atol=1e-3, rtol=1e-3)

    print("KERNEL_OK")
</pallas_src>

<mosaic_0001>
module attributes {stable_mosaic.version = 11 : i64} {
  func.func @_fused_kernel(%arg0: memref<32x256xf32, #tpu.memory_space<vmem>>, %arg1: memref<32x256xf32, #tpu.memory_space<vmem>>, %arg2: memref<32x256xf32, #tpu.memory_space<vmem>>, %arg3: memref<32x256xf32, #tpu.memory_space<vmem>>, %arg4: memref<7x352x256xf32, #tpu.memory_space<vmem>>, %arg5: memref<1x256xf32, #tpu.memory_space<vmem>>, %arg6: memref<3x288x256xf32, #tpu.memory_space<vmem>>, %arg7: memref<1x256xf32, #tpu.memory_space<vmem>>, %arg8: memref<32x256xf32, #tpu.memory_space<vmem>>, %arg9: memref<32x256xf32, #tpu.memory_space<vmem>>, %arg10: memref<2x22x352xf32, #tpu.memory_space<vmem>>, %arg11: memref<2x18x288xf32, #tpu.memory_space<vmem>>) attributes {dimension_semantics = [], scalar_prefetch = 0 : i64, scratch_operands = 2 : i64, tpu.core_type = #tpu.core_type<tc>} {
    %cst = arith.constant 0.000000e+00 : f32
    %0 = vector.broadcast %cst : f32 to vector<2x22x352xf32>
    %c0 = arith.constant 0 : index
    %c0_0 = arith.constant 0 : index
    %c0_1 = arith.constant 0 : index
    %1 = vector.load %arg10[%c0, %c0_0, %c0_1] : memref<2x22x352xf32, #tpu.memory_space<vmem>>, vector<2x22x352xf32>
    tpu.vector_store %arg10[%c0, %c0_0, %c0_1], %0 {strides = array<i32>} : memref<2x22x352xf32, #tpu.memory_space<vmem>>, vector<2x22x352xf32>,
    %cst_2 = arith.constant 0.000000e+00 : f32
    %2 = vector.broadcast %cst_2 : f32 to vector<2x18x288xf32>
    %c0_3 = arith.constant 0 : index
    %c0_4 = arith.constant 0 : index
    %c0_5 = arith.constant 0 : index
    %3 = vector.load %arg11[%c0_3, %c0_4, %c0_5] : memref<2x18x288xf32, #tpu.memory_space<vmem>>, vector<2x18x288xf32>
    tpu.vector_store %arg11[%c0_3, %c0_4, %c0_5], %2 {strides = array<i32>} : memref<2x18x288xf32, #tpu.memory_space<vmem>>, vector<2x18x288xf32>,
    %c0_6 = arith.constant 0 : index
    %c0_7 = arith.constant 0 : index
    %4 = vector.load %arg0[%c0_6, %c0_7] : memref<32x256xf32, #tpu.memory_space<vmem>>, vector<32x256xf32>
    %5 = vector.shape_cast %4 : vector<32x256xf32> to vector<2x16x256xf32>
    %c0_8 = arith.constant 0 : index
    %c3 = arith.constant 3 : index
    %c48 = arith.constant 48 : index
    %6 = vector.load %arg10[%c0_8, %c3, %c48] : memref<2x22x352xf32, #tpu.memory_space<vmem>>, vector<2x16x256xf32>
    tpu.vector_store %arg10[%c0_8, %c3, %c48], %5 {strides = array<i32>} : memref<2x22x352xf32, #tpu.memory_space<vmem>>, vector<2x16x256xf32>,
    %cst_9 = arith.constant 0.000000e+00 : f32
    %7 = vector.broadcast %cst_9 : f32 to vector<32x256xf32>
    %c0_10 = arith.constant 0 : index
    %c0_11 = arith.constant 0 : index
    %c0_12 = arith.constant 0 : index
    %8 = vector.load %arg10[%c0_10, %c0_11, %c0_12] : memref<2x22x352xf32, #tpu.memory_space<vmem>>, vector<2x16x352xf32>
    %9 = vector.shape_cast %8 : vector<2x16x352xf32> to vector<32x352xf32>
    %c0_13 = arith.constant 0 : index
    %c0_14 = arith.constant 0 : index
    %c0_15 = arith.constant 0 : index
    %10 = vector.load %arg4[%c0_13, %c0_14, %c0_15] : memref<7x352x256xf32, #tpu.memory_space<vmem>>, vector<1x352x256xf32>
    %11 = vector.shape_cast %10 : vector<1x352x256xf32> to vector<352x256xf32>
    %cst_16 = arith.constant dense<0.000000e+00> : vector<32x256xf32>
    %12 = tpu.matmul %9, %11, %cst_16 {dimension_numbers = #tpu.dot_dimension_numbers<[1], [0], [0], [1], [0, 0, 1, 1], [], []>} : vector<32x352xf32>, vector<352x256xf32>, vector<32x256xf32> -> vector<32x256xf32>
    %13 = arith.addf %7, %12 : vector<32x256xf32>
    %c0_17 = arith.constant 0 : index
    %c1 = arith.constant 1 : index
    %c0_18 = arith.constant 0 : index
    %14 = vector.load %arg10[%c0_17, %c1, %c0_18] : memref<2x22x352xf32, #tpu.memory_space<vmem>>, vector<2x16x352xf32>
    %15 = vector.shape_cast %14 : vector<2x16x352xf32> to vector<32x352xf32>
    %c1_19 = arith.constant 1 : index
    %c0_20 = arith.constant 0 : index
    %c0_21 = arith.constant 0 : index
    %16 = vector.load %arg4[%c1_19, %c0_20, %c0_21] : memref<7x352x256xf32, #tpu.memory_space<vmem>>, vector<1x352x256xf32>
    %17 = vector.shape_cast %16 : vector<1x352x256xf32> to vector<352x256xf32>
    %cst_22 = arith.constant dense<0.000000e+00> : vector<32x256xf32>
    %18 = tpu.matmul %15, %17, %cst_22 {dimension_numbers = #tpu.dot_dimension_numbers<[1], [0], [0], [1], [0, 0, 1, 1], [], []>} : vector<32x352xf32>, vector<352x256xf32>, vector<32x256xf32> -> vector<32x256xf32>
    %19 = arith.addf %13, %18 : vector<32x256xf32>
    %c0_23 = arith.constant 0 : index
    %c2 = arith.constant 2 : index
    %c0_24 = arith.constant 0 : index
    %20 = vector.load %arg10[%c0_23, %c2, %c0_24] : memref<2x22x352xf32, #tpu.memory_space<vmem>>, vector<2x16x352xf32>
    %21 = vector.shape_cast %20 : vector<2x16x352xf32> to vector<32x352xf32>
    %c2_25 = arith.constant 2 : index
    %c0_26 = arith.constant 0 : index
    %c0_27 = arith.constant 0 : index
    %22 = vector.load %arg4[%c2_25, %c0_26, %c0_27] : memref<7x352x256xf32, #tpu.memory_space<vmem>>, vector<1x352x256xf32>
    %23 = vector.shape_cast %22 : vector<1x352x256xf32> to vector<352x256xf32>
    %cst_28 = arith.constant dense<0.000000e+00> : vector<32x256xf32>
    %24 = tpu.matmul %21, %23, %cst_28 {dimension_numbers = #tpu.dot_dimension_numbers<[1], [0], [0], [1], [0, 0, 1, 1], [], []>} : vector<32x352xf32>, vector<352x256xf32>, vector<32x256xf32> -> vector<32x256xf32>
    %25 = arith.addf %19, %24 : vector<32x256xf32>
    %c0_29 = arith.constant 0 : index
    %c3_30 = arith.constant 3 : index
    %c0_31 = arith.constant 0 : index
    %26 = vector.load %arg10[%c0_29, %c3_30, %c0_31] : memref<2x22x352xf32, #tpu.memory_space<vmem>>, vector<2x16x352xf32>
    %27 = vector.shape_cast %26 : vector<2x16x352xf32> to vector<32x352xf32>
    %c3_32 = arith.constant 3 : index
    %c0_33 = arith.constant 0 : index
    %c0_34 = arith.constant 0 : index
    %28 = vector.load %arg4[%c3_32, %c0_33, %c0_34] : memref<7x352x256xf32, #tpu.memory_space<vmem>>, vector<1x352x256xf32>
    %29 = vector.shape_cast %28 : vector<1x352x256xf32> to vector<352x256xf32>
    %cst_35 = arith.constant dense<0.000000e+00> : vector<32x256xf32>
    %30 = tpu.matmul %27, %29, %cst_35 {dimension_numbers = #tpu.dot_dimension_numbers<[1], [0], [0], [1], [0, 0, 1, 1], [], []>} : vector<32x352xf32>, vector<352x256xf32>, vector<32x256xf32> -> vector<32x256xf32>
    %31 = arith.addf %25, %30 : vector<32x256xf32>
    %c0_36 = arith.constant 0 : index
    %c4 = arith.constant 4 : index
    %c0_37 = arith.constant 0 : index
    %32 = vector.load %arg10[%c0_36, %c4, %c0_37] : memref<2x22x352xf32, #tpu.memory_space<vmem>>, vector<2x16x352xf32>
    %33 = vector.shape_cast %32 : vector<2x16x352xf32> to vector<32x352xf32>
    %c4_38 = arith.constant 4 : index
    %c0_39 = arith.constant 0 : index
    %c0_40 = arith.constant 0 : index
    %34 = vector.load %arg4[%c4_38, %c0_39, %c0_40] : memref<7x352x256xf32, #tpu.memory_space<vmem>>, vector<1x352x256xf32>
    %35 = vector.shape_cast %34 : vector<1x352x256xf32> to vector<352x256xf32>
    %cst_41 = arith.constant dense<0.000000e+00> : vector<32x256xf32>
    %36 = tpu.matmul %33, %35, %cst_41 {dimension_numbers = #tpu.dot_dimension_numbers<[1], [0], [0], [1], [0, 0, 1, 1], [], []>} : vector<32x352xf32>, vector<352x256xf32>, vector<32x256xf32> -> vector<32x256xf32>
    %37 = arith.addf %31, %36 : vector<32x256xf32>
    %c0_42 = arith.constant 0 : index
    %c5 = arith.constant 5 : index
    %c0_43 = arith.constant 0 : index
    %38 = vector.load %arg10[%c0_42, %c5, %c0_43] : memref<2x22x352xf32, #tpu.memory_space<vmem>>, vector<2x16x352xf32>
    %39 = vector.shape_cast %38 : vector<2x16x352xf32> to vector<32x352xf32>
    %c5_44 = arith.constant 5 : index
    %c0_45 = arith.constant 0 : index
    %c0_46 = arith.constant 0 : index
    %40 = vector.load %arg4[%c5_44, %c0_45, %c0_46] : memref<7x352x256xf32, #tpu.memory_space<vmem>>, vector<1x352x256xf32>
    %41 = vector.shape_cast %40 : vector<1x352x256xf32> to vector<352x256xf32>
    %cst_47 = arith.constant dense<0.000000e+00> : vector<32x256xf32>
    %42 = tpu.matmul %39, %41, %cst_47 {dimension_numbers = #tpu.dot_dimension_numbers<[1], [0], [0], [1], [0, 0, 1, 1], [], []>} : vector<32x352xf32>, vector<352x256xf32>, vector<32x256xf32> -> vector<32x256xf32>
    %43 = arith.addf %37, %42 : vector<32x256xf32>
    %c0_48 = arith.constant 0 : index
    %c6 = arith.constant 6 : index
    %c0_49 = arith.constant 0 : index
    %44 = vector.load %arg10[%c0_48, %c6, %c0_49] : memref<2x22x352xf32, #tpu.memory_space<vmem>>, vector<2x16x352xf32>
    %45 = vector.shape_cast %44 : vector<2x16x352xf32> to vector<32x352xf32>
    %c6_50 = arith.constant 6 : index
    %c0_51 = arith.constant 0 : index
    %c0_52 = arith.constant 0 : index
    %46 = vector.load %arg4[%c6_50, %c0_51, %c0_52] : memref<7x352x256xf32, #tpu.memory_space<vmem>>, vector<1x352x256xf32>
    %47 = vector.shape_cast %46 : vector<1x352x256xf32> to vector<352x256xf32>
    %cst_53 = arith.constant dense<0.000000e+00> : vector<32x256xf32>
    %48 = tpu.matmul %45, %47, %cst_53 {dimension_numbers = #tpu.dot_dimension_numbers<[1], [0], [0], [1], [0, 0, 1, 1], [], []>} : vector<32x352xf32>, vector<352x256xf32>, vector<32x256xf32> -> vector<32x256xf32>
    %49 = arith.addf %43, %48 : vector<32x256xf32>
    %c0_54 = arith.constant 0 : index
    %c0_55 = arith.constant 0 : index
    %50 = vector.load %arg5[%c0_54, %c0_55] : memref<1x256xf32, #tpu.memory_space<vmem>>, vector<1x256xf32>
    %51 = vector.broadcast %50 : vector<1x256xf32> to vector<32x256xf32>
    %52 = arith.addf %49, %51 : vector<32x256xf32>
    %53 = vector.shape_cast %52 : vector<32x256xf32> to vector<2x16x256xf32>
    %c0_56 = arith.constant 0 : index
    %c3_57 = arith.constant 3 : index
    %c48_58 = arith.constant 48 : index
    %54 = vector.load %arg10[%c0_56, %c3_57, %c48_58] : memref<2x22x352xf32, #tpu.memory_space<vmem>>, vector<2x16x256xf32>
    tpu.vector_store %arg10[%c0_56, %c3_57, %c48_58], %53 {strides = array<i32>} : memref<2x22x352xf32, #tpu.memory_space<vmem>>, vector<2x16x256xf32>,
    %cst_59 = arith.constant 0.000000e+00 : f32
    %55 = vector.broadcast %cst_59 : f32 to vector<32x256xf32>
    %c0_60 = arith.constant 0 : index
    %c0_61 = arith.constant 0 : index
    %c0_62 = arith.constant 0 : index
    %56 = vector.load %arg10[%c0_60, %c0_61, %c0_62] : memref<2x22x352xf32, #tpu.memory_space<vmem>>, vector<2x16x352xf32>
    %57 = vector.shape_cast %56 : vector<2x16x352xf32> to vector<32x352xf32>
    %c0_63 = arith.constant 0 : index
    %c0_64 = arith.constant 0 : index
    %c0_65 = arith.constant 0 : index
    %58 = vector.load %arg4[%c0_63, %c0_64, %c0_65] : memref<7x352x256xf32, #tpu.memory_space<vmem>>, vector<1x352x256xf32>
    %59 = vector.shape_cast %58 : vector<1x352x256xf32> to vector<352x256xf32>
    %cst_66 = arith.constant dense<0.000000e+00> : vector<32x256xf32>
    %60 = tpu.matmul %57, %59, %cst_66 {dimension_numbers = #tpu.dot_dimension_numbers<[1], [0], [0], [1], [0, 0, 1, 1], [], []>} : vector<32x352xf32>, vector<352x256xf32>, vector<32x256xf32> -> vector<32x256xf32>
    %61 = arith.addf %55, %60 : vector<32x256xf32>
    %c0_67 = arith.constant 0 : index
    %c1_68 = arith.constant 1 : index
    %c0_69 = arith.constant 0 : index
    %62 = vector.load %arg10[%c0_67, %c1_68, %c0_69] : memref<2x22x352xf32, #tpu.memory_space<vmem>>, vector<2x16x352xf32>
    %63 = vector.shape_cast %62 : vector<2x16x352xf32> to vector<32x352xf32>
    %c1_70 = arith.constant 1 : index
    %c0_71 = arith.constant 0 : index
    %c0_72 = arith.constant 0 : index
    %64 = vector.load %arg4[%c1_70, %c0_71, %c0_72] : memref<7x352x256xf32, #tpu.memory_space<vmem>>, vector<1x352x256xf32>
    %65 = vector.shape_cast %64 : vector<1x352x256xf32> to vector<352x256xf32>
    %cst_73 = arith.constant dense<0.000000e+00> : vector<32x256xf32>
    %66 = tpu.matmul %63, %65, %cst_73 {dimension_numbers = #tpu.dot_dimension_numbers<[1], [0], [0], [1], [0, 0, 1, 1], [], []>} : vector<32x352xf32>, vector<352x256xf32>, vector<32x256xf32> -> vector<32x256xf32>
    %67 = arith.addf %61, %66 : vector<32x256xf32>
    %c0_74 = arith.constant 0 : index
    %c2_75 = arith.constant 2 : index
    %c0_76 = arith.constant 0 : index
    %68 = vector.load %arg10[%c0_74, %c2_75, %c0_76] : memref<2x22x352xf32, #tpu.memory_space<vmem>>, vector<2x16x352xf32>
    %69 = vector.shape_cast %68 : vector<2x16x352xf32> to vector<32x352xf32>
    %c2_77 = arith.constant 2 : index
    %c0_78 = arith.constant 0 : index
    %c0_79 = arith.constant 0 : index
    %70 = vector.load %arg4[%c2_77, %c0_78, %c0_79] : memref<7x352x256xf32, #tpu.memory_space<vmem>>, vector<1x352x256xf32>
    %71 = vector.shape_cast %70 : vector<1x352x256xf32> to vector<352x256xf32>
    %cst_80 = arith.constant dense<0.000000e+00> : vector<32x256xf32>
    %72 = tpu.matmul %69, %71, %cst_80 {dimension_numbers = #tpu.dot_dimension_numbers<[1], [0], [0], [1], [0, 0, 1, 1], [], []>} : vector<32x352xf32>, vector<352x256xf32>, vector<32x256xf32> -> vector<32x256xf32>
    %73 = arith.addf %67, %72 : vector<32x256xf32>
    %c0_81 = arith.constant 0 : index
    %c3_82 = arith.constant 3 : index
    %c0_83 = arith.constant 0 : index
    %74 = vector.load %arg10[%c0_81, %c3_82, %c0_83] : memref<2x22x352xf32, #tpu.memory_space<vmem>>, vector<2x16x352xf32>
    %75 = vector.shape_cast %74 : vector<2x16x352xf32> to vector<32x352xf32>
    %c3_84 = arith.constant 3 : index
    %c0_85 = arith.constant 0 : index
    %c0_86 = arith.constant 0 : index
    %76 = vector.load %arg4[%c3_84, %c0_85, %c0_86] : memref<7x352x256xf32, #tpu.memory_space<vmem>>, vector<1x352x256xf32>
    %77 = vector.shape_cast %76 : vector<1x352x256xf32> to vector<352x256xf32>
    %cst_87 = arith.constant dense<0.000000e+00> : vector<32x256xf32>
    %78 = tpu.matmul %75, %77, %cst_87 {dimension_numbers = #tpu.dot_dimension_numbers<[1], [0], [0], [1], [0, 0, 1, 1], [], []>} : vector<32x352xf32>, vector<352x256xf32>, vector<32x256xf32> -> vector<32x256xf32>
    %79 = arith.addf %73, %78 : vector<32x256xf32>
    %c0_88 = arith.constant 0 : index
    %c4_89 = arith.constant 4 : index
    %c0_90 = arith.constant 0 : index
    %80 = vector.load %arg10[%c0_88, %c4_89, %c0_90] : memref<2x22x352xf32, #tpu.memory_space<vmem>>, vector<2x16x352xf32>
    %81 = vector.shape_cast %80 : vector<2x16x352xf32> to vector<32x352xf32>
    %c4_91 = arith.constant 4 : index
    %c0_92 = arith.constant 0 : index
    %c0_93 = arith.constant 0 : index
    %82 = vector.load %arg4[%c4_91, %c0_92, %c0_93] : memref<7x352x256xf32, #tpu.memory_space<vmem>>, vector<1x352x256xf32>
    %83 = vector.shape_cast %82 : vector<1x352x256xf32> to vector<352x256xf32>
    %cst_94 = arith.constant dense<0.000000e+00> : vector<32x256xf32>
    %84 = tpu.matmul %81, %83, %cst_94 {dimension_numbers = #tpu.dot_dimension_numbers<[1], [0], [0], [1], [0, 0, 1, 1], [], []>} : vector<32x352xf32>, vector<352x256xf32>, vector<32x256xf32> -> vector<32x256xf32>
    %85 = arith.addf %79, %84 : vector<32x256xf32>
    %c0_95 = arith.constant 0 : index
    %c5_96 = arith.constant 5 : index
    %c0_97 = arith.constant 0 : index
    %86 = vector.load %arg10[%c0_95, %c5_96, %c0_97] : memref<2x22x352xf32, #tpu.memory_space<vmem>>, vector<2x16x352xf32>
    %87 = vector.shape_cast %86 : vector<2x16x352xf32> to vector<32x352xf32>
    %c5_98 = arith.constant 5 : index
    %c0_99 = arith.constant 0 : index
    %c0_100 = arith.constant 0 : index
    %88 = vector.load %arg4[%c5_98, %c0_99, %c0_100] : memref<7x352x256xf32, #tpu.memory_space<vmem>>, vector<1x352x256xf32>
    %89 = vector.shape_cast %88 : vector<1x352x256xf32> to vector<352x256xf32>
    %cst_101 = arith.constant dense<0.000000e+00> : vector<32x256xf32>
    %90 = tpu.matmul %87, %89, %cst_101 {dimension_numbers = #tpu.dot_dimension_numbers<[1], [0], [0], [1], [0, 0, 1, 1], [], []>} : vector<32x352xf32>, vector<352x256xf32>, vector<32x256xf32> -> vector<32x256xf32>
    %91 = arith.addf %85, %90 : vector<32x256xf32>
    %c0_102 = arith.constant 0 : index
    %c6_103 = arith.constant 6 : index
    %c0_104 = arith.constant 0 : index
    %92 = vector.load %arg10[%c0_102, %c6_103, %c0_104] : memref<2x22x352xf32, #tpu.memory_space<vmem>>, vector<2x16x352xf32>
    %93 = vector.shape_cast %92 : vector<2x16x352xf32> to vector<32x352xf32>
    %c6_105 = arith.constant 6 : index
    %c0_106 = arith.constant 0 : index
    %c0_107 = arith.constant 0 : index
    %94 = vector.load %arg4[%c6_105, %c0_106, %c0_107] : memref<7x352x256xf32, #tpu.memory_space<vmem>>, vector<1x352x256xf32>
    %95 = vector.shape_cast %94 : vector<1x352x256xf32> to vector<352x256xf32>
    %cst_108 = arith.constant dense<0.000000e+00> : vector<32x256xf32>
    %96 = tpu.matmul %93, %95, %cst_108 {dimension_numbers = #tpu.dot_dimension_numbers<[1], [0], [0], [1], [0, 0, 1, 1], [], []>} : vector<32x352xf32>, vector<352x256xf32>, vector<32x256xf32> -> vector<32x256xf32>
    %97 = arith.addf %91, %96 : vector<32x256xf32>
    %c0_109 = arith.constant 0 : index
    %c0_110 = arith.constant 0 : index
    %98 = vector.load %arg5[%c0_109, %c0_110] : memref<1x256xf32, #tpu.memory_space<vmem>>, vector<1x256xf32>
    %99 = vector.broadcast %98 : vector<1x256xf32> to vector<32x256xf32>
    %100 = arith.addf %97, %99 : vector<32x256xf32>
    %c0_111 = arith.constant 0 : index
    %c0_112 = arith.constant 0 : index
    %101 = vector.load %arg1[%c0_111, %c0_112] : memref<32x256xf32, #tpu.memory_space<vmem>>, vector<32x256xf32>
    %102 = arith.addf %52, %101 : vector<32x256xf32>
    %cst_113 = arith.constant 0.000000e+00 : f32
    %103 = vector.broadcast %cst_113 : f32 to vector<32x256xf32>
    %104 = arith.maximumf %102, %103 : vector<32x256xf32>
    %105 = arith.addf %100, %104 : vector<32x256xf32>
    %cst_114 = arith.constant 0.000000e+00 : f32
    %106 = vector.broadcast %cst_114 : f32 to vector<32x256xf32>
    %107 = arith.maximumf %105, %106 : vector<32x256xf32>
    %108 = vector.shape_cast %107 : vector<32x256xf32> to vector<2x16x256xf32>
    %c0_115 = arith.constant 0 : index
    %c1_116 = arith.constant 1 : index
    %c16 = arith.constant 16 : index
    %109 = vector.load %arg11[%c0_115, %c1_116, %c16] : memref<2x18x288xf32, #tpu.memory_space<vmem>>, vector<2x16x256xf32>
    tpu.vector_store %arg11[%c0_115, %c1_116, %c16], %108 {strides = array<i32>} : memref<2x18x288xf32, #tpu.memory_space<vmem>>, vector<2x16x256xf32>,
    %cst_117 = arith.constant 0.000000e+00 : f32
    %110 = vector.broadcast %cst_117 : f32 to vector<32x256xf32>
    %c0_118 = arith.constant 0 : index
    %c0_119 = arith.constant 0 : index
    %c0_120 = arith.constant 0 : index
    %111 = vector.load %arg11[%c0_118, %c0_119, %c0_120] : memref<2x18x288xf32, #tpu.memory_space<vmem>>, vector<2x16x288xf32>
    %112 = vector.shape_cast %111 : vector<2x16x288xf32> to vector<32x288xf32>
    %c0_121 = arith.constant 0 : index
    %c0_122 = arith.constant 0 : index
    %c0_123 = arith.constant 0 : index
    %113 = vector.load %arg6[%c0_121, %c0_122, %c0_123] : memref<3x288x256xf32, #tpu.memory_space<vmem>>, vector<1x288x256xf32>
    %114 = vector.shape_cast %113 : vector<1x288x256xf32> to vector<288x256xf32>
    %cst_124 = arith.constant dense<0.000000e+00> : vector<32x256xf32>
    %115 = tpu.matmul %112, %114, %cst_124 {dimension_numbers = #tpu.dot_dimension_numbers<[1], [0], [0], [1], [0, 0, 1, 1], [], []>} : vector<32x288xf32>, vector<288x256xf32>, vector<32x256xf32> -> vector<32x256xf32>
    %116 = arith.addf %110, %115 : vector<32x256xf32>
    %c0_125 = arith.constant 0 : index
    %c1_126 = arith.constant 1 : index
    %c0_127 = arith.constant 0 : index
    %117 = vector.load %arg11[%c0_125, %c1_126, %c0_127] : memref<2x18x288xf32, #tpu.memory_space<vmem>>, vector<2x16x288xf32>
    %118 = vector.shape_cast %117 : vector<2x16x288xf32> to vector<32x288xf32>
    %c1_128 = arith.constant 1 : index
    %c0_129 = arith.constant 0 : index
    %c0_130 = arith.constant 0 : index
    %119 = vector.load %arg6[%c1_128, %c0_129, %c0_130] : memref<3x288x256xf32, #tpu.memory_space<vmem>>, vector<1x288x256xf32>
    %120 = vector.shape_cast %119 : vector<1x288x256xf32> to vector<288x256xf32>
    %cst_131 = arith.constant dense<0.000000e+00> : vector<32x256xf32>
    %121 = tpu.matmul %118, %120, %cst_131 {dimension_numbers = #tpu.dot_dimension_numbers<[1], [0], [0], [1], [0, 0, 1, 1], [], []>} : vector<32x288xf32>, vector<288x256xf32>, vector<32x256xf32> -> vector<32x256xf32>
    %122 = arith.addf %116, %121 : vector<32x256xf32>
    %c0_132 = arith.constant 0 : index
    %c2_133 = arith.constant 2 : index
    %c0_134 = arith.constant 0 : index
    %123 = vector.load %arg11[%c0_132, %c2_133, %c0_134] : memref<2x18x288xf32, #tpu.memory_space<vmem>>, vector<2x16x288xf32>
    %124 = vector.shape_cast %123 : vector<2x16x288xf32> to vector<32x288xf32>
    %c2_135 = arith.constant 2 : index
    %c0_136 = arith.constant 0 : index
    %c0_137 = arith.constant 0 : index
    %125 = vector.load %arg6[%c2_135, %c0_136, %c0_137] : memref<3x288x256xf32, #tpu.memory_space<vmem>>, vector<1x288x256xf32>
    %126 = vector.shape_cast %125 : vector<1x288x256xf32> to vector<288x256xf32>
    %cst_138 = arith.constant dense<0.000000e+00> : vector<32x256xf32>
    %127 = tpu.matmul %124, %126, %cst_138 {dimension_numbers = #tpu.dot_dimension_numbers<[1], [0], [0], [1], [0, 0, 1, 1], [], []>} : vector<32x288xf32>, vector<288x256xf32>, vector<32x256xf32> -> vector<32x256xf32>
    %128 = arith.addf %122, %127 : vector<32x256xf32>
    %c0_139 = arith.constant 0 : index
    %c0_140 = arith.constant 0 : index
    %129 = vector.load %arg7[%c0_139, %c0_140] : memref<1x256xf32, #tpu.memory_space<vmem>>, vector<1x256xf32>
    %130 = vector.broadcast %129 : vector<1x256xf32> to vector<32x256xf32>
    %131 = arith.addf %128, %130 : vector<32x256xf32>
    %c0_141 = arith.constant 0 : index
    %c0_142 = arith.constant 0 : index
    %132 = vector.load %arg2[%c0_141, %c0_142] : memref<32x256xf32, #tpu.memory_space<vmem>>, vector<32x256xf32>
    %133 = arith.addf %131, %132 : vector<32x256xf32>
    %cst_143 = arith.constant 0.000000e+00 : f32
    %134 = vector.broadcast %cst_143 : f32 to vector<32x256xf32>
    %135 = arith.maximumf %133, %134 : vector<32x256xf32>
    %c0_144 = arith.constant 0 : index
    %c0_145 = arith.constant 0 : index
    %136 = vector.load %arg8[%c0_144, %c0_145] : memref<32x256xf32, #tpu.memory_space<vmem>>, vector<32x256xf32>
    tpu.vector_store %arg8[%c0_144, %c0_145], %135 {strides = array<i32>} : memref<32x256xf32, #tpu.memory_space<vmem>>, vector<32x256xf32>,
    %c0_146 = arith.constant 0 : index
    %c0_147 = arith.constant 0 : index
    %137 = vector.load %arg3[%c0_146, %c0_147] : memref<32x256xf32, #tpu.memory_space<vmem>>, vector<32x256xf32>
    %138 = arith.addf %131, %137 : vector<32x256xf32>
    %cst_148 = arith.constant 0.000000e+00 : f32
    %139 = vector.broadcast %cst_148 : f32 to vector<32x256xf32>
    %140 = arith.maximumf %138, %139 : vector<32x256xf32>
    %c0_149 = arith.constant 0 : index
    %c0_150 = arith.constant 0 : index
    %141 = vector.load %arg9[%c0_149, %c0_150] : memref<32x256xf32, #tpu.memory_space<vmem>>, vector<32x256xf32>
    tpu.vector_store %arg9[%c0_149, %c0_150], %140 {strides = array<i32>} : memref<32x256xf32, #tpu.memory_space<vmem>>, vector<32x256xf32>,
    return
  }
}

</mosaic_0001>

<llo_original>
// kernel: model_forward.1
$region0: #{model_forward.1}
  #allocation0 [shape = 'u32[]', space=smem, size = 0x4, offset = 0x4, fixed_abs, tag = 'smem constant byte address 0x4 - core index']
  #allocation1 [shape = 'u32[72,128]{1,0:T(1,128)}', space=vmem, size = 0x9000, scoped, tag = 'internal scratch']
  #allocation2 [shape = 'f32[2,22,352]{2,1,0:T(8,128)}', space=vmem, size = 0x12000, scoped, tag = 'scratch operand']
  #allocation3 [shape = 'f32[2,18,288]{2,1,0:T(8,128)}', space=vmem, size = 0x12000, scoped, tag = 'scratch operand']
  %s0 = inlined_call_operand.vmem [shape: f32[32,256], index: 0, kind: input, shape index: {}]
  %s1 = inlined_call_operand.vmem [shape: f32[32,256], index: 1, kind: input, shape index: {}]
  %s2 = inlined_call_operand.vmem [shape: f32[32,256], index: 2, kind: input, shape index: {}]
  %s3 = inlined_call_operand.vmem [shape: f32[32,256], index: 3, kind: input, shape index: {}]
  %s4 = inlined_call_operand.vmem [shape: f32[7,352,256], index: 4, kind: input, shape index: {}]
  %s5 = inlined_call_operand.vmem [shape: f32[1,256], index: 5, kind: input, shape index: {}]
  %s6 = inlined_call_operand.vmem [shape: f32[3,288,256], index: 6, kind: input, shape index: {}]
  %s7 = inlined_call_operand.vmem [shape: f32[1,256], index: 7, kind: input, shape index: {}]
  %s8 = inlined_call_operand.vmem [shape: f32[32,256], index: 8, kind: output, shape index: {0}]
  %s9 = inlined_call_operand.vmem [shape: f32[32,256], index: 9, kind: output, shape index: {1}]
  %10 = xla_tuple %s8, %s9
  %s11 = sld [smem:[#allocation0]]
  $region50: #{model_forward.1} parent=0
    _
  %s13 = ssub.s32 1, %s11
  %s14 = scalar_select 0, %s13, %s11
  // Predicated region
  $region2: #{model_forward.1} parent=0 // pred_check
    _
  $region3: #{model_forward.1} parent=0 // pred_check_branch
    %16 = sbr.rel (0) target = $region5
  $region4: #{model_forward.1} parent=0 // pred_region
    _
  $region5: #{model_forward.1} parent=0 // pred_fallthru
    _
  // Predicated region
  $region6: #{model_forward.1} parent=0 // pred_check
    _
  $region7: #{model_forward.1} parent=0 // pred_check_branch
    %18 = sbr.rel (0) target = $region9
  $region8: #{model_forward.1} parent=0 // pred_region
    _
  $region9: #{model_forward.1} parent=0 // pred_fallthru
    _
  // Predicated region
  $region10: #{model_forward.1} parent=0 // pred_check
    _
  $region11: #{model_forward.1} parent=0 // pred_check_branch
    %20 = sbr.rel (0) target = $region13
  $region12: #{model_forward.1} parent=0 // pred_region
    _
  $region13: #{model_forward.1} parent=0 // pred_fallthru
    _
  // Predicated region
  $region14: #{model_forward.1} parent=0 // pred_check
    _
  $region15: #{model_forward.1} parent=0 // pred_check_branch
    %22 = sbr.rel (0) target = $region17
  $region16: #{model_forward.1} parent=0 // pred_region
    _
  $region17: #{model_forward.1} parent=0 // pred_fallthru
    _
  // Predicated region
  $region18: #{model_forward.1} parent=0 // pred_check
    _
  $region19: #{model_forward.1} parent=0 // pred_check_branch
    %24 = sbr.rel (0) target = $region21
  $region20: #{model_forward.1} parent=0 // pred_region
    _
  $region21: #{model_forward.1} parent=0 // pred_fallthru
    _
  // Predicated region
  $region22: #{model_forward.1} parent=0 // pred_check
    _
  $region23: #{model_forward.1} parent=0 // pred_check_branch
    %26 = sbr.rel (0) target = $region25
  $region24: #{model_forward.1} parent=0 // pred_region
    _
  $region25: #{model_forward.1} parent=0 // pred_fallthru
    _
  // Predicated region
  $region26: #{model_forward.1} parent=0 // pred_check
    _
  $region27: #{model_forward.1} parent=0 // pred_check_branch
    %28 = sbr.rel (0) target = $region29
  $region28: #{model_forward.1} parent=0 // pred_region
    _
  $region29: #{model_forward.1} parent=0 // pred_fallthru
    _
  // Predicated region
  $region30: #{model_forward.1} parent=0 // pred_check
    _
  $region31: #{model_forward.1} parent=0 // pred_check_branch
    %30 = sbr.rel (0) target = $region33
  $region32: #{model_forward.1} parent=0 // pred_region
    _
  $region33: #{model_forward.1} parent=0 // pred_fallthru
    _
  %31 = vst [vmem:[#allocation2] sm:$0xff] 0.0
  %32 = vst [vmem:[#allocation2 + $0x8] sm:$0xff] 0.0
  %vm33 = vcmask 785408
  %34 = vst.msk [vmem:[#allocation2 + $0x10] sm:$0xff] %vm33, 0.0
  %35 = vst [vmem:[#allocation2 + $0x18] sm:$0xff] 0.0
  %36 = vst [vmem:[#allocation2 + $0x20] sm:$0xff] 0.0
  %37 = vst.msk [vmem:[#allocation2 + $0x28] sm:$0xff] %vm33, 0.0
  %38 = vst [vmem:[#allocation2 + $0x30] sm:$0x3f] 0.0
  %39 = vst [vmem:[#allocation2 + $0x38] sm:$0x3f] 0.0
  %vm40 = vcmask 783360
  %41 = vst.msk [vmem:[#allocation2 + $0x40] sm:$0x3f] %vm40, 0.0
  %42 = vst [vmem:[#allocation2 + $0x48] sm:$0xff] 0.0
  %43 = vst [vmem:[#allocation2 + $0x50] sm:$0xff] 0.0
  %44 = vst.msk [vmem:[#allocation2 + $0x58] sm:$0xff] %vm33, 0.0
  %45 = vst [vmem:[#allocation2 + $0x60] sm:$0xff] 0.0
  %46 = vst [vmem:[#allocation2 + $0x68] sm:$0xff] 0.0
  %47 = vst.msk [vmem:[#allocation2 + $0x70] sm:$0xff] %vm33, 0.0
  %48 = vst [vmem:[#allocation2 + $0x78] sm:$0x3f] 0.0
  %49 = vst [vmem:[#allocation2 + $0x80] sm:$0x3f] 0.0
  %50 = vst.msk [vmem:[#allocation2 + $0x88] sm:$0x3f] %vm40, 0.0
  %51 = vst [vmem:[#allocation3] sm:$0xff] 0.0
  %52 = vst [vmem:[#allocation3 + $0x8] sm:$0xff] 0.0
  %vm53 = vcmask 261120
  %54 = vst.msk [vmem:[#allocation3 + $0x10] sm:$0xff] %vm53, 0.0
  %55 = vst [vmem:[#allocation3 + $0x18] sm:$0xff] 0.0
  %56 = vst [vmem:[#allocation3 + $0x20] sm:$0xff] 0.0
  %57 = vst.msk [vmem:[#allocation3 + $0x28] sm:$0xff] %vm53, 0.0
  %58 = vst [vmem:[#allocation3 + $0x30] sm:$0x3] 0.0
  %59 = vst [vmem:[#allocation3 + $0x38] sm:$0x3] 0.0
  %vm60 = vcmask 254976
  %61 = vst.msk [vmem:[#allocation3 + $0x40] sm:$0x3] %vm60, 0.0
  %62 = vst [vmem:[#allocation3 + $0x48] sm:$0xff] 0.0
  %63 = vst [vmem:[#allocation3 + $0x50] sm:$0xff] 0.0
  %64 = vst.msk [vmem:[#allocation3 + $0x58] sm:$0xff] %vm53, 0.0
  %65 = vst [vmem:[#allocation3 + $0x60] sm:$0xff] 0.0
  %66 = vst [vmem:[#allocation3 + $0x68] sm:$0xff] 0.0
  %67 = vst.msk [vmem:[#allocation3 + $0x70] sm:$0xff] %vm53, 0.0
  %68 = vst [vmem:[#allocation3 + $0x78] sm:$0x3] 0.0
  %69 = vst [vmem:[#allocation3 + $0x80] sm:$0x3] 0.0
  %70 = vst.msk [vmem:[#allocation3 + $0x88] sm:$0x3] %vm60, 0.0
  %v71 = vld [vmem:[%s0] sm:$0xff]
  %v72 = vld [vmem:[%s0 + $0x8] sm:$0xff]
  %v73 = vld [vmem:[%s0 + $0x10] sm:$0xff]
  %v74 = vld [vmem:[%s0 + $0x18] sm:$0xff]
  %v75 = vld [vmem:[%s0 + $0x20] sm:$0xff]
  %v76 = vld [vmem:[%s0 + $0x28] sm:$0xff]
  %v77 = vld [vmem:[%s0 + $0x30] sm:$0xff]
  %v78 = vld [vmem:[%s0 + $0x38] sm:$0xff]
  %vm87 = vcmask 1042432
  %v88 = vrot.slane %v71, 5
  %v89 = vrot.slane %v72, 5
  %v90 = vrot.slane %v73, 5
  %v91 = vsel %vm87, %v88, %v90
  %v92 = vrot.slane %v74, 5
  %v93 = vsel %vm87, %v89, %v92
  %v94 = vrot.slane %v75, 5
  %v95 = vrot.slane %v76, 5
  %v96 = vrot.slane %v77, 5
  %v97 = vsel %vm87, %v94, %v96
  %v98 = vrot.slane %v78, 5
  %v99 = vsel %vm87, %v95, %v98
  %100 = vrot.lane.b32.xlu0 %v88, 48
  %v101 = vpop.permute.xlu0 %100
  %102 = vrot.lane.b32.xlu0 %v89, 48
  %v103 = vpop.permute.xlu0 %102
  %104 = vrot.lane.b32.xlu0 %v91, 48
  %v105 = vpop.permute.xlu0 %104
  %106 = vrot.lane.b32.xlu0 %v93, 48
  %v107 = vpop.permute.xlu0 %106
  %108 = vrot.lane.b32.xlu0 %v90, 48
  %v109 = vpop.permute.xlu0 %108
  %110 = vrot.lane.b32.xlu0 %v92, 48
  %v111 = vpop.permute.xlu0 %110
  %112 = vrot.lane.b32.xlu0 %v94, 48
  %v113 = vpop.permute.xlu0 %112
  %114 = vrot.lane.b32.xlu0 %v95, 48
  %v115 = vpop.permute.xlu0 %114
  %116 = vrot.lane.b32.xlu0 %v97, 48
  %v117 = vpop.permute.xlu0 %116
  %118 = vrot.lane.b32.xlu0 %v99, 48
  %v119 = vpop.permute.xlu0 %118
  %120 = vrot.lane.b32.xlu0 %v96, 48
  %v121 = vpop.permute.xlu0 %120
  %122 = vrot.lane.b32.xlu0 %v98, 48
  %v123 = vpop.permute.xlu0 %122
  %vm124 = vcmask 392192
  %v125 = vsel %vm124, %v101, %v103
  %v126 = vsel %vm124, %v105, %v107
  %v127 = vsel %vm124, %v109, %v111
  %v128 = vsel %vm124, %v113, %v115
  %v129 = vsel %vm124, %v117, %v119
  %v130 = vsel %vm124, %v121, %v123
  %vm149 = vcmask 1047939
  %150 = vst.msk [vmem:[#allocation2] sm:$0xf8] %vm149, %v101
  %151 = vst [vmem:[#allocation2 + $0x8] sm:$0xf8] %v125
  %vm152 = vcmask 392195
  %153 = vst.msk [vmem:[#allocation2 + $0x10] sm:$0xf8] %vm152, %v103
  %vm154 = vcmask 1047936
  %155 = vst.msk [vmem:[#allocation2 + $0x18] sm:$0xff] %vm154, %v105
  %156 = vst [vmem:[#allocation2 + $0x20] sm:$0xff] %v126
  %157 = vst.msk [vmem:[#allocation2 + $0x28] sm:$0xff] %vm124, %v107
  %vm158 = vcmask 1042816
  %159 = vst.msk [vmem:[#allocation2 + $0x30] sm:$0x7] %vm158, %v109
  %160 = vst [vmem:[#allocation2 + $0x38] sm:$0x7] %v127
  %vm161 = vcmask 387072
  %162 = vst.msk [vmem:[#allocation2 + $0x40] sm:$0x7] %vm161, %v111
  %163 = vst.msk [vmem:[#allocation2 + $0x48] sm:$0xf8] %vm149, %v113
  %164 = vst [vmem:[#allocation2 + $0x50] sm:$0xf8] %v128
  %165 = vst.msk [vmem:[#allocation2 + $0x58] sm:$0xf8] %vm152, %v115
  %166 = vst.msk [vmem:[#allocation2 + $0x60] sm:$0xff] %vm154, %v117
  %167 = vst [vmem:[#allocation2 + $0x68] sm:$0xff] %v129
  %168 = vst.msk [vmem:[#allocation2 + $0x70] sm:$0xff] %vm124, %v119
  %169 = vst.msk [vmem:[#allocation2 + $0x78] sm:$0x7] %vm158, %v121
  %170 = vst [vmem:[#allocation2 + $0x80] sm:$0x7] %v130
  %171 = vst.msk [vmem:[#allocation2 + $0x88] sm:$0x7] %vm161, %v123
  %v172 = vld [vmem:[#allocation2] sm:$0xff]
  %v173 = vld [vmem:[#allocation2 + $0x8] sm:$0xff]
  %v174 = vld [vmem:[#allocation2 + $0x10] sm:$0xff]
  %v175 = vld [vmem:[#allocation2 + $0x18] sm:$0xff]
  %v176 = vld [vmem:[#allocation2 + $0x20] sm:$0xff]
  %v177 = vld [vmem:[#allocation2 + $0x28] sm:$0xff]
  %v178 = vld [vmem:[#allocation2 + $0x48] sm:$0xff]
  %v179 = vld [vmem:[#allocation2 + $0x50] sm:$0xff]
  %v180 = vld [vmem:[#allocation2 + $0x58] sm:$0xff]
  %v181 = vld [vmem:[#allocation2 + $0x60] sm:$0xff]
  %v182 = vld [vmem:[#allocation2 + $0x68] sm:$0xff]
  %v183 = vld [vmem:[#allocation2 + $0x70] sm:$0xff]
  %v184 = vld [vmem:[%s4] sm:$0xff]
  %v185 = vld [vmem:[%s4 + $0x8] sm:$0xff]
  %v186 = vld [vmem:[%s4 + $0x10] sm:$0xff]
  %v187 = vld [vmem:[%s4 + $0x18] sm:$0xff]
  %v188 = vld [vmem:[%s4 + $0x20] sm:$0xff]
  %v189 = vld [vmem:[%s4 + $0x28] sm:$0xff]
  %v190 = vld [vmem:[%s4 + $0x30] sm:$0xff]
  %v191 = vld [vmem:[%s4 + $0x38] sm:$0xff]
  %v192 = vld [vmem:[%s4 + $0x40] sm:$0xff]
  %v193 = vld [vmem:[%s4 + $0x48] sm:$0xff]
  %v194 = vld [vmem:[%s4 + $0x50] sm:$0xff]
  %v195 = vld [vmem:[%s4 + $0x58] sm:$0xff]
  %v196 = vld [vmem:[%s4 + $0x60] sm:$0xff]
  %v197 = vld [vmem:[%s4 + $0x68] sm:$0xff]
  %v198 = vld [vmem:[%s4 + $0x70] sm:$0xff]
  %v199 = vld [vmem:[%s4 + $0x78] sm:$0xff]
  %v200 = vld [vmem:[%s4 + $0x80] sm:$0xff]
  %v201 = vld [vmem:[%s4 + $0x88] sm:$0xff]
  %v202 = vld [vmem:[%s4 + $0x90] sm:$0xff]
  %v203 = vld [vmem:[%s4 + $0x98] sm:$0xff]
  %v204 = vld [vmem:[%s4 + $0xa0] sm:$0xff]
  %v205 = vld [vmem:[%s4 + $0xa8] sm:$0xff]
  %v206 = vld [vmem:[%s4 + $0xb0] sm:$0xff]
  %v207 = vld [vmem:[%s4 + $0xb8] sm:$0xff]
  %v208 = vld [vmem:[%s4 + $0xc0] sm:$0xff]
  %v209 = vld [vmem:[%s4 + $0xc8] sm:$0xff]
  %v210 = vld [vmem:[%s4 + $0xd0] sm:$0xff]
  %v211 = vld [vmem:[%s4 + $0xd8] sm:$0xff]
  %v212 = vld [vmem:[%s4 + $0xe0] sm:$0xff]
  %v213 = vld [vmem:[%s4 + $0xe8] sm:$0xff]
  %v214 = vld [vmem:[%s4 + $0xf0] sm:$0xff]
  %v215 = vld [vmem:[%s4 + $0xf8] sm:$0xff]
  %v216 = vld [vmem:[%s4 + $0x100] sm:$0xff]
  %v217 = vld [vmem:[%s4 + $0x108] sm:$0xff]
  %v218 = vld [vmem:[%s4 + $0x110] sm:$0xff]
  %v219 = vld [vmem:[%s4 + $0x118] sm:$0xff]
  %v220 = vld [vmem:[%s4 + $0x120] sm:$0xff]
  %v221 = vld [vmem:[%s4 + $0x128] sm:$0xff]
  %v222 = vld [vmem:[%s4 + $0x130] sm:$0xff]
  %v223 = vld [vmem:[%s4 + $0x138] sm:$0xff]
  %v224 = vld [vmem:[%s4 + $0x140] sm:$0xff]
  %v225 = vld [vmem:[%s4 + $0x148] sm:$0xff]
  %v226 = vld [vmem:[%s4 + $0x150] sm:$0xff]
  %v227 = vld [vmem:[%s4 + $0x158] sm:$0xff]
  %v228 = vld [vmem:[%s4 + $0x160] sm:$0xff]
  %v229 = vld [vmem:[%s4 + $0x168] sm:$0xff]
  %v230 = vld [vmem:[%s4 + $0x170] sm:$0xff]
  %v231 = vld [vmem:[%s4 + $0x178] sm:$0xff]
  %v232 = vld [vmem:[%s4 + $0x180] sm:$0xff]
  %v233 = vld [vmem:[%s4 + $0x188] sm:$0xff]
  %v234 = vld [vmem:[%s4 + $0x190] sm:$0xff]
  %v235 = vld [vmem:[%s4 + $0x198] sm:$0xff]
  %v236 = vld [vmem:[%s4 + $0x1a0] sm:$0xff]
  %v237 = vld [vmem:[%s4 + $0x1a8] sm:$0xff]
  %v238 = vld [vmem:[%s4 + $0x1b0] sm:$0xff]
  %v239 = vld [vmem:[%s4 + $0x1b8] sm:$0xff]
  %v240 = vld [vmem:[%s4 + $0x1c0] sm:$0xff]
  %v241 = vld [vmem:[%s4 + $0x1c8] sm:$0xff]
  %v242 = vld [vmem:[%s4 + $0x1d0] sm:$0xff]
  %v243 = vld [vmem:[%s4 + $0x1d8] sm:$0xff]
  %v244 = vld [vmem:[%s4 + $0x1e0] sm:$0xff]
  %v245 = vld [vmem:[%s4 + $0x1e8] sm:$0xff]
  %v246 = vld [vmem:[%s4 + $0x1f0] sm:$0xff]
  %v247 = vld [vmem:[%s4 + $0x1f8] sm:$0xff]
  %v248 = vld [vmem:[%s4 + $0x200] sm:$0xff]
  %v249 = vld [vmem:[%s4 + $0x208] sm:$0xff]
  %v250 = vld [vmem:[%s4 + $0x210] sm:$0xff]
  %v251 = vld [vmem:[%s4 + $0x218] sm:$0xff]
  %v252 = vld [vmem:[%s4 + $0x220] sm:$0xff]
  %v253 = vld [vmem:[%s4 + $0x228] sm:$0xff]
  %v254 = vld [vmem:[%s4 + $0x230] sm:$0xff]
  %v255 = vld [vmem:[%s4 + $0x238] sm:$0xff]
  %v256 = vld [vmem:[%s4 + $0x240] sm:$0xff]
  %v257 = vld [vmem:[%s4 + $0x248] sm:$0xff]
  %v258 = vld [vmem:[%s4 + $0x250] sm:$0xff]
  %v259 = vld [vmem:[%s4 + $0x258] sm:$0xff]
  %v260 = vld [vmem:[%s4 + $0x260] sm:$0xff]
  %v261 = vld [vmem:[%s4 + $0x268] sm:$0xff]
  %v262 = vld [vmem:[%s4 + $0x270] sm:$0xff]
  %v263 = vld [vmem:[%s4 + $0x278] sm:$0xff]
  %v264 = vld [vmem:[%s4 + $0x280] sm:$0xff]
  %v265 = vld [vmem:[%s4 + $0x288] sm:$0xff]
  %v266 = vld [vmem:[%s4 + $0x290] sm:$0xff]
  %v267 = vld [vmem:[%s4 + $0x298] sm:$0xff]
  %v268 = vld [vmem:[%s4 + $0x2a0] sm:$0xff]
  %v269 = vld [vmem:[%s4 + $0x2a8] sm:$0xff]
  %v270 = vld [vmem:[%s4 + $0x2b0] sm:$0xff]
  %v271 = vld [vmem:[%s4 + $0x2b8] sm:$0xff]
  %v272 = vld [vmem:[#allocation2] sm:$0xfe]
  %v273 = vld [vmem:[#allocation2 + $0x8] sm:$0xfe]
  %v274 = vld [vmem:[#allocation2 + $0x10] sm:$0xfe]
  %v275 = vld [vmem:[#allocation2 + $0x30] sm:$0x1]
  %v276 = vld [vmem:[#allocation2 + $0x38] sm:$0x1]
  %v277 = vld [vmem:[#allocation2 + $0x40] sm:$0x1]
  %v278 = vld [vmem:[#allocation2 + $0x48] sm:$0xfe]
  %v279 = vld [vmem:[#allocation2 + $0x50] sm:$0xfe]
  %v280 = vld [vmem:[#allocation2 + $0x58] sm:$0xfe]
  %v281 = vld [vmem:[#allocation2 + $0x78] sm:$0x1]
  %v282 = vld [vmem:[#allocation2 + $0x80] sm:$0x1]
  %v283 = vld [vmem:[#allocation2 + $0x88] sm:$0x1]
  %vm302 = vcmask 1046528
  %v303 = vrot.slane %v272, 1
  %v304 = vrot.slane %v175, 1
  %v305 = vsel %vm302, %v303, %v304
  %v306 = vrot.slane %v273, 1
  %v307 = vrot.slane %v176, 1
  %v308 = vsel %vm302, %v306, %v307
  %v309 = vrot.slane %v274, 1
  %v310 = vrot.slane %v177, 1
  %v311 = vsel %vm302, %v309, %v310
  %v312 = vrot.slane %v275, 1
  %v313 = vsel %vm302, %v304, %v312
  %v314 = vrot.slane %v276, 1
  %v315 = vsel %vm302, %v307, %v314
  %v316 = vrot.slane %v277, 1
  %v317 = vsel %vm302, %v310, %v316
  %v318 = vrot.slane %v278, 1
  %v319 = vrot.slane %v181, 1
  %v320 = vsel %vm302, %v318, %v319
  %v321 = vrot.slane %v279, 1
  %v322 = vrot.slane %v182, 1
  %v323 = vsel %vm302, %v321, %v322
  %v324 = vrot.slane %v280, 1
  %v325 = vrot.slane %v183, 1
  %v326 = vsel %vm302, %v324, %v325
  %v327 = vrot.slane %v281, 1
  %v328 = vsel %vm302, %v319, %v327
  %v329 = vrot.slane %v282, 1
  %v330 = vsel %vm302, %v322, %v329
  %v331 = vrot.slane %v283, 1
  %v332 = vsel %vm302, %v325, %v331
  %s341 = scalar_lea.vmem %s4, 704
  %v342 = vld [vmem:[%s341] sm:$0xff]
  %v343 = vld [vmem:[%s341 + $0x8] sm:$0xff]
  %v344 = vld [vmem:[%s341 + $0x10] sm:$0xff]
  %v345 = vld [vmem:[%s341 + $0x18] sm:$0xff]
  %v346 = vld [vmem:[%s341 + $0x20] sm:$0xff]
  %v347 = vld [vmem:[%s341 + $0x28] sm:$0xff]
  %v348 = vld [vmem:[%s341 + $0x30] sm:$0xff]
  %v349 = vld [vmem:[%s341 + $0x38] sm:$0xff]
  %v350 = vld [vmem:[%s341 + $0x40] sm:$0xff]
  %v351 = vld [vmem:[%s341 + $0x48] sm:$0xff]
  %v352 = vld [vmem:[%s341 + $0x50] sm:$0xff]
  %v353 = vld [vmem:[%s341 + $0x58] sm:$0xff]
  %v354 = vld [vmem:[%s341 + $0x60] sm:$0xff]
  %v355 = vld [vmem:[%s341 + $0x68] sm:$0xff]
  %v356 = vld [vmem:[%s341 + $0x70] sm:$0xff]
  %v357 = vld [vmem:[%s341 + $0x78] sm:$0xff]
  %v358 = vld [vmem:[%s341 + $0x80] sm:$0xff]
  %v359 = vld [vmem:[%s341 + $0x88] sm:$0xff]
  %v360 = vld [vmem:[%s341 + $0x90] sm:$0xff]
  %v361 = vld [vmem:[%s341 + $0x98] sm:$0xff]
  %v362 = vld [vmem:[%s341 + $0xa0] sm:$0xff]
  %v363 = vld [vmem:[%s341 + $0xa8] sm:$0xff]
  %v364 = vld [vmem:[%s341 + $0xb0] sm:$0xff]
  %v365 = vld [vmem:[%s341 + $0xb8] sm:$0xff]
  %v366 = vld [vmem:[%s341 + $0xc0] sm:$0xff]
  %v367 = vld [vmem:[%s341 + $0xc8] sm:$0xff]
  %v368 = vld [vmem:[%s341 + $0xd0] sm:$0xff]
  %v369 = vld [vmem:[%s341 + $0xd8] sm:$0xff]
  %v370 = vld [vmem:[%s341 + $0xe0] sm:$0xff]
  %v371 = vld [vmem:[%s341 + $0xe8] sm:$0xff]
  %v372 = vld [vmem:[%s341 + $0xf0] sm:$0xff]
  %v373 = vld [vmem:[%s341 + $0xf8] sm:$0xff]
  %v374 = vld [vmem:[%s341 + $0x100] sm:$0xff]
  %v375 = vld [vmem:[%s341 + $0x108] sm:$0xff]
  %v376 = vld [vmem:[%s341 + $0x110] sm:$0xff]
  %v377 = vld [vmem:[%s341 + $0x118] sm:$0xff]
  %v378 = vld [vmem:[%s341 + $0x120] sm:$0xff]
  %v379 = vld [vmem:[%s341 + $0x128] sm:$0xff]
  %v380 = vld [vmem:[%s341 + $0x130] sm:$0xff]
  %v381 = vld [vmem:[%s341 + $0x138] sm:$0xff]
  %v382 = vld [vmem:[%s341 + $0x140] sm:$0xff]
  %v383 = vld [vmem:[%s341 + $0x148] sm:$0xff]
  %v384 = vld [vmem:[%s341 + $0x150] sm:$0xff]
  %v385 = vld [vmem:[%s341 + $0x158] sm:$0xff]
  %v386 = vld [vmem:[%s341 + $0x160] sm:$0xff]
  %v387 = vld [vmem:[%s341 + $0x168] sm:$0xff]
  %v388 = vld [vmem:[%s341 + $0x170] sm:$0xff]
  %v389 = vld [vmem:[%s341 + $0x178] sm:$0xff]
  %v390 = vld [vmem:[%s341 + $0x180] sm:$0xff]
  %v391 = vld [vmem:[%s341 + $0x188] sm:$0xff]
  %v392 = vld [vmem:[%s341 + $0x190] sm:$0xff]
  %v393 = vld [vmem:[%s341 + $0x198] sm:$0xff]
  %v394 = vld [vmem:[%s341 + $0x1a0] sm:$0xff]
  %v395 = vld [vmem:[%s341 + $0x1a8] sm:$0xff]
  %v396 = vld [vmem:[%s341 + $0x1b0] sm:$0xff]
  %v397 = vld [vmem:[%s341 + $0x1b8] sm:$0xff]
  %v398 = vld [vmem:[%s341 + $0x1c0] sm:$0xff]
  %v399 = vld [vmem:[%s341 + $0x1c8] sm:$0xff]
  %v400 = vld [vmem:[%s341 + $0x1d0] sm:$0xff]
  %v401 = vld [vmem:[%s341 + $0x1d8] sm:$0xff]
  %v402 = vld [vmem:[%s341 + $0x1e0] sm:$0xff]
  %v403 = vld [vmem:[%s341 + $0x1e8] sm:$0xff]
  %v404 = vld [vmem:[%s341 + $0x1f0] sm:$0xff]
  %v405 = vld [vmem:[%s341 + $0x1f8] sm:$0xff]
  %v406 = vld [vmem:[%s341 + $0x200] sm:$0xff]
  %v407 = vld [vmem:[%s341 + $0x208] sm:$0xff]
  %v408 = vld [vmem:[%s341 + $0x210] sm:$0xff]
  %v409 = vld [vmem:[%s341 + $0x218] sm:$0xff]
  %v410 = vld [vmem:[%s341 + $0x220] sm:$0xff]
  %v411 = vld [vmem:[%s341 + $0x228] sm:$0xff]
  %v412 = vld [vmem:[%s341 + $0x230] sm:$0xff]
  %v413 = vld [vmem:[%s341 + $0x238] sm:$0xff]
  %v414 = vld [vmem:[%s341 + $0x240] sm:$0xff]
  %v415 = vld [vmem:[%s341 + $0x248] sm:$0xff]
  %v416 = vld [vmem:[%s341 + $0x250] sm:$0xff]
  %v417 = vld [vmem:[%s341 + $0x258] sm:$0xff]
  %v418 = vld [vmem:[%s341 + $0x260] sm:$0xff]
  %v419 = vld [vmem:[%s341 + $0x268] sm:$0xff]
  %v420 = vld [vmem:[%s341 + $0x270] sm:$0xff]
  %v421 = vld [vmem:[%s341 + $0x278] sm:$0xff]
  %v422 = vld [vmem:[%s341 + $0x280] sm:$0xff]
  %v423 = vld [vmem:[%s341 + $0x288] sm:$0xff]
  %v424 = vld [vmem:[%s341 + $0x290] sm:$0xff]
  %v425 = vld [vmem:[%s341 + $0x298] sm:$0xff]
  %v426 = vld [vmem:[%s341 + $0x2a0] sm:$0xff]
  %v427 = vld [vmem:[%s341 + $0x2a8] sm:$0xff]
  %v428 = vld [vmem:[%s341 + $0x2b0] sm:$0xff]
  %v429 = vld [vmem:[%s341 + $0x2b8] sm:$0xff]
  %v430 = vsel %vm33, %v311, 0
  %v432 = vsel %vm33, %v317, 0
  %v434 = vsel %vm33, %v326, 0
  %v436 = vsel %vm33, %v332, 0
  %438 = vmatpush.msra.mxu0 %v372
  %439 = vmatpush.msra.mxu0 %v370
  %440 = vmatpush.msra.mxu0 %v368
  %441 = vmatpush.msra.mxu0 %v366
  %442 = vmatpush.msra.mxu0 %v364
  %443 = vmatpush.msra.mxu0 %v362
  %444 = vmatpush.msra.mxu0 %v360
  %445 = vmatpush.msra.mxu0 %v358
  %446 = vmatpush.msra.mxu0 %v356
  %447 = vmatpush.msra.mxu0 %v354
  %448 = vmatpush.msra.mxu0 %v352
  %449 = vmatpush.msra.mxu0 %v350
  %450 = vmatpush.msra.mxu0 %v348
  %451 = vmatpush.msra.mxu0 %v346
  %452 = vmatpush.msra.mxu0 %v344
  %453 = vmatpush.msra.mxu0 %v342
  %454 = vmatmul.f32.gmra.mxu0 %v305
  %v455 = vpop.f32.mrf.mxu0
  %v456 = vadd.f32 0.0, %v455
  %457 = vmatmul.f32.gmra.mxu0 %v313
  %v458 = vpop.f32.mrf.mxu0
  %v459 = vadd.f32 0.0, %v458
  %460 = vmatmul.f32.gmra.mxu0 %v320
  %v461 = vpop.f32.mrf.mxu0
  %v462 = vadd.f32 0.0, %v461
  %463 = vmatmul.f32.gmra.mxu0 %v328
  %v464 = vpop.f32.mrf.mxu0
  %v465 = vadd.f32 0.0, %v464
  %466 = vdwg.mxu0
  %467 = vmatpush.msra.mxu0 %v404
  %468 = vmatpush.msra.mxu0 %v402
  %469 = vmatpush.msra.mxu0 %v400
  %470 = vmatpush.msra.mxu0 %v398
  %471 = vmatpush.msra.mxu0 %v396
  %472 = vmatpush.msra.mxu0 %v394
  %473 = vmatpush.msra.mxu0 %v392
  %474 = vmatpush.msra.mxu0 %v390
  %475 = vmatpush.msra.mxu0 %v388
  %476 = vmatpush.msra.mxu0 %v386
  %477 = vmatpush.msra.mxu0 %v384
  %478 = vmatpush.msra.mxu0 %v382
  %479 = vmatpush.msra.mxu0 %v380
  %480 = vmatpush.msra.mxu0 %v378
  %481 = vmatpush.msra.mxu0 %v376
  %482 = vmatpush.msra.mxu0 %v374
  %483 = vmatmul.f32.gmra.mxu0 %v308
  %v484 = vpop.f32.mrf.mxu0
  %v485 = vadd.f32 %v456, %v484
  %486 = vmatmul.f32.gmra.mxu0 %v315
  %v487 = vpop.f32.mrf.mxu0
  %v488 = vadd.f32 %v459, %v487
  %489 = vmatmul.f32.gmra.mxu0 %v323
  %v490 = vpop.f32.mrf.mxu0
  %v491 = vadd.f32 %v462, %v490
  %492 = vmatmul.f32.gmra.mxu0 %v330
  %v493 = vpop.f32.mrf.mxu0
  %v494 = vadd.f32 %v465, %v493
  %495 = vdwg.mxu0
  %496 = vmatpush.msra.mxu0 0.0
  %497 = vmatpush.msra.mxu0 0.0
  %498 = vmatpush.msra.mxu0 0.0
  %499 = vmatpush.msra.mxu0 0.0
  %500 = vmatpush.msra.mxu0 %v428
  %501 = vmatpush.msra.mxu0 %v426
  %502 = vmatpush.msra.mxu0 %v424
  %503 = vmatpush.msra.mxu0 %v422
  %504 = vmatpush.msra.mxu0 %v420
  %505 = vmatpush.msra.mxu0 %v418
  %506 = vmatpush.msra.mxu0 %v416
  %507 = vmatpush.msra.mxu0 %v414
  %508 = vmatpush.msra.mxu0 %v412
  %509 = vmatpush.msra.mxu0 %v410
  %510 = vmatpush.msra.mxu0 %v408
  %511 = vmatpush.msra.mxu0 %v406
  %512 = vmatmul.f32.gmra.mxu0 %v430
  %v513 = vpop.f32.mrf.mxu0
  %v514 = vadd.f32 %v485, %v513
  %515 = vmatmul.f32.gmra.mxu0 %v432
  %v516 = vpop.f32.mrf.mxu0
  %v517 = vadd.f32 %v488, %v516
  %518 = vmatmul.f32.gmra.mxu0 %v434
  %v519 = vpop.f32.mrf.mxu0
  %v520 = vadd.f32 %v491, %v519
  %521 = vmatmul.f32.gmra.mxu0 %v436
  %v522 = vpop.f32.mrf.mxu0
  %v523 = vadd.f32 %v494, %v522
  %524 = vdwg.mxu0
  %525 = vmatpush.msra.mxu0 %v373
  %526 = vmatpush.msra.mxu0 %v371
  %527 = vmatpush.msra.mxu0 %v369
  %528 = vmatpush.msra.mxu0 %v367
  %529 = vmatpush.msra.mxu0 %v365
  %530 = vmatpush.msra.mxu0 %v363
  %531 = vmatpush.msra.mxu0 %v361
  %532 = vmatpush.msra.mxu0 %v359
  %533 = vmatpush.msra.mxu0 %v357
  %534 = vmatpush.msra.mxu0 %v355
  %535 = vmatpush.msra.mxu0 %v353
  %536 = vmatpush.msra.mxu0 %v351
  %537 = vmatpush.msra.mxu0 %v349
  %538 = vmatpush.msra.mxu0 %v347
  %539 = vmatpush.msra.mxu0 %v345
  %540 = vmatpush.msra.mxu0 %v343
  %541 = vmatmul.f32.gmra.mxu0 %v305
  %v542 = vpop.f32.mrf.mxu0
  %v543 = vadd.f32 0.0, %v542
  %544 = vmatmul.f32.gmra.mxu0 %v313
  %v545 = vpop.f32.mrf.mxu0
  %v546 = vadd.f32 0.0, %v545
  %547 = vmatmul.f32.gmra.mxu0 %v320
  %v548 = vpop.f32.mrf.mxu0
  %v549 = vadd.f32 0.0, %v548
  %550 = vmatmul.f32.gmra.mxu0 %v328
  %v551 = vpop.f32.mrf.mxu0
  %v552 = vadd.f32 0.0, %v551
  %553 = vdwg.mxu0
  %554 = vmatpush.msra.mxu0 %v405
  %555 = vmatpush.msra.mxu0 %v403
  %556 = vmatpush.msra.mxu0 %v401
  %557 = vmatpush.msra.mxu0 %v399
  %558 = vmatpush.msra.mxu0 %v397
  %559 = vmatpush.msra.mxu0 %v395
  %560 = vmatpush.msra.mxu0 %v393
  %561 = vmatpush.msra.mxu0 %v391
  %562 = vmatpush.msra.mxu0 %v389
  %563 = vmatpush.msra.mxu0 %v387
  %564 = vmatpush.msra.mxu0 %v385
  %565 = vmatpush.msra.mxu0 %v383
  %566 = vmatpush.msra.mxu0 %v381
  %567 = vmatpush.msra.mxu0 %v379
  %568 = vmatpush.msra.mxu0 %v377
  %569 = vmatpush.msra.mxu0 %v375
  %570 = vmatmul.f32.gmra.mxu0 %v308
  %v571 = vpop.f32.mrf.mxu0
  %v572 = vadd.f32 %v543, %v571
  %573 = vmatmul.f32.gmra.mxu0 %v315
  %v574 = vpop.f32.mrf.mxu0
  %v575 = vadd.f32 %v546, %v574
  %576 = vmatmul.f32.gmra.mxu0 %v323
  %v577 = vpop.f32.mrf.mxu0
  %v578 = vadd.f32 %v549, %v577
  %579 = vmatmul.f32.gmra.mxu0 %v330
  %v580 = vpop.f32.mrf.mxu0
  %v581 = vadd.f32 %v552, %v580
  %582 = vdwg.mxu0
  %583 = vmatpush.msra.mxu0 0.0
  %584 = vmatpush.msra.mxu0 0.0
  %585 = vmatpush.msra.mxu0 0.0
  %586 = vmatpush.msra.mxu0 0.0
  %587 = vmatpush.msra.mxu0 %v429
  %588 = vmatpush.msra.mxu0 %v427
  %589 = vmatpush.msra.mxu0 %v425
  %590 = vmatpush.msra.mxu0 %v423
  %591 = vmatpush.msra.mxu0 %v421
  %592 = vmatpush.msra.mxu0 %v419
  %593 = vmatpush.msra.mxu0 %v417
  %594 = vmatpush.msra.mxu0 %v415
  %595 = vmatpush.msra.mxu0 %v413
  %596 = vmatpush.msra.mxu0 %v411
  %597 = vmatpush.msra.mxu0 %v409
  %598 = vmatpush.msra.mxu0 %v407
  %599 = vmatmul.f32.gmra.mxu0 %v430
  %v600 = vpop.f32.mrf.mxu0
  %v601 = vadd.f32 %v572, %v600
  %602 = vmatmul.f32.gmra.mxu0 %v432
  %v603 = vpop.f32.mrf.mxu0
  %v604 = vadd.f32 %v575, %v603
  %605 = vmatmul.f32.gmra.mxu0 %v434
  %v606 = vpop.f32.mrf.mxu0
  %v607 = vadd.f32 %v578, %v606
  %608 = vmatmul.f32.gmra.mxu0 %v436
  %v609 = vpop.f32.mrf.mxu0
  %v610 = vadd.f32 %v581, %v609
  %611 = vdwg.mxu0
  %v613 = vsel %vm33, %v174, 0
  %v615 = vsel %vm33, %v177, 0
  %v618 = vsel %vm33, %v180, 0
  %v620 = vsel %vm33, %v183, 0
  %622 = vmatpush.msra.mxu0 %v214
  %623 = vmatpush.msra.mxu0 %v212
  %624 = vmatpush.msra.mxu0 %v210
  %625 = vmatpush.msra.mxu0 %v208
  %626 = vmatpush.msra.mxu0 %v206
  %627 = vmatpush.msra.mxu0 %v204
  %628 = vmatpush.msra.mxu0 %v202
  %629 = vmatpush.msra.mxu0 %v200
  %630 = vmatpush.msra.mxu0 %v198
  %631 = vmatpush.msra.mxu0 %v196
  %632 = vmatpush.msra.mxu0 %v194
  %633 = vmatpush.msra.mxu0 %v192
  %634 = vmatpush.msra.mxu0 %v190
  %635 = vmatpush.msra.mxu0 %v188
  %636 = vmatpush.msra.mxu0 %v186
  %637 = vmatpush.msra.mxu0 %v184
  %638 = vmatmul.f32.gmra.mxu0 %v172
  %v639 = vpop.f32.mrf.mxu0
  %v640 = vadd.f32 %v514, %v639
  %641 = vmatmul.f32.gmra.mxu0 %v175
  %v642 = vpop.f32.mrf.mxu0
  %v643 = vadd.f32 %v517, %v642
  %644 = vmatmul.f32.gmra.mxu0 %v178
  %v645 = vpop.f32.mrf.mxu0
  %v646 = vadd.f32 %v520, %v645
  %647 = vmatmul.f32.gmra.mxu0 %v181
  %v648 = vpop.f32.mrf.mxu0
  %v649 = vadd.f32 %v523, %v648
  %650 = vdwg.mxu0
  %651 = vmatpush.msra.mxu0 %v246
  %652 = vmatpush.msra.mxu0 %v244
  %653 = vmatpush.msra.mxu0 %v242
  %654 = vmatpush.msra.mxu0 %v240
  %655 = vmatpush.msra.mxu0 %v238
  %656 = vmatpush.msra.mxu0 %v236
  %657 = vmatpush.msra.mxu0 %v234
  %658 = vmatpush.msra.mxu0 %v232
  %659 = vmatpush.msra.mxu0 %v230
  %660 = vmatpush.msra.mxu0 %v228
  %661 = vmatpush.msra.mxu0 %v226
  %662 = vmatpush.msra.mxu0 %v224
  %663 = vmatpush.msra.mxu0 %v222
  %664 = vmatpush.msra.mxu0 %v220
  %665 = vmatpush.msra.mxu0 %v218
  %666 = vmatpush.msra.mxu0 %v216
  %667 = vmatmul.f32.gmra.mxu0 %v173
  %v668 = vpop.f32.mrf.mxu0
  %v669 = vadd.f32 %v640, %v668
  %670 = vmatmul.f32.gmra.mxu0 %v176
  %v671 = vpop.f32.mrf.mxu0
  %v672 = vadd.f32 %v643, %v671
  %673 = vmatmul.f32.gmra.mxu0 %v179
  %v674 = vpop.f32.mrf.mxu0
  %v675 = vadd.f32 %v646, %v674
  %676 = vmatmul.f32.gmra.mxu0 %v182
  %v677 = vpop.f32.mrf.mxu0
  %v678 = vadd.f32 %v649, %v677
  %679 = vdwg.mxu0
  %680 = vmatpush.msra.mxu0 0.0
  %681 = vmatpush.msra.mxu0 0.0
  %682 = vmatpush.msra.mxu0 0.0
  %683 = vmatpush.msra.mxu0 0.0
  %684 = vmatpush.msra.mxu0 %v270
  %685 = vmatpush.msra.mxu0 %v268
  %686 = vmatpush.msra.mxu0 %v266
  %687 = vmatpush.msra.mxu0 %v264
  %688 = vmatpush.msra.mxu0 %v262
  %689 = vmatpush.msra.mxu0 %v260
  %690 = vmatpush.msra.mxu0 %v258
  %691 = vmatpush.msra.mxu0 %v256
  %692 = vmatpush.msra.mxu0 %v254
  %693 = vmatpush.msra.mxu0 %v252
  %694 = vmatpush.msra.mxu0 %v250
  %695 = vmatpush.msra.mxu0 %v248
  %696 = vmatmul.f32.gmra.mxu0 %v613
  %v697 = vpop.f32.mrf.mxu0
  %v698 = vadd.f32 %v669, %v697
  %699 = vmatmul.f32.gmra.mxu0 %v615
  %v700 = vpop.f32.mrf.mxu0
  %v701 = vadd.f32 %v672, %v700
  %702 = vmatmul.f32.gmra.mxu0 %v618
  %v703 = vpop.f32.mrf.mxu0
  %v704 = vadd.f32 %v675, %v703
  %705 = vmatmul.f32.gmra.mxu0 %v620
  %v706 = vpop.f32.mrf.mxu0
  %v707 = vadd.f32 %v678, %v706
  %708 = vdwg.mxu0
  %709 = vmatpush.msra.mxu0 %v215
  %710 = vmatpush.msra.mxu0 %v213
  %711 = vmatpush.msra.mxu0 %v211
  %712 = vmatpush.msra.mxu0 %v209
  %713 = vmatpush.msra.mxu0 %v207
  %714 = vmatpush.msra.mxu0 %v205
  %715 = vmatpush.msra.mxu0 %v203
  %716 = vmatpush.msra.mxu0 %v201
  %717 = vmatpush.msra.mxu0 %v199
  %718 = vmatpush.msra.mxu0 %v197
  %719 = vmatpush.msra.mxu0 %v195
  %720 = vmatpush.msra.mxu0 %v193
  %721 = vmatpush.msra.mxu0 %v191
  %722 = vmatpush.msra.mxu0 %v189
  %723 = vmatpush.msra.mxu0 %v187
  %724 = vmatpush.msra.mxu0 %v185
  %725 = vmatmul.f32.gmra.mxu0 %v172
  %v726 = vpop.f32.mrf.mxu0
  %v727 = vadd.f32 %v601, %v726
  %728 = vmatmul.f32.gmra.mxu0 %v175
  %v729 = vpop.f32.mrf.mxu0
  %v730 = vadd.f32 %v604, %v729
  %731 = vmatmul.f32.gmra.mxu0 %v178
  %v732 = vpop.f32.mrf.mxu0
  %v733 = vadd.f32 %v607, %v732
  %734 = vmatmul.f32.gmra.mxu0 %v181
  %v735 = vpop.f32.mrf.mxu0
  %v736 = vadd.f32 %v610, %v735
  %737 = vdwg.mxu0
  %738 = vmatpush.msra.mxu0 %v247
  %739 = vmatpush.msra.mxu0 %v245
  %740 = vmatpush.msra.mxu0 %v243
  %741 = vmatpush.msra.mxu0 %v241
  %742 = vmatpush.msra.mxu0 %v239
  %743 = vmatpush.msra.mxu0 %v237
  %744 = vmatpush.msra.mxu0 %v235
  %745 = vmatpush.msra.mxu0 %v233
  %746 = vmatpush.msra.mxu0 %v231
  %747 = vmatpush.msra.mxu0 %v229
  %748 = vmatpush.msra.mxu0 %v227
  %749 = vmatpush.msra.mxu0 %v225
  %750 = vmatpush.msra.mxu0 %v223
  %751 = vmatpush.msra.mxu0 %v221
  %752 = vmatpush.msra.mxu0 %v219
  %753 = vmatpush.msra.mxu0 %v217
  %754 = vmatmul.f32.gmra.mxu0 %v173
  %v755 = vpop.f32.mrf.mxu0
  %v756 = vadd.f32 %v727, %v755
  %757 = vmatmul.f32.gmra.mxu0 %v176
  %v758 = vpop.f32.mrf.mxu0
  %v759 = vadd.f32 %v730, %v758
  %760 = vmatmul.f32.gmra.mxu0 %v179
  %v761 = vpop.f32.mrf.mxu0
  %v762 = vadd.f32 %v733, %v761
  %763 = vmatmul.f32.gmra.mxu0 %v182
  %v764 = vpop.f32.mrf.mxu0
  %v765 = vadd.f32 %v736, %v764
  %766 = vdwg.mxu0
  %767 = vmatpush.msra.mxu0 0.0
  %768 = vmatpush.msra.mxu0 0.0
  %769 = vmatpush.msra.mxu0 0.0
  %770 = vmatpush.msra.mxu0 0.0
  %771 = vmatpush.msra.mxu0 %v271
  %772 = vmatpush.msra.mxu0 %v269
  %773 = vmatpush.msra.mxu0 %v267
  %774 = vmatpush.msra.mxu0 %v265
  %775 = vmatpush.msra.mxu0 %v263
  %776 = vmatpush.msra.mxu0 %v261
  %777 = vmatpush.msra.mxu0 %v259
  %778 = vmatpush.msra.mxu0 %v257
  %779 = vmatpush.msra.mxu0 %v255
  %780 = vmatpush.msra.mxu0 %v253
  %781 = vmatpush.msra.mxu0 %v251
  %782 = vmatpush.msra.mxu0 %v249
  %783 = vmatmul.f32.gmra.mxu0 %v613
  %v784 = vpop.f32.mrf.mxu0
  %v785 = vadd.f32 %v756, %v784
  %786 = vmatmul.f32.gmra.mxu0 %v615
  %v787 = vpop.f32.mrf.mxu0
  %v788 = vadd.f32 %v759, %v787
  %789 = vmatmul.f32.gmra.mxu0 %v618
  %v790 = vpop.f32.mrf.mxu0
  %v791 = vadd.f32 %v762, %v790
  %792 = vmatmul.f32.gmra.mxu0 %v620
  %v793 = vpop.f32.mrf.mxu0
  %v794 = vadd.f32 %v765, %v793
  %795 = vdwg.mxu0
  %v796 = vld [vmem:[#allocation2] sm:$0xfc]
  %v797 = vld [vmem:[#allocation2 + $0x8] sm:$0xfc]
  %v798 = vld [vmem:[#allocation2 + $0x10] sm:$0xfc]
  %v799 = vld [vmem:[#allocation2 + $0x30] sm:$0x3]
  %v800 = vld [vmem:[#allocation2 + $0x38] sm:$0x3]
  %v801 = vld [vmem:[#allocation2 + $0x40] sm:$0x3]
  %v802 = vld [vmem:[#allocation2 + $0x48] sm:$0xfc]
  %v803 = vld [vmem:[#allocation2 + $0x50] sm:$0xfc]
  %v804 = vld [vmem:[#allocation2 + $0x58] sm:$0xfc]
  %v805 = vld [vmem:[#allocation2 + $0x78] sm:$0x3]
  %v806 = vld [vmem:[#allocation2 + $0x80] sm:$0x3]
  %v807 = vld [vmem:[#allocation2 + $0x88] sm:$0x3]
  %vm820 = vcmask 1045504
  %v821 = vrot.slane %v796, 2
  %v822 = vrot.slane %v175, 2
  %v823 = vsel %vm820, %v821, %v822
  %v824 = vrot.slane %v797, 2
  %v825 = vrot.slane %v176, 2
  %v826 = vsel %vm820, %v824, %v825
  %v827 = vrot.slane %v798, 2
  %v828 = vrot.slane %v177, 2
  %v829 = vsel %vm820, %v827, %v828
  %v830 = vrot.slane %v799, 2
  %v831 = vsel %vm820, %v822, %v830
  %v832 = vrot.slane %v800, 2
  %v833 = vsel %vm820, %v825, %v832
  %v834 = vrot.slane %v801, 2
  %v835 = vsel %vm820, %v828, %v834
  %v836 = vrot.slane %v802, 2
  %v837 = vrot.slane %v181, 2
  %v838 = vsel %vm820, %v836, %v837
  %v839 = vrot.slane %v803, 2
  %v840 = vrot.slane %v182, 2
  %v841 = vsel %vm820, %v839, %v840
  %v842 = vrot.slane %v804, 2
  %v843 = vrot.slane %v183, 2
  %v844 = vsel %vm820, %v842, %v843
  %v845 = vrot.slane %v805, 2
  %v846 = vsel %vm820, %v837, %v845
  %v847 = vrot.slane %v806, 2
  %v848 = vsel %vm820, %v840, %v847
  %v849 = vrot.slane %v807, 2
  %v850 = vsel %vm820, %v843, %v849
  %s859 = scalar_lea.vmem %s4, 1408
  %v860 = vld [vmem:[%s859] sm:$0xff]
  %v861 = vld [vmem:[%s859 + $0x8] sm:$0xff]
  %v862 = vld [vmem:[%s859 + $0x10] sm:$0xff]
  %v863 = vld [vmem:[%s859 + $0x18] sm:$0xff]
  %v864 = vld [vmem:[%s859 + $0x20] sm:$0xff]
  %v865 = vld [vmem:[%s859 + $0x28] sm:$0xff]
  %v866 = vld [vmem:[%s859 + $0x30] sm:$0xff]
  %v867 = vld [vmem:[%s859 + $0x38] sm:$0xff]
  %v868 = vld [vmem:[%s859 + $0x40] sm:$0xff]
  %v869 = vld [vmem:[%s859 + $0x48] sm:$0xff]
  %v870 = vld [vmem:[%s859 + $0x50] sm:$0xff]
  %v871 = vld [vmem:[%s859 + $0x58] sm:$0xff]
  %v872 = vld [vmem:[%s859 + $0x60] sm:$0xff]
  %v873 = vld [vmem:[%s859 + $0x68] sm:$0xff]
  %v874 = vld [vmem:[%s859 + $0x70] sm:$0xff]
  %v875 = vld [vmem:[%s859 + $0x78] sm:$0xff]
  %v876 = vld [vmem:[%s859 + $0x80] sm:$0xff]
  %v877 = vld [vmem:[%s859 + $0x88] sm:$0xff]
  %v878 = vld [vmem:[%s859 + $0x90] sm:$0xff]
  %v879 = vld [vmem:[%s859 + $0x98] sm:$0xff]
  %v880 = vld [vmem:[%s859 + $0xa0] sm:$0xff]
  %v881 = vld [vmem:[%s859 + $0xa8] sm:$0xff]
  %v882 = vld [vmem:[%s859 + $0xb0] sm:$0xff]
  %v883 = vld [vmem:[%s859 + $0xb8] sm:$0xff]
  %v884 = vld [vmem:[%s859 + $0xc0] sm:$0xff]
  %v885 = vld [vmem:[%s859 + $0xc8] sm:$0xff]
  %v886 = vld [vmem:[%s859 + $0xd0] sm:$0xff]
  %v887 = vld [vmem:[%s859 + $0xd8] sm:$0xff]
  %v888 = vld [vmem:[%s859 + $0xe0] sm:$0xff]
  %v889 = vld [vmem:[%s859 + $0xe8] sm:$0xff]
  %v890 = vld [vmem:[%s859 + $0xf0] sm:$0xff]
  %v891 = vld [vmem:[%s859 + $0xf8] sm:$0xff]
  %v892 = vld [vmem:[%s859 + $0x100] sm:$0xff]
  %v893 = vld [vmem:[%s859 + $0x108] sm:$0xff]
  %v894 = vld [vmem:[%s859 + $0x110] sm:$0xff]
  %v895 = vld [vmem:[%s859 + $0x118] sm:$0xff]
  %v896 = vld [vmem:[%s859 + $0x120] sm:$0xff]
  %v897 = vld [vmem:[%s859 + $0x128] sm:$0xff]
  %v898 = vld [vmem:[%s859 + $0x130] sm:$0xff]
  %v899 = vld [vmem:[%s859 + $0x138] sm:$0xff]
  %v900 = vld [vmem:[%s859 + $0x140] sm:$0xff]
  %v901 = vld [vmem:[%s859 + $0x148] sm:$0xff]
  %v902 = vld [vmem:[%s859 + $0x150] sm:$0xff]
  %v903 = vld [vmem:[%s859 + $0x158] sm:$0xff]
  %v904 = vld [vmem:[%s859 + $0x160] sm:$0xff]
  %v905 = vld [vmem:[%s859 + $0x168] sm:$0xff]
  %v906 = vld [vmem:[%s859 + $0x170] sm:$0xff]
  %v907 = vld [vmem:[%s859 + $0x178] sm:$0xff]
  %v908 = vld [vmem:[%s859 + $0x180] sm:$0xff]
  %v909 = vld [vmem:[%s859 + $0x188] sm:$0xff]
  %v910 = vld [vmem:[%s859 + $0x190] sm:$0xff]
  %v911 = vld [vmem:[%s859 + $0x198] sm:$0xff]
  %v912 = vld [vmem:[%s859 + $0x1a0] sm:$0xff]
  %v913 = vld [vmem:[%s859 + $0x1a8] sm:$0xff]
  %v914 = vld [vmem:[%s859 + $0x1b0] sm:$0xff]
  %v915 = vld [vmem:[%s859 + $0x1b8] sm:$0xff]
  %v916 = vld [vmem:[%s859 + $0x1c0] sm:$0xff]
  %v917 = vld [vmem:[%s859 + $0x1c8] sm:$0xff]
  %v918 = vld [vmem:[%s859 + $0x1d0] sm:$0xff]
  %v919 = vld [vmem:[%s859 + $0x1d8] sm:$0xff]
  %v920 = vld [vmem:[%s859 + $0x1e0] sm:$0xff]
  %v921 = vld [vmem:[%s859 + $0x1e8] sm:$0xff]
  %v922 = vld [vmem:[%s859 + $0x1f0] sm:$0xff]
  %v923 = vld [vmem:[%s859 + $0x1f8] sm:$0xff]
  %v924 = vld [vmem:[%s859 + $0x200] sm:$0xff]
  %v925 = vld [vmem:[%s859 + $0x208] sm:$0xff]
  %v926 = vld [vmem:[%s859 + $0x210] sm:$0xff]
  %v927 = vld [vmem:[%s859 + $0x218] sm:$0xff]
  %v928 = vld [vmem:[%s859 + $0x220] sm:$0xff]
  %v929 = vld [vmem:[%s859 + $0x228] sm:$0xff]
  %v930 = vld [vmem:[%s859 + $0x230] sm:$0xff]
  %v931 = vld [vmem:[%s859 + $0x238] sm:$0xff]
  %v932 = vld [vmem:[%s859 + $0x240] sm:$0xff]
  %v933 = vld [vmem:[%s859 + $0x248] sm:$0xff]
  %v934 = vld [vmem:[%s859 + $0x250] sm:$0xff]
  %v935 = vld [vmem:[%s859 + $0x258] sm:$0xff]
  %v936 = vld [vmem:[%s859 + $0x260] sm:$0xff]
  %v937 = vld [vmem:[%s859 + $0x268] sm:$0xff]
  %v938 = vld [vmem:[%s859 + $0x270] sm:$0xff]
  %v939 = vld [vmem:[%s859 + $0x278] sm:$0xff]
  %v940 = vld [vmem:[%s859 + $0x280] sm:$0xff]
  %v941 = vld [vmem:[%s859 + $0x288] sm:$0xff]
  %v942 = vld [vmem:[%s859 + $0x290] sm:$0xff]
  %v943 = vld [vmem:[%s859 + $0x298] sm:$0xff]
  %v944 = vld [vmem:[%s859 + $0x2a0] sm:$0xff]
  %v945 = vld [vmem:[%s859 + $0x2a8] sm:$0xff]
  %v946 = vld [vmem:[%s859 + $0x2b0] sm:$0xff]
  %v947 = vld [vmem:[%s859 + $0x2b8] sm:$0xff]
  %v948 = vsel %vm33, %v829, 0
  %v950 = vsel %vm33, %v835, 0
  %v952 = vsel %vm33, %v844, 0
  %v954 = vsel %vm33, %v850, 0
  %956 = vmatpush.msra.mxu0 %v890
  %957 = vmatpush.msra.mxu0 %v888
  %958 = vmatpush.msra.mxu0 %v886
  %959 = vmatpush.msra.mxu0 %v884
  %960 = vmatpush.msra.mxu0 %v882
  %961 = vmatpush.msra.mxu0 %v880
  %962 = vmatpush.msra.mxu0 %v878
  %963 = vmatpush.msra.mxu0 %v876
  %964 = vmatpush.msra.mxu0 %v874
  %965 = vmatpush.msra.mxu0 %v872
  %966 = vmatpush.msra.mxu0 %v870
  %967 = vmatpush.msra.mxu0 %v868
  %968 = vmatpush.msra.mxu0 %v866
  %969 = vmatpush.msra.mxu0 %v864
  %970 = vmatpush.msra.mxu0 %v862
  %971 = vmatpush.msra.mxu0 %v860
  %972 = vmatmul.f32.gmra.mxu0 %v823
  %v973 = vpop.f32.mrf.mxu0
  %v974 = vadd.f32 0.0, %v973
  %975 = vmatmul.f32.gmra.mxu0 %v831
  %v976 = vpop.f32.mrf.mxu0
  %v977 = vadd.f32 0.0, %v976
  %978 = vmatmul.f32.gmra.mxu0 %v838
  %v979 = vpop.f32.mrf.mxu0
  %v980 = vadd.f32 0.0, %v979
  %981 = vmatmul.f32.gmra.mxu0 %v846
  %v982 = vpop.f32.mrf.mxu0
  %v983 = vadd.f32 0.0, %v982
  %984 = vdwg.mxu0
  %985 = vmatpush.msra.mxu0 %v922
  %986 = vmatpush.msra.mxu0 %v920
  %987 = vmatpush.msra.mxu0 %v918
  %988 = vmatpush.msra.mxu0 %v916
  %989 = vmatpush.msra.mxu0 %v914
  %990 = vmatpush.msra.mxu0 %v912
  %991 = vmatpush.msra.mxu0 %v910
  %992 = vmatpush.msra.mxu0 %v908
  %993 = vmatpush.msra.mxu0 %v906
  %994 = vmatpush.msra.mxu0 %v904
  %995 = vmatpush.msra.mxu0 %v902
  %996 = vmatpush.msra.mxu0 %v900
  %997 = vmatpush.msra.mxu0 %v898
  %998 = vmatpush.msra.mxu0 %v896
  %999 = vmatpush.msra.mxu0 %v894
  %1000 = vmatpush.msra.mxu0 %v892
  %1001 = vmatmul.f32.gmra.mxu0 %v826
  %v1002 = vpop.f32.mrf.mxu0
  %v1003 = vadd.f32 %v974, %v1002
  %1004 = vmatmul.f32.gmra.mxu0 %v833
  %v1005 = vpop.f32.mrf.mxu0
  %v1006 = vadd.f32 %v977, %v1005
  %1007 = vmatmul.f32.gmra.mxu0 %v841
  %v1008 = vpop.f32.mrf.mxu0
  %v1009 = vadd.f32 %v980, %v1008
  %1010 = vmatmul.f32.gmra.mxu0 %v848
  %v1011 = vpop.f32.mrf.mxu0
  %v1012 = vadd.f32 %v983, %v1011
  %1013 = vdwg.mxu0
  %1014 = vmatpush.msra.mxu0 0.0
  %1015 = vmatpush.msra.mxu0 0.0
  %1016 = vmatpush.msra.mxu0 0.0
  %1017 = vmatpush.msra.mxu0 0.0
  %1018 = vmatpush.msra.mxu0 %v946
  %1019 = vmatpush.msra.mxu0 %v944
  %1020 = vmatpush.msra.mxu0 %v942
  %1021 = vmatpush.msra.mxu0 %v940
  %1022 = vmatpush.msra.mxu0 %v938
  %1023 = vmatpush.msra.mxu0 %v936
  %1024 = vmatpush.msra.mxu0 %v934
  %1025 = vmatpush.msra.mxu0 %v932
  %1026 = vmatpush.msra.mxu0 %v930
  %1027 = vmatpush.msra.mxu0 %v928
  %1028 = vmatpush.msra.mxu0 %v926
  %1029 = vmatpush.msra.mxu0 %v924
  %1030 = vmatmul.f32.gmra.mxu0 %v948
  %v1031 = vpop.f32.mrf.mxu0
  %v1032 = vadd.f32 %v1003, %v1031
  %1033 = vmatmul.f32.gmra.mxu0 %v950
  %v1034 = vpop.f32.mrf.mxu0
  %v1035 = vadd.f32 %v1006, %v1034
  %1036 = vmatmul.f32.gmra.mxu0 %v952
  %v1037 = vpop.f32.mrf.mxu0
  %v1038 = vadd.f32 %v1009, %v1037
  %1039 = vmatmul.f32.gmra.mxu0 %v954
  %v1040 = vpop.f32.mrf.mxu0
  %v1041 = vadd.f32 %v1012, %v1040
  %1042 = vdwg.mxu0
  %1043 = vmatpush.msra.mxu0 %v891
  %1044 = vmatpush.msra.mxu0 %v889
  %1045 = vmatpush.msra.mxu0 %v887
  %1046 = vmatpush.msra.mxu0 %v885
  %1047 = vmatpush.msra.mxu0 %v883
  %1048 = vmatpush.msra.mxu0 %v881
  %1049 = vmatpush.msra.mxu0 %v879
  %1050 = vmatpush.msra.mxu0 %v877
  %1051 = vmatpush.msra.mxu0 %v875
  %1052 = vmatpush.msra.mxu0 %v873
  %1053 = vmatpush.msra.mxu0 %v871
  %1054 = vmatpush.msra.mxu0 %v869
  %1055 = vmatpush.msra.mxu0 %v867
  %1056 = vmatpush.msra.mxu0 %v865
  %1057 = vmatpush.msra.mxu0 %v863
  %1058 = vmatpush.msra.mxu0 %v861
  %1059 = vmatmul.f32.gmra.mxu0 %v823
  %v1060 = vpop.f32.mrf.mxu0
  %v1061 = vadd.f32 0.0, %v1060
  %1062 = vmatmul.f32.gmra.mxu0 %v831
  %v1063 = vpop.f32.mrf.mxu0
  %v1064 = vadd.f32 0.0, %v1063
  %1065 = vmatmul.f32.gmra.mxu0 %v838
  %v1066 = vpop.f32.mrf.mxu0
  %v1067 = vadd.f32 0.0, %v1066
  %1068 = vmatmul.f32.gmra.mxu0 %v846
  %v1069 = vpop.f32.mrf.mxu0
  %v1070 = vadd.f32 0.0, %v1069
  %1071 = vdwg.mxu0
  %1072 = vmatpush.msra.mxu0 %v923
  %1073 = vmatpush.msra.mxu0 %v921
  %1074 = vmatpush.msra.mxu0 %v919
  %1075 = vmatpush.msra.mxu0 %v917
  %1076 = vmatpush.msra.mxu0 %v915
  %1077 = vmatpush.msra.mxu0 %v913
  %1078 = vmatpush.msra.mxu0 %v911
  %1079 = vmatpush.msra.mxu0 %v909
  %1080 = vmatpush.msra.mxu0 %v907
  %1081 = vmatpush.msra.mxu0 %v905
  %1082 = vmatpush.msra.mxu0 %v903
  %1083 = vmatpush.msra.mxu0 %v901
  %1084 = vmatpush.msra.mxu0 %v899
  %1085 = vmatpush.msra.mxu0 %v897
  %1086 = vmatpush.msra.mxu0 %v895
  %1087 = vmatpush.msra.mxu0 %v893
  %1088 = vmatmul.f32.gmra.mxu0 %v826
  %v1089 = vpop.f32.mrf.mxu0
  %v1090 = vadd.f32 %v1061, %v1089
  %1091 = vmatmul.f32.gmra.mxu0 %v833
  %v1092 = vpop.f32.mrf.mxu0
  %v1093 = vadd.f32 %v1064, %v1092
  %1094 = vmatmul.f32.gmra.mxu0 %v841
  %v1095 = vpop.f32.mrf.mxu0
  %v1096 = vadd.f32 %v1067, %v1095
  %1097 = vmatmul.f32.gmra.mxu0 %v848
  %v1098 = vpop.f32.mrf.mxu0
  %v1099 = vadd.f32 %v1070, %v1098
  %1100 = vdwg.mxu0
  %1101 = vmatpush.msra.mxu0 0.0
  %1102 = vmatpush.msra.mxu0 0.0
  %1103 = vmatpush.msra.mxu0 0.0
  %1104 = vmatpush.msra.mxu0 0.0
  %1105 = vmatpush.msra.mxu0 %v947
  %1106 = vmatpush.msra.mxu0 %v945
  %1107 = vmatpush.msra.mxu0 %v943
  %1108 = vmatpush.msra.mxu0 %v941
  %1109 = vmatpush.msra.mxu0 %v939
  %1110 = vmatpush.msra.mxu0 %v937
  %1111 = vmatpush.msra.mxu0 %v935
  %1112 = vmatpush.msra.mxu0 %v933
  %1113 = vmatpush.msra.mxu0 %v931
  %1114 = vmatpush.msra.mxu0 %v929
  %1115 = vmatpush.msra.mxu0 %v927
  %1116 = vmatpush.msra.mxu0 %v925
  %1117 = vmatmul.f32.gmra.mxu0 %v948
  %v1118 = vpop.f32.mrf.mxu0
  %v1119 = vadd.f32 %v1090, %v1118
  %1120 = vmatmul.f32.gmra.mxu0 %v950
  %v1121 = vpop.f32.mrf.mxu0
  %v1122 = vadd.f32 %v1093, %v1121
  %1123 = vmatmul.f32.gmra.mxu0 %v952
  %v1124 = vpop.f32.mrf.mxu0
  %v1125 = vadd.f32 %v1096, %v1124
  %1126 = vmatmul.f32.gmra.mxu0 %v954
  %v1127 = vpop.f32.mrf.mxu0
  %v1128 = vadd.f32 %v1099, %v1127
  %1129 = vdwg.mxu0
  %v1130 = vadd.f32 %v698, %v1032
  %v1131 = vadd.f32 %v785, %v1119
  %v1132 = vadd.f32 %v701, %v1035
  %v1133 = vadd.f32 %v788, %v1122
  %v1134 = vadd.f32 %v704, %v1038
  %v1135 = vadd.f32 %v791, %v1125
  %v1136 = vadd.f32 %v707, %v1041
  %v1137 = vadd.f32 %v794, %v1128
  %v1138 = vld [vmem:[#allocation2] sm:$0xf8]
  %v1139 = vld [vmem:[#allocation2 + $0x8] sm:$0xf8]
  %v1140 = vld [vmem:[#allocation2 + $0x10] sm:$0xf8]
  %v1141 = vld [vmem:[#allocation2 + $0x30] sm:$0x7]
  %v1142 = vld [vmem:[#allocation2 + $0x38] sm:$0x7]
  %v1143 = vld [vmem:[#allocation2 + $0x40] sm:$0x7]
  %v1144 = vld [vmem:[#allocation2 + $0x48] sm:$0xf8]
  %v1145 = vld [vmem:[#allocation2 + $0x50] sm:$0xf8]
  %v1146 = vld [vmem:[#allocation2 + $0x58] sm:$0xf8]
  %v1147 = vld [vmem:[#allocation2 + $0x78] sm:$0x7]
  %v1148 = vld [vmem:[#allocation2 + $0x80] sm:$0x7]
  %v1149 = vld [vmem:[#allocation2 + $0x88] sm:$0x7]
  %vm1162 = vcmask 1044480
  %v1163 = vrot.slane %v1138, 3
  %v1164 = vrot.slane %v175, 3
  %v1165 = vsel %vm1162, %v1163, %v1164
  %v1166 = vrot.slane %v1139, 3
  %v1167 = vrot.slane %v176, 3
  %v1168 = vsel %vm1162, %v1166, %v1167
  %v1169 = vrot.slane %v1140, 3
  %v1170 = vrot.slane %v177, 3
  %v1171 = vsel %vm1162, %v1169, %v1170
  %v1172 = vrot.slane %v1141, 3
  %v1173 = vsel %vm1162, %v1164, %v1172
  %v1174 = vrot.slane %v1142, 3
  %v1175 = vsel %vm1162, %v1167, %v1174
  %v1176 = vrot.slane %v1143, 3
  %v1177 = vsel %vm1162, %v1170, %v1176
  %v1178 = vrot.slane %v1144, 3
  %v1179 = vrot.slane %v181, 3
  %v1180 = vsel %vm1162, %v1178, %v1179
  %v1181 = vrot.slane %v1145, 3
  %v1182 = vrot.slane %v182, 3
  %v1183 = vsel %vm1162, %v1181, %v1182
  %v1184 = vrot.slane %v1146, 3
  %v1185 = vrot.slane %v183, 3
  %v1186 = vsel %vm1162, %v1184, %v1185
  %v1187 = vrot.slane %v1147, 3
  %v1188 = vsel %vm1162, %v1179, %v1187
  %v1189 = vrot.slane %v1148, 3
  %v1190 = vsel %vm1162, %v1182, %v1189
  %v1191 = vrot.slane %v1149, 3
  %v1192 = vsel %vm1162, %v1185, %v1191
  %s1201 = scalar_lea.vmem %s4, 2112
  %v1202 = vld [vmem:[%s1201] sm:$0xff]
  %v1203 = vld [vmem:[%s1201 + $0x8] sm:$0xff]
  %v1204 = vld [vmem:[%s1201 + $0x10] sm:$0xff]
  %v1205 = vld [vmem:[%s1201 + $0x18] sm:$0xff]
  %v1206 = vld [vmem:[%s1201 + $0x20] sm:$0xff]
  %v1207 = vld [vmem:[%s1201 + $0x28] sm:$0xff]
  %v1208 = vld [vmem:[%s1201 + $0x30] sm:$0xff]
  %v1209 = vld [vmem:[%s1201 + $0x38] sm:$0xff]
  %v1210 = vld [vmem:[%s1201 + $0x40] sm:$0xff]
  %v1211 = vld [vmem:[%s1201 + $0x48] sm:$0xff]
  %v1212 = vld [vmem:[%s1201 + $0x50] sm:$0xff]
  %v1213 = vld [vmem:[%s1201 + $0x58] sm:$0xff]
  %v1214 = vld [vmem:[%s1201 + $0x60] sm:$0xff]
  %v1215 = vld [vmem:[%s1201 + $0x68] sm:$0xff]
  %v1216 = vld [vmem:[%s1201 + $0x70] sm:$0xff]
  %v1217 = vld [vmem:[%s1201 + $0x78] sm:$0xff]
  %v1218 = vld [vmem:[%s1201 + $0x80] sm:$0xff]
  %v1219 = vld [vmem:[%s1201 + $0x88] sm:$0xff]
  %v1220 = vld [vmem:[%s1201 + $0x90] sm:$0xff]
  %v1221 = vld [vmem:[%s1201 + $0x98] sm:$0xff]
  %v1222 = vld [vmem:[%s1201 + $0xa0] sm:$0xff]
  %v1223 = vld [vmem:[%s1201 + $0xa8] sm:$0xff]
  %v1224 = vld [vmem:[%s1201 + $0xb0] sm:$0xff]
  %v1225 = vld [vmem:[%s1201 + $0xb8] sm:$0xff]
  %v1226 = vld [vmem:[%s1201 + $0xc0] sm:$0xff]
  %v1227 = vld [vmem:[%s1201 + $0xc8] sm:$0xff]
  %v1228 = vld [vmem:[%s1201 + $0xd0] sm:$0xff]
  %v1229 = vld [vmem:[%s1201 + $0xd8] sm:$0xff]
  %v1230 = vld [vmem:[%s1201 + $0xe0] sm:$0xff]
  %v1231 = vld [vmem:[%s1201 + $0xe8] sm:$0xff]
  %v1232 = vld [vmem:[%s1201 + $0xf0] sm:$0xff]
  %v1233 = vld [vmem:[%s1201 + $0xf8] sm:$0xff]
  %v1234 = vld [vmem:[%s1201 + $0x100] sm:$0xff]
  %v1235 = vld [vmem:[%s1201 + $0x108] sm:$0xff]
  %v1236 = vld [vmem:[%s1201 + $0x110] sm:$0xff]
  %v1237 = vld [vmem:[%s1201 + $0x118] sm:$0xff]
  %v1238 = vld [vmem:[%s1201 + $0x120] sm:$0xff]
  %v1239 = vld [vmem:[%s1201 + $0x128] sm:$0xff]
  %v1240 = vld [vmem:[%s1201 + $0x130] sm:$0xff]
  %v1241 = vld [vmem:[%s1201 + $0x138] sm:$0xff]
  %v1242 = vld [vmem:[%s1201 + $0x140] sm:$0xff]
  %v1243 = vld [vmem:[%s1201 + $0x148] sm:$0xff]
  %v1244 = vld [vmem:[%s1201 + $0x150] sm:$0xff]
  %v1245 = vld [vmem:[%s1201 + $0x158] sm:$0xff]
  %v1246 = vld [vmem:[%s1201 + $0x160] sm:$0xff]
  %v1247 = vld [vmem:[%s1201 + $0x168] sm:$0xff]
  %v1248 = vld [vmem:[%s1201 + $0x170] sm:$0xff]
  %v1249 = vld [vmem:[%s1201 + $0x178] sm:$0xff]
  %v1250 = vld [vmem:[%s1201 + $0x180] sm:$0xff]
  %v1251 = vld [vmem:[%s1201 + $0x188] sm:$0xff]
  %v1252 = vld [vmem:[%s1201 + $0x190] sm:$0xff]
  %v1253 = vld [vmem:[%s1201 + $0x198] sm:$0xff]
  %v1254 = vld [vmem:[%s1201 + $0x1a0] sm:$0xff]
  %v1255 = vld [vmem:[%s1201 + $0x1a8] sm:$0xff]
  %v1256 = vld [vmem:[%s1201 + $0x1b0] sm:$0xff]
  %v1257 = vld [vmem:[%s1201 + $0x1b8] sm:$0xff]
  %v1258 = vld [vmem:[%s1201 + $0x1c0] sm:$0xff]
  %v1259 = vld [vmem:[%s1201 + $0x1c8] sm:$0xff]
  %v1260 = vld [vmem:[%s1201 + $0x1d0] sm:$0xff]
  %v1261 = vld [vmem:[%s1201 + $0x1d8] sm:$0xff]
  %v1262 = vld [vmem:[%s1201 + $0x1e0] sm:$0xff]
  %v1263 = vld [vmem:[%s1201 + $0x1e8] sm:$0xff]
  %v1264 = vld [vmem:[%s1201 + $0x1f0] sm:$0xff]
  %v1265 = vld [vmem:[%s1201 + $0x1f8] sm:$0xff]
  %v1266 = vld [vmem:[%s1201 + $0x200] sm:$0xff]
  %v1267 = vld [vmem:[%s1201 + $0x208] sm:$0xff]
  %v1268 = vld [vmem:[%s1201 + $0x210] sm:$0xff]
  %v1269 = vld [vmem:[%s1201 + $0x218] sm:$0xff]
  %v1270 = vld [vmem:[%s1201 + $0x220] sm:$0xff]
  %v1271 = vld [vmem:[%s1201 + $0x228] sm:$0xff]
  %v1272 = vld [vmem:[%s1201 + $0x230] sm:$0xff]
  %v1273 = vld [vmem:[%s1201 + $0x238] sm:$0xff]
  %v1274 = vld [vmem:[%s1201 + $0x240] sm:$0xff]
  %v1275 = vld [vmem:[%s1201 + $0x248] sm:$0xff]
  %v1276 = vld [vmem:[%s1201 + $0x250] sm:$0xff]
  %v1277 = vld [vmem:[%s1201 + $0x258] sm:$0xff]
  %v1278 = vld [vmem:[%s1201 + $0x260] sm:$0xff]
  %v1279 = vld [vmem:[%s1201 + $0x268] sm:$0xff]
  %v1280 = vld [vmem:[%s1201 + $0x270] sm:$0xff]
  %v1281 = vld [vmem:[%s1201 + $0x278] sm:$0xff]
  %v1282 = vld [vmem:[%s1201 + $0x280] sm:$0xff]
  %v1283 = vld [vmem:[%s1201 + $0x288] sm:$0xff]
  %v1284 = vld [vmem:[%s1201 + $0x290] sm:$0xff]
  %v1285 = vld [vmem:[%s1201 + $0x298] sm:$0xff]
  %v1286 = vld [vmem:[%s1201 + $0x2a0] sm:$0xff]
  %v1287 = vld [vmem:[%s1201 + $0x2a8] sm:$0xff]
  %v1288 = vld [vmem:[%s1201 + $0x2b0] sm:$0xff]
  %v1289 = vld [vmem:[%s1201 + $0x2b8] sm:$0xff]
  %v1290 = vsel %vm33, %v1171, 0
  %v1292 = vsel %vm33, %v1177, 0
  %v1294 = vsel %vm33, %v1186, 0
  %v1296 = vsel %vm33, %v1192, 0
  %1298 = vmatpush.msra.mxu0 %v1232
  %1299 = vmatpush.msra.mxu0 %v1230
  %1300 = vmatpush.msra.mxu0 %v1228
  %1301 = vmatpush.msra.mxu0 %v1226
  %1302 = vmatpush.msra.mxu0 %v1224
  %1303 = vmatpush.msra.mxu0 %v1222
  %1304 = vmatpush.msra.mxu0 %v1220
  %1305 = vmatpush.msra.mxu0 %v1218
  %1306 = vmatpush.msra.mxu0 %v1216
  %1307 = vmatpush.msra.mxu0 %v1214
  %1308 = vmatpush.msra.mxu0 %v1212
  %1309 = vmatpush.msra.mxu0 %v1210
  %1310 = vmatpush.msra.mxu0 %v1208
  %1311 = vmatpush.msra.mxu0 %v1206
  %1312 = vmatpush.msra.mxu0 %v1204
  %1313 = vmatpush.msra.mxu0 %v1202
  %1314 = vmatmul.f32.gmra.mxu0 %v1165
  %v1315 = vpop.f32.mrf.mxu0
  %v1316 = vadd.f32 0.0, %v1315
  %1317 = vmatmul.f32.gmra.mxu0 %v1173
  %v1318 = vpop.f32.mrf.mxu0
  %v1319 = vadd.f32 0.0, %v1318
  %1320 = vmatmul.f32.gmra.mxu0 %v1180
  %v1321 = vpop.f32.mrf.mxu0
  %v1322 = vadd.f32 0.0, %v1321
  %1323 = vmatmul.f32.gmra.mxu0 %v1188
  %v1324 = vpop.f32.mrf.mxu0
  %v1325 = vadd.f32 0.0, %v1324
  %1326 = vdwg.mxu0
  %1327 = vmatpush.msra.mxu0 %v1264
  %1328 = vmatpush.msra.mxu0 %v1262
  %1329 = vmatpush.msra.mxu0 %v1260
  %1330 = vmatpush.msra.mxu0 %v1258
  %1331 = vmatpush.msra.mxu0 %v1256
  %1332 = vmatpush.msra.mxu0 %v1254
  %1333 = vmatpush.msra.mxu0 %v1252
  %1334 = vmatpush.msra.mxu0 %v1250
  %1335 = vmatpush.msra.mxu0 %v1248
  %1336 = vmatpush.msra.mxu0 %v1246
  %1337 = vmatpush.msra.mxu0 %v1244
  %1338 = vmatpush.msra.mxu0 %v1242
  %1339 = vmatpush.msra.mxu0 %v1240
  %1340 = vmatpush.msra.mxu0 %v1238
  %1341 = vmatpush.msra.mxu0 %v1236
  %1342 = vmatpush.msra.mxu0 %v1234
  %1343 = vmatmul.f32.gmra.mxu0 %v1168
  %v1344 = vpop.f32.mrf.mxu0
  %v1345 = vadd.f32 %v1316, %v1344
  %1346 = vmatmul.f32.gmra.mxu0 %v1175
  %v1347 = vpop.f32.mrf.mxu0
  %v1348 = vadd.f32 %v1319, %v1347
  %1349 = vmatmul.f32.gmra.mxu0 %v1183
  %v1350 = vpop.f32.mrf.mxu0
  %v1351 = vadd.f32 %v1322, %v1350
  %1352 = vmatmul.f32.gmra.mxu0 %v1190
  %v1353 = vpop.f32.mrf.mxu0
  %v1354 = vadd.f32 %v1325, %v1353
  %1355 = vdwg.mxu0
  %1356 = vmatpush.msra.mxu0 0.0
  %1357 = vmatpush.msra.mxu0 0.0
  %1358 = vmatpush.msra.mxu0 0.0
  %1359 = vmatpush.msra.mxu0 0.0
  %1360 = vmatpush.msra.mxu0 %v1288
  %1361 = vmatpush.msra.mxu0 %v1286
  %1362 = vmatpush.msra.mxu0 %v1284
  %1363 = vmatpush.msra.mxu0 %v1282
  %1364 = vmatpush.msra.mxu0 %v1280
  %1365 = vmatpush.msra.mxu0 %v1278
  %1366 = vmatpush.msra.mxu0 %v1276
  %1367 = vmatpush.msra.mxu0 %v1274
  %1368 = vmatpush.msra.mxu0 %v1272
  %1369 = vmatpush.msra.mxu0 %v1270
  %1370 = vmatpush.msra.mxu0 %v1268
  %1371 = vmatpush.msra.mxu0 %v1266
  %1372 = vmatmul.f32.gmra.mxu0 %v1290
  %v1373 = vpop.f32.mrf.mxu0
  %v1374 = vadd.f32 %v1345, %v1373
  %1375 = vmatmul.f32.gmra.mxu0 %v1292
  %v1376 = vpop.f32.mrf.mxu0
  %v1377 = vadd.f32 %v1348, %v1376
  %1378 = vmatmul.f32.gmra.mxu0 %v1294
  %v1379 = vpop.f32.mrf.mxu0
  %v1380 = vadd.f32 %v1351, %v1379
  %1381 = vmatmul.f32.gmra.mxu0 %v1296
  %v1382 = vpop.f32.mrf.mxu0
  %v1383 = vadd.f32 %v1354, %v1382
  %1384 = vdwg.mxu0
  %1385 = vmatpush.msra.mxu0 %v1233
  %1386 = vmatpush.msra.mxu0 %v1231
  %1387 = vmatpush.msra.mxu0 %v1229
  %1388 = vmatpush.msra.mxu0 %v1227
  %1389 = vmatpush.msra.mxu0 %v1225
  %1390 = vmatpush.msra.mxu0 %v1223
  %1391 = vmatpush.msra.mxu0 %v1221
  %1392 = vmatpush.msra.mxu0 %v1219
  %1393 = vmatpush.msra.mxu0 %v1217
  %1394 = vmatpush.msra.mxu0 %v1215
  %1395 = vmatpush.msra.mxu0 %v1213
  %1396 = vmatpush.msra.mxu0 %v1211
  %1397 = vmatpush.msra.mxu0 %v1209
  %1398 = vmatpush.msra.mxu0 %v1207
  %1399 = vmatpush.msra.mxu0 %v1205
  %1400 = vmatpush.msra.mxu0 %v1203
  %1401 = vmatmul.f32.gmra.mxu0 %v1165
  %v1402 = vpop.f32.mrf.mxu0
  %v1403 = vadd.f32 0.0, %v1402
  %1404 = vmatmul.f32.gmra.mxu0 %v1173
  %v1405 = vpop.f32.mrf.mxu0
  %v1406 = vadd.f32 0.0, %v1405
  %1407 = vmatmul.f32.gmra.mxu0 %v1180
  %v1408 = vpop.f32.mrf.mxu0
  %v1409 = vadd.f32 0.0, %v1408
  %1410 = vmatmul.f32.gmra.mxu0 %v1188
  %v1411 = vpop.f32.mrf.mxu0
  %v1412 = vadd.f32 0.0, %v1411
  %1413 = vdwg.mxu0
  %1414 = vmatpush.msra.mxu0 %v1265
  %1415 = vmatpush.msra.mxu0 %v1263
  %1416 = vmatpush.msra.mxu0 %v1261
  %1417 = vmatpush.msra.mxu0 %v1259
  %1418 = vmatpush.msra.mxu0 %v1257
  %1419 = vmatpush.msra.mxu0 %v1255
  %1420 = vmatpush.msra.mxu0 %v1253
  %1421 = vmatpush.msra.mxu0 %v1251
  %1422 = vmatpush.msra.mxu0 %v1249
  %1423 = vmatpush.msra.mxu0 %v1247
  %1424 = vmatpush.msra.mxu0 %v1245
  %1425 = vmatpush.msra.mxu0 %v1243
  %1426 = vmatpush.msra.mxu0 %v1241
  %1427 = vmatpush.msra.mxu0 %v1239
  %1428 = vmatpush.msra.mxu0 %v1237
  %1429 = vmatpush.msra.mxu0 %v1235
  %1430 = vmatmul.f32.gmra.mxu0 %v1168
  %v1431 = vpop.f32.mrf.mxu0
  %v1432 = vadd.f32 %v1403, %v1431
  %1433 = vmatmul.f32.gmra.mxu0 %v1175
  %v1434 = vpop.f32.mrf.mxu0
  %v1435 = vadd.f32 %v1406, %v1434
  %1436 = vmatmul.f32.gmra.mxu0 %v1183
  %v1437 = vpop.f32.mrf.mxu0
  %v1438 = vadd.f32 %v1409, %v1437
  %1439 = vmatmul.f32.gmra.mxu0 %v1190
  %v1440 = vpop.f32.mrf.mxu0
  %v1441 = vadd.f32 %v1412, %v1440
  %1442 = vdwg.mxu0
  %1443 = vmatpush.msra.mxu0 0.0
  %1444 = vmatpush.msra.mxu0 0.0
  %1445 = vmatpush.msra.mxu0 0.0
  %1446 = vmatpush.msra.mxu0 0.0
  %1447 = vmatpush.msra.mxu0 %v1289
  %1448 = vmatpush.msra.mxu0 %v1287
  %1449 = vmatpush.msra.mxu0 %v1285
  %1450 = vmatpush.msra.mxu0 %v1283
  %1451 = vmatpush.msra.mxu0 %v1281
  %1452 = vmatpush.msra.mxu0 %v1279
  %1453 = vmatpush.msra.mxu0 %v1277
  %1454 = vmatpush.msra.mxu0 %v1275
  %1455 = vmatpush.msra.mxu0 %v1273
  %1456 = vmatpush.msra.mxu0 %v1271
  %1457 = vmatpush.msra.mxu0 %v1269
  %1458 = vmatpush.msra.mxu0 %v1267
  %1459 = vmatmul.f32.gmra.mxu0 %v1290
  %v1460 = vpop.f32.mrf.mxu0
  %v1461 = vadd.f32 %v1432, %v1460
  %1462 = vmatmul.f32.gmra.mxu0 %v1292
  %v1463 = vpop.f32.mrf.mxu0
  %v1464 = vadd.f32 %v1435, %v1463
  %1465 = vmatmul.f32.gmra.mxu0 %v1294
  %v1466 = vpop.f32.mrf.mxu0
  %v1467 = vadd.f32 %v1438, %v1466
  %1468 = vmatmul.f32.gmra.mxu0 %v1296
  %v1469 = vpop.f32.mrf.mxu0
  %v1470 = vadd.f32 %v1441, %v1469
  %1471 = vdwg.mxu0
  %v1472 = vadd.f32 %v1130, %v1374
  %v1473 = vadd.f32 %v1131, %v1461
  %v1474 = vadd.f32 %v1132, %v1377
  %v1475 = vadd.f32 %v1133, %v1464
  %v1476 = vadd.f32 %v1134, %v1380
  %v1477 = vadd.f32 %v1135, %v1467
  %v1478 = vadd.f32 %v1136, %v1383
  %v1479 = vadd.f32 %v1137, %v1470
  %v1480 = vld [vmem:[#allocation2] sm:$0xf0]
  %v1481 = vld [vmem:[#allocation2 + $0x8] sm:$0xf0]
  %v1482 = vld [vmem:[#allocation2 + $0x10] sm:$0xf0]
  %v1483 = vld [vmem:[#allocation2 + $0x30] sm:$0xf]
  %v1484 = vld [vmem:[#allocation2 + $0x38] sm:$0xf]
  %v1485 = vld [vmem:[#allocation2 + $0x40] sm:$0xf]
  %v1486 = vld [vmem:[#allocation2 + $0x48] sm:$0xf0]
  %v1487 = vld [vmem:[#allocation2 + $0x50] sm:$0xf0]
  %v1488 = vld [vmem:[#allocation2 + $0x58] sm:$0xf0]
  %v1489 = vld [vmem:[#allocation2 + $0x78] sm:$0xf]
  %v1490 = vld [vmem:[#allocation2 + $0x80] sm:$0xf]
  %v1491 = vld [vmem:[#allocation2 + $0x88] sm:$0xf]
  %vm1504 = vcmask 1043456
  %v1505 = vrot.slane %v1480, 4
  %v1506 = vrot.slane %v175, 4
  %v1507 = vsel %vm1504, %v1505, %v1506
  %v1508 = vrot.slane %v1481, 4
  %v1509 = vrot.slane %v176, 4
  %v1510 = vsel %vm1504, %v1508, %v1509
  %v1511 = vrot.slane %v1482, 4
  %v1512 = vrot.slane %v177, 4
  %v1513 = vsel %vm1504, %v1511, %v1512
  %v1514 = vrot.slane %v1483, 4
  %v1515 = vsel %vm1504, %v1506, %v1514
  %v1516 = vrot.slane %v1484, 4
  %v1517 = vsel %vm1504, %v1509, %v1516
  %v1518 = vrot.slane %v1485, 4
  %v1519 = vsel %vm1504, %v1512, %v1518
  %v1520 = vrot.slane %v1486, 4
  %v1521 = vrot.slane %v181, 4
  %v1522 = vsel %vm1504, %v1520, %v1521
  %v1523 = vrot.slane %v1487, 4
  %v1524 = vrot.slane %v182, 4
  %v1525 = vsel %vm1504, %v1523, %v1524
  %v1526 = vrot.slane %v1488, 4
  %v1527 = vrot.slane %v183, 4
  %v1528 = vsel %vm1504, %v1526, %v1527
  %v1529 = vrot.slane %v1489, 4
  %v1530 = vsel %vm1504, %v1521, %v1529
  %v1531 = vrot.slane %v1490, 4
  %v1532 = vsel %vm1504, %v1524, %v1531
  %v1533 = vrot.slane %v1491, 4
  %v1534 = vsel %vm1504, %v1527, %v1533
  %s1543 = scalar_lea.vmem %s4, 2816
  %v1544 = vld [vmem:[%s1543] sm:$0xff]
  %v1545 = vld [vmem:[%s1543 + $0x8] sm:$0xff]
  %v1546 = vld [vmem:[%s1543 + $0x10] sm:$0xff]
  %v1547 = vld [vmem:[%s1543 + $0x18] sm:$0xff]
  %v1548 = vld [vmem:[%s1543 + $0x20] sm:$0xff]
  %v1549 = vld [vmem:[%s1543 + $0x28] sm:$0xff]
  %v1550 = vld [vmem:[%s1543 + $0x30] sm:$0xff]
  %v1551 = vld [vmem:[%s1543 + $0x38] sm:$0xff]
  %v1552 = vld [vmem:[%s1543 + $0x40] sm:$0xff]
  %v1553 = vld [vmem:[%s1543 + $0x48] sm:$0xff]
  %v1554 = vld [vmem:[%s1543 + $0x50] sm:$0xff]
  %v1555 = vld [vmem:[%s1543 + $0x58] sm:$0xff]
  %v1556 = vld [vmem:[%s1543 + $0x60] sm:$0xff]
  %v1557 = vld [vmem:[%s1543 + $0x68] sm:$0xff]
  %v1558 = vld [vmem:[%s1543 + $0x70] sm:$0xff]
  %v1559 = vld [vmem:[%s1543 + $0x78] sm:$0xff]
  %v1560 = vld [vmem:[%s1543 + $0x80] sm:$0xff]
  %v1561 = vld [vmem:[%s1543 + $0x88] sm:$0xff]
  %v1562 = vld [vmem:[%s1543 + $0x90] sm:$0xff]
  %v1563 = vld [vmem:[%s1543 + $0x98] sm:$0xff]
  %v1564 = vld [vmem:[%s1543 + $0xa0] sm:$0xff]
  %v1565 = vld [vmem:[%s1543 + $0xa8] sm:$0xff]
  %v1566 = vld [vmem:[%s1543 + $0xb0] sm:$0xff]
  %v1567 = vld [vmem:[%s1543 + $0xb8] sm:$0xff]
  %v1568 = vld [vmem:[%s1543 + $0xc0] sm:$0xff]
  %v1569 = vld [vmem:[%s1543 + $0xc8] sm:$0xff]
  %v1570 = vld [vmem:[%s1543 + $0xd0] sm:$0xff]
  %v1571 = vld [vmem:[%s1543 + $0xd8] sm:$0xff]
  %v1572 = vld [vmem:[%s1543 + $0xe0] sm:$0xff]
  %v1573 = vld [vmem:[%s1543 + $0xe8] sm:$0xff]
  %v1574 = vld [vmem:[%s1543 + $0xf0] sm:$0xff]
  %v1575 = vld [vmem:[%s1543 + $0xf8] sm:$0xff]
  %v1576 = vld [vmem:[%s1543 + $0x100] sm:$0xff]
  %v1577 = vld [vmem:[%s1543 + $0x108] sm:$0xff]
  %v1578 = vld [vmem:[%s1543 + $0x110] sm:$0xff]
  %v1579 = vld [vmem:[%s1543 + $0x118] sm:$0xff]
  %v1580 = vld [vmem:[%s1543 + $0x120] sm:$0xff]
  %v1581 = vld [vmem:[%s1543 + $0x128] sm:$0xff]
  %v1582 = vld [vmem:[%s1543 + $0x130] sm:$0xff]
  %v1583 = vld [vmem:[%s1543 + $0x138] sm:$0xff]
  %v1584 = vld [vmem:[%s1543 + $0x140] sm:$0xff]
  %v1585 = vld [vmem:[%s1543 + $0x148] sm:$0xff]
  %v1586 = vld [vmem:[%s1543 + $0x150] sm:$0xff]
  %v1587 = vld [vmem:[%s1543 + $0x158] sm:$0xff]
  %v1588 = vld [vmem:[%s1543 + $0x160] sm:$0xff]
  %v1589 = vld [vmem:[%s1543 + $0x168] sm:$0xff]
  %v1590 = vld [vmem:[%s1543 + $0x170] sm:$0xff]
  %v1591 = vld [vmem:[%s1543 + $0x178] sm:$0xff]
  %v1592 = vld [vmem:[%s1543 + $0x180] sm:$0xff]
  %v1593 = vld [vmem:[%s1543 + $0x188] sm:$0xff]
  %v1594 = vld [vmem:[%s1543 + $0x190] sm:$0xff]
  %v1595 = vld [vmem:[%s1543 + $0x198] sm:$0xff]
  %v1596 = vld [vmem:[%s1543 + $0x1a0] sm:$0xff]
  %v1597 = vld [vmem:[%s1543 + $0x1a8] sm:$0xff]
  %v1598 = vld [vmem:[%s1543 + $0x1b0] sm:$0xff]
  %v1599 = vld [vmem:[%s1543 + $0x1b8] sm:$0xff]
  %v1600 = vld [vmem:[%s1543 + $0x1c0] sm:$0xff]
  %v1601 = vld [vmem:[%s1543 + $0x1c8] sm:$0xff]
  %v1602 = vld [vmem:[%s1543 + $0x1d0] sm:$0xff]
  %v1603 = vld [vmem:[%s1543 + $0x1d8] sm:$0xff]
  %v1604 = vld [vmem:[%s1543 + $0x1e0] sm:$0xff]
  %v1605 = vld [vmem:[%s1543 + $0x1e8] sm:$0xff]
  %v1606 = vld [vmem:[%s1543 + $0x1f0] sm:$0xff]
  %v1607 = vld [vmem:[%s1543 + $0x1f8] sm:$0xff]
  %v1608 = vld [vmem:[%s1543 + $0x200] sm:$0xff]
  %v1609 = vld [vmem:[%s1543 + $0x208] sm:$0xff]
  %v1610 = vld [vmem:[%s1543 + $0x210] sm:$0xff]
  %v1611 = vld [vmem:[%s1543 + $0x218] sm:$0xff]
  %v1612 = vld [vmem:[%s1543 + $0x220] sm:$0xff]
  %v1613 = vld [vmem:[%s1543 + $0x228] sm:$0xff]
  %v1614 = vld [vmem:[%s1543 + $0x230] sm:$0xff]
  %v1615 = vld [vmem:[%s1543 + $0x238] sm:$0xff]
  %v1616 = vld [vmem:[%s1543 + $0x240] sm:$0xff]
  %v1617 = vld [vmem:[%s1543 + $0x248] sm:$0xff]
  %v1618 = vld [vmem:[%s1543 + $0x250] sm:$0xff]
  %v1619 = vld [vmem:[%s1543 + $0x258] sm:$0xff]
  %v1620 = vld [vmem:[%s1543 + $0x260] sm:$0xff]
  %v1621 = vld [vmem:[%s1543 + $0x268] sm:$0xff]
  %v1622 = vld [vmem:[%s1543 + $0x270] sm:$0xff]
  %v1623 = vld [vmem:[%s1543 + $0x278] sm:$0xff]
  %v1624 = vld [vmem:[%s1543 + $0x280] sm:$0xff]
  %v1625 = vld [vmem:[%s1543 + $0x288] sm:$0xff]
  %v1626 = vld [vmem:[%s1543 + $0x290] sm:$0xff]
  %v1627 = vld [vmem:[%s1543 + $0x298] sm:$0xff]
  %v1628 = vld [vmem:[%s1543 + $0x2a0] sm:$0xff]
  %v1629 = vld [vmem:[%s1543 + $0x2a8] sm:$0xff]
  %v1630 = vld [vmem:[%s1543 + $0x2b0] sm:$0xff]
  %v1631 = vld [vmem:[%s1543 + $0x2b8] sm:$0xff]
  %v1632 = vsel %vm33, %v1513, 0
  %v1634 = vsel %vm33, %v1519, 0
  %v1636 = vsel %vm33, %v1528, 0
  %v1638 = vsel %vm33, %v1534, 0
  %1640 = vmatpush.msra.mxu0 %v1574
  %1641 = vmatpush.msra.mxu0 %v1572
  %1642 = vmatpush.msra.mxu0 %v1570
  %1643 = vmatpush.msra.mxu0 %v1568
  %1644 = vmatpush.msra.mxu0 %v1566
  %1645 = vmatpush.msra.mxu0 %v1564
  %1646 = vmatpush.msra.mxu0 %v1562
  %1647 = vmatpush.msra.mxu0 %v1560
  %1648 = vmatpush.msra.mxu0 %v1558
  %1649 = vmatpush.msra.mxu0 %v1556
  %1650 = vmatpush.msra.mxu0 %v1554
  %1651 = vmatpush.msra.mxu0 %v1552
  %1652 = vmatpush.msra.mxu0 %v1550
  %1653 = vmatpush.msra.mxu0 %v1548
  %1654 = vmatpush.msra.mxu0 %v1546
  %1655 = vmatpush.msra.mxu0 %v1544
  %1656 = vmatmul.f32.gmra.mxu0 %v1507
  %v1657 = vpop.f32.mrf.mxu0
  %v1658 = vadd.f32 0.0, %v1657
  %1659 = vmatmul.f32.gmra.mxu0 %v1515
  %v1660 = vpop.f32.mrf.mxu0
  %v1661 = vadd.f32 0.0, %v1660
  %1662 = vmatmul.f32.gmra.mxu0 %v1522
  %v1663 = vpop.f32.mrf.mxu0
  %v1664 = vadd.f32 0.0, %v1663
  %1665 = vmatmul.f32.gmra.mxu0 %v1530
  %v1666 = vpop.f32.mrf.mxu0
  %v1667 = vadd.f32 0.0, %v1666
  %1668 = vdwg.mxu0
  %1669 = vmatpush.msra.mxu0 %v1606
  %1670 = vmatpush.msra.mxu0 %v1604
  %1671 = vmatpush.msra.mxu0 %v1602
  %1672 = vmatpush.msra.mxu0 %v1600
  %1673 = vmatpush.msra.mxu0 %v1598
  %1674 = vmatpush.msra.mxu0 %v1596
  %1675 = vmatpush.msra.mxu0 %v1594
  %1676 = vmatpush.msra.mxu0 %v1592
  %1677 = vmatpush.msra.mxu0 %v1590
  %1678 = vmatpush.msra.mxu0 %v1588
  %1679 = vmatpush.msra.mxu0 %v1586
  %1680 = vmatpush.msra.mxu0 %v1584
  %1681 = vmatpush.msra.mxu0 %v1582
  %1682 = vmatpush.msra.mxu0 %v1580
  %1683 = vmatpush.msra.mxu0 %v1578
  %1684 = vmatpush.msra.mxu0 %v1576
  %1685 = vmatmul.f32.gmra.mxu0 %v1510
  %v1686 = vpop.f32.mrf.mxu0
  %v1687 = vadd.f32 %v1658, %v1686
  %1688 = vmatmul.f32.gmra.mxu0 %v1517
  %v1689 = vpop.f32.mrf.mxu0
  %v1690 = vadd.f32 %v1661, %v1689
  %1691 = vmatmul.f32.gmra.mxu0 %v1525
  %v1692 = vpop.f32.mrf.mxu0
  %v1693 = vadd.f32 %v1664, %v1692
  %1694 = vmatmul.f32.gmra.mxu0 %v1532
  %v1695 = vpop.f32.mrf.mxu0
  %v1696 = vadd.f32 %v1667, %v1695
  %1697 = vdwg.mxu0
  %1698 = vmatpush.msra.mxu0 0.0
  %1699 = vmatpush.msra.mxu0 0.0
  %1700 = vmatpush.msra.mxu0 0.0
  %1701 = vmatpush.msra.mxu0 0.0
  %1702 = vmatpush.msra.mxu0 %v1630
  %1703 = vmatpush.msra.mxu0 %v1628
  %1704 = vmatpush.msra.mxu0 %v1626
  %1705 = vmatpush.msra.mxu0 %v1624
  %1706 = vmatpush.msra.mxu0 %v1622
  %1707 = vmatpush.msra.mxu0 %v1620
  %1708 = vmatpush.msra.mxu0 %v1618
  %1709 = vmatpush.msra.mxu0 %v1616
  %1710 = vmatpush.msra.mxu0 %v1614
  %1711 = vmatpush.msra.mxu0 %v1612
  %1712 = vmatpush.msra.mxu0 %v1610
  %1713 = vmatpush.msra.mxu0 %v1608
  %1714 = vmatmul.f32.gmra.mxu0 %v1632
  %v1715 = vpop.f32.mrf.mxu0
  %v1716 = vadd.f32 %v1687, %v1715
  %1717 = vmatmul.f32.gmra.mxu0 %v1634
  %v1718 = vpop.f32.mrf.mxu0
  %v1719 = vadd.f32 %v1690, %v1718
  %1720 = vmatmul.f32.gmra.mxu0 %v1636
  %v1721 = vpop.f32.mrf.mxu0
  %v1722 = vadd.f32 %v1693, %v1721
  %1723 = vmatmul.f32.gmra.mxu0 %v1638
  %v1724 = vpop.f32.mrf.mxu0
  %v1725 = vadd.f32 %v1696, %v1724
  %1726 = vdwg.mxu0
  %1727 = vmatpush.msra.mxu0 %v1575
  %1728 = vmatpush.msra.mxu0 %v1573
  %1729 = vmatpush.msra.mxu0 %v1571
  %1730 = vmatpush.msra.mxu0 %v1569
  %1731 = vmatpush.msra.mxu0 %v1567
  %1732 = vmatpush.msra.mxu0 %v1565
  %1733 = vmatpush.msra.mxu0 %v1563
  %1734 = vmatpush.msra.mxu0 %v1561
  %1735 = vmatpush.msra.mxu0 %v1559
  %1736 = vmatpush.msra.mxu0 %v1557
  %1737 = vmatpush.msra.mxu0 %v1555
  %1738 = vmatpush.msra.mxu0 %v1553
  %1739 = vmatpush.msra.mxu0 %v1551
  %1740 = vmatpush.msra.mxu0 %v1549
  %1741 = vmatpush.msra.mxu0 %v1547
  %1742 = vmatpush.msra.mxu0 %v1545
  %1743 = vmatmul.f32.gmra.mxu0 %v1507
  %v1744 = vpop.f32.mrf.mxu0
  %v1745 = vadd.f32 0.0, %v1744
  %1746 = vmatmul.f32.gmra.mxu0 %v1515
  %v1747 = vpop.f32.mrf.mxu0
  %v1748 = vadd.f32 0.0, %v1747
  %1749 = vmatmul.f32.gmra.mxu0 %v1522
  %v1750 = vpop.f32.mrf.mxu0
  %v1751 = vadd.f32 0.0, %v1750
  %1752 = vmatmul.f32.gmra.mxu0 %v1530
  %v1753 = vpop.f32.mrf.mxu0
  %v1754 = vadd.f32 0.0, %v1753
  %1755 = vdwg.mxu0
  %1756 = vmatpush.msra.mxu0 %v1607
  %1757 = vmatpush.msra.mxu0 %v1605
  %1758 = vmatpush.msra.mxu0 %v1603
  %1759 = vmatpush.msra.mxu0 %v1601
  %1760 = vmatpush.msra.mxu0 %v1599
  %1761 = vmatpush.msra.mxu0 %v1597
  %1762 = vmatpush.msra.mxu0 %v1595
  %1763 = vmatpush.msra.mxu0 %v1593
  %1764 = vmatpush.msra.mxu0 %v1591
  %1765 = vmatpush.msra.mxu0 %v1589
  %1766 = vmatpush.msra.mxu0 %v1587
  %1767 = vmatpush.msra.mxu0 %v1585
  %1768 = vmatpush.msra.mxu0 %v1583
  %1769 = vmatpush.msra.mxu0 %v1581
  %1770 = vmatpush.msra.mxu0 %v1579
  %1771 = vmatpush.msra.mxu0 %v1577
  %1772 = vmatmul.f32.gmra.mxu0 %v1510
  %v1773 = vpop.f32.mrf.mxu0
  %v1774 = vadd.f32 %v1745, %v1773
  %1775 = vmatmul.f32.gmra.mxu0 %v1517
  %v1776 = vpop.f32.mrf.mxu0
  %v1777 = vadd.f32 %v1748, %v1776
  %1778 = vmatmul.f32.gmra.mxu0 %v1525
  %v1779 = vpop.f32.mrf.mxu0
  %v1780 = vadd.f32 %v1751, %v1779
  %1781 = vmatmul.f32.gmra.mxu0 %v1532
  %v1782 = vpop.f32.mrf.mxu0
  %v1783 = vadd.f32 %v1754, %v1782
  %1784 = vdwg.mxu0
  %1785 = vmatpush.msra.mxu0 0.0
  %1786 = vmatpush.msra.mxu0 0.0
  %1787 = vmatpush.msra.mxu0 0.0
  %1788 = vmatpush.msra.mxu0 0.0
  %1789 = vmatpush.msra.mxu0 %v1631
  %1790 = vmatpush.msra.mxu0 %v1629
  %1791 = vmatpush.msra.mxu0 %v1627
  %1792 = vmatpush.msra.mxu0 %v1625
  %1793 = vmatpush.msra.mxu0 %v1623
  %1794 = vmatpush.msra.mxu0 %v1621
  %1795 = vmatpush.msra.mxu0 %v1619
  %1796 = vmatpush.msra.mxu0 %v1617
  %1797 = vmatpush.msra.mxu0 %v1615
  %1798 = vmatpush.msra.mxu0 %v1613
  %1799 = vmatpush.msra.mxu0 %v1611
  %1800 = vmatpush.msra.mxu0 %v1609
  %1801 = vmatmul.f32.gmra.mxu0 %v1632
  %v1802 = vpop.f32.mrf.mxu0
  %v1803 = vadd.f32 %v1774, %v1802
  %1804 = vmatmul.f32.gmra.mxu0 %v1634
  %v1805 = vpop.f32.mrf.mxu0
  %v1806 = vadd.f32 %v1777, %v1805
  %1807 = vmatmul.f32.gmra.mxu0 %v1636
  %v1808 = vpop.f32.mrf.mxu0
  %v1809 = vadd.f32 %v1780, %v1808
  %1810 = vmatmul.f32.gmra.mxu0 %v1638
  %v1811 = vpop.f32.mrf.mxu0
  %v1812 = vadd.f32 %v1783, %v1811
  %1813 = vdwg.mxu0
  %v1814 = vadd.f32 %v1472, %v1716
  %v1815 = vadd.f32 %v1473, %v1803
  %v1816 = vadd.f32 %v1474, %v1719
  %v1817 = vadd.f32 %v1475, %v1806
  %v1818 = vadd.f32 %v1476, %v1722
  %v1819 = vadd.f32 %v1477, %v1809
  %v1820 = vadd.f32 %v1478, %v1725
  %v1821 = vadd.f32 %v1479, %v1812
  %v1822 = vld [vmem:[#allocation2] sm:$0xe0]
  %v1823 = vld [vmem:[#allocation2 + $0x8] sm:$0xe0]
  %v1824 = vld [vmem:[#allocation2 + $0x10] sm:$0xe0]
  %v1825 = vld [vmem:[#allocation2 + $0x30] sm:$0x1f]
  %v1826 = vld [vmem:[#allocation2 + $0x38] sm:$0x1f]
  %v1827 = vld [vmem:[#allocation2 + $0x40] sm:$0x1f]
  %v1828 = vld [vmem:[#allocation2 + $0x48] sm:$0xe0]
  %v1829 = vld [vmem:[#allocation2 + $0x50] sm:$0xe0]
  %v1830 = vld [vmem:[#allocation2 + $0x58] sm:$0xe0]
  %v1831 = vld [vmem:[#allocation2 + $0x78] sm:$0x1f]
  %v1832 = vld [vmem:[#allocation2 + $0x80] sm:$0x1f]
  %v1833 = vld [vmem:[#allocation2 + $0x88] sm:$0x1f]
  %v1846 = vrot.slane %v1822, 5
  %v1847 = vrot.slane %v175, 5
  %v1848 = vsel %vm87, %v1846, %v1847
  %v1849 = vrot.slane %v1823, 5
  %v1850 = vrot.slane %v176, 5
  %v1851 = vsel %vm87, %v1849, %v1850
  %v1852 = vrot.slane %v1824, 5
  %v1853 = vrot.slane %v177, 5
  %v1854 = vsel %vm87, %v1852, %v1853
  %v1855 = vrot.slane %v1825, 5
  %v1856 = vsel %vm87, %v1847, %v1855
  %v1857 = vrot.slane %v1826, 5
  %v1858 = vsel %vm87, %v1850, %v1857
  %v1859 = vrot.slane %v1827, 5
  %v1860 = vsel %vm87, %v1853, %v1859
  %v1861 = vrot.slane %v1828, 5
  %v1862 = vrot.slane %v181, 5
  %v1863 = vsel %vm87, %v1861, %v1862
  %v1864 = vrot.slane %v1829, 5
  %v1865 = vrot.slane %v182, 5
  %v1866 = vsel %vm87, %v1864, %v1865
  %v1867 = vrot.slane %v1830, 5
  %v1868 = vrot.slane %v183, 5
  %v1869 = vsel %vm87, %v1867, %v1868
  %v1870 = vrot.slane %v1831, 5
  %v1871 = vsel %vm87, %v1862, %v1870
  %v1872 = vrot.slane %v1832, 5
  %v1873 = vsel %vm87, %v1865, %v1872
  %v1874 = vrot.slane %v1833, 5
  %v1875 = vsel %vm87, %v1868, %v1874
  %s1884 = scalar_lea.vmem %s4, 3520
  %v1885 = vld [vmem:[%s1884] sm:$0xff]
  %v1886 = vld [vmem:[%s1884 + $0x8] sm:$0xff]
  %v1887 = vld [vmem:[%s1884 + $0x10] sm:$0xff]
  %v1888 = vld [vmem:[%s1884 + $0x18] sm:$0xff]
  %v1889 = vld [vmem:[%s1884 + $0x20] sm:$0xff]
  %v1890 = vld [vmem:[%s1884 + $0x28] sm:$0xff]
  %v1891 = vld [vmem:[%s1884 + $0x30] sm:$0xff]
  %v1892 = vld [vmem:[%s1884 + $0x38] sm:$0xff]
  %v1893 = vld [vmem:[%s1884 + $0x40] sm:$0xff]
  %v1894 = vld [vmem:[%s1884 + $0x48] sm:$0xff]
  %v1895 = vld [vmem:[%s1884 + $0x50] sm:$0xff]
  %v1896 = vld [vmem:[%s1884 + $0x58] sm:$0xff]
  %v1897 = vld [vmem:[%s1884 + $0x60] sm:$0xff]
  %v1898 = vld [vmem:[%s1884 + $0x68] sm:$0xff]
  %v1899 = vld [vmem:[%s1884 + $0x70] sm:$0xff]
  %v1900 = vld [vmem:[%s1884 + $0x78] sm:$0xff]
  %v1901 = vld [vmem:[%s1884 + $0x80] sm:$0xff]
  %v1902 = vld [vmem:[%s1884 + $0x88] sm:$0xff]
  %v1903 = vld [vmem:[%s1884 + $0x90] sm:$0xff]
  %v1904 = vld [vmem:[%s1884 + $0x98] sm:$0xff]
  %v1905 = vld [vmem:[%s1884 + $0xa0] sm:$0xff]
  %v1906 = vld [vmem:[%s1884 + $0xa8] sm:$0xff]
  %v1907 = vld [vmem:[%s1884 + $0xb0] sm:$0xff]
  %v1908 = vld [vmem:[%s1884 + $0xb8] sm:$0xff]
  %v1909 = vld [vmem:[%s1884 + $0xc0] sm:$0xff]
  %v1910 = vld [vmem:[%s1884 + $0xc8] sm:$0xff]
  %v1911 = vld [vmem:[%s1884 + $0xd0] sm:$0xff]
  %v1912 = vld [vmem:[%s1884 + $0xd8] sm:$0xff]
  %v1913 = vld [vmem:[%s1884 + $0xe0] sm:$0xff]
  %v1914 = vld [vmem:[%s1884 + $0xe8] sm:$0xff]
  %v1915 = vld [vmem:[%s1884 + $0xf0] sm:$0xff]
  %v1916 = vld [vmem:[%s1884 + $0xf8] sm:$0xff]
  %v1917 = vld [vmem:[%s1884 + $0x100] sm:$0xff]
  %v1918 = vld [vmem:[%s1884 + $0x108] sm:$0xff]
  %v1919 = vld [vmem:[%s1884 + $0x110] sm:$0xff]
  %v1920 = vld [vmem:[%s1884 + $0x118] sm:$0xff]
  %v1921 = vld [vmem:[%s1884 + $0x120] sm:$0xff]
  %v1922 = vld [vmem:[%s1884 + $0x128] sm:$0xff]
  %v1923 = vld [vmem:[%s1884 + $0x130] sm:$0xff]
  %v1924 = vld [vmem:[%s1884 + $0x138] sm:$0xff]
  %v1925 = vld [vmem:[%s1884 + $0x140] sm:$0xff]
  %v1926 = vld [vmem:[%s1884 + $0x148] sm:$0xff]
  %v1927 = vld [vmem:[%s1884 + $0x150] sm:$0xff]
  %v1928 = vld [vmem:[%s1884 + $0x158] sm:$0xff]
  %v1929 = vld [vmem:[%s1884 + $0x160] sm:$0xff]
  %v1930 = vld [vmem:[%s1884 + $0x168] sm:$0xff]
  %v1931 = vld [vmem:[%s1884 + $0x170] sm:$0xff]
  %v1932 = vld [vmem:[%s1884 + $0x178] sm:$0xff]
  %v1933 = vld [vmem:[%s1884 + $0x180] sm:$0xff]
  %v1934 = vld [vmem:[%s1884 + $0x188] sm:$0xff]
  %v1935 = vld [vmem:[%s1884 + $0x190] sm:$0xff]
  %v1936 = vld [vmem:[%s1884 + $0x198] sm:$0xff]
  %v1937 = vld [vmem:[%s1884 + $0x1a0] sm:$0xff]
  %v1938 = vld [vmem:[%s1884 + $0x1a8] sm:$0xff]
  %v1939 = vld [vmem:[%s1884 + $0x1b0] sm:$0xff]
  %v1940 = vld [vmem:[%s1884 + $0x1b8] sm:$0xff]
  %v1941 = vld [vmem:[%s1884 + $0x1c0] sm:$0xff]
  %v1942 = vld [vmem:[%s1884 + $0x1c8] sm:$0xff]
  %v1943 = vld [vmem:[%s1884 + $0x1d0] sm:$0xff]
  %v1944 = vld [vmem:[%s1884 + $0x1d8] sm:$0xff]
  %v1945 = vld [vmem:[%s1884 + $0x1e0] sm:$0xff]
  %v1946 = vld [vmem:[%s1884 + $0x1e8] sm:$0xff]
  %v1947 = vld [vmem:[%s1884 + $0x1f0] sm:$0xff]
  %v1948 = vld [vmem:[%s1884 + $0x1f8] sm:$0xff]
  %v1949 = vld [vmem:[%s1884 + $0x200] sm:$0xff]
  %v1950 = vld [vmem:[%s1884 + $0x208] sm:$0xff]
  %v1951 = vld [vmem:[%s1884 + $0x210] sm:$0xff]
  %v1952 = vld [vmem:[%s1884 + $0x218] sm:$0xff]
  %v1953 = vld [vmem:[%s1884 + $0x220] sm:$0xff]
  %v1954 = vld [vmem:[%s1884 + $0x228] sm:$0xff]
  %v1955 = vld [vmem:[%s1884 + $0x230] sm:$0xff]
  %v1956 = vld [vmem:[%s1884 + $0x238] sm:$0xff]
  %v1957 = vld [vmem:[%s1884 + $0x240] sm:$0xff]
  %v1958 = vld [vmem:[%s1884 + $0x248] sm:$0xff]
  %v1959 = vld [vmem:[%s1884 + $0x250] sm:$0xff]
  %v1960 = vld [vmem:[%s1884 + $0x258] sm:$0xff]
  %v1961 = vld [vmem:[%s1884 + $0x260] sm:$0xff]
  %v1962 = vld [vmem:[%s1884 + $0x268] sm:$0xff]
  %v1963 = vld [vmem:[%s1884 + $0x270] sm:$0xff]
  %v1964 = vld [vmem:[%s1884 + $0x278] sm:$0xff]
  %v1965 = vld [vmem:[%s1884 + $0x280] sm:$0xff]
  %v1966 = vld [vmem:[%s1884 + $0x288] sm:$0xff]
  %v1967 = vld [vmem:[%s1884 + $0x290] sm:$0xff]
  %v1968 = vld [vmem:[%s1884 + $0x298] sm:$0xff]
  %v1969 = vld [vmem:[%s1884 + $0x2a0] sm:$0xff]
  %v1970 = vld [vmem:[%s1884 + $0x2a8] sm:$0xff]
  %v1971 = vld [vmem:[%s1884 + $0x2b0] sm:$0xff]
  %v1972 = vld [vmem:[%s1884 + $0x2b8] sm:$0xff]
  %v1973 = vsel %vm33, %v1854, 0
  %v1975 = vsel %vm33, %v1860, 0
  %v1977 = vsel %vm33, %v1869, 0
  %v1979 = vsel %vm33, %v1875, 0
  %1981 = vmatpush.msra.mxu0 %v1915
  %1982 = vmatpush.msra.mxu0 %v1913
  %1983 = vmatpush.msra.mxu0 %v1911
  %1984 = vmatpush.msra.mxu0 %v1909
  %1985 = vmatpush.msra.mxu0 %v1907
  %1986 = vmatpush.msra.mxu0 %v1905
  %1987 = vmatpush.msra.mxu0 %v1903
  %1988 = vmatpush.msra.mxu0 %v1901
  %1989 = vmatpush.msra.mxu0 %v1899
  %1990 = vmatpush.msra.mxu0 %v1897
  %1991 = vmatpush.msra.mxu0 %v1895
  %1992 = vmatpush.msra.mxu0 %v1893
  %1993 = vmatpush.msra.mxu0 %v1891
  %1994 = vmatpush.msra.mxu0 %v1889
  %1995 = vmatpush.msra.mxu0 %v1887
  %1996 = vmatpush.msra.mxu0 %v1885
  %1997 = vmatmul.f32.gmra.mxu0 %v1848
  %v1998 = vpop.f32.mrf.mxu0
  %v1999 = vadd.f32 0.0, %v1998
  %2000 = vmatmul.f32.gmra.mxu0 %v1856
  %v2001 = vpop.f32.mrf.mxu0
  %v2002 = vadd.f32 0.0, %v2001
  %2003 = vmatmul.f32.gmra.mxu0 %v1863
  %v2004 = vpop.f32.mrf.mxu0
  %v2005 = vadd.f32 0.0, %v2004
  %2006 = vmatmul.f32.gmra.mxu0 %v1871
  %v2007 = vpop.f32.mrf.mxu0
  %v2008 = vadd.f32 0.0, %v2007
  %2009 = vdwg.mxu0
  %2010 = vmatpush.msra.mxu0 %v1947
  %2011 = vmatpush.msra.mxu0 %v1945
  %2012 = vmatpush.msra.mxu0 %v1943
  %2013 = vmatpush.msra.mxu0 %v1941
  %2014 = vmatpush.msra.mxu0 %v1939
  %2015 = vmatpush.msra.mxu0 %v1937
  %2016 = vmatpush.msra.mxu0 %v1935
  %2017 = vmatpush.msra.mxu0 %v1933
  %2018 = vmatpush.msra.mxu0 %v1931
  %2019 = vmatpush.msra.mxu0 %v1929
  %2020 = vmatpush.msra.mxu0 %v1927
  %2021 = vmatpush.msra.mxu0 %v1925
  %2022 = vmatpush.msra.mxu0 %v1923
  %2023 = vmatpush.msra.mxu0 %v1921
  %2024 = vmatpush.msra.mxu0 %v1919
  %2025 = vmatpush.msra.mxu0 %v1917
  %2026 = vmatmul.f32.gmra.mxu0 %v1851
  %v2027 = vpop.f32.mrf.mxu0
  %v2028 = vadd.f32 %v1999, %v2027
  %2029 = vmatmul.f32.gmra.mxu0 %v1858
  %v2030 = vpop.f32.mrf.mxu0
  %v2031 = vadd.f32 %v2002, %v2030
  %2032 = vmatmul.f32.gmra.mxu0 %v1866
  %v2033 = vpop.f32.mrf.mxu0
  %v2034 = vadd.f32 %v2005, %v2033
  %2035 = vmatmul.f32.gmra.mxu0 %v1873
  %v2036 = vpop.f32.mrf.mxu0
  %v2037 = vadd.f32 %v2008, %v2036
  %2038 = vdwg.mxu0
  %2039 = vmatpush.msra.mxu0 0.0
  %2040 = vmatpush.msra.mxu0 0.0
  %2041 = vmatpush.msra.mxu0 0.0
  %2042 = vmatpush.msra.mxu0 0.0
  %2043 = vmatpush.msra.mxu0 %v1971
  %2044 = vmatpush.msra.mxu0 %v1969
  %2045 = vmatpush.msra.mxu0 %v1967
  %2046 = vmatpush.msra.mxu0 %v1965
  %2047 = vmatpush.msra.mxu0 %v1963
  %2048 = vmatpush.msra.mxu0 %v1961
  %2049 = vmatpush.msra.mxu0 %v1959
  %2050 = vmatpush.msra.mxu0 %v1957
  %2051 = vmatpush.msra.mxu0 %v1955
  %2052 = vmatpush.msra.mxu0 %v1953
  %2053 = vmatpush.msra.mxu0 %v1951
  %2054 = vmatpush.msra.mxu0 %v1949
  %2055 = vmatmul.f32.gmra.mxu0 %v1973
  %v2056 = vpop.f32.mrf.mxu0
  %v2057 = vadd.f32 %v2028, %v2056
  %2058 = vmatmul.f32.gmra.mxu0 %v1975
  %v2059 = vpop.f32.mrf.mxu0
  %v2060 = vadd.f32 %v2031, %v2059
  %2061 = vmatmul.f32.gmra.mxu0 %v1977
  %v2062 = vpop.f32.mrf.mxu0
  %v2063 = vadd.f32 %v2034, %v2062
  %2064 = vmatmul.f32.gmra.mxu0 %v1979
  %v2065 = vpop.f32.mrf.mxu0
  %v2066 = vadd.f32 %v2037, %v2065
  %2067 = vdwg.mxu0
  %2068 = vmatpush.msra.mxu0 %v1916
  %2069 = vmatpush.msra.mxu0 %v1914
  %2070 = vmatpush.msra.mxu0 %v1912
  %2071 = vmatpush.msra.mxu0 %v1910
  %2072 = vmatpush.msra.mxu0 %v1908
  %2073 = vmatpush.msra.mxu0 %v1906
  %2074 = vmatpush.msra.mxu0 %v1904
  %2075 = vmatpush.msra.mxu0 %v1902
  %2076 = vmatpush.msra.mxu0 %v1900
  %2077 = vmatpush.msra.mxu0 %v1898
  %2078 = vmatpush.msra.mxu0 %v1896
  %2079 = vmatpush.msra.mxu0 %v1894
  %2080 = vmatpush.msra.mxu0 %v1892
  %2081 = vmatpush.msra.mxu0 %v1890
  %2082 = vmatpush.msra.mxu0 %v1888
  %2083 = vmatpush.msra.mxu0 %v1886
  %2084 = vmatmul.f32.gmra.mxu0 %v1848
  %v2085 = vpop.f32.mrf.mxu0
  %v2086 = vadd.f32 0.0, %v2085
  %2087 = vmatmul.f32.gmra.mxu0 %v1856
  %v2088 = vpop.f32.mrf.mxu0
  %v2089 = vadd.f32 0.0, %v2088
  %2090 = vmatmul.f32.gmra.mxu0 %v1863
  %v2091 = vpop.f32.mrf.mxu0
  %v2092 = vadd.f32 0.0, %v2091
  %2093 = vmatmul.f32.gmra.mxu0 %v1871
  %v2094 = vpop.f32.mrf.mxu0
  %v2095 = vadd.f32 0.0, %v2094
  %2096 = vdwg.mxu0
  %2097 = vmatpush.msra.mxu0 %v1948
  %2098 = vmatpush.msra.mxu0 %v1946
  %2099 = vmatpush.msra.mxu0 %v1944
  %2100 = vmatpush.msra.mxu0 %v1942
  %2101 = vmatpush.msra.mxu0 %v1940
  %2102 = vmatpush.msra.mxu0 %v1938
  %2103 = vmatpush.msra.mxu0 %v1936
  %2104 = vmatpush.msra.mxu0 %v1934
  %2105 = vmatpush.msra.mxu0 %v1932
  %2106 = vmatpush.msra.mxu0 %v1930
  %2107 = vmatpush.msra.mxu0 %v1928
  %2108 = vmatpush.msra.mxu0 %v1926
  %2109 = vmatpush.msra.mxu0 %v1924
  %2110 = vmatpush.msra.mxu0 %v1922
  %2111 = vmatpush.msra.mxu0 %v1920
  %2112 = vmatpush.msra.mxu0 %v1918
  %2113 = vmatmul.f32.gmra.mxu0 %v1851
  %v2114 = vpop.f32.mrf.mxu0
  %v2115 = vadd.f32 %v2086, %v2114
  %2116 = vmatmul.f32.gmra.mxu0 %v1858
  %v2117 = vpop.f32.mrf.mxu0
  %v2118 = vadd.f32 %v2089, %v2117
  %2119 = vmatmul.f32.gmra.mxu0 %v1866
  %v2120 = vpop.f32.mrf.mxu0
  %v2121 = vadd.f32 %v2092, %v2120
  %2122 = vmatmul.f32.gmra.mxu0 %v1873
  %v2123 = vpop.f32.mrf.mxu0
  %v2124 = vadd.f32 %v2095, %v2123
  %2125 = vdwg.mxu0
  %2126 = vmatpush.msra.mxu0 0.0
  %2127 = vmatpush.msra.mxu0 0.0
  %2128 = vmatpush.msra.mxu0 0.0
  %2129 = vmatpush.msra.mxu0 0.0
  %2130 = vmatpush.msra.mxu0 %v1972
  %2131 = vmatpush.msra.mxu0 %v1970
  %2132 = vmatpush.msra.mxu0 %v1968
  %2133 = vmatpush.msra.mxu0 %v1966
  %2134 = vmatpush.msra.mxu0 %v1964
  %2135 = vmatpush.msra.mxu0 %v1962
  %2136 = vmatpush.msra.mxu0 %v1960
  %2137 = vmatpush.msra.mxu0 %v1958
  %2138 = vmatpush.msra.mxu0 %v1956
  %2139 = vmatpush.msra.mxu0 %v1954
  %2140 = vmatpush.msra.mxu0 %v1952
  %2141 = vmatpush.msra.mxu0 %v1950
  %2142 = vmatmul.f32.gmra.mxu0 %v1973
  %v2143 = vpop.f32.mrf.mxu0
  %v2144 = vadd.f32 %v2115, %v2143
  %2145 = vmatmul.f32.gmra.mxu0 %v1975
  %v2146 = vpop.f32.mrf.mxu0
  %v2147 = vadd.f32 %v2118, %v2146
  %2148 = vmatmul.f32.gmra.mxu0 %v1977
  %v2149 = vpop.f32.mrf.mxu0
  %v2150 = vadd.f32 %v2121, %v2149
  %2151 = vmatmul.f32.gmra.mxu0 %v1979
  %v2152 = vpop.f32.mrf.mxu0
  %v2153 = vadd.f32 %v2124, %v2152
  %2154 = vdwg.mxu0
  %v2155 = vadd.f32 %v1814, %v2057
  %v2156 = vadd.f32 %v1815, %v2144
  %v2157 = vadd.f32 %v1816, %v2060
  %v2158 = vadd.f32 %v1817, %v2147
  %v2159 = vadd.f32 %v1818, %v2063
  %v2160 = vadd.f32 %v1819, %v2150
  %v2161 = vadd.f32 %v1820, %v2066
  %v2162 = vadd.f32 %v1821, %v2153
  %v2163 = vld [vmem:[#allocation2] sm:$0xc0]
  %v2164 = vld [vmem:[#allocation2 + $0x8] sm:$0xc0]
  %v2165 = vld [vmem:[#allocation2 + $0x10] sm:$0xc0]
  %v2166 = vld [vmem:[#allocation2 + $0x30] sm:$0x3f]
  %v2167 = vld [vmem:[#allocation2 + $0x38] sm:$0x3f]
  %v2168 = vld [vmem:[#allocation2 + $0x40] sm:$0x3f]
  %v2169 = vld [vmem:[#allocation2 + $0x48] sm:$0xc0]
  %v2170 = vld [vmem:[#allocation2 + $0x50] sm:$0xc0]
  %v2171 = vld [vmem:[#allocation2 + $0x58] sm:$0xc0]
  %v2172 = vld [vmem:[#allocation2 + $0x78] sm:$0x3f]
  %v2173 = vld [vmem:[#allocation2 + $0x80] sm:$0x3f]
  %v2174 = vld [vmem:[#allocation2 + $0x88] sm:$0x3f]
  %vm2187 = vcmask 1041408
  %v2188 = vrot.slane %v2163, 6
  %v2189 = vrot.slane %v175, 6
  %v2190 = vsel %vm2187, %v2188, %v2189
  %v2191 = vrot.slane %v2164, 6
  %v2192 = vrot.slane %v176, 6
  %v2193 = vsel %vm2187, %v2191, %v2192
  %v2194 = vrot.slane %v2165, 6
  %v2195 = vrot.slane %v177, 6
  %v2196 = vsel %vm2187, %v2194, %v2195
  %v2197 = vrot.slane %v2166, 6
  %v2198 = vsel %vm2187, %v2189, %v2197
  %v2199 = vrot.slane %v2167, 6
  %v2200 = vsel %vm2187, %v2192, %v2199
  %v2201 = vrot.slane %v2168, 6
  %v2202 = vsel %vm2187, %v2195, %v2201
  %v2203 = vrot.slane %v2169, 6
  %v2204 = vrot.slane %v181, 6
  %v2205 = vsel %vm2187, %v2203, %v2204
  %v2206 = vrot.slane %v2170, 6
  %v2207 = vrot.slane %v182, 6
  %v2208 = vsel %vm2187, %v2206, %v2207
  %v2209 = vrot.slane %v2171, 6
  %v2210 = vrot.slane %v183, 6
  %v2211 = vsel %vm2187, %v2209, %v2210
  %v2212 = vrot.slane %v2172, 6
  %v2213 = vsel %vm2187, %v2204, %v2212
  %v2214 = vrot.slane %v2173, 6
  %v2215 = vsel %vm2187, %v2207, %v2214
  %v2216 = vrot.slane %v2174, 6
  %v2217 = vsel %vm2187, %v2210, %v2216
  %s2226 = scalar_lea.vmem %s4, 4224
  %v2227 = vld [vmem:[%s2226] sm:$0xff]
  %v2228 = vld [vmem:[%s2226 + $0x8] sm:$0xff]
  %v2229 = vld [vmem:[%s2226 + $0x10] sm:$0xff]
  %v2230 = vld [vmem:[%s2226 + $0x18] sm:$0xff]
  %v2231 = vld [vmem:[%s2226 + $0x20] sm:$0xff]
  %v2232 = vld [vmem:[%s2226 + $0x28] sm:$0xff]
  %v2233 = vld [vmem:[%s2226 + $0x30] sm:$0xff]
  %v2234 = vld [vmem:[%s2226 + $0x38] sm:$0xff]
  %v2235 = vld [vmem:[%s2226 + $0x40] sm:$0xff]
  %v2236 = vld [vmem:[%s2226 + $0x48] sm:$0xff]
  %v2237 = vld [vmem:[%s2226 + $0x50] sm:$0xff]
  %v2238 = vld [vmem:[%s2226 + $0x58] sm:$0xff]
  %v2239 = vld [vmem:[%s2226 + $0x60] sm:$0xff]
  %v2240 = vld [vmem:[%s2226 + $0x68] sm:$0xff]
  %v2241 = vld [vmem:[%s2226 + $0x70] sm:$0xff]
  %v2242 = vld [vmem:[%s2226 + $0x78] sm:$0xff]
  %v2243 = vld [vmem:[%s2226 + $0x80] sm:$0xff]
  %v2244 = vld [vmem:[%s2226 + $0x88] sm:$0xff]
  %v2245 = vld [vmem:[%s2226 + $0x90] sm:$0xff]
  %v2246 = vld [vmem:[%s2226 + $0x98] sm:$0xff]
  %v2247 = vld [vmem:[%s2226 + $0xa0] sm:$0xff]
  %v2248 = vld [vmem:[%s2226 + $0xa8] sm:$0xff]
  %v2249 = vld [vmem:[%s2226 + $0xb0] sm:$0xff]
  %v2250 = vld [vmem:[%s2226 + $0xb8] sm:$0xff]
  %v2251 = vld [vmem:[%s2226 + $0xc0] sm:$0xff]
  %v2252 = vld [vmem:[%s2226 + $0xc8] sm:$0xff]
  %v2253 = vld [vmem:[%s2226 + $0xd0] sm:$0xff]
  %v2254 = vld [vmem:[%s2226 + $0xd8] sm:$0xff]
  %v2255 = vld [vmem:[%s2226 + $0xe0] sm:$0xff]
  %v2256 = vld [vmem:[%s2226 + $0xe8] sm:$0xff]
  %v2257 = vld [vmem:[%s2226 + $0xf0] sm:$0xff]
  %v2258 = vld [vmem:[%s2226 + $0xf8] sm:$0xff]
  %v2259 = vld [vmem:[%s2226 + $0x100] sm:$0xff]
  %v2260 = vld [vmem:[%s2226 + $0x108] sm:$0xff]
  %v2261 = vld [vmem:[%s2226 + $0x110] sm:$0xff]
  %v2262 = vld [vmem:[%s2226 + $0x118] sm:$0xff]
  %v2263 = vld [vmem:[%s2226 + $0x120] sm:$0xff]
  %v2264 = vld [vmem:[%s2226 + $0x128] sm:$0xff]
  %v2265 = vld [vmem:[%s2226 + $0x130] sm:$0xff]
  %v2266 = vld [vmem:[%s2226 + $0x138] sm:$0xff]
  %v2267 = vld [vmem:[%s2226 + $0x140] sm:$0xff]
  %v2268 = vld [vmem:[%s2226 + $0x148] sm:$0xff]
  %v2269 = vld [vmem:[%s2226 + $0x150] sm:$0xff]
  %v2270 = vld [vmem:[%s2226 + $0x158] sm:$0xff]
  %v2271 = vld [vmem:[%s2226 + $0x160] sm:$0xff]
  %v2272 = vld [vmem:[%s2226 + $0x168] sm:$0xff]
  %v2273 = vld [vmem:[%s2226 + $0x170] sm:$0xff]
  %v2274 = vld [vmem:[%s2226 + $0x178] sm:$0xff]
  %v2275 = vld [vmem:[%s2226 + $0x180] sm:$0xff]
  %v2276 = vld [vmem:[%s2226 + $0x188] sm:$0xff]
  %v2277 = vld [vmem:[%s2226 + $0x190] sm:$0xff]
  %v2278 = vld [vmem:[%s2226 + $0x198] sm:$0xff]
  %v2279 = vld [vmem:[%s2226 + $0x1a0] sm:$0xff]
  %v2280 = vld [vmem:[%s2226 + $0x1a8] sm:$0xff]
  %v2281 = vld [vmem:[%s2226 + $0x1b0] sm:$0xff]
  %v2282 = vld [vmem:[%s2226 + $0x1b8] sm:$0xff]
  %v2283 = vld [vmem:[%s2226 + $0x1c0] sm:$0xff]
  %v2284 = vld [vmem:[%s2226 + $0x1c8] sm:$0xff]
  %v2285 = vld [vmem:[%s2226 + $0x1d0] sm:$0xff]
  %v2286 = vld [vmem:[%s2226 + $0x1d8] sm:$0xff]
  %v2287 = vld [vmem:[%s2226 + $0x1e0] sm:$0xff]
  %v2288 = vld [vmem:[%s2226 + $0x1e8] sm:$0xff]
  %v2289 = vld [vmem:[%s2226 + $0x1f0] sm:$0xff]
  %v2290 = vld [vmem:[%s2226 + $0x1f8] sm:$0xff]
  %v2291 = vld [vmem:[%s2226 + $0x200] sm:$0xff]
  %v2292 = vld [vmem:[%s2226 + $0x208] sm:$0xff]
  %v2293 = vld [vmem:[%s2226 + $0x210] sm:$0xff]
  %v2294 = vld [vmem:[%s2226 + $0x218] sm:$0xff]
  %v2295 = vld [vmem:[%s2226 + $0x220] sm:$0xff]
  %v2296 = vld [vmem:[%s2226 + $0x228] sm:$0xff]
  %v2297 = vld [vmem:[%s2226 + $0x230] sm:$0xff]
  %v2298 = vld [vmem:[%s2226 + $0x238] sm:$0xff]
  %v2299 = vld [vmem:[%s2226 + $0x240] sm:$0xff]
  %v2300 = vld [vmem:[%s2226 + $0x248] sm:$0xff]
  %v2301 = vld [vmem:[%s2226 + $0x250] sm:$0xff]
  %v2302 = vld [vmem:[%s2226 + $0x258] sm:$0xff]
  %v2303 = vld [vmem:[%s2226 + $0x260] sm:$0xff]
  %v2304 = vld [vmem:[%s2226 + $0x268] sm:$0xff]
  %v2305 = vld [vmem:[%s2226 + $0x270] sm:$0xff]
  %v2306 = vld [vmem:[%s2226 + $0x278] sm:$0xff]
  %v2307 = vld [vmem:[%s2226 + $0x280] sm:$0xff]
  %v2308 = vld [vmem:[%s2226 + $0x288] sm:$0xff]
  %v2309 = vld [vmem:[%s2226 + $0x290] sm:$0xff]
  %v2310 = vld [vmem:[%s2226 + $0x298] sm:$0xff]
  %v2311 = vld [vmem:[%s2226 + $0x2a0] sm:$0xff]
  %v2312 = vld [vmem:[%s2226 + $0x2a8] sm:$0xff]
  %v2313 = vld [vmem:[%s2226 + $0x2b0] sm:$0xff]
  %v2314 = vld [vmem:[%s2226 + $0x2b8] sm:$0xff]
  %v2315 = vsel %vm33, %v2196, 0
  %v2317 = vsel %vm33, %v2202, 0
  %v2319 = vsel %vm33, %v2211, 0
  %v2321 = vsel %vm33, %v2217, 0
  %2323 = vmatpush.msra.mxu0 %v2257
  %2324 = vmatpush.msra.mxu0 %v2255
  %2325 = vmatpush.msra.mxu0 %v2253
  %2326 = vmatpush.msra.mxu0 %v2251
  %2327 = vmatpush.msra.mxu0 %v2249
  %2328 = vmatpush.msra.mxu0 %v2247
  %2329 = vmatpush.msra.mxu0 %v2245
  %2330 = vmatpush.msra.mxu0 %v2243
  %2331 = vmatpush.msra.mxu0 %v2241
  %2332 = vmatpush.msra.mxu0 %v2239
  %2333 = vmatpush.msra.mxu0 %v2237
  %2334 = vmatpush.msra.mxu0 %v2235
  %2335 = vmatpush.msra.mxu0 %v2233
  %2336 = vmatpush.msra.mxu0 %v2231
  %2337 = vmatpush.msra.mxu0 %v2229
  %2338 = vmatpush.msra.mxu0 %v2227
  %2339 = vmatmul.f32.gmra.mxu0 %v2190
  %v2340 = vpop.f32.mrf.mxu0
  %v2341 = vadd.f32 0.0, %v2340
  %2342 = vmatmul.f32.gmra.mxu0 %v2198
  %v2343 = vpop.f32.mrf.mxu0
  %v2344 = vadd.f32 0.0, %v2343
  %2345 = vmatmul.f32.gmra.mxu0 %v2205
  %v2346 = vpop.f32.mrf.mxu0
  %v2347 = vadd.f32 0.0, %v2346
  %2348 = vmatmul.f32.gmra.mxu0 %v2213
  %v2349 = vpop.f32.mrf.mxu0
  %v2350 = vadd.f32 0.0, %v2349
  %2351 = vdwg.mxu0
  %2352 = vmatpush.msra.mxu0 %v2289
  %2353 = vmatpush.msra.mxu0 %v2287
  %2354 = vmatpush.msra.mxu0 %v2285
  %2355 = vmatpush.msra.mxu0 %v2283
  %2356 = vmatpush.msra.mxu0 %v2281
  %2357 = vmatpush.msra.mxu0 %v2279
  %2358 = vmatpush.msra.mxu0 %v2277
  %2359 = vmatpush.msra.mxu0 %v2275
  %2360 = vmatpush.msra.mxu0 %v2273
  %2361 = vmatpush.msra.mxu0 %v2271
  %2362 = vmatpush.msra.mxu0 %v2269
  %2363 = vmatpush.msra.mxu0 %v2267
  %2364 = vmatpush.msra.mxu0 %v2265
  %2365 = vmatpush.msra.mxu0 %v2263
  %2366 = vmatpush.msra.mxu0 %v2261
  %2367 = vmatpush.msra.mxu0 %v2259
  %2368 = vmatmul.f32.gmra.mxu0 %v2193
  %v2369 = vpop.f32.mrf.mxu0
  %v2370 = vadd.f32 %v2341, %v2369
  %2371 = vmatmul.f32.gmra.mxu0 %v2200
  %v2372 = vpop.f32.mrf.mxu0
  %v2373 = vadd.f32 %v2344, %v2372
  %2374 = vmatmul.f32.gmra.mxu0 %v2208
  %v2375 = vpop.f32.mrf.mxu0
  %v2376 = vadd.f32 %v2347, %v2375
  %2377 = vmatmul.f32.gmra.mxu0 %v2215
  %v2378 = vpop.f32.mrf.mxu0
  %v2379 = vadd.f32 %v2350, %v2378
  %2380 = vdwg.mxu0
  %2381 = vmatpush.msra.mxu0 0.0
  %2382 = vmatpush.msra.mxu0 0.0
  %2383 = vmatpush.msra.mxu0 0.0
  %2384 = vmatpush.msra.mxu0 0.0
  %2385 = vmatpush.msra.mxu0 %v2313
  %2386 = vmatpush.msra.mxu0 %v2311
  %2387 = vmatpush.msra.mxu0 %v2309
  %2388 = vmatpush.msra.mxu0 %v2307
  %2389 = vmatpush.msra.mxu0 %v2305
  %2390 = vmatpush.msra.mxu0 %v2303
  %2391 = vmatpush.msra.mxu0 %v2301
  %2392 = vmatpush.msra.mxu0 %v2299
  %2393 = vmatpush.msra.mxu0 %v2297
  %2394 = vmatpush.msra.mxu0 %v2295
  %2395 = vmatpush.msra.mxu0 %v2293
  %2396 = vmatpush.msra.mxu0 %v2291
  %2397 = vmatmul.f32.gmra.mxu0 %v2315
  %v2398 = vpop.f32.mrf.mxu0
  %v2399 = vadd.f32 %v2370, %v2398
  %2400 = vmatmul.f32.gmra.mxu0 %v2317
  %v2401 = vpop.f32.mrf.mxu0
  %v2402 = vadd.f32 %v2373, %v2401
  %2403 = vmatmul.f32.gmra.mxu0 %v2319
  %v2404 = vpop.f32.mrf.mxu0
  %v2405 = vadd.f32 %v2376, %v2404
  %2406 = vmatmul.f32.gmra.mxu0 %v2321
  %v2407 = vpop.f32.mrf.mxu0
  %v2408 = vadd.f32 %v2379, %v2407
  %2409 = vdwg.mxu0
  %2410 = vmatpush.msra.mxu0 %v2258
  %2411 = vmatpush.msra.mxu0 %v2256
  %2412 = vmatpush.msra.mxu0 %v2254
  %2413 = vmatpush.msra.mxu0 %v2252
  %2414 = vmatpush.msra.mxu0 %v2250
  %2415 = vmatpush.msra.mxu0 %v2248
  %2416 = vmatpush.msra.mxu0 %v2246
  %2417 = vmatpush.msra.mxu0 %v2244
  %2418 = vmatpush.msra.mxu0 %v2242
  %2419 = vmatpush.msra.mxu0 %v2240
  %2420 = vmatpush.msra.mxu0 %v2238
  %2421 = vmatpush.msra.mxu0 %v2236
  %2422 = vmatpush.msra.mxu0 %v2234
  %2423 = vmatpush.msra.mxu0 %v2232
  %2424 = vmatpush.msra.mxu0 %v2230
  %2425 = vmatpush.msra.mxu0 %v2228
  %2426 = vmatmul.f32.gmra.mxu0 %v2190
  %v2427 = vpop.f32.mrf.mxu0
  %v2428 = vadd.f32 0.0, %v2427
  %2429 = vmatmul.f32.gmra.mxu0 %v2198
  %v2430 = vpop.f32.mrf.mxu0
  %v2431 = vadd.f32 0.0, %v2430
  %2432 = vmatmul.f32.gmra.mxu0 %v2205
  %v2433 = vpop.f32.mrf.mxu0
  %v2434 = vadd.f32 0.0, %v2433
  %2435 = vmatmul.f32.gmra.mxu0 %v2213
  %v2436 = vpop.f32.mrf.mxu0
  %v2437 = vadd.f32 0.0, %v2436
  %2438 = vdwg.mxu0
  %2439 = vmatpush.msra.mxu0 %v2290
  %2440 = vmatpush.msra.mxu0 %v2288
  %2441 = vmatpush.msra.mxu0 %v2286
  %2442 = vmatpush.msra.mxu0 %v2284
  %2443 = vmatpush.msra.mxu0 %v2282
  %2444 = vmatpush.msra.mxu0 %v2280
  %2445 = vmatpush.msra.mxu0 %v2278
  %2446 = vmatpush.msra.mxu0 %v2276
  %2447 = vmatpush.msra.mxu0 %v2274
  %2448 = vmatpush.msra.mxu0 %v2272
  %2449 = vmatpush.msra.mxu0 %v2270
  %2450 = vmatpush.msra.mxu0 %v2268
  %2451 = vmatpush.msra.mxu0 %v2266
  %2452 = vmatpush.msra.mxu0 %v2264
  %2453 = vmatpush.msra.mxu0 %v2262
  %2454 = vmatpush.msra.mxu0 %v2260
  %2455 = vmatmul.f32.gmra.mxu0 %v2193
  %v2456 = vpop.f32.mrf.mxu0
  %v2457 = vadd.f32 %v2428, %v2456
  %2458 = vmatmul.f32.gmra.mxu0 %v2200
  %v2459 = vpop.f32.mrf.mxu0
  %v2460 = vadd.f32 %v2431, %v2459
  %2461 = vmatmul.f32.gmra.mxu0 %v2208
  %v2462 = vpop.f32.mrf.mxu0
  %v2463 = vadd.f32 %v2434, %v2462
  %2464 = vmatmul.f32.gmra.mxu0 %v2215
  %v2465 = vpop.f32.mrf.mxu0
  %v2466 = vadd.f32 %v2437, %v2465
  %2467 = vdwg.mxu0
  %2468 = vmatpush.msra.mxu0 0.0
  %2469 = vmatpush.msra.mxu0 0.0
  %2470 = vmatpush.msra.mxu0 0.0
  %2471 = vmatpush.msra.mxu0 0.0
  %2472 = vmatpush.msra.mxu0 %v2314
  %2473 = vmatpush.msra.mxu0 %v2312
  %2474 = vmatpush.msra.mxu0 %v2310
  %2475 = vmatpush.msra.mxu0 %v2308
  %2476 = vmatpush.msra.mxu0 %v2306
  %2477 = vmatpush.msra.mxu0 %v2304
  %2478 = vmatpush.msra.mxu0 %v2302
  %2479 = vmatpush.msra.mxu0 %v2300
  %2480 = vmatpush.msra.mxu0 %v2298
  %2481 = vmatpush.msra.mxu0 %v2296
  %2482 = vmatpush.msra.mxu0 %v2294
  %2483 = vmatpush.msra.mxu0 %v2292
  %2484 = vmatmul.f32.gmra.mxu0 %v2315
  %v2485 = vpop.f32.mrf.mxu0
  %v2486 = vadd.f32 %v2457, %v2485
  %2487 = vmatmul.f32.gmra.mxu0 %v2317
  %v2488 = vpop.f32.mrf.mxu0
  %v2489 = vadd.f32 %v2460, %v2488
  %2490 = vmatmul.f32.gmra.mxu0 %v2319
  %v2491 = vpop.f32.mrf.mxu0
  %v2492 = vadd.f32 %v2463, %v2491
  %2493 = vmatmul.f32.gmra.mxu0 %v2321
  %v2494 = vpop.f32.mrf.mxu0
  %v2495 = vadd.f32 %v2466, %v2494
  %2496 = vdwg.mxu0
  %v2497 = vadd.f32 %v2155, %v2399
  %v2498 = vadd.f32 %v2156, %v2486
  %v2499 = vadd.f32 %v2157, %v2402
  %v2500 = vadd.f32 %v2158, %v2489
  %v2501 = vadd.f32 %v2159, %v2405
  %v2502 = vadd.f32 %v2160, %v2492
  %v2503 = vadd.f32 %v2161, %v2408
  %v2504 = vadd.f32 %v2162, %v2495
  %v2505 = vld [vmem:[%s5] sm:$0x3]
  %v2507 = vperm.slane %v2505, 0
  %v2508 = vperm.slane %v2505, 1
  %v2511 = vadd.f32 %v2497, %v2507
  %v2512 = vadd.f32 %v2498, %v2508
  %v2513 = vadd.f32 %v2499, %v2507
  %v2514 = vadd.f32 %v2500, %v2508
  %v2515 = vadd.f32 %v2501, %v2507
  %v2516 = vadd.f32 %v2502, %v2508
  %v2517 = vadd.f32 %v2503, %v2507
  %v2518 = vadd.f32 %v2504, %v2508
  %v2527 = vrot.slane %v2511, 5
  %v2528 = vrot.slane %v2512, 5
  %v2529 = vrot.slane %v2513, 5
  %v2530 = vsel %vm87, %v2527, %v2529
  %v2531 = vrot.slane %v2514, 5
  %v2532 = vsel %vm87, %v2528, %v2531
  %v2533 = vrot.slane %v2515, 5
  %v2534 = vrot.slane %v2516, 5
  %v2535 = vrot.slane %v2517, 5
  %v2536 = vsel %vm87, %v2533, %v2535
  %v2537 = vrot.slane %v2518, 5
  %v2538 = vsel %vm87, %v2534, %v2537
  %2539 = vrot.lane.b32.xlu0 %v2527, 48
  %v2540 = vpop.permute.xlu0 %2539
  %2541 = vrot.lane.b32.xlu0 %v2528, 48
  %v2542 = vpop.permute.xlu0 %2541
  %2543 = vrot.lane.b32.xlu0 %v2530, 48
  %v2544 = vpop.permute.xlu0 %2543
  %2545 = vrot.lane.b32.xlu0 %v2532, 48
  %v2546 = vpop.permute.xlu0 %2545
  %2547 = vrot.lane.b32.xlu0 %v2529, 48
  %v2548 = vpop.permute.xlu0 %2547
  %2549 = vrot.lane.b32.xlu0 %v2531, 48
  %v2550 = vpop.permute.xlu0 %2549
  %2551 = vrot.lane.b32.xlu0 %v2533, 48
  %v2552 = vpop.permute.xlu0 %2551
  %2553 = vrot.lane.b32.xlu0 %v2534, 48
  %v2554 = vpop.permute.xlu0 %2553
  %2555 = vrot.lane.b32.xlu0 %v2536, 48
  %v2556 = vpop.permute.xlu0 %2555
  %2557 = vrot.lane.b32.xlu0 %v2538, 48
  %v2558 = vpop.permute.xlu0 %2557
  %2559 = vrot.lane.b32.xlu0 %v2535, 48
  %v2560 = vpop.permute.xlu0 %2559
  %2561 = vrot.lane.b32.xlu0 %v2537, 48
  %v2562 = vpop.permute.xlu0 %2561
  %v2563 = vsel %vm124, %v2540, %v2542
  %v2564 = vsel %vm124, %v2544, %v2546
  %v2565 = vsel %vm124, %v2548, %v2550
  %v2566 = vsel %vm124, %v2552, %v2554
  %v2567 = vsel %vm124, %v2556, %v2558
  %v2568 = vsel %vm124, %v2560, %v2562
  %2587 = vst.msk [vmem:[#allocation2] sm:$0xf8] %vm149, %v2540
  %2588 = vst [vmem:[#allocation2 + $0x8] sm:$0xf8] %v2563
  %2589 = vst.msk [vmem:[#allocation2 + $0x10] sm:$0xf8] %vm152, %v2542
  %2590 = vst.msk [vmem:[#allocation2 + $0x18] sm:$0xff] %vm154, %v2544
  %2591 = vst [vmem:[#allocation2 + $0x20] sm:$0xff] %v2564
  %2592 = vst.msk [vmem:[#allocation2 + $0x28] sm:$0xff] %vm124, %v2546
  %2593 = vst.msk [vmem:[#allocation2 + $0x30] sm:$0x7] %vm158, %v2548
  %2594 = vst [vmem:[#allocation2 + $0x38] sm:$0x7] %v2565
  %2595 = vst.msk [vmem:[#allocation2 + $0x40] sm:$0x7] %vm161, %v2550
  %2596 = vst.msk [vmem:[#allocation2 + $0x48] sm:$0xf8] %vm149, %v2552
  %2597 = vst [vmem:[#allocation2 + $0x50] sm:$0xf8] %v2566
  %2598 = vst.msk [vmem:[#allocation2 + $0x58] sm:$0xf8] %vm152, %v2554
  %2599 = vst.msk [vmem:[#allocation2 + $0x60] sm:$0xff] %vm154, %v2556
  %2600 = vst [vmem:[#allocation2 + $0x68] sm:$0xff] %v2567
  %2601 = vst.msk [vmem:[#allocation2 + $0x70] sm:$0xff] %vm124, %v2558
  %2602 = vst.msk [vmem:[#allocation2 + $0x78] sm:$0x7] %vm158, %v2560
  %2603 = vst [vmem:[#allocation2 + $0x80] sm:$0x7] %v2568
  %2604 = vst.msk [vmem:[#allocation2 + $0x88] sm:$0x7] %vm161, %v2562
  %v2605 = vld [vmem:[#allocation2] sm:$0xff]
  %v2606 = vld [vmem:[#allocation2 + $0x8] sm:$0xff]
  %v2607 = vld [vmem:[#allocation2 + $0x10] sm:$0xff]
  %v2608 = vld [vmem:[#allocation2 + $0x18] sm:$0xff]
  %v2609 = vld [vmem:[#allocation2 + $0x20] sm:$0xff]
  %v2610 = vld [vmem:[#allocation2 + $0x28] sm:$0xff]
  %v2611 = vld [vmem:[#allocation2 + $0x48] sm:$0xff]
  %v2612 = vld [vmem:[#allocation2 + $0x50] sm:$0xff]
  %v2613 = vld [vmem:[#allocation2 + $0x58] sm:$0xff]
  %v2614 = vld [vmem:[#allocation2 + $0x60] sm:$0xff]
  %v2615 = vld [vmem:[#allocation2 + $0x68] sm:$0xff]
  %v2616 = vld [vmem:[#allocation2 + $0x70] sm:$0xff]
  %v2617 = vld [vmem:[%s4] sm:$0xff]
  %v2618 = vld [vmem:[%s4 + $0x8] sm:$0xff]
  %v2619 = vld [vmem:[%s4 + $0x10] sm:$0xff]
  %v2620 = vld [vmem:[%s4 + $0x18] sm:$0xff]
  %v2621 = vld [vmem:[%s4 + $0x20] sm:$0xff]
  %v2622 = vld [vmem:[%s4 + $0x28] sm:$0xff]
  %v2623 = vld [vmem:[%s4 + $0x30] sm:$0xff]
  %v2624 = vld [vmem:[%s4 + $0x38] sm:$0xff]
  %v2625 = vld [vmem:[%s4 + $0x40] sm:$0xff]
  %v2626 = vld [vmem:[%s4 + $0x48] sm:$0xff]
  %v2627 = vld [vmem:[%s4 + $0x50] sm:$0xff]
  %v2628 = vld [vmem:[%s4 + $0x58] sm:$0xff]
  %v2629 = vld [vmem:[%s4 + $0x60] sm:$0xff]
  %v2630 = vld [vmem:[%s4 + $0x68] sm:$0xff]
  %v2631 = vld [vmem:[%s4 + $0x70] sm:$0xff]
  %v2632 = vld [vmem:[%s4 + $0x78] sm:$0xff]
  %v2633 = vld [vmem:[%s4 + $0x80] sm:$0xff]
  %v2634 = vld [vmem:[%s4 + $0x88] sm:$0xff]
  %v2635 = vld [vmem:[%s4 + $0x90] sm:$0xff]
  %v2636 = vld [vmem:[%s4 + $0x98] sm:$0xff]
  %v2637 = vld [vmem:[%s4 + $0xa0] sm:$0xff]
  %v2638 = vld [vmem:[%s4 + $0xa8] sm:$0xff]
  %v2639 = vld [vmem:[%s4 + $0xb0] sm:$0xff]
  %v2640 = vld [vmem:[%s4 + $0xb8] sm:$0xff]
  %v2641 = vld [vmem:[%s4 + $0xc0] sm:$0xff]
  %v2642 = vld [vmem:[%s4 + $0xc8] sm:$0xff]
  %v2643 = vld [vmem:[%s4 + $0xd0] sm:$0xff]
  %v2644 = vld [vmem:[%s4 + $0xd8] sm:$0xff]
  %v2645 = vld [vmem:[%s4 + $0xe0] sm:$0xff]
  %v2646 = vld [vmem:[%s4 + $0xe8] sm:$0xff]
  %v2647 = vld [vmem:[%s4 + $0xf0] sm:$0xff]
  %v2648 = vld [vmem:[%s4 + $0xf8] sm:$0xff]
  %v2649 = vld [vmem:[%s4 + $0x100] sm:$0xff]
  %v2650 = vld [vmem:[%s4 + $0x108] sm:$0xff]
  %v2651 = vld [vmem:[%s4 + $0x110] sm:$0xff]
  %v2652 = vld [vmem:[%s4 + $0x118] sm:$0xff]
  %v2653 = vld [vmem:[%s4 + $0x120] sm:$0xff]
  %v2654 = vld [vmem:[%s4 + $0x128] sm:$0xff]
  %v2655 = vld [vmem:[%s4 + $0x130] sm:$0xff]
  %v2656 = vld [vmem:[%s4 + $0x138] sm:$0xff]
  %v2657 = vld [vmem:[%s4 + $0x140] sm:$0xff]
  %v2658 = vld [vmem:[%s4 + $0x148] sm:$0xff]
  %v2659 = vld [vmem:[%s4 + $0x150] sm:$0xff]
  %v2660 = vld [vmem:[%s4 + $0x158] sm:$0xff]
  %v2661 = vld [vmem:[%s4 + $0x160] sm:$0xff]
  %v2662 = vld [vmem:[%s4 + $0x168] sm:$0xff]
  %v2663 = vld [vmem:[%s4 + $0x170] sm:$0xff]
  %v2664 = vld [vmem:[%s4 + $0x178] sm:$0xff]
  %v2665 = vld [vmem:[%s4 + $0x180] sm:$0xff]
  %v2666 = vld [vmem:[%s4 + $0x188] sm:$0xff]
  %v2667 = vld [vmem:[%s4 + $0x190] sm:$0xff]
  %v2668 = vld [vmem:[%s4 + $0x198] sm:$0xff]
  %v2669 = vld [vmem:[%s4 + $0x1a0] sm:$0xff]
  %v2670 = vld [vmem:[%s4 + $0x1a8] sm:$0xff]
  %v2671 = vld [vmem:[%s4 + $0x1b0] sm:$0xff]
  %v2672 = vld [vmem:[%s4 + $0x1b8] sm:$0xff]
  %v2673 = vld [vmem:[%s4 + $0x1c0] sm:$0xff]
  %v2674 = vld [vmem:[%s4 + $0x1c8] sm:$0xff]
  %v2675 = vld [vmem:[%s4 + $0x1d0] sm:$0xff]
  %v2676 = vld [vmem:[%s4 + $0x1d8] sm:$0xff]
  %v2677 = vld [vmem:[%s4 + $0x1e0] sm:$0xff]
  %v2678 = vld [vmem:[%s4 + $0x1e8] sm:$0xff]
  %v2679 = vld [vmem:[%s4 + $0x1f0] sm:$0xff]
  %v2680 = vld [vmem:[%s4 + $0x1f8] sm:$0xff]
  %v2681 = vld [vmem:[%s4 + $0x200] sm:$0xff]
  %v2682 = vld [vmem:[%s4 + $0x208] sm:$0xff]
  %v2683 = vld [vmem:[%s4 + $0x210] sm:$0xff]
  %v2684 = vld [vmem:[%s4 + $0x218] sm:$0xff]
  %v2685 = vld [vmem:[%s4 + $0x220] sm:$0xff]
  %v2686 = vld [vmem:[%s4 + $0x228] sm:$0xff]
  %v2687 = vld [vmem:[%s4 + $0x230] sm:$0xff]
  %v2688 = vld [vmem:[%s4 + $0x238] sm:$0xff]
  %v2689 = vld [vmem:[%s4 + $0x240] sm:$0xff]
  %v2690 = vld [vmem:[%s4 + $0x248] sm:$0xff]
  %v2691 = vld [vmem:[%s4 + $0x250] sm:$0xff]
  %v2692 = vld [vmem:[%s4 + $0x258] sm:$0xff]
  %v2693 = vld [vmem:[%s4 + $0x260] sm:$0xff]
  %v2694 = vld [vmem:[%s4 + $0x268] sm:$0xff]
  %v2695 = vld [vmem:[%s4 + $0x270] sm:$0xff]
  %v2696 = vld [vmem:[%s4 + $0x278] sm:$0xff]
  %v2697 = vld [vmem:[%s4 + $0x280] sm:$0xff]
  %v2698 = vld [vmem:[%s4 + $0x288] sm:$0xff]
  %v2699 = vld [vmem:[%s4 + $0x290] sm:$0xff]
  %v2700 = vld [vmem:[%s4 + $0x298] sm:$0xff]
  %v2701 = vld [vmem:[%s4 + $0x2a0] sm:$0xff]
  %v2702 = vld [vmem:[%s4 + $0x2a8] sm:$0xff]
  %v2703 = vld [vmem:[%s4 + $0x2b0] sm:$0xff]
  %v2704 = vld [vmem:[%s4 + $0x2b8] sm:$0xff]
  %v2705 = vld [vmem:[#allocation2] sm:$0xfe]
  %v2706 = vld [vmem:[#allocation2 + $0x8] sm:$0xfe]
  %v2707 = vld [vmem:[#allocation2 + $0x10] sm:$0xfe]
  %v2708 = vld [vmem:[#allocation2 + $0x30] sm:$0x1]
  %v2709 = vld [vmem:[#allocation2 + $0x38] sm:$0x1]
  %v2710 = vld [vmem:[#allocation2 + $0x40] sm:$0x1]
  %v2711 = vld [vmem:[#allocation2 + $0x48] sm:$0xfe]
  %v2712 = vld [vmem:[#allocation2 + $0x50] sm:$0xfe]
  %v2713 = vld [vmem:[#allocation2 + $0x58] sm:$0xfe]
  %v2714 = vld [vmem:[#allocation2 + $0x78] sm:$0x1]
  %v2715 = vld [vmem:[#allocation2 + $0x80] sm:$0x1]
  %v2716 = vld [vmem:[#allocation2 + $0x88] sm:$0x1]
  %v2735 = vrot.slane %v2705, 1
  %v2736 = vrot.slane %v2608, 1
  %v2737 = vsel %vm302, %v2735, %v2736
  %v2738 = vrot.slane %v2706, 1
  %v2739 = vrot.slane %v2609, 1
  %v2740 = vsel %vm302, %v2738, %v2739
  %v2741 = vrot.slane %v2707, 1
  %v2742 = vrot.slane %v2610, 1
  %v2743 = vsel %vm302, %v2741, %v2742
  %v2744 = vrot.slane %v2708, 1
  %v2745 = vsel %vm302, %v2736, %v2744
  %v2746 = vrot.slane %v2709, 1
  %v2747 = vsel %vm302, %v2739, %v2746
  %v2748 = vrot.slane %v2710, 1
  %v2749 = vsel %vm302, %v2742, %v2748
  %v2750 = vrot.slane %v2711, 1
  %v2751 = vrot.slane %v2614, 1
  %v2752 = vsel %vm302, %v2750, %v2751
  %v2753 = vrot.slane %v2712, 1
  %v2754 = vrot.slane %v2615, 1
  %v2755 = vsel %vm302, %v2753, %v2754
  %v2756 = vrot.slane %v2713, 1
  %v2757 = vrot.slane %v2616, 1
  %v2758 = vsel %vm302, %v2756, %v2757
  %v2759 = vrot.slane %v2714, 1
  %v2760 = vsel %vm302, %v2751, %v2759
  %v2761 = vrot.slane %v2715, 1
  %v2762 = vsel %vm302, %v2754, %v2761
  %v2763 = vrot.slane %v2716, 1
  %v2764 = vsel %vm302, %v2757, %v2763
  %v2773 = vld [vmem:[%s341] sm:$0xff]
  %v2774 = vld [vmem:[%s341 + $0x8] sm:$0xff]
  %v2775 = vld [vmem:[%s341 + $0x10] sm:$0xff]
  %v2776 = vld [vmem:[%s341 + $0x18] sm:$0xff]
  %v2777 = vld [vmem:[%s341 + $0x20] sm:$0xff]
  %v2778 = vld [vmem:[%s341 + $0x28] sm:$0xff]
  %v2779 = vld [vmem:[%s341 + $0x30] sm:$0xff]
  %v2780 = vld [vmem:[%s341 + $0x38] sm:$0xff]
  %v2781 = vld [vmem:[%s341 + $0x40] sm:$0xff]
  %v2782 = vld [vmem:[%s341 + $0x48] sm:$0xff]
  %v2783 = vld [vmem:[%s341 + $0x50] sm:$0xff]
  %v2784 = vld [vmem:[%s341 + $0x58] sm:$0xff]
  %v2785 = vld [vmem:[%s341 + $0x60] sm:$0xff]
  %v2786 = vld [vmem:[%s341 + $0x68] sm:$0xff]
  %v2787 = vld [vmem:[%s341 + $0x70] sm:$0xff]
  %v2788 = vld [vmem:[%s341 + $0x78] sm:$0xff]
  %v2789 = vld [vmem:[%s341 + $0x80] sm:$0xff]
  %v2790 = vld [vmem:[%s341 + $0x88] sm:$0xff]
  %v2791 = vld [vmem:[%s341 + $0x90] sm:$0xff]
  %v2792 = vld [vmem:[%s341 + $0x98] sm:$0xff]
  %v2793 = vld [vmem:[%s341 + $0xa0] sm:$0xff]
  %v2794 = vld [vmem:[%s341 + $0xa8] sm:$0xff]
  %v2795 = vld [vmem:[%s341 + $0xb0] sm:$0xff]
  %v2796 = vld [vmem:[%s341 + $0xb8] sm:$0xff]
  %v2797 = vld [vmem:[%s341 + $0xc0] sm:$0xff]
  %v2798 = vld [vmem:[%s341 + $0xc8] sm:$0xff]
  %v2799 = vld [vmem:[%s341 + $0xd0] sm:$0xff]
  %v2800 = vld [vmem:[%s341 + $0xd8] sm:$0xff]
  %v2801 = vld [vmem:[%s341 + $0xe0] sm:$0xff]
  %v2802 = vld [vmem:[%s341 + $0xe8] sm:$0xff]
  %v2803 = vld [vmem:[%s341 + $0xf0] sm:$0xff]
  %v2804 = vld [vmem:[%s341 + $0xf8] sm:$0xff]
  %v2805 = vld [vmem:[%s341 + $0x100] sm:$0xff]
  %v2806 = vld [vmem:[%s341 + $0x108] sm:$0xff]
  %v2807 = vld [vmem:[%s341 + $0x110] sm:$0xff]
  %v2808 = vld [vmem:[%s341 + $0x118] sm:$0xff]
  %v2809 = vld [vmem:[%s341 + $0x120] sm:$0xff]
  %v2810 = vld [vmem:[%s341 + $0x128] sm:$0xff]
  %v2811 = vld [vmem:[%s341 + $0x130] sm:$0xff]
  %v2812 = vld [vmem:[%s341 + $0x138] sm:$0xff]
  %v2813 = vld [vmem:[%s341 + $0x140] sm:$0xff]
  %v2814 = vld [vmem:[%s341 + $0x148] sm:$0xff]
  %v2815 = vld [vmem:[%s341 + $0x150] sm:$0xff]
  %v2816 = vld [vmem:[%s341 + $0x158] sm:$0xff]
  %v2817 = vld [vmem:[%s341 + $0x160] sm:$0xff]
  %v2818 = vld [vmem:[%s341 + $0x168] sm:$0xff]
  %v2819 = vld [vmem:[%s341 + $0x170] sm:$0xff]
  %v2820 = vld [vmem:[%s341 + $0x178] sm:$0xff]
  %v2821 = vld [vmem:[%s341 + $0x180] sm:$0xff]
  %v2822 = vld [vmem:[%s341 + $0x188] sm:$0xff]
  %v2823 = vld [vmem:[%s341 + $0x190] sm:$0xff]
  %v2824 = vld [vmem:[%s341 + $0x198] sm:$0xff]
  %v2825 = vld [vmem:[%s341 + $0x1a0] sm:$0xff]
  %v2826 = vld [vmem:[%s341 + $0x1a8] sm:$0xff]
  %v2827 = vld [vmem:[%s341 + $0x1b0] sm:$0xff]
  %v2828 = vld [vmem:[%s341 + $0x1b8] sm:$0xff]
  %v2829 = vld [vmem:[%s341 + $0x1c0] sm:$0xff]
  %v2830 = vld [vmem:[%s341 + $0x1c8] sm:$0xff]
  %v2831 = vld [vmem:[%s341 + $0x1d0] sm:$0xff]
  %v2832 = vld [vmem:[%s341 + $0x1d8] sm:$0xff]
  %v2833 = vld [vmem:[%s341 + $0x1e0] sm:$0xff]
  %v2834 = vld [vmem:[%s341 + $0x1e8] sm:$0xff]
  %v2835 = vld [vmem:[%s341 + $0x1f0] sm:$0xff]
  %v2836 = vld [vmem:[%s341 + $0x1f8] sm:$0xff]
  %v2837 = vld [vmem:[%s341 + $0x200] sm:$0xff]
  %v2838 = vld [vmem:[%s341 + $0x208] sm:$0xff]
  %v2839 = vld [vmem:[%s341 + $0x210] sm:$0xff]
  %v2840 = vld [vmem:[%s341 + $0x218] sm:$0xff]
  %v2841 = vld [vmem:[%s341 + $0x220] sm:$0xff]
  %v2842 = vld [vmem:[%s341 + $0x228] sm:$0xff]
  %v2843 = vld [vmem:[%s341 + $0x230] sm:$0xff]
  %v2844 = vld [vmem:[%s341 + $0x238] sm:$0xff]
  %v2845 = vld [vmem:[%s341 + $0x240] sm:$0xff]
  %v2846 = vld [vmem:[%s341 + $0x248] sm:$0xff]
  %v2847 = vld [vmem:[%s341 + $0x250] sm:$0xff]
  %v2848 = vld [vmem:[%s341 + $0x258] sm:$0xff]
  %v2849 = vld [vmem:[%s341 + $0x260] sm:$0xff]
  %v2850 = vld [vmem:[%s341 + $0x268] sm:$0xff]
  %v2851 = vld [vmem:[%s341 + $0x270] sm:$0xff]
  %v2852 = vld [vmem:[%s341 + $0x278] sm:$0xff]
  %v2853 = vld [vmem:[%s341 + $0x280] sm:$0xff]
  %v2854 = vld [vmem:[%s341 + $0x288] sm:$0xff]
  %v2855 = vld [vmem:[%s341 + $0x290] sm:$0xff]
  %v2856 = vld [vmem:[%s341 + $0x298] sm:$0xff]
  %v2857 = vld [vmem:[%s341 + $0x2a0] sm:$0xff]
  %v2858 = vld [vmem:[%s341 + $0x2a8] sm:$0xff]
  %v2859 = vld [vmem:[%s341 + $0x2b0] sm:$0xff]
  %v2860 = vld [vmem:[%s341 + $0x2b8] sm:$0xff]
  %v2861 = vsel %vm33, %v2743, 0
  %v2863 = vsel %vm33, %v2749, 0
  %v2865 = vsel %vm33, %v2758, 0
  %v2867 = vsel %vm33, %v2764, 0
  %2869 = vmatpush.msra.mxu0 %v2803
  %2870 = vmatpush.msra.mxu0 %v2801
  %2871 = vmatpush.msra.mxu0 %v2799
  %2872 = vmatpush.msra.mxu0 %v2797
  %2873 = vmatpush.msra.mxu0 %v2795
  %2874 = vmatpush.msra.mxu0 %v2793
  %2875 = vmatpush.msra.mxu0 %v2791
  %2876 = vmatpush.msra.mxu0 %v2789
  %2877 = vmatpush.msra.mxu0 %v2787
  %2878 = vmatpush.msra.mxu0 %v2785
  %2879 = vmatpush.msra.mxu0 %v2783
  %2880 = vmatpush.msra.mxu0 %v2781
  %2881 = vmatpush.msra.mxu0 %v2779
  %2882 = vmatpush.msra.mxu0 %v2777
  %2883 = vmatpush.msra.mxu0 %v2775
  %2884 = vmatpush.msra.mxu0 %v2773
  %2885 = vmatmul.f32.gmra.mxu0 %v2737
  %v2886 = vpop.f32.mrf.mxu0
  %v2887 = vadd.f32 0.0, %v2886
  %2888 = vmatmul.f32.gmra.mxu0 %v2745
  %v2889 = vpop.f32.mrf.mxu0
  %v2890 = vadd.f32 0.0, %v2889
  %2891 = vmatmul.f32.gmra.mxu0 %v2752
  %v2892 = vpop.f32.mrf.mxu0
  %v2893 = vadd.f32 0.0, %v2892
  %2894 = vmatmul.f32.gmra.mxu0 %v2760
  %v2895 = vpop.f32.mrf.mxu0
  %v2896 = vadd.f32 0.0, %v2895
  %2897 = vdwg.mxu0
  %2898 = vmatpush.msra.mxu0 %v2835
  %2899 = vmatpush.msra.mxu0 %v2833
  %2900 = vmatpush.msra.mxu0 %v2831
  %2901 = vmatpush.msra.mxu0 %v2829
  %2902 = vmatpush.msra.mxu0 %v2827
  %2903 = vmatpush.msra.mxu0 %v2825
  %2904 = vmatpush.msra.mxu0 %v2823
  %2905 = vmatpush.msra.mxu0 %v2821
  %2906 = vmatpush.msra.mxu0 %v2819
  %2907 = vmatpush.msra.mxu0 %v2817
  %2908 = vmatpush.msra.mxu0 %v2815
  %2909 = vmatpush.msra.mxu0 %v2813
  %2910 = vmatpush.msra.mxu0 %v2811
  %2911 = vmatpush.msra.mxu0 %v2809
  %2912 = vmatpush.msra.mxu0 %v2807
  %2913 = vmatpush.msra.mxu0 %v2805
  %2914 = vmatmul.f32.gmra.mxu0 %v2740
  %v2915 = vpop.f32.mrf.mxu0
  %v2916 = vadd.f32 %v2887, %v2915
  %2917 = vmatmul.f32.gmra.mxu0 %v2747
  %v2918 = vpop.f32.mrf.mxu0
  %v2919 = vadd.f32 %v2890, %v2918
  %2920 = vmatmul.f32.gmra.mxu0 %v2755
  %v2921 = vpop.f32.mrf.mxu0
  %v2922 = vadd.f32 %v2893, %v2921
  %2923 = vmatmul.f32.gmra.mxu0 %v2762
  %v2924 = vpop.f32.mrf.mxu0
  %v2925 = vadd.f32 %v2896, %v2924
  %2926 = vdwg.mxu0
  %2927 = vmatpush.msra.mxu0 0.0
  %2928 = vmatpush.msra.mxu0 0.0
  %2929 = vmatpush.msra.mxu0 0.0
  %2930 = vmatpush.msra.mxu0 0.0
  %2931 = vmatpush.msra.mxu0 %v2859
  %2932 = vmatpush.msra.mxu0 %v2857
  %2933 = vmatpush.msra.mxu0 %v2855
  %2934 = vmatpush.msra.mxu0 %v2853
  %2935 = vmatpush.msra.mxu0 %v2851
  %2936 = vmatpush.msra.mxu0 %v2849
  %2937 = vmatpush.msra.mxu0 %v2847
  %2938 = vmatpush.msra.mxu0 %v2845
  %2939 = vmatpush.msra.mxu0 %v2843
  %2940 = vmatpush.msra.mxu0 %v2841
  %2941 = vmatpush.msra.mxu0 %v2839
  %2942 = vmatpush.msra.mxu0 %v2837
  %2943 = vmatmul.f32.gmra.mxu0 %v2861
  %v2944 = vpop.f32.mrf.mxu0
  %v2945 = vadd.f32 %v2916, %v2944
  %2946 = vmatmul.f32.gmra.mxu0 %v2863
  %v2947 = vpop.f32.mrf.mxu0
  %v2948 = vadd.f32 %v2919, %v2947
  %2949 = vmatmul.f32.gmra.mxu0 %v2865
  %v2950 = vpop.f32.mrf.mxu0
  %v2951 = vadd.f32 %v2922, %v2950
  %2952 = vmatmul.f32.gmra.mxu0 %v2867
  %v2953 = vpop.f32.mrf.mxu0
  %v2954 = vadd.f32 %v2925, %v2953
  %2955 = vdwg.mxu0
  %2956 = vmatpush.msra.mxu0 %v2804
  %2957 = vmatpush.msra.mxu0 %v2802
  %2958 = vmatpush.msra.mxu0 %v2800
  %2959 = vmatpush.msra.mxu0 %v2798
  %2960 = vmatpush.msra.mxu0 %v2796
  %2961 = vmatpush.msra.mxu0 %v2794
  %2962 = vmatpush.msra.mxu0 %v2792
  %2963 = vmatpush.msra.mxu0 %v2790
  %2964 = vmatpush.msra.mxu0 %v2788
  %2965 = vmatpush.msra.mxu0 %v2786
  %2966 = vmatpush.msra.mxu0 %v2784
  %2967 = vmatpush.msra.mxu0 %v2782
  %2968 = vmatpush.msra.mxu0 %v2780
  %2969 = vmatpush.msra.mxu0 %v2778
  %2970 = vmatpush.msra.mxu0 %v2776
  %2971 = vmatpush.msra.mxu0 %v2774
  %2972 = vmatmul.f32.gmra.mxu0 %v2737
  %v2973 = vpop.f32.mrf.mxu0
  %v2974 = vadd.f32 0.0, %v2973
  %2975 = vmatmul.f32.gmra.mxu0 %v2745
  %v2976 = vpop.f32.mrf.mxu0
  %v2977 = vadd.f32 0.0, %v2976
  %2978 = vmatmul.f32.gmra.mxu0 %v2752
  %v2979 = vpop.f32.mrf.mxu0
  %v2980 = vadd.f32 0.0, %v2979
  %2981 = vmatmul.f32.gmra.mxu0 %v2760
  %v2982 = vpop.f32.mrf.mxu0
  %v2983 = vadd.f32 0.0, %v2982
  %2984 = vdwg.mxu0
  %2985 = vmatpush.msra.mxu0 %v2836
  %2986 = vmatpush.msra.mxu0 %v2834
  %2987 = vmatpush.msra.mxu0 %v2832
  %2988 = vmatpush.msra.mxu0 %v2830
  %2989 = vmatpush.msra.mxu0 %v2828
  %2990 = vmatpush.msra.mxu0 %v2826
  %2991 = vmatpush.msra.mxu0 %v2824
  %2992 = vmatpush.msra.mxu0 %v2822
  %2993 = vmatpush.msra.mxu0 %v2820
  %2994 = vmatpush.msra.mxu0 %v2818
  %2995 = vmatpush.msra.mxu0 %v2816
  %2996 = vmatpush.msra.mxu0 %v2814
  %2997 = vmatpush.msra.mxu0 %v2812
  %2998 = vmatpush.msra.mxu0 %v2810
  %2999 = vmatpush.msra.mxu0 %v2808
  %3000 = vmatpush.msra.mxu0 %v2806
  %3001 = vmatmul.f32.gmra.mxu0 %v2740
  %v3002 = vpop.f32.mrf.mxu0
  %v3003 = vadd.f32 %v2974, %v3002
  %3004 = vmatmul.f32.gmra.mxu0 %v2747
  %v3005 = vpop.f32.mrf.mxu0
  %v3006 = vadd.f32 %v2977, %v3005
  %3007 = vmatmul.f32.gmra.mxu0 %v2755
  %v3008 = vpop.f32.mrf.mxu0
  %v3009 = vadd.f32 %v2980, %v3008
  %3010 = vmatmul.f32.gmra.mxu0 %v2762
  %v3011 = vpop.f32.mrf.mxu0
  %v3012 = vadd.f32 %v2983, %v3011
  %3013 = vdwg.mxu0
  %3014 = vmatpush.msra.mxu0 0.0
  %3015 = vmatpush.msra.mxu0 0.0
  %3016 = vmatpush.msra.mxu0 0.0
  %3017 = vmatpush.msra.mxu0 0.0
  %3018 = vmatpush.msra.mxu0 %v2860
  %3019 = vmatpush.msra.mxu0 %v2858
  %3020 = vmatpush.msra.mxu0 %v2856
  %3021 = vmatpush.msra.mxu0 %v2854
  %3022 = vmatpush.msra.mxu0 %v2852
  %3023 = vmatpush.msra.mxu0 %v2850
  %3024 = vmatpush.msra.mxu0 %v2848
  %3025 = vmatpush.msra.mxu0 %v2846
  %3026 = vmatpush.msra.mxu0 %v2844
  %3027 = vmatpush.msra.mxu0 %v2842
  %3028 = vmatpush.msra.mxu0 %v2840
  %3029 = vmatpush.msra.mxu0 %v2838
  %3030 = vmatmul.f32.gmra.mxu0 %v2861
  %v3031 = vpop.f32.mrf.mxu0
  %v3032 = vadd.f32 %v3003, %v3031
  %3033 = vmatmul.f32.gmra.mxu0 %v2863
  %v3034 = vpop.f32.mrf.mxu0
  %v3035 = vadd.f32 %v3006, %v3034
  %3036 = vmatmul.f32.gmra.mxu0 %v2865
  %v3037 = vpop.f32.mrf.mxu0
  %v3038 = vadd.f32 %v3009, %v3037
  %3039 = vmatmul.f32.gmra.mxu0 %v2867
  %v3040 = vpop.f32.mrf.mxu0
  %v3041 = vadd.f32 %v3012, %v3040
  %3042 = vdwg.mxu0
  %v3044 = vsel %vm33, %v2607, 0
  %v3046 = vsel %vm33, %v2610, 0
  %v3049 = vsel %vm33, %v2613, 0
  %v3051 = vsel %vm33, %v2616, 0
  %3053 = vmatpush.msra.mxu0 %v2647
  %3054 = vmatpush.msra.mxu0 %v2645
  %3055 = vmatpush.msra.mxu0 %v2643
  %3056 = vmatpush.msra.mxu0 %v2641
  %3057 = vmatpush.msra.mxu0 %v2639
  %3058 = vmatpush.msra.mxu0 %v2637
  %3059 = vmatpush.msra.mxu0 %v2635
  %3060 = vmatpush.msra.mxu0 %v2633
  %3061 = vmatpush.msra.mxu0 %v2631
  %3062 = vmatpush.msra.mxu0 %v2629
  %3063 = vmatpush.msra.mxu0 %v2627
  %3064 = vmatpush.msra.mxu0 %v2625
  %3065 = vmatpush.msra.mxu0 %v2623
  %3066 = vmatpush.msra.mxu0 %v2621
  %3067 = vmatpush.msra.mxu0 %v2619
  %3068 = vmatpush.msra.mxu0 %v2617
  %3069 = vmatmul.f32.gmra.mxu0 %v2605
  %v3070 = vpop.f32.mrf.mxu0
  %v3071 = vadd.f32 %v2945, %v3070
  %3072 = vmatmul.f32.gmra.mxu0 %v2608
  %v3073 = vpop.f32.mrf.mxu0
  %v3074 = vadd.f32 %v2948, %v3073
  %3075 = vmatmul.f32.gmra.mxu0 %v2611
  %v3076 = vpop.f32.mrf.mxu0
  %v3077 = vadd.f32 %v2951, %v3076
  %3078 = vmatmul.f32.gmra.mxu0 %v2614
  %v3079 = vpop.f32.mrf.mxu0
  %v3080 = vadd.f32 %v2954, %v3079
  %3081 = vdwg.mxu0
  %3082 = vmatpush.msra.mxu0 %v2679
  %3083 = vmatpush.msra.mxu0 %v2677
  %3084 = vmatpush.msra.mxu0 %v2675
  %3085 = vmatpush.msra.mxu0 %v2673
  %3086 = vmatpush.msra.mxu0 %v2671
  %3087 = vmatpush.msra.mxu0 %v2669
  %3088 = vmatpush.msra.mxu0 %v2667
  %3089 = vmatpush.msra.mxu0 %v2665
  %3090 = vmatpush.msra.mxu0 %v2663
  %3091 = vmatpush.msra.mxu0 %v2661
  %3092 = vmatpush.msra.mxu0 %v2659
  %3093 = vmatpush.msra.mxu0 %v2657
  %3094 = vmatpush.msra.mxu0 %v2655
  %3095 = vmatpush.msra.mxu0 %v2653
  %3096 = vmatpush.msra.mxu0 %v2651
  %3097 = vmatpush.msra.mxu0 %v2649
  %3098 = vmatmul.f32.gmra.mxu0 %v2606
  %v3099 = vpop.f32.mrf.mxu0
  %v3100 = vadd.f32 %v3071, %v3099
  %3101 = vmatmul.f32.gmra.mxu0 %v2609
  %v3102 = vpop.f32.mrf.mxu0
  %v3103 = vadd.f32 %v3074, %v3102
  %3104 = vmatmul.f32.gmra.mxu0 %v2612
  %v3105 = vpop.f32.mrf.mxu0
  %v3106 = vadd.f32 %v3077, %v3105
  %3107 = vmatmul.f32.gmra.mxu0 %v2615
  %v3108 = vpop.f32.mrf.mxu0
  %v3109 = vadd.f32 %v3080, %v3108
  %3110 = vdwg.mxu0
  %3111 = vmatpush.msra.mxu0 0.0
  %3112 = vmatpush.msra.mxu0 0.0
  %3113 = vmatpush.msra.mxu0 0.0
  %3114 = vmatpush.msra.mxu0 0.0
  %3115 = vmatpush.msra.mxu0 %v2703
  %3116 = vmatpush.msra.mxu0 %v2701
  %3117 = vmatpush.msra.mxu0 %v2699
  %3118 = vmatpush.msra.mxu0 %v2697
  %3119 = vmatpush.msra.mxu0 %v2695
  %3120 = vmatpush.msra.mxu0 %v2693
  %3121 = vmatpush.msra.mxu0 %v2691
  %3122 = vmatpush.msra.mxu0 %v2689
  %3123 = vmatpush.msra.mxu0 %v2687
  %3124 = vmatpush.msra.mxu0 %v2685
  %3125 = vmatpush.msra.mxu0 %v2683
  %3126 = vmatpush.msra.mxu0 %v2681
  %3127 = vmatmul.f32.gmra.mxu0 %v3044
  %v3128 = vpop.f32.mrf.mxu0
  %v3129 = vadd.f32 %v3100, %v3128
  %3130 = vmatmul.f32.gmra.mxu0 %v3046
  %v3131 = vpop.f32.mrf.mxu0
  %v3132 = vadd.f32 %v3103, %v3131
  %3133 = vmatmul.f32.gmra.mxu0 %v3049
  %v3134 = vpop.f32.mrf.mxu0
  %v3135 = vadd.f32 %v3106, %v3134
  %3136 = vmatmul.f32.gmra.mxu0 %v3051
  %v3137 = vpop.f32.mrf.mxu0
  %v3138 = vadd.f32 %v3109, %v3137
  %3139 = vdwg.mxu0
  %3140 = vmatpush.msra.mxu0 %v2648
  %3141 = vmatpush.msra.mxu0 %v2646
  %3142 = vmatpush.msra.mxu0 %v2644
  %3143 = vmatpush.msra.mxu0 %v2642
  %3144 = vmatpush.msra.mxu0 %v2640
  %3145 = vmatpush.msra.mxu0 %v2638
  %3146 = vmatpush.msra.mxu0 %v2636
  %3147 = vmatpush.msra.mxu0 %v2634
  %3148 = vmatpush.msra.mxu0 %v2632
  %3149 = vmatpush.msra.mxu0 %v2630
  %3150 = vmatpush.msra.mxu0 %v2628
  %3151 = vmatpush.msra.mxu0 %v2626
  %3152 = vmatpush.msra.mxu0 %v2624
  %3153 = vmatpush.msra.mxu0 %v2622
  %3154 = vmatpush.msra.mxu0 %v2620
  %3155 = vmatpush.msra.mxu0 %v2618
  %3156 = vmatmul.f32.gmra.mxu0 %v2605
  %v3157 = vpop.f32.mrf.mxu0
  %v3158 = vadd.f32 %v3032, %v3157
  %3159 = vmatmul.f32.gmra.mxu0 %v2608
  %v3160 = vpop.f32.mrf.mxu0
  %v3161 = vadd.f32 %v3035, %v3160
  %3162 = vmatmul.f32.gmra.mxu0 %v2611
  %v3163 = vpop.f32.mrf.mxu0
  %v3164 = vadd.f32 %v3038, %v3163
  %3165 = vmatmul.f32.gmra.mxu0 %v2614
  %v3166 = vpop.f32.mrf.mxu0
  %v3167 = vadd.f32 %v3041, %v3166
  %3168 = vdwg.mxu0
  %3169 = vmatpush.msra.mxu0 %v2680
  %3170 = vmatpush.msra.mxu0 %v2678
  %3171 = vmatpush.msra.mxu0 %v2676
  %3172 = vmatpush.msra.mxu0 %v2674
  %3173 = vmatpush.msra.mxu0 %v2672
  %3174 = vmatpush.msra.mxu0 %v2670
  %3175 = vmatpush.msra.mxu0 %v2668
  %3176 = vmatpush.msra.mxu0 %v2666
  %3177 = vmatpush.msra.mxu0 %v2664
  %3178 = vmatpush.msra.mxu0 %v2662
  %3179 = vmatpush.msra.mxu0 %v2660
  %3180 = vmatpush.msra.mxu0 %v2658
  %3181 = vmatpush.msra.mxu0 %v2656
  %3182 = vmatpush.msra.mxu0 %v2654
  %3183 = vmatpush.msra.mxu0 %v2652
  %3184 = vmatpush.msra.mxu0 %v2650
  %3185 = vmatmul.f32.gmra.mxu0 %v2606
  %v3186 = vpop.f32.mrf.mxu0
  %v3187 = vadd.f32 %v3158, %v3186
  %3188 = vmatmul.f32.gmra.mxu0 %v2609
  %v3189 = vpop.f32.mrf.mxu0
  %v3190 = vadd.f32 %v3161, %v3189
  %3191 = vmatmul.f32.gmra.mxu0 %v2612
  %v3192 = vpop.f32.mrf.mxu0
  %v3193 = vadd.f32 %v3164, %v3192
  %3194 = vmatmul.f32.gmra.mxu0 %v2615
  %v3195 = vpop.f32.mrf.mxu0
  %v3196 = vadd.f32 %v3167, %v3195
  %3197 = vdwg.mxu0
  %3198 = vmatpush.msra.mxu0 0.0
  %3199 = vmatpush.msra.mxu0 0.0
  %3200 = vmatpush.msra.mxu0 0.0
  %3201 = vmatpush.msra.mxu0 0.0
  %3202 = vmatpush.msra.mxu0 %v2704
  %3203 = vmatpush.msra.mxu0 %v2702
  %3204 = vmatpush.msra.mxu0 %v2700
  %3205 = vmatpush.msra.mxu0 %v2698
  %3206 = vmatpush.msra.mxu0 %v2696
  %3207 = vmatpush.msra.mxu0 %v2694
  %3208 = vmatpush.msra.mxu0 %v2692
  %3209 = vmatpush.msra.mxu0 %v2690
  %3210 = vmatpush.msra.mxu0 %v2688
  %3211 = vmatpush.msra.mxu0 %v2686
  %3212 = vmatpush.msra.mxu0 %v2684
  %3213 = vmatpush.msra.mxu0 %v2682
  %3214 = vmatmul.f32.gmra.mxu0 %v3044
  %v3215 = vpop.f32.mrf.mxu0
  %v3216 = vadd.f32 %v3187, %v3215
  %3217 = vmatmul.f32.gmra.mxu0 %v3046
  %v3218 = vpop.f32.mrf.mxu0
  %v3219 = vadd.f32 %v3190, %v3218
  %3220 = vmatmul.f32.gmra.mxu0 %v3049
  %v3221 = vpop.f32.mrf.mxu0
  %v3222 = vadd.f32 %v3193, %v3221
  %3223 = vmatmul.f32.gmra.mxu0 %v3051
  %v3224 = vpop.f32.mrf.mxu0
  %v3225 = vadd.f32 %v3196, %v3224
  %3226 = vdwg.mxu0
  %v3227 = vld [vmem:[#allocation2] sm:$0xfc]
  %v3228 = vld [vmem:[#allocation2 + $0x8] sm:$0xfc]
  %v3229 = vld [vmem:[#allocation2 + $0x10] sm:$0xfc]
  %v3230 = vld [vmem:[#allocation2 + $0x30] sm:$0x3]
  %v3231 = vld [vmem:[#allocation2 + $0x38] sm:$0x3]
  %v3232 = vld [vmem:[#allocation2 + $0x40] sm:$0x3]
  %v3233 = vld [vmem:[#allocation2 + $0x48] sm:$0xfc]
  %v3234 = vld [vmem:[#allocation2 + $0x50] sm:$0xfc]
  %v3235 = vld [vmem:[#allocation2 + $0x58] sm:$0xfc]
  %v3236 = vld [vmem:[#allocation2 + $0x78] sm:$0x3]
  %v3237 = vld [vmem:[#allocation2 + $0x80] sm:$0x3]
  %v3238 = vld [vmem:[#allocation2 + $0x88] sm:$0x3]
  %v3251 = vrot.slane %v3227, 2
  %v3252 = vrot.slane %v2608, 2
  %v3253 = vsel %vm820, %v3251, %v3252
  %v3254 = vrot.slane %v3228, 2
  %v3255 = vrot.slane %v2609, 2
  %v3256 = vsel %vm820, %v3254, %v3255
  %v3257 = vrot.slane %v3229, 2
  %v3258 = vrot.slane %v2610, 2
  %v3259 = vsel %vm820, %v3257, %v3258
  %v3260 = vrot.slane %v3230, 2
  %v3261 = vsel %vm820, %v3252, %v3260
  %v3262 = vrot.slane %v3231, 2
  %v3263 = vsel %vm820, %v3255, %v3262
  %v3264 = vrot.slane %v3232, 2
  %v3265 = vsel %vm820, %v3258, %v3264
  %v3266 = vrot.slane %v3233, 2
  %v3267 = vrot.slane %v2614, 2
  %v3268 = vsel %vm820, %v3266, %v3267
  %v3269 = vrot.slane %v3234, 2
  %v3270 = vrot.slane %v2615, 2
  %v3271 = vsel %vm820, %v3269, %v3270
  %v3272 = vrot.slane %v3235, 2
  %v3273 = vrot.slane %v2616, 2
  %v3274 = vsel %vm820, %v3272, %v3273
  %v3275 = vrot.slane %v3236, 2
  %v3276 = vsel %vm820, %v3267, %v3275
  %v3277 = vrot.slane %v3237, 2
  %v3278 = vsel %vm820, %v3270, %v3277
  %v3279 = vrot.slane %v3238, 2
  %v3280 = vsel %vm820, %v3273, %v3279
  %v3289 = vld [vmem:[%s859] sm:$0xff]
  %v3290 = vld [vmem:[%s859 + $0x8] sm:$0xff]
  %v3291 = vld [vmem:[%s859 + $0x10] sm:$0xff]
  %v3292 = vld [vmem:[%s859 + $0x18] sm:$0xff]
  %v3293 = vld [vmem:[%s859 + $0x20] sm:$0xff]
  %v3294 = vld [vmem:[%s859 + $0x28] sm:$0xff]
  %v3295 = vld [vmem:[%s859 + $0x30] sm:$0xff]
  %v3296 = vld [vmem:[%s859 + $0x38] sm:$0xff]
  %v3297 = vld [vmem:[%s859 + $0x40] sm:$0xff]
  %v3298 = vld [vmem:[%s859 + $0x48] sm:$0xff]
  %v3299 = vld [vmem:[%s859 + $0x50] sm:$0xff]
  %v3300 = vld [vmem:[%s859 + $0x58] sm:$0xff]
  %v3301 = vld [vmem:[%s859 + $0x60] sm:$0xff]
  %v3302 = vld [vmem:[%s859 + $0x68] sm:$0xff]
  %v3303 = vld [vmem:[%s859 + $0x70] sm:$0xff]
  %v3304 = vld [vmem:[%s859 + $0x78] sm:$0xff]
  %v3305 = vld [vmem:[%s859 + $0x80] sm:$0xff]
  %v3306 = vld [vmem:[%s859 + $0x88] sm:$0xff]
  %v3307 = vld [vmem:[%s859 + $0x90] sm:$0xff]
  %v3308 = vld [vmem:[%s859 + $0x98] sm:$0xff]
  %v3309 = vld [vmem:[%s859 + $0xa0] sm:$0xff]
  %v3310 = vld [vmem:[%s859 + $0xa8] sm:$0xff]
  %v3311 = vld [vmem:[%s859 + $0xb0] sm:$0xff]
  %v3312 = vld [vmem:[%s859 + $0xb8] sm:$0xff]
  %v3313 = vld [vmem:[%s859 + $0xc0] sm:$0xff]
  %v3314 = vld [vmem:[%s859 + $0xc8] sm:$0xff]
  %v3315 = vld [vmem:[%s859 + $0xd0] sm:$0xff]
  %v3316 = vld [vmem:[%s859 + $0xd8] sm:$0xff]
  %v3317 = vld [vmem:[%s859 + $0xe0] sm:$0xff]
  %v3318 = vld [vmem:[%s859 + $0xe8] sm:$0xff]
  %v3319 = vld [vmem:[%s859 + $0xf0] sm:$0xff]
  %v3320 = vld [vmem:[%s859 + $0xf8] sm:$0xff]
  %v3321 = vld [vmem:[%s859 + $0x100] sm:$0xff]
  %v3322 = vld [vmem:[%s859 + $0x108] sm:$0xff]
  %v3323 = vld [vmem:[%s859 + $0x110] sm:$0xff]
  %v3324 = vld [vmem:[%s859 + $0x118] sm:$0xff]
  %v3325 = vld [vmem:[%s859 + $0x120] sm:$0xff]
  %v3326 = vld [vmem:[%s859 + $0x128] sm:$0xff]
  %v3327 = vld [vmem:[%s859 + $0x130] sm:$0xff]
  %v3328 = vld [vmem:[%s859 + $0x138] sm:$0xff]
  %v3329 = vld [vmem:[%s859 + $0x140] sm:$0xff]
  %v3330 = vld [vmem:[%s859 + $0x148] sm:$0xff]
  %v3331 = vld [vmem:[%s859 + $0x150] sm:$0xff]
  %v3332 = vld [vmem:[%s859 + $0x158] sm:$0xff]
  %v3333 = vld [vmem:[%s859 + $0x160] sm:$0xff]
  %v3334 = vld [vmem:[%s859 + $0x168] sm:$0xff]
  %v3335 = vld [vmem:[%s859 + $0x170] sm:$0xff]
  %v3336 = vld [vmem:[%s859 + $0x178] sm:$0xff]
  %v3337 = vld [vmem:[%s859 + $0x180] sm:$0xff]
  %v3338 = vld [vmem:[%s859 + $0x188] sm:$0xff]
  %v3339 = vld [vmem:[%s859 + $0x190] sm:$0xff]
  %v3340 = vld [vmem:[%s859 + $0x198] sm:$0xff]
  %v3341 = vld [vmem:[%s859 + $0x1a0] sm:$0xff]
  %v3342 = vld [vmem:[%s859 + $0x1a8] sm:$0xff]
  %v3343 = vld [vmem:[%s859 + $0x1b0] sm:$0xff]
  %v3344 = vld [vmem:[%s859 + $0x1b8] sm:$0xff]
  %v3345 = vld [vmem:[%s859 + $0x1c0] sm:$0xff]
  %v3346 = vld [vmem:[%s859 + $0x1c8] sm:$0xff]
  %v3347 = vld [vmem:[%s859 + $0x1d0] sm:$0xff]
  %v3348 = vld [vmem:[%s859 + $0x1d8] sm:$0xff]
  %v3349 = vld [vmem:[%s859 + $0x1e0] sm:$0xff]
  %v3350 = vld [vmem:[%s859 + $0x1e8] sm:$0xff]
  %v3351 = vld [vmem:[%s859 + $0x1f0] sm:$0xff]
  %v3352 = vld [vmem:[%s859 + $0x1f8] sm:$0xff]
  %v3353 = vld [vmem:[%s859 + $0x200] sm:$0xff]
  %v3354 = vld [vmem:[%s859 + $0x208] sm:$0xff]
  %v3355 = vld [vmem:[%s859 + $0x210] sm:$0xff]
  %v3356 = vld [vmem:[%s859 + $0x218] sm:$0xff]
  %v3357 = vld [vmem:[%s859 + $0x220] sm:$0xff]
  %v3358 = vld [vmem:[%s859 + $0x228] sm:$0xff]
  %v3359 = vld [vmem:[%s859 + $0x230] sm:$0xff]
  %v3360 = vld [vmem:[%s859 + $0x238] sm:$0xff]
  %v3361 = vld [vmem:[%s859 + $0x240] sm:$0xff]
  %v3362 = vld [vmem:[%s859 + $0x248] sm:$0xff]
  %v3363 = vld [vmem:[%s859 + $0x250] sm:$0xff]
  %v3364 = vld [vmem:[%s859 + $0x258] sm:$0xff]
  %v3365 = vld [vmem:[%s859 + $0x260] sm:$0xff]
  %v3366 = vld [vmem:[%s859 + $0x268] sm:$0xff]
  %v3367 = vld [vmem:[%s859 + $0x270] sm:$0xff]
  %v3368 = vld [vmem:[%s859 + $0x278] sm:$0xff]
  %v3369 = vld [vmem:[%s859 + $0x280] sm:$0xff]
  %v3370 = vld [vmem:[%s859 + $0x288] sm:$0xff]
  %v3371 = vld [vmem:[%s859 + $0x290] sm:$0xff]
  %v3372 = vld [vmem:[%s859 + $0x298] sm:$0xff]
  %v3373 = vld [vmem:[%s859 + $0x2a0] sm:$0xff]
  %v3374 = vld [vmem:[%s859 + $0x2a8] sm:$0xff]
  %v3375 = vld [vmem:[%s859 + $0x2b0] sm:$0xff]
  %v3376 = vld [vmem:[%s859 + $0x2b8] sm:$0xff]
  %v3377 = vsel %vm33, %v3259, 0
  %v3379 = vsel %vm33, %v3265, 0
  %v3381 = vsel %vm33, %v3274, 0
  %v3383 = vsel %vm33, %v3280, 0
  %3385 = vmatpush.msra.mxu0 %v3319
  %3386 = vmatpush.msra.mxu0 %v3317
  %3387 = vmatpush.msra.mxu0 %v3315
  %3388 = vmatpush.msra.mxu0 %v3313
  %3389 = vmatpush.msra.mxu0 %v3311
  %3390 = vmatpush.msra.mxu0 %v3309
  %3391 = vmatpush.msra.mxu0 %v3307
  %3392 = vmatpush.msra.mxu0 %v3305
  %3393 = vmatpush.msra.mxu0 %v3303
  %3394 = vmatpush.msra.mxu0 %v3301
  %3395 = vmatpush.msra.mxu0 %v3299
  %3396 = vmatpush.msra.mxu0 %v3297
  %3397 = vmatpush.msra.mxu0 %v3295
  %3398 = vmatpush.msra.mxu0 %v3293
  %3399 = vmatpush.msra.mxu0 %v3291
  %3400 = vmatpush.msra.mxu0 %v3289
  %3401 = vmatmul.f32.gmra.mxu0 %v3253
  %v3402 = vpop.f32.mrf.mxu0
  %v3403 = vadd.f32 0.0, %v3402
  %3404 = vmatmul.f32.gmra.mxu0 %v3261
  %v3405 = vpop.f32.mrf.mxu0
  %v3406 = vadd.f32 0.0, %v3405
  %3407 = vmatmul.f32.gmra.mxu0 %v3268
  %v3408 = vpop.f32.mrf.mxu0
  %v3409 = vadd.f32 0.0, %v3408
  %3410 = vmatmul.f32.gmra.mxu0 %v3276
  %v3411 = vpop.f32.mrf.mxu0
  %v3412 = vadd.f32 0.0, %v3411
  %3413 = vdwg.mxu0
  %3414 = vmatpush.msra.mxu0 %v3351
  %3415 = vmatpush.msra.mxu0 %v3349
  %3416 = vmatpush.msra.mxu0 %v3347
  %3417 = vmatpush.msra.mxu0 %v3345
  %3418 = vmatpush.msra.mxu0 %v3343
  %3419 = vmatpush.msra.mxu0 %v3341
  %3420 = vmatpush.msra.mxu0 %v3339
  %3421 = vmatpush.msra.mxu0 %v3337
  %3422 = vmatpush.msra.mxu0 %v3335
  %3423 = vmatpush.msra.mxu0 %v3333
  %3424 = vmatpush.msra.mxu0 %v3331
  %3425 = vmatpush.msra.mxu0 %v3329
  %3426 = vmatpush.msra.mxu0 %v3327
  %3427 = vmatpush.msra.mxu0 %v3325
  %3428 = vmatpush.msra.mxu0 %v3323
  %3429 = vmatpush.msra.mxu0 %v3321
  %3430 = vmatmul.f32.gmra.mxu0 %v3256
  %v3431 = vpop.f32.mrf.mxu0
  %v3432 = vadd.f32 %v3403, %v3431
  %3433 = vmatmul.f32.gmra.mxu0 %v3263
  %v3434 = vpop.f32.mrf.mxu0
  %v3435 = vadd.f32 %v3406, %v3434
  %3436 = vmatmul.f32.gmra.mxu0 %v3271
  %v3437 = vpop.f32.mrf.mxu0
  %v3438 = vadd.f32 %v3409, %v3437
  %3439 = vmatmul.f32.gmra.mxu0 %v3278
  %v3440 = vpop.f32.mrf.mxu0
  %v3441 = vadd.f32 %v3412, %v3440
  %3442 = vdwg.mxu0
  %3443 = vmatpush.msra.mxu0 0.0
  %3444 = vmatpush.msra.mxu0 0.0
  %3445 = vmatpush.msra.mxu0 0.0
  %3446 = vmatpush.msra.mxu0 0.0
  %3447 = vmatpush.msra.mxu0 %v3375
  %3448 = vmatpush.msra.mxu0 %v3373
  %3449 = vmatpush.msra.mxu0 %v3371
  %3450 = vmatpush.msra.mxu0 %v3369
  %3451 = vmatpush.msra.mxu0 %v3367
  %3452 = vmatpush.msra.mxu0 %v3365
  %3453 = vmatpush.msra.mxu0 %v3363
  %3454 = vmatpush.msra.mxu0 %v3361
  %3455 = vmatpush.msra.mxu0 %v3359
  %3456 = vmatpush.msra.mxu0 %v3357
  %3457 = vmatpush.msra.mxu0 %v3355
  %3458 = vmatpush.msra.mxu0 %v3353
  %3459 = vmatmul.f32.gmra.mxu0 %v3377
  %v3460 = vpop.f32.mrf.mxu0
  %v3461 = vadd.f32 %v3432, %v3460
  %3462 = vmatmul.f32.gmra.mxu0 %v3379
  %v3463 = vpop.f32.mrf.mxu0
  %v3464 = vadd.f32 %v3435, %v3463
  %3465 = vmatmul.f32.gmra.mxu0 %v3381
  %v3466 = vpop.f32.mrf.mxu0
  %v3467 = vadd.f32 %v3438, %v3466
  %3468 = vmatmul.f32.gmra.mxu0 %v3383
  %v3469 = vpop.f32.mrf.mxu0
  %v3470 = vadd.f32 %v3441, %v3469
  %3471 = vdwg.mxu0
  %3472 = vmatpush.msra.mxu0 %v3320
  %3473 = vmatpush.msra.mxu0 %v3318
  %3474 = vmatpush.msra.mxu0 %v3316
  %3475 = vmatpush.msra.mxu0 %v3314
  %3476 = vmatpush.msra.mxu0 %v3312
  %3477 = vmatpush.msra.mxu0 %v3310
  %3478 = vmatpush.msra.mxu0 %v3308
  %3479 = vmatpush.msra.mxu0 %v3306
  %3480 = vmatpush.msra.mxu0 %v3304
  %3481 = vmatpush.msra.mxu0 %v3302
  %3482 = vmatpush.msra.mxu0 %v3300
  %3483 = vmatpush.msra.mxu0 %v3298
  %3484 = vmatpush.msra.mxu0 %v3296
  %3485 = vmatpush.msra.mxu0 %v3294
  %3486 = vmatpush.msra.mxu0 %v3292
  %3487 = vmatpush.msra.mxu0 %v3290
  %3488 = vmatmul.f32.gmra.mxu0 %v3253
  %v3489 = vpop.f32.mrf.mxu0
  %v3490 = vadd.f32 0.0, %v3489
  %3491 = vmatmul.f32.gmra.mxu0 %v3261
  %v3492 = vpop.f32.mrf.mxu0
  %v3493 = vadd.f32 0.0, %v3492
  %3494 = vmatmul.f32.gmra.mxu0 %v3268
  %v3495 = vpop.f32.mrf.mxu0
  %v3496 = vadd.f32 0.0, %v3495
  %3497 = vmatmul.f32.gmra.mxu0 %v3276
  %v3498 = vpop.f32.mrf.mxu0
  %v3499 = vadd.f32 0.0, %v3498
  %3500 = vdwg.mxu0
  %3501 = vmatpush.msra.mxu0 %v3352
  %3502 = vmatpush.msra.mxu0 %v3350
  %3503 = vmatpush.msra.mxu0 %v3348
  %3504 = vmatpush.msra.mxu0 %v3346
  %3505 = vmatpush.msra.mxu0 %v3344
  %3506 = vmatpush.msra.mxu0 %v3342
  %3507 = vmatpush.msra.mxu0 %v3340
  %3508 = vmatpush.msra.mxu0 %v3338
  %3509 = vmatpush.msra.mxu0 %v3336
  %3510 = vmatpush.msra.mxu0 %v3334
  %3511 = vmatpush.msra.mxu0 %v3332
  %3512 = vmatpush.msra.mxu0 %v3330
  %3513 = vmatpush.msra.mxu0 %v3328
  %3514 = vmatpush.msra.mxu0 %v3326
  %3515 = vmatpush.msra.mxu0 %v3324
  %3516 = vmatpush.msra.mxu0 %v3322
  %3517 = vmatmul.f32.gmra.mxu0 %v3256
  %v3518 = vpop.f32.mrf.mxu0
  %v3519 = vadd.f32 %v3490, %v3518
  %3520 = vmatmul.f32.gmra.mxu0 %v3263
  %v3521 = vpop.f32.mrf.mxu0
  %v3522 = vadd.f32 %v3493, %v3521
  %3523 = vmatmul.f32.gmra.mxu0 %v3271
  %v3524 = vpop.f32.mrf.mxu0
  %v3525 = vadd.f32 %v3496, %v3524
  %3526 = vmatmul.f32.gmra.mxu0 %v3278
  %v3527 = vpop.f32.mrf.mxu0
  %v3528 = vadd.f32 %v3499, %v3527
  %3529 = vdwg.mxu0
  %3530 = vmatpush.msra.mxu0 0.0
  %3531 = vmatpush.msra.mxu0 0.0
  %3532 = vmatpush.msra.mxu0 0.0
  %3533 = vmatpush.msra.mxu0 0.0
  %3534 = vmatpush.msra.mxu0 %v3376
  %3535 = vmatpush.msra.mxu0 %v3374
  %3536 = vmatpush.msra.mxu0 %v3372
  %3537 = vmatpush.msra.mxu0 %v3370
  %3538 = vmatpush.msra.mxu0 %v3368
  %3539 = vmatpush.msra.mxu0 %v3366
  %3540 = vmatpush.msra.mxu0 %v3364
  %3541 = vmatpush.msra.mxu0 %v3362
  %3542 = vmatpush.msra.mxu0 %v3360
  %3543 = vmatpush.msra.mxu0 %v3358
  %3544 = vmatpush.msra.mxu0 %v3356
  %3545 = vmatpush.msra.mxu0 %v3354
  %3546 = vmatmul.f32.gmra.mxu0 %v3377
  %v3547 = vpop.f32.mrf.mxu0
  %v3548 = vadd.f32 %v3519, %v3547
  %3549 = vmatmul.f32.gmra.mxu0 %v3379
  %v3550 = vpop.f32.mrf.mxu0
  %v3551 = vadd.f32 %v3522, %v3550
  %3552 = vmatmul.f32.gmra.mxu0 %v3381
  %v3553 = vpop.f32.mrf.mxu0
  %v3554 = vadd.f32 %v3525, %v3553
  %3555 = vmatmul.f32.gmra.mxu0 %v3383
  %v3556 = vpop.f32.mrf.mxu0
  %v3557 = vadd.f32 %v3528, %v3556
  %3558 = vdwg.mxu0
  %v3559 = vadd.f32 %v3129, %v3461
  %v3560 = vadd.f32 %v3216, %v3548
  %v3561 = vadd.f32 %v3132, %v3464
  %v3562 = vadd.f32 %v3219, %v3551
  %v3563 = vadd.f32 %v3135, %v3467
  %v3564 = vadd.f32 %v3222, %v3554
  %v3565 = vadd.f32 %v3138, %v3470
  %v3566 = vadd.f32 %v3225, %v3557
  %v3567 = vld [vmem:[#allocation2] sm:$0xf8]
  %v3568 = vld [vmem:[#allocation2 + $0x8] sm:$0xf8]
  %v3569 = vld [vmem:[#allocation2 + $0x10] sm:$0xf8]
  %v3570 = vld [vmem:[#allocation2 + $0x30] sm:$0x7]
  %v3571 = vld [vmem:[#allocation2 + $0x38] sm:$0x7]
  %v3572 = vld [vmem:[#allocation2 + $0x40] sm:$0x7]
  %v3573 = vld [vmem:[#allocation2 + $0x48] sm:$0xf8]
  %v3574 = vld [vmem:[#allocation2 + $0x50] sm:$0xf8]
  %v3575 = vld [vmem:[#allocation2 + $0x58] sm:$0xf8]
  %v3576 = vld [vmem:[#allocation2 + $0x78] sm:$0x7]
  %v3577 = vld [vmem:[#allocation2 + $0x80] sm:$0x7]
  %v3578 = vld [vmem:[#allocation2 + $0x88] sm:$0x7]
  %v3591 = vrot.slane %v3567, 3
  %v3592 = vrot.slane %v2608, 3
  %v3593 = vsel %vm1162, %v3591, %v3592
  %v3594 = vrot.slane %v3568, 3
  %v3595 = vrot.slane %v2609, 3
  %v3596 = vsel %vm1162, %v3594, %v3595
  %v3597 = vrot.slane %v3569, 3
  %v3598 = vrot.slane %v2610, 3
  %v3599 = vsel %vm1162, %v3597, %v3598
  %v3600 = vrot.slane %v3570, 3
  %v3601 = vsel %vm1162, %v3592, %v3600
  %v3602 = vrot.slane %v3571, 3
  %v3603 = vsel %vm1162, %v3595, %v3602
  %v3604 = vrot.slane %v3572, 3
  %v3605 = vsel %vm1162, %v3598, %v3604
  %v3606 = vrot.slane %v3573, 3
  %v3607 = vrot.slane %v2614, 3
  %v3608 = vsel %vm1162, %v3606, %v3607
  %v3609 = vrot.slane %v3574, 3
  %v3610 = vrot.slane %v2615, 3
  %v3611 = vsel %vm1162, %v3609, %v3610
  %v3612 = vrot.slane %v3575, 3
  %v3613 = vrot.slane %v2616, 3
  %v3614 = vsel %vm1162, %v3612, %v3613
  %v3615 = vrot.slane %v3576, 3
  %v3616 = vsel %vm1162, %v3607, %v3615
  %v3617 = vrot.slane %v3577, 3
  %v3618 = vsel %vm1162, %v3610, %v3617
  %v3619 = vrot.slane %v3578, 3
  %v3620 = vsel %vm1162, %v3613, %v3619
  %v3629 = vld [vmem:[%s1201] sm:$0xff]
  %v3630 = vld [vmem:[%s1201 + $0x8] sm:$0xff]
  %v3631 = vld [vmem:[%s1201 + $0x10] sm:$0xff]
  %v3632 = vld [vmem:[%s1201 + $0x18] sm:$0xff]
  %v3633 = vld [vmem:[%s1201 + $0x20] sm:$0xff]
  %v3634 = vld [vmem:[%s1201 + $0x28] sm:$0xff]
  %v3635 = vld [vmem:[%s1201 + $0x30] sm:$0xff]
  %v3636 = vld [vmem:[%s1201 + $0x38] sm:$0xff]
  %v3637 = vld [vmem:[%s1201 + $0x40] sm:$0xff]
  %v3638 = vld [vmem:[%s1201 + $0x48] sm:$0xff]
  %v3639 = vld [vmem:[%s1201 + $0x50] sm:$0xff]
  %v3640 = vld [vmem:[%s1201 + $0x58] sm:$0xff]
  %v3641 = vld [vmem:[%s1201 + $0x60] sm:$0xff]
  %v3642 = vld [vmem:[%s1201 + $0x68] sm:$0xff]
  %v3643 = vld [vmem:[%s1201 + $0x70] sm:$0xff]
  %v3644 = vld [vmem:[%s1201 + $0x78] sm:$0xff]
  %v3645 = vld [vmem:[%s1201 + $0x80] sm:$0xff]
  %v3646 = vld [vmem:[%s1201 + $0x88] sm:$0xff]
  %v3647 = vld [vmem:[%s1201 + $0x90] sm:$0xff]
  %v3648 = vld [vmem:[%s1201 + $0x98] sm:$0xff]
  %v3649 = vld [vmem:[%s1201 + $0xa0] sm:$0xff]
  %v3650 = vld [vmem:[%s1201 + $0xa8] sm:$0xff]
  %v3651 = vld [vmem:[%s1201 + $0xb0] sm:$0xff]
  %v3652 = vld [vmem:[%s1201 + $0xb8] sm:$0xff]
  %v3653 = vld [vmem:[%s1201 + $0xc0] sm:$0xff]
  %v3654 = vld [vmem:[%s1201 + $0xc8] sm:$0xff]
  %v3655 = vld [vmem:[%s1201 + $0xd0] sm:$0xff]
  %v3656 = vld [vmem:[%s1201 + $0xd8] sm:$0xff]
  %v3657 = vld [vmem:[%s1201 + $0xe0] sm:$0xff]
  %v3658 = vld [vmem:[%s1201 + $0xe8] sm:$0xff]
  %v3659 = vld [vmem:[%s1201 + $0xf0] sm:$0xff]
  %v3660 = vld [vmem:[%s1201 + $0xf8] sm:$0xff]
  %v3661 = vld [vmem:[%s1201 + $0x100] sm:$0xff]
  %v3662 = vld [vmem:[%s1201 + $0x108] sm:$0xff]
  %v3663 = vld [vmem:[%s1201 + $0x110] sm:$0xff]
  %v3664 = vld [vmem:[%s1201 + $0x118] sm:$0xff]
  %v3665 = vld [vmem:[%s1201 + $0x120] sm:$0xff]
  %v3666 = vld [vmem:[%s1201 + $0x128] sm:$0xff]
  %v3667 = vld [vmem:[%s1201 + $0x130] sm:$0xff]
  %v3668 = vld [vmem:[%s1201 + $0x138] sm:$0xff]
  %v3669 = vld [vmem:[%s1201 + $0x140] sm:$0xff]
  %v3670 = vld [vmem:[%s1201 + $0x148] sm:$0xff]
  %v3671 = vld [vmem:[%s1201 + $0x150] sm:$0xff]
  %v3672 = vld [vmem:[%s1201 + $0x158] sm:$0xff]
  %v3673 = vld [vmem:[%s1201 + $0x160] sm:$0xff]
  %v3674 = vld [vmem:[%s1201 + $0x168] sm:$0xff]
  %v3675 = vld [vmem:[%s1201 + $0x170] sm:$0xff]
  %v3676 = vld [vmem:[%s1201 + $0x178] sm:$0xff]
  %v3677 = vld [vmem:[%s1201 + $0x180] sm:$0xff]
  %v3678 = vld [vmem:[%s1201 + $0x188] sm:$0xff]
  %v3679 = vld [vmem:[%s1201 + $0x190] sm:$0xff]
  %v3680 = vld [vmem:[%s1201 + $0x198] sm:$0xff]
  %v3681 = vld [vmem:[%s1201 + $0x1a0] sm:$0xff]
  %v3682 = vld [vmem:[%s1201 + $0x1a8] sm:$0xff]
  %v3683 = vld [vmem:[%s1201 + $0x1b0] sm:$0xff]
  %v3684 = vld [vmem:[%s1201 + $0x1b8] sm:$0xff]
  %v3685 = vld [vmem:[%s1201 + $0x1c0] sm:$0xff]
  %v3686 = vld [vmem:[%s1201 + $0x1c8] sm:$0xff]
  %v3687 = vld [vmem:[%s1201 + $0x1d0] sm:$0xff]
  %v3688 = vld [vmem:[%s1201 + $0x1d8] sm:$0xff]
  %v3689 = vld [vmem:[%s1201 + $0x1e0] sm:$0xff]
  %v3690 = vld [vmem:[%s1201 + $0x1e8] sm:$0xff]
  %v3691 = vld [vmem:[%s1201 + $0x1f0] sm:$0xff]
  %v3692 = vld [vmem:[%s1201 + $0x1f8] sm:$0xff]
  %v3693 = vld [vmem:[%s1201 + $0x200] sm:$0xff]
  %v3694 = vld [vmem:[%s1201 + $0x208] sm:$0xff]
  %v3695 = vld [vmem:[%s1201 + $0x210] sm:$0xff]
  %v3696 = vld [vmem:[%s1201 + $0x218] sm:$0xff]
  %v3697 = vld [vmem:[%s1201 + $0x220] sm:$0xff]
  %v3698 = vld [vmem:[%s1201 + $0x228] sm:$0xff]
  %v3699 = vld [vmem:[%s1201 + $0x230] sm:$0xff]
  %v3700 = vld [vmem:[%s1201 + $0x238] sm:$0xff]
  %v3701 = vld [vmem:[%s1201 + $0x240] sm:$0xff]
  %v3702 = vld [vmem:[%s1201 + $0x248] sm:$0xff]
  %v3703 = vld [vmem:[%s1201 + $0x250] sm:$0xff]
  %v3704 = vld [vmem:[%s1201 + $0x258] sm:$0xff]
  %v3705 = vld [vmem:[%s1201 + $0x260] sm:$0xff]
  %v3706 = vld [vmem:[%s1201 + $0x268] sm:$0xff]
  %v3707 = vld [vmem:[%s1201 + $0x270] sm:$0xff]
  %v3708 = vld [vmem:[%s1201 + $0x278] sm:$0xff]
  %v3709 = vld [vmem:[%s1201 + $0x280] sm:$0xff]
  %v3710 = vld [vmem:[%s1201 + $0x288] sm:$0xff]
  %v3711 = vld [vmem:[%s1201 + $0x290] sm:$0xff]
  %v3712 = vld [vmem:[%s1201 + $0x298] sm:$0xff]
  %v3713 = vld [vmem:[%s1201 + $0x2a0] sm:$0xff]
  %v3714 = vld [vmem:[%s1201 + $0x2a8] sm:$0xff]
  %v3715 = vld [vmem:[%s1201 + $0x2b0] sm:$0xff]
  %v3716 = vld [vmem:[%s1201 + $0x2b8] sm:$0xff]
  %v3717 = vsel %vm33, %v3599, 0
  %v3719 = vsel %vm33, %v3605, 0
  %v3721 = vsel %vm33, %v3614, 0
  %v3723 = vsel %vm33, %v3620, 0
  %3725 = vmatpush.msra.mxu0 %v3659
  %3726 = vmatpush.msra.mxu0 %v3657
  %3727 = vmatpush.msra.mxu0 %v3655
  %3728 = vmatpush.msra.mxu0 %v3653
  %3729 = vmatpush.msra.mxu0 %v3651
  %3730 = vmatpush.msra.mxu0 %v3649
  %3731 = vmatpush.msra.mxu0 %v3647
  %3732 = vmatpush.msra.mxu0 %v3645
  %3733 = vmatpush.msra.mxu0 %v3643
  %3734 = vmatpush.msra.mxu0 %v3641
  %3735 = vmatpush.msra.mxu0 %v3639
  %3736 = vmatpush.msra.mxu0 %v3637
  %3737 = vmatpush.msra.mxu0 %v3635
  %3738 = vmatpush.msra.mxu0 %v3633
  %3739 = vmatpush.msra.mxu0 %v3631
  %3740 = vmatpush.msra.mxu0 %v3629
  %3741 = vmatmul.f32.gmra.mxu0 %v3593
  %v3742 = vpop.f32.mrf.mxu0
  %v3743 = vadd.f32 0.0, %v3742
  %3744 = vmatmul.f32.gmra.mxu0 %v3601
  %v3745 = vpop.f32.mrf.mxu0
  %v3746 = vadd.f32 0.0, %v3745
  %3747 = vmatmul.f32.gmra.mxu0 %v3608
  %v3748 = vpop.f32.mrf.mxu0
  %v3749 = vadd.f32 0.0, %v3748
  %3750 = vmatmul.f32.gmra.mxu0 %v3616
  %v3751 = vpop.f32.mrf.mxu0
  %v3752 = vadd.f32 0.0, %v3751
  %3753 = vdwg.mxu0
  %3754 = vmatpush.msra.mxu0 %v3691
  %3755 = vmatpush.msra.mxu0 %v3689
  %3756 = vmatpush.msra.mxu0 %v3687
  %3757 = vmatpush.msra.mxu0 %v3685
  %3758 = vmatpush.msra.mxu0 %v3683
  %3759 = vmatpush.msra.mxu0 %v3681
  %3760 = vmatpush.msra.mxu0 %v3679
  %3761 = vmatpush.msra.mxu0 %v3677
  %3762 = vmatpush.msra.mxu0 %v3675
  %3763 = vmatpush.msra.mxu0 %v3673
  %3764 = vmatpush.msra.mxu0 %v3671
  %3765 = vmatpush.msra.mxu0 %v3669
  %3766 = vmatpush.msra.mxu0 %v3667
  %3767 = vmatpush.msra.mxu0 %v3665
  %3768 = vmatpush.msra.mxu0 %v3663
  %3769 = vmatpush.msra.mxu0 %v3661
  %3770 = vmatmul.f32.gmra.mxu0 %v3596
  %v3771 = vpop.f32.mrf.mxu0
  %v3772 = vadd.f32 %v3743, %v3771
  %3773 = vmatmul.f32.gmra.mxu0 %v3603
  %v3774 = vpop.f32.mrf.mxu0
  %v3775 = vadd.f32 %v3746, %v3774
  %3776 = vmatmul.f32.gmra.mxu0 %v3611
  %v3777 = vpop.f32.mrf.mxu0
  %v3778 = vadd.f32 %v3749, %v3777
  %3779 = vmatmul.f32.gmra.mxu0 %v3618
  %v3780 = vpop.f32.mrf.mxu0
  %v3781 = vadd.f32 %v3752, %v3780
  %3782 = vdwg.mxu0
  %3783 = vmatpush.msra.mxu0 0.0
  %3784 = vmatpush.msra.mxu0 0.0
  %3785 = vmatpush.msra.mxu0 0.0
  %3786 = vmatpush.msra.mxu0 0.0
  %3787 = vmatpush.msra.mxu0 %v3715
  %3788 = vmatpush.msra.mxu0 %v3713
  %3789 = vmatpush.msra.mxu0 %v3711
  %3790 = vmatpush.msra.mxu0 %v3709
  %3791 = vmatpush.msra.mxu0 %v3707
  %3792 = vmatpush.msra.mxu0 %v3705
  %3793 = vmatpush.msra.mxu0 %v3703
  %3794 = vmatpush.msra.mxu0 %v3701
  %3795 = vmatpush.msra.mxu0 %v3699
  %3796 = vmatpush.msra.mxu0 %v3697
  %3797 = vmatpush.msra.mxu0 %v3695
  %3798 = vmatpush.msra.mxu0 %v3693
  %3799 = vmatmul.f32.gmra.mxu0 %v3717
  %v3800 = vpop.f32.mrf.mxu0
  %v3801 = vadd.f32 %v3772, %v3800
  %3802 = vmatmul.f32.gmra.mxu0 %v3719
  %v3803 = vpop.f32.mrf.mxu0
  %v3804 = vadd.f32 %v3775, %v3803
  %3805 = vmatmul.f32.gmra.mxu0 %v3721
  %v3806 = vpop.f32.mrf.mxu0
  %v3807 = vadd.f32 %v3778, %v3806
  %3808 = vmatmul.f32.gmra.mxu0 %v3723
  %v3809 = vpop.f32.mrf.mxu0
  %v3810 = vadd.f32 %v3781, %v3809
  %3811 = vdwg.mxu0
  %3812 = vmatpush.msra.mxu0 %v3660
  %3813 = vmatpush.msra.mxu0 %v3658
  %3814 = vmatpush.msra.mxu0 %v3656
  %3815 = vmatpush.msra.mxu0 %v3654
  %3816 = vmatpush.msra.mxu0 %v3652
  %3817 = vmatpush.msra.mxu0 %v3650
  %3818 = vmatpush.msra.mxu0 %v3648
  %3819 = vmatpush.msra.mxu0 %v3646
  %3820 = vmatpush.msra.mxu0 %v3644
  %3821 = vmatpush.msra.mxu0 %v3642
  %3822 = vmatpush.msra.mxu0 %v3640
  %3823 = vmatpush.msra.mxu0 %v3638
  %3824 = vmatpush.msra.mxu0 %v3636
  %3825 = vmatpush.msra.mxu0 %v3634
  %3826 = vmatpush.msra.mxu0 %v3632
  %3827 = vmatpush.msra.mxu0 %v3630
  %3828 = vmatmul.f32.gmra.mxu0 %v3593
  %v3829 = vpop.f32.mrf.mxu0
  %v3830 = vadd.f32 0.0, %v3829
  %3831 = vmatmul.f32.gmra.mxu0 %v3601
  %v3832 = vpop.f32.mrf.mxu0
  %v3833 = vadd.f32 0.0, %v3832
  %3834 = vmatmul.f32.gmra.mxu0 %v3608
  %v3835 = vpop.f32.mrf.mxu0
  %v3836 = vadd.f32 0.0, %v3835
  %3837 = vmatmul.f32.gmra.mxu0 %v3616
  %v3838 = vpop.f32.mrf.mxu0
  %v3839 = vadd.f32 0.0, %v3838
  %3840 = vdwg.mxu0
  %3841 = vmatpush.msra.mxu0 %v3692
  %3842 = vmatpush.msra.mxu0 %v3690
  %3843 = vmatpush.msra.mxu0 %v3688
  %3844 = vmatpush.msra.mxu0 %v3686
  %3845 = vmatpush.msra.mxu0 %v3684
  %3846 = vmatpush.msra.mxu0 %v3682
  %3847 = vmatpush.msra.mxu0 %v3680
  %3848 = vmatpush.msra.mxu0 %v3678
  %3849 = vmatpush.msra.mxu0 %v3676
  %3850 = vmatpush.msra.mxu0 %v3674
  %3851 = vmatpush.msra.mxu0 %v3672
  %3852 = vmatpush.msra.mxu0 %v3670
  %3853 = vmatpush.msra.mxu0 %v3668
  %3854 = vmatpush.msra.mxu0 %v3666
  %3855 = vmatpush.msra.mxu0 %v3664
  %3856 = vmatpush.msra.mxu0 %v3662
  %3857 = vmatmul.f32.gmra.mxu0 %v3596
  %v3858 = vpop.f32.mrf.mxu0
  %v3859 = vadd.f32 %v3830, %v3858
  %3860 = vmatmul.f32.gmra.mxu0 %v3603
  %v3861 = vpop.f32.mrf.mxu0
  %v3862 = vadd.f32 %v3833, %v3861
  %3863 = vmatmul.f32.gmra.mxu0 %v3611
  %v3864 = vpop.f32.mrf.mxu0
  %v3865 = vadd.f32 %v3836, %v3864
  %3866 = vmatmul.f32.gmra.mxu0 %v3618
  %v3867 = vpop.f32.mrf.mxu0
  %v3868 = vadd.f32 %v3839, %v3867
  %3869 = vdwg.mxu0
  %3870 = vmatpush.msra.mxu0 0.0
  %3871 = vmatpush.msra.mxu0 0.0
  %3872 = vmatpush.msra.mxu0 0.0
  %3873 = vmatpush.msra.mxu0 0.0
  %3874 = vmatpush.msra.mxu0 %v3716
  %3875 = vmatpush.msra.mxu0 %v3714
  %3876 = vmatpush.msra.mxu0 %v3712
  %3877 = vmatpush.msra.mxu0 %v3710
  %3878 = vmatpush.msra.mxu0 %v3708
  %3879 = vmatpush.msra.mxu0 %v3706
  %3880 = vmatpush.msra.mxu0 %v3704
  %3881 = vmatpush.msra.mxu0 %v3702
  %3882 = vmatpush.msra.mxu0 %v3700
  %3883 = vmatpush.msra.mxu0 %v3698
  %3884 = vmatpush.msra.mxu0 %v3696
  %3885 = vmatpush.msra.mxu0 %v3694
  %3886 = vmatmul.f32.gmra.mxu0 %v3717
  %v3887 = vpop.f32.mrf.mxu0
  %v3888 = vadd.f32 %v3859, %v3887
  %3889 = vmatmul.f32.gmra.mxu0 %v3719
  %v3890 = vpop.f32.mrf.mxu0
  %v3891 = vadd.f32 %v3862, %v3890
  %3892 = vmatmul.f32.gmra.mxu0 %v3721
  %v3893 = vpop.f32.mrf.mxu0
  %v3894 = vadd.f32 %v3865, %v3893
  %3895 = vmatmul.f32.gmra.mxu0 %v3723
  %v3896 = vpop.f32.mrf.mxu0
  %v3897 = vadd.f32 %v3868, %v3896
  %3898 = vdwg.mxu0
  %v3899 = vadd.f32 %v3559, %v3801
  %v3900 = vadd.f32 %v3560, %v3888
  %v3901 = vadd.f32 %v3561, %v3804
  %v3902 = vadd.f32 %v3562, %v3891
  %v3903 = vadd.f32 %v3563, %v3807
  %v3904 = vadd.f32 %v3564, %v3894
  %v3905 = vadd.f32 %v3565, %v3810
  %v3906 = vadd.f32 %v3566, %v3897
  %v3907 = vld [vmem:[#allocation2] sm:$0xf0]
  %v3908 = vld [vmem:[#allocation2 + $0x8] sm:$0xf0]
  %v3909 = vld [vmem:[#allocation2 + $0x10] sm:$0xf0]
  %v3910 = vld [vmem:[#allocation2 + $0x30] sm:$0xf]
  %v3911 = vld [vmem:[#allocation2 + $0x38] sm:$0xf]
  %v3912 = vld [vmem:[#allocation2 + $0x40] sm:$0xf]
  %v3913 = vld [vmem:[#allocation2 + $0x48] sm:$0xf0]
  %v3914 = vld [vmem:[#allocation2 + $0x50] sm:$0xf0]
  %v3915 = vld [vmem:[#allocation2 + $0x58] sm:$0xf0]
  %v3916 = vld [vmem:[#allocation2 + $0x78] sm:$0xf]
  %v3917 = vld [vmem:[#allocation2 + $0x80] sm:$0xf]
  %v3918 = vld [vmem:[#allocation2 + $0x88] sm:$0xf]
  %v3931 = vrot.slane %v3907, 4
  %v3932 = vrot.slane %v2608, 4
  %v3933 = vsel %vm1504, %v3931, %v3932
  %v3934 = vrot.slane %v3908, 4
  %v3935 = vrot.slane %v2609, 4
  %v3936 = vsel %vm1504, %v3934, %v3935
  %v3937 = vrot.slane %v3909, 4
  %v3938 = vrot.slane %v2610, 4
  %v3939 = vsel %vm1504, %v3937, %v3938
  %v3940 = vrot.slane %v3910, 4
  %v3941 = vsel %vm1504, %v3932, %v3940
  %v3942 = vrot.slane %v3911, 4
  %v3943 = vsel %vm1504, %v3935, %v3942
  %v3944 = vrot.slane %v3912, 4
  %v3945 = vsel %vm1504, %v3938, %v3944
  %v3946 = vrot.slane %v3913, 4
  %v3947 = vrot.slane %v2614, 4
  %v3948 = vsel %vm1504, %v3946, %v3947
  %v3949 = vrot.slane %v3914, 4
  %v3950 = vrot.slane %v2615, 4
  %v3951 = vsel %vm1504, %v3949, %v3950
  %v3952 = vrot.slane %v3915, 4
  %v3953 = vrot.slane %v2616, 4
  %v3954 = vsel %vm1504, %v3952, %v3953
  %v3955 = vrot.slane %v3916, 4
  %v3956 = vsel %vm1504, %v3947, %v3955
  %v3957 = vrot.slane %v3917, 4
  %v3958 = vsel %vm1504, %v3950, %v3957
  %v3959 = vrot.slane %v3918, 4
  %v3960 = vsel %vm1504, %v3953, %v3959
  %v3969 = vld [vmem:[%s1543] sm:$0xff]
  %v3970 = vld [vmem:[%s1543 + $0x8] sm:$0xff]
  %v3971 = vld [vmem:[%s1543 + $0x10] sm:$0xff]
  %v3972 = vld [vmem:[%s1543 + $0x18] sm:$0xff]
  %v3973 = vld [vmem:[%s1543 + $0x20] sm:$0xff]
  %v3974 = vld [vmem:[%s1543 + $0x28] sm:$0xff]
  %v3975 = vld [vmem:[%s1543 + $0x30] sm:$0xff]
  %v3976 = vld [vmem:[%s1543 + $0x38] sm:$0xff]
  %v3977 = vld [vmem:[%s1543 + $0x40] sm:$0xff]
  %v3978 = vld [vmem:[%s1543 + $0x48] sm:$0xff]
  %v3979 = vld [vmem:[%s1543 + $0x50] sm:$0xff]
  %v3980 = vld [vmem:[%s1543 + $0x58] sm:$0xff]
  %v3981 = vld [vmem:[%s1543 + $0x60] sm:$0xff]
  %v3982 = vld [vmem:[%s1543 + $0x68] sm:$0xff]
  %v3983 = vld [vmem:[%s1543 + $0x70] sm:$0xff]
  %v3984 = vld [vmem:[%s1543 + $0x78] sm:$0xff]
  %v3985 = vld [vmem:[%s1543 + $0x80] sm:$0xff]
  %v3986 = vld [vmem:[%s1543 + $0x88] sm:$0xff]
  %v3987 = vld [vmem:[%s1543 + $0x90] sm:$0xff]
  %v3988 = vld [vmem:[%s1543 + $0x98] sm:$0xff]
  %v3989 = vld [vmem:[%s1543 + $0xa0] sm:$0xff]
  %v3990 = vld [vmem:[%s1543 + $0xa8] sm:$0xff]
  %v3991 = vld [vmem:[%s1543 + $0xb0] sm:$0xff]
  %v3992 = vld [vmem:[%s1543 + $0xb8] sm:$0xff]
  %v3993 = vld [vmem:[%s1543 + $0xc0] sm:$0xff]
  %v3994 = vld [vmem:[%s1543 + $0xc8] sm:$0xff]
  %v3995 = vld [vmem:[%s1543 + $0xd0] sm:$0xff]
  %v3996 = vld [vmem:[%s1543 + $0xd8] sm:$0xff]
  %v3997 = vld [vmem:[%s1543 + $0xe0] sm:$0xff]
  %v3998 = vld [vmem:[%s1543 + $0xe8] sm:$0xff]
  %v3999 = vld [vmem:[%s1543 + $0xf0] sm:$0xff]
  %v4000 = vld [vmem:[%s1543 + $0xf8] sm:$0xff]
  %v4001 = vld [vmem:[%s1543 + $0x100] sm:$0xff]
  %v4002 = vld [vmem:[%s1543 + $0x108] sm:$0xff]
  %v4003 = vld [vmem:[%s1543 + $0x110] sm:$0xff]
  %v4004 = vld [vmem:[%s1543 + $0x118] sm:$0xff]
  %v4005 = vld [vmem:[%s1543 + $0x120] sm:$0xff]
  %v4006 = vld [vmem:[%s1543 + $0x128] sm:$0xff]
  %v4007 = vld [vmem:[%s1543 + $0x130] sm:$0xff]
  %v4008 = vld [vmem:[%s1543 + $0x138] sm:$0xff]
  %v4009 = vld [vmem:[%s1543 + $0x140] sm:$0xff]
  %v4010 = vld [vmem:[%s1543 + $0x148] sm:$0xff]
  %v4011 = vld [vmem:[%s1543 + $0x150] sm:$0xff]
  %v4012 = vld [vmem:[%s1543 + $0x158] sm:$0xff]
  %v4013 = vld [vmem:[%s1543 + $0x160] sm:$0xff]
  %v4014 = vld [vmem:[%s1543 + $0x168] sm:$0xff]
  %v4015 = vld [vmem:[%s1543 + $0x170] sm:$0xff]
  %v4016 = vld [vmem:[%s1543 + $0x178] sm:$0xff]
  %v4017 = vld [vmem:[%s1543 + $0x180] sm:$0xff]
  %v4018 = vld [vmem:[%s1543 + $0x188] sm:$0xff]
  %v4019 = vld [vmem:[%s1543 + $0x190] sm:$0xff]
  %v4020 = vld [vmem:[%s1543 + $0x198] sm:$0xff]
  %v4021 = vld [vmem:[%s1543 + $0x1a0] sm:$0xff]
  %v4022 = vld [vmem:[%s1543 + $0x1a8] sm:$0xff]
  %v4023 = vld [vmem:[%s1543 + $0x1b0] sm:$0xff]
  %v4024 = vld [vmem:[%s1543 + $0x1b8] sm:$0xff]
  %v4025 = vld [vmem:[%s1543 + $0x1c0] sm:$0xff]
  %v4026 = vld [vmem:[%s1543 + $0x1c8] sm:$0xff]
  %v4027 = vld [vmem:[%s1543 + $0x1d0] sm:$0xff]
  %v4028 = vld [vmem:[%s1543 + $0x1d8] sm:$0xff]
  %v4029 = vld [vmem:[%s1543 + $0x1e0] sm:$0xff]
  %v4030 = vld [vmem:[%s1543 + $0x1e8] sm:$0xff]
  %v4031 = vld [vmem:[%s1543 + $0x1f0] sm:$0xff]
  %v4032 = vld [vmem:[%s1543 + $0x1f8] sm:$0xff]
  %v4033 = vld [vmem:[%s1543 + $0x200] sm:$0xff]
  %v4034 = vld [vmem:[%s1543 + $0x208] sm:$0xff]
  %v4035 = vld [vmem:[%s1543 + $0x210] sm:$0xff]
  %v4036 = vld [vmem:[%s1543 + $0x218] sm:$0xff]
  %v4037 = vld [vmem:[%s1543 + $0x220] sm:$0xff]
  %v4038 = vld [vmem:[%s1543 + $0x228] sm:$0xff]
  %v4039 = vld [vmem:[%s1543 + $0x230] sm:$0xff]
  %v4040 = vld [vmem:[%s1543 + $0x238] sm:$0xff]
  %v4041 = vld [vmem:[%s1543 + $0x240] sm:$0xff]
  %v4042 = vld [vmem:[%s1543 + $0x248] sm:$0xff]
  %v4043 = vld [vmem:[%s1543 + $0x250] sm:$0xff]
  %v4044 = vld [vmem:[%s1543 + $0x258] sm:$0xff]
  %v4045 = vld [vmem:[%s1543 + $0x260] sm:$0xff]
  %v4046 = vld [vmem:[%s1543 + $0x268] sm:$0xff]
  %v4047 = vld [vmem:[%s1543 + $0x270] sm:$0xff]
  %v4048 = vld [vmem:[%s1543 + $0x278] sm:$0xff]
  %v4049 = vld [vmem:[%s1543 + $0x280] sm:$0xff]
  %v4050 = vld [vmem:[%s1543 + $0x288] sm:$0xff]
  %v4051 = vld [vmem:[%s1543 + $0x290] sm:$0xff]
  %v4052 = vld [vmem:[%s1543 + $0x298] sm:$0xff]
  %v4053 = vld [vmem:[%s1543 + $0x2a0] sm:$0xff]
  %v4054 = vld [vmem:[%s1543 + $0x2a8] sm:$0xff]
  %v4055 = vld [vmem:[%s1543 + $0x2b0] sm:$0xff]
  %v4056 = vld [vmem:[%s1543 + $0x2b8] sm:$0xff]
  %v4057 = vsel %vm33, %v3939, 0
  %v4059 = vsel %vm33, %v3945, 0
  %v4061 = vsel %vm33, %v3954, 0
  %v4063 = vsel %vm33, %v3960, 0
  %4065 = vmatpush.msra.mxu0 %v3999
  %4066 = vmatpush.msra.mxu0 %v3997
  %4067 = vmatpush.msra.mxu0 %v3995
  %4068 = vmatpush.msra.mxu0 %v3993
  %4069 = vmatpush.msra.mxu0 %v3991
  %4070 = vmatpush.msra.mxu0 %v3989
  %4071 = vmatpush.msra.mxu0 %v3987
  %4072 = vmatpush.msra.mxu0 %v3985
  %4073 = vmatpush.msra.mxu0 %v3983
  %4074 = vmatpush.msra.mxu0 %v3981
  %4075 = vmatpush.msra.mxu0 %v3979
  %4076 = vmatpush.msra.mxu0 %v3977
  %4077 = vmatpush.msra.mxu0 %v3975
  %4078 = vmatpush.msra.mxu0 %v3973
  %4079 = vmatpush.msra.mxu0 %v3971
  %4080 = vmatpush.msra.mxu0 %v3969
  %4081 = vmatmul.f32.gmra.mxu0 %v3933
  %v4082 = vpop.f32.mrf.mxu0
  %v4083 = vadd.f32 0.0, %v4082
  %4084 = vmatmul.f32.gmra.mxu0 %v3941
  %v4085 = vpop.f32.mrf.mxu0
  %v4086 = vadd.f32 0.0, %v4085
  %4087 = vmatmul.f32.gmra.mxu0 %v3948
  %v4088 = vpop.f32.mrf.mxu0
  %v4089 = vadd.f32 0.0, %v4088
  %4090 = vmatmul.f32.gmra.mxu0 %v3956
  %v4091 = vpop.f32.mrf.mxu0
  %v4092 = vadd.f32 0.0, %v4091
  %4093 = vdwg.mxu0
  %4094 = vmatpush.msra.mxu0 %v4031
  %4095 = vmatpush.msra.mxu0 %v4029
  %4096 = vmatpush.msra.mxu0 %v4027
  %4097 = vmatpush.msra.mxu0 %v4025
  %4098 = vmatpush.msra.mxu0 %v4023
  %4099 = vmatpush.msra.mxu0 %v4021
  %4100 = vmatpush.msra.mxu0 %v4019
  %4101 = vmatpush.msra.mxu0 %v4017
  %4102 = vmatpush.msra.mxu0 %v4015
  %4103 = vmatpush.msra.mxu0 %v4013
  %4104 = vmatpush.msra.mxu0 %v4011
  %4105 = vmatpush.msra.mxu0 %v4009
  %4106 = vmatpush.msra.mxu0 %v4007
  %4107 = vmatpush.msra.mxu0 %v4005
  %4108 = vmatpush.msra.mxu0 %v4003
  %4109 = vmatpush.msra.mxu0 %v4001
  %4110 = vmatmul.f32.gmra.mxu0 %v3936
  %v4111 = vpop.f32.mrf.mxu0
  %v4112 = vadd.f32 %v4083, %v4111
  %4113 = vmatmul.f32.gmra.mxu0 %v3943
  %v4114 = vpop.f32.mrf.mxu0
  %v4115 = vadd.f32 %v4086, %v4114
  %4116 = vmatmul.f32.gmra.mxu0 %v3951
  %v4117 = vpop.f32.mrf.mxu0
  %v4118 = vadd.f32 %v4089, %v4117
  %4119 = vmatmul.f32.gmra.mxu0 %v3958
  %v4120 = vpop.f32.mrf.mxu0
  %v4121 = vadd.f32 %v4092, %v4120
  %4122 = vdwg.mxu0
  %4123 = vmatpush.msra.mxu0 0.0
  %4124 = vmatpush.msra.mxu0 0.0
  %4125 = vmatpush.msra.mxu0 0.0
  %4126 = vmatpush.msra.mxu0 0.0
  %4127 = vmatpush.msra.mxu0 %v4055
  %4128 = vmatpush.msra.mxu0 %v4053
  %4129 = vmatpush.msra.mxu0 %v4051
  %4130 = vmatpush.msra.mxu0 %v4049
  %4131 = vmatpush.msra.mxu0 %v4047
  %4132 = vmatpush.msra.mxu0 %v4045
  %4133 = vmatpush.msra.mxu0 %v4043
  %4134 = vmatpush.msra.mxu0 %v4041
  %4135 = vmatpush.msra.mxu0 %v4039
  %4136 = vmatpush.msra.mxu0 %v4037
  %4137 = vmatpush.msra.mxu0 %v4035
  %4138 = vmatpush.msra.mxu0 %v4033
  %4139 = vmatmul.f32.gmra.mxu0 %v4057
  %v4140 = vpop.f32.mrf.mxu0
  %v4141 = vadd.f32 %v4112, %v4140
  %4142 = vmatmul.f32.gmra.mxu0 %v4059
  %v4143 = vpop.f32.mrf.mxu0
  %v4144 = vadd.f32 %v4115, %v4143
  %4145 = vmatmul.f32.gmra.mxu0 %v4061
  %v4146 = vpop.f32.mrf.mxu0
  %v4147 = vadd.f32 %v4118, %v4146
  %4148 = vmatmul.f32.gmra.mxu0 %v4063
  %v4149 = vpop.f32.mrf.mxu0
  %v4150 = vadd.f32 %v4121, %v4149
  %4151 = vdwg.mxu0
  %4152 = vmatpush.msra.mxu0 %v4000
  %4153 = vmatpush.msra.mxu0 %v3998
  %4154 = vmatpush.msra.mxu0 %v3996
  %4155 = vmatpush.msra.mxu0 %v3994
  %4156 = vmatpush.msra.mxu0 %v3992
  %4157 = vmatpush.msra.mxu0 %v3990
  %4158 = vmatpush.msra.mxu0 %v3988
  %4159 = vmatpush.msra.mxu0 %v3986
  %4160 = vmatpush.msra.mxu0 %v3984
  %4161 = vmatpush.msra.mxu0 %v3982
  %4162 = vmatpush.msra.mxu0 %v3980
  %4163 = vmatpush.msra.mxu0 %v3978
  %4164 = vmatpush.msra.mxu0 %v3976
  %4165 = vmatpush.msra.mxu0 %v3974
  %4166 = vmatpush.msra.mxu0 %v3972
  %4167 = vmatpush.msra.mxu0 %v3970
  %4168 = vmatmul.f32.gmra.mxu0 %v3933
  %v4169 = vpop.f32.mrf.mxu0
  %v4170 = vadd.f32 0.0, %v4169
  %4171 = vmatmul.f32.gmra.mxu0 %v3941
  %v4172 = vpop.f32.mrf.mxu0
  %v4173 = vadd.f32 0.0, %v4172
  %4174 = vmatmul.f32.gmra.mxu0 %v3948
  %v4175 = vpop.f32.mrf.mxu0
  %v4176 = vadd.f32 0.0, %v4175
  %4177 = vmatmul.f32.gmra.mxu0 %v3956
  %v4178 = vpop.f32.mrf.mxu0
  %v4179 = vadd.f32 0.0, %v4178
  %4180 = vdwg.mxu0
  %4181 = vmatpush.msra.mxu0 %v4032
  %4182 = vmatpush.msra.mxu0 %v4030
  %4183 = vmatpush.msra.mxu0 %v4028
  %4184 = vmatpush.msra.mxu0 %v4026
  %4185 = vmatpush.msra.mxu0 %v4024
  %4186 = vmatpush.msra.mxu0 %v4022
  %4187 = vmatpush.msra.mxu0 %v4020
  %4188 = vmatpush.msra.mxu0 %v4018
  %4189 = vmatpush.msra.mxu0 %v4016
  %4190 = vmatpush.msra.mxu0 %v4014
  %4191 = vmatpush.msra.mxu0 %v4012
  %4192 = vmatpush.msra.mxu0 %v4010
  %4193 = vmatpush.msra.mxu0 %v4008
  %4194 = vmatpush.msra.mxu0 %v4006
  %4195 = vmatpush.msra.mxu0 %v4004
  %4196 = vmatpush.msra.mxu0 %v4002
  %4197 = vmatmul.f32.gmra.mxu0 %v3936
  %v4198 = vpop.f32.mrf.mxu0
  %v4199 = vadd.f32 %v4170, %v4198
  %4200 = vmatmul.f32.gmra.mxu0 %v3943
  %v4201 = vpop.f32.mrf.mxu0
  %v4202 = vadd.f32 %v4173, %v4201
  %4203 = vmatmul.f32.gmra.mxu0 %v3951
  %v4204 = vpop.f32.mrf.mxu0
  %v4205 = vadd.f32 %v4176, %v4204
  %4206 = vmatmul.f32.gmra.mxu0 %v3958
  %v4207 = vpop.f32.mrf.mxu0
  %v4208 = vadd.f32 %v4179, %v4207
  %4209 = vdwg.mxu0
  %4210 = vmatpush.msra.mxu0 0.0
  %4211 = vmatpush.msra.mxu0 0.0
  %4212 = vmatpush.msra.mxu0 0.0
  %4213 = vmatpush.msra.mxu0 0.0
  %4214 = vmatpush.msra.mxu0 %v4056
  %4215 = vmatpush.msra.mxu0 %v4054
  %4216 = vmatpush.msra.mxu0 %v4052
  %4217 = vmatpush.msra.mxu0 %v4050
  %4218 = vmatpush.msra.mxu0 %v4048
  %4219 = vmatpush.msra.mxu0 %v4046
  %4220 = vmatpush.msra.mxu0 %v4044
  %4221 = vmatpush.msra.mxu0 %v4042
  %4222 = vmatpush.msra.mxu0 %v4040
  %4223 = vmatpush.msra.mxu0 %v4038
  %4224 = vmatpush.msra.mxu0 %v4036
  %4225 = vmatpush.msra.mxu0 %v4034
  %4226 = vmatmul.f32.gmra.mxu0 %v4057
  %v4227 = vpop.f32.mrf.mxu0
  %v4228 = vadd.f32 %v4199, %v4227
  %4229 = vmatmul.f32.gmra.mxu0 %v4059
  %v4230 = vpop.f32.mrf.mxu0
  %v4231 = vadd.f32 %v4202, %v4230
  %4232 = vmatmul.f32.gmra.mxu0 %v4061
  %v4233 = vpop.f32.mrf.mxu0
  %v4234 = vadd.f32 %v4205, %v4233
  %4235 = vmatmul.f32.gmra.mxu0 %v4063
  %v4236 = vpop.f32.mrf.mxu0
  %v4237 = vadd.f32 %v4208, %v4236
  %4238 = vdwg.mxu0
  %v4239 = vadd.f32 %v3899, %v4141
  %v4240 = vadd.f32 %v3900, %v4228
  %v4241 = vadd.f32 %v3901, %v4144
  %v4242 = vadd.f32 %v3902, %v4231
  %v4243 = vadd.f32 %v3903, %v4147
  %v4244 = vadd.f32 %v3904, %v4234
  %v4245 = vadd.f32 %v3905, %v4150
  %v4246 = vadd.f32 %v3906, %v4237
  %v4247 = vld [vmem:[#allocation2] sm:$0xe0]
  %v4248 = vld [vmem:[#allocation2 + $0x8] sm:$0xe0]
  %v4249 = vld [vmem:[#allocation2 + $0x10] sm:$0xe0]
  %v4250 = vld [vmem:[#allocation2 + $0x30] sm:$0x1f]
  %v4251 = vld [vmem:[#allocation2 + $0x38] sm:$0x1f]
  %v4252 = vld [vmem:[#allocation2 + $0x40] sm:$0x1f]
  %v4253 = vld [vmem:[#allocation2 + $0x48] sm:$0xe0]
  %v4254 = vld [vmem:[#allocation2 + $0x50] sm:$0xe0]
  %v4255 = vld [vmem:[#allocation2 + $0x58] sm:$0xe0]
  %v4256 = vld [vmem:[#allocation2 + $0x78] sm:$0x1f]
  %v4257 = vld [vmem:[#allocation2 + $0x80] sm:$0x1f]
  %v4258 = vld [vmem:[#allocation2 + $0x88] sm:$0x1f]
  %v4271 = vrot.slane %v4247, 5
  %v4272 = vrot.slane %v2608, 5
  %v4273 = vsel %vm87, %v4271, %v4272
  %v4274 = vrot.slane %v4248, 5
  %v4275 = vrot.slane %v2609, 5
  %v4276 = vsel %vm87, %v4274, %v4275
  %v4277 = vrot.slane %v4249, 5
  %v4278 = vrot.slane %v2610, 5
  %v4279 = vsel %vm87, %v4277, %v4278
  %v4280 = vrot.slane %v4250, 5
  %v4281 = vsel %vm87, %v4272, %v4280
  %v4282 = vrot.slane %v4251, 5
  %v4283 = vsel %vm87, %v4275, %v4282
  %v4284 = vrot.slane %v4252, 5
  %v4285 = vsel %vm87, %v4278, %v4284
  %v4286 = vrot.slane %v4253, 5
  %v4287 = vrot.slane %v2614, 5
  %v4288 = vsel %vm87, %v4286, %v4287
  %v4289 = vrot.slane %v4254, 5
  %v4290 = vrot.slane %v2615, 5
  %v4291 = vsel %vm87, %v4289, %v4290
  %v4292 = vrot.slane %v4255, 5
  %v4293 = vrot.slane %v2616, 5
  %v4294 = vsel %vm87, %v4292, %v4293
  %v4295 = vrot.slane %v4256, 5
  %v4296 = vsel %vm87, %v4287, %v4295
  %v4297 = vrot.slane %v4257, 5
  %v4298 = vsel %vm87, %v4290, %v4297
  %v4299 = vrot.slane %v4258, 5
  %v4300 = vsel %vm87, %v4293, %v4299
  %v4309 = vld [vmem:[%s1884] sm:$0xff]
  %v4310 = vld [vmem:[%s1884 + $0x8] sm:$0xff]
  %v4311 = vld [vmem:[%s1884 + $0x10] sm:$0xff]
  %v4312 = vld [vmem:[%s1884 + $0x18] sm:$0xff]
  %v4313 = vld [vmem:[%s1884 + $0x20] sm:$0xff]
  %v4314 = vld [vmem:[%s1884 + $0x28] sm:$0xff]
  %v4315 = vld [vmem:[%s1884 + $0x30] sm:$0xff]
  %v4316 = vld [vmem:[%s1884 + $0x38] sm:$0xff]
  %v4317 = vld [vmem:[%s1884 + $0x40] sm:$0xff]
  %v4318 = vld [vmem:[%s1884 + $0x48] sm:$0xff]
  %v4319 = vld [vmem:[%s1884 + $0x50] sm:$0xff]
  %v4320 = vld [vmem:[%s1884 + $0x58] sm:$0xff]
  %v4321 = vld [vmem:[%s1884 + $0x60] sm:$0xff]
  %v4322 = vld [vmem:[%s1884 + $0x68] sm:$0xff]
  %v4323 = vld [vmem:[%s1884 + $0x70] sm:$0xff]
  %v4324 = vld [vmem:[%s1884 + $0x78] sm:$0xff]
  %v4325 = vld [vmem:[%s1884 + $0x80] sm:$0xff]
  %v4326 = vld [vmem:[%s1884 + $0x88] sm:$0xff]
  %v4327 = vld [vmem:[%s1884 + $0x90] sm:$0xff]
  %v4328 = vld [vmem:[%s1884 + $0x98] sm:$0xff]
  %v4329 = vld [vmem:[%s1884 + $0xa0] sm:$0xff]
  %v4330 = vld [vmem:[%s1884 + $0xa8] sm:$0xff]
  %v4331 = vld [vmem:[%s1884 + $0xb0] sm:$0xff]
  %v4332 = vld [vmem:[%s1884 + $0xb8] sm:$0xff]
  %v4333 = vld [vmem:[%s1884 + $0xc0] sm:$0xff]
  %v4334 = vld [vmem:[%s1884 + $0xc8] sm:$0xff]
  %v4335 = vld [vmem:[%s1884 + $0xd0] sm:$0xff]
  %v4336 = vld [vmem:[%s1884 + $0xd8] sm:$0xff]
  %v4337 = vld [vmem:[%s1884 + $0xe0] sm:$0xff]
  %v4338 = vld [vmem:[%s1884 + $0xe8] sm:$0xff]
  %v4339 = vld [vmem:[%s1884 + $0xf0] sm:$0xff]
  %v4340 = vld [vmem:[%s1884 + $0xf8] sm:$0xff]
  %v4341 = vld [vmem:[%s1884 + $0x100] sm:$0xff]
  %v4342 = vld [vmem:[%s1884 + $0x108] sm:$0xff]
  %v4343 = vld [vmem:[%s1884 + $0x110] sm:$0xff]
  %v4344 = vld [vmem:[%s1884 + $0x118] sm:$0xff]
  %v4345 = vld [vmem:[%s1884 + $0x120] sm:$0xff]
  %v4346 = vld [vmem:[%s1884 + $0x128] sm:$0xff]
  %v4347 = vld [vmem:[%s1884 + $0x130] sm:$0xff]
  %v4348 = vld [vmem:[%s1884 + $0x138] sm:$0xff]
  %v4349 = vld [vmem:[%s1884 + $0x140] sm:$0xff]
  %v4350 = vld [vmem:[%s1884 + $0x148] sm:$0xff]
  %v4351 = vld [vmem:[%s1884 + $0x150] sm:$0xff]
  %v4352 = vld [vmem:[%s1884 + $0x158] sm:$0xff]
  %v4353 = vld [vmem:[%s1884 + $0x160] sm:$0xff]
  %v4354 = vld [vmem:[%s1884 + $0x168] sm:$0xff]
  %v4355 = vld [vmem:[%s1884 + $0x170] sm:$0xff]
  %v4356 = vld [vmem:[%s1884 + $0x178] sm:$0xff]
  %v4357 = vld [vmem:[%s1884 + $0x180] sm:$0xff]
  %v4358 = vld [vmem:[%s1884 + $0x188] sm:$0xff]
  %v4359 = vld [vmem:[%s1884 + $0x190] sm:$0xff]
  %v4360 = vld [vmem:[%s1884 + $0x198] sm:$0xff]
  %v4361 = vld [vmem:[%s1884 + $0x1a0] sm:$0xff]
  %v4362 = vld [vmem:[%s1884 + $0x1a8] sm:$0xff]
  %v4363 = vld [vmem:[%s1884 + $0x1b0] sm:$0xff]
  %v4364 = vld [vmem:[%s1884 + $0x1b8] sm:$0xff]
  %v4365 = vld [vmem:[%s1884 + $0x1c0] sm:$0xff]
  %v4366 = vld [vmem:[%s1884 + $0x1c8] sm:$0xff]
  %v4367 = vld [vmem:[%s1884 + $0x1d0] sm:$0xff]
  %v4368 = vld [vmem:[%s1884 + $0x1d8] sm:$0xff]
  %v4369 = vld [vmem:[%s1884 + $0x1e0] sm:$0xff]
  %v4370 = vld [vmem:[%s1884 + $0x1e8] sm:$0xff]
  %v4371 = vld [vmem:[%s1884 + $0x1f0] sm:$0xff]
  %v4372 = vld [vmem:[%s1884 + $0x1f8] sm:$0xff]
  %v4373 = vld [vmem:[%s1884 + $0x200] sm:$0xff]
  %v4374 = vld [vmem:[%s1884 + $0x208] sm:$0xff]
  %v4375 = vld [vmem:[%s1884 + $0x210] sm:$0xff]
  %v4376 = vld [vmem:[%s1884 + $0x218] sm:$0xff]
  %v4377 = vld [vmem:[%s1884 + $0x220] sm:$0xff]
  %v4378 = vld [vmem:[%s1884 + $0x228] sm:$0xff]
  %v4379 = vld [vmem:[%s1884 + $0x230] sm:$0xff]
  %v4380 = vld [vmem:[%s1884 + $0x238] sm:$0xff]
  %v4381 = vld [vmem:[%s1884 + $0x240] sm:$0xff]
  %v4382 = vld [vmem:[%s1884 + $0x248] sm:$0xff]
  %v4383 = vld [vmem:[%s1884 + $0x250] sm:$0xff]
  %v4384 = vld [vmem:[%s1884 + $0x258] sm:$0xff]
  %v4385 = vld [vmem:[%s1884 + $0x260] sm:$0xff]
  %v4386 = vld [vmem:[%s1884 + $0x268] sm:$0xff]
  %v4387 = vld [vmem:[%s1884 + $0x270] sm:$0xff]
  %v4388 = vld [vmem:[%s1884 + $0x278] sm:$0xff]
  %v4389 = vld [vmem:[%s1884 + $0x280] sm:$0xff]
  %v4390 = vld [vmem:[%s1884 + $0x288] sm:$0xff]
  %v4391 = vld [vmem:[%s1884 + $0x290] sm:$0xff]
  %v4392 = vld [vmem:[%s1884 + $0x298] sm:$0xff]
  %v4393 = vld [vmem:[%s1884 + $0x2a0] sm:$0xff]
  %v4394 = vld [vmem:[%s1884 + $0x2a8] sm:$0xff]
  %v4395 = vld [vmem:[%s1884 + $0x2b0] sm:$0xff]
  %v4396 = vld [vmem:[%s1884 + $0x2b8] sm:$0xff]
  %v4397 = vsel %vm33, %v4279, 0
  %v4399 = vsel %vm33, %v4285, 0
  %v4401 = vsel %vm33, %v4294, 0
  %v4403 = vsel %vm33, %v4300, 0
  %4405 = vmatpush.msra.mxu0 %v4339
  %4406 = vmatpush.msra.mxu0 %v4337
  %4407 = vmatpush.msra.mxu0 %v4335
  %4408 = vmatpush.msra.mxu0 %v4333
  %4409 = vmatpush.msra.mxu0 %v4331
  %4410 = vmatpush.msra.mxu0 %v4329
  %4411 = vmatpush.msra.mxu0 %v4327
  %4412 = vmatpush.msra.mxu0 %v4325
  %4413 = vmatpush.msra.mxu0 %v4323
  %4414 = vmatpush.msra.mxu0 %v4321
  %4415 = vmatpush.msra.mxu0 %v4319
  %4416 = vmatpush.msra.mxu0 %v4317
  %4417 = vmatpush.msra.mxu0 %v4315
  %4418 = vmatpush.msra.mxu0 %v4313
  %4419 = vmatpush.msra.mxu0 %v4311
  %4420 = vmatpush.msra.mxu0 %v4309
  %4421 = vmatmul.f32.gmra.mxu0 %v4273
  %v4422 = vpop.f32.mrf.mxu0
  %v4423 = vadd.f32 0.0, %v4422
  %4424 = vmatmul.f32.gmra.mxu0 %v4281
  %v4425 = vpop.f32.mrf.mxu0
  %v4426 = vadd.f32 0.0, %v4425
  %4427 = vmatmul.f32.gmra.mxu0 %v4288
  %v4428 = vpop.f32.mrf.mxu0
  %v4429 = vadd.f32 0.0, %v4428
  %4430 = vmatmul.f32.gmra.mxu0 %v4296
  %v4431 = vpop.f32.mrf.mxu0
  %v4432 = vadd.f32 0.0, %v4431
  %4433 = vdwg.mxu0
  %4434 = vmatpush.msra.mxu0 %v4371
  %4435 = vmatpush.msra.mxu0 %v4369
  %4436 = vmatpush.msra.mxu0 %v4367
  %4437 = vmatpush.msra.mxu0 %v4365
  %4438 = vmatpush.msra.mxu0 %v4363
  %4439 = vmatpush.msra.mxu0 %v4361
  %4440 = vmatpush.msra.mxu0 %v4359
  %4441 = vmatpush.msra.mxu0 %v4357
  %4442 = vmatpush.msra.mxu0 %v4355
  %4443 = vmatpush.msra.mxu0 %v4353
  %4444 = vmatpush.msra.mxu0 %v4351
  %4445 = vmatpush.msra.mxu0 %v4349
  %4446 = vmatpush.msra.mxu0 %v4347
  %4447 = vmatpush.msra.mxu0 %v4345
  %4448 = vmatpush.msra.mxu0 %v4343
  %4449 = vmatpush.msra.mxu0 %v4341
  %4450 = vmatmul.f32.gmra.mxu0 %v4276
  %v4451 = vpop.f32.mrf.mxu0
  %v4452 = vadd.f32 %v4423, %v4451
  %4453 = vmatmul.f32.gmra.mxu0 %v4283
  %v4454 = vpop.f32.mrf.mxu0
  %v4455 = vadd.f32 %v4426, %v4454
  %4456 = vmatmul.f32.gmra.mxu0 %v4291
  %v4457 = vpop.f32.mrf.mxu0
  %v4458 = vadd.f32 %v4429, %v4457
  %4459 = vmatmul.f32.gmra.mxu0 %v4298
  %v4460 = vpop.f32.mrf.mxu0
  %v4461 = vadd.f32 %v4432, %v4460
  %4462 = vdwg.mxu0
  %4463 = vmatpush.msra.mxu0 0.0
  %4464 = vmatpush.msra.mxu0 0.0
  %4465 = vmatpush.msra.mxu0 0.0
  %4466 = vmatpush.msra.mxu0 0.0
  %4467 = vmatpush.msra.mxu0 %v4395
  %4468 = vmatpush.msra.mxu0 %v4393
  %4469 = vmatpush.msra.mxu0 %v4391
  %4470 = vmatpush.msra.mxu0 %v4389
  %4471 = vmatpush.msra.mxu0 %v4387
  %4472 = vmatpush.msra.mxu0 %v4385
  %4473 = vmatpush.msra.mxu0 %v4383
  %4474 = vmatpush.msra.mxu0 %v4381
  %4475 = vmatpush.msra.mxu0 %v4379
  %4476 = vmatpush.msra.mxu0 %v4377
  %4477 = vmatpush.msra.mxu0 %v4375
  %4478 = vmatpush.msra.mxu0 %v4373
  %4479 = vmatmul.f32.gmra.mxu0 %v4397
  %v4480 = vpop.f32.mrf.mxu0
  %v4481 = vadd.f32 %v4452, %v4480
  %4482 = vmatmul.f32.gmra.mxu0 %v4399
  %v4483 = vpop.f32.mrf.mxu0
  %v4484 = vadd.f32 %v4455, %v4483
  %4485 = vmatmul.f32.gmra.mxu0 %v4401
  %v4486 = vpop.f32.mrf.mxu0
  %v4487 = vadd.f32 %v4458, %v4486
  %4488 = vmatmul.f32.gmra.mxu0 %v4403
  %v4489 = vpop.f32.mrf.mxu0
  %v4490 = vadd.f32 %v4461, %v4489
  %4491 = vdwg.mxu0
  %4492 = vmatpush.msra.mxu0 %v4340
  %4493 = vmatpush.msra.mxu0 %v4338
  %4494 = vmatpush.msra.mxu0 %v4336
  %4495 = vmatpush.msra.mxu0 %v4334
  %4496 = vmatpush.msra.mxu0 %v4332
  %4497 = vmatpush.msra.mxu0 %v4330
  %4498 = vmatpush.msra.mxu0 %v4328
  %4499 = vmatpush.msra.mxu0 %v4326
  %4500 = vmatpush.msra.mxu0 %v4324
  %4501 = vmatpush.msra.mxu0 %v4322
  %4502 = vmatpush.msra.mxu0 %v4320
  %4503 = vmatpush.msra.mxu0 %v4318
  %4504 = vmatpush.msra.mxu0 %v4316
  %4505 = vmatpush.msra.mxu0 %v4314
  %4506 = vmatpush.msra.mxu0 %v4312
  %4507 = vmatpush.msra.mxu0 %v4310
  %4508 = vmatmul.f32.gmra.mxu0 %v4273
  %v4509 = vpop.f32.mrf.mxu0
  %v4510 = vadd.f32 0.0, %v4509
  %4511 = vmatmul.f32.gmra.mxu0 %v4281
  %v4512 = vpop.f32.mrf.mxu0
  %v4513 = vadd.f32 0.0, %v4512
  %4514 = vmatmul.f32.gmra.mxu0 %v4288
  %v4515 = vpop.f32.mrf.mxu0
  %v4516 = vadd.f32 0.0, %v4515
  %4517 = vmatmul.f32.gmra.mxu0 %v4296
  %v4518 = vpop.f32.mrf.mxu0
  %v4519 = vadd.f32 0.0, %v4518
  %4520 = vdwg.mxu0
  %4521 = vmatpush.msra.mxu0 %v4372
  %4522 = vmatpush.msra.mxu0 %v4370
  %4523 = vmatpush.msra.mxu0 %v4368
  %4524 = vmatpush.msra.mxu0 %v4366
  %4525 = vmatpush.msra.mxu0 %v4364
  %4526 = vmatpush.msra.mxu0 %v4362
  %4527 = vmatpush.msra.mxu0 %v4360
  %4528 = vmatpush.msra.mxu0 %v4358
  %4529 = vmatpush.msra.mxu0 %v4356
  %4530 = vmatpush.msra.mxu0 %v4354
  %4531 = vmatpush.msra.mxu0 %v4352
  %4532 = vmatpush.msra.mxu0 %v4350
  %4533 = vmatpush.msra.mxu0 %v4348
  %4534 = vmatpush.msra.mxu0 %v4346
  %4535 = vmatpush.msra.mxu0 %v4344
  %4536 = vmatpush.msra.mxu0 %v4342
  %4537 = vmatmul.f32.gmra.mxu0 %v4276
  %v4538 = vpop.f32.mrf.mxu0
  %v4539 = vadd.f32 %v4510, %v4538
  %4540 = vmatmul.f32.gmra.mxu0 %v4283
  %v4541 = vpop.f32.mrf.mxu0
  %v4542 = vadd.f32 %v4513, %v4541
  %4543 = vmatmul.f32.gmra.mxu0 %v4291
  %v4544 = vpop.f32.mrf.mxu0
  %v4545 = vadd.f32 %v4516, %v4544
  %4546 = vmatmul.f32.gmra.mxu0 %v4298
  %v4547 = vpop.f32.mrf.mxu0
  %v4548 = vadd.f32 %v4519, %v4547
  %4549 = vdwg.mxu0
  %4550 = vmatpush.msra.mxu0 0.0
  %4551 = vmatpush.msra.mxu0 0.0
  %4552 = vmatpush.msra.mxu0 0.0
  %4553 = vmatpush.msra.mxu0 0.0
  %4554 = vmatpush.msra.mxu0 %v4396
  %4555 = vmatpush.msra.mxu0 %v4394
  %4556 = vmatpush.msra.mxu0 %v4392
  %4557 = vmatpush.msra.mxu0 %v4390
  %4558 = vmatpush.msra.mxu0 %v4388
  %4559 = vmatpush.msra.mxu0 %v4386
  %4560 = vmatpush.msra.mxu0 %v4384
  %4561 = vmatpush.msra.mxu0 %v4382
  %4562 = vmatpush.msra.mxu0 %v4380
  %4563 = vmatpush.msra.mxu0 %v4378
  %4564 = vmatpush.msra.mxu0 %v4376
  %4565 = vmatpush.msra.mxu0 %v4374
  %4566 = vmatmul.f32.gmra.mxu0 %v4397
  %v4567 = vpop.f32.mrf.mxu0
  %v4568 = vadd.f32 %v4539, %v4567
  %4569 = vmatmul.f32.gmra.mxu0 %v4399
  %v4570 = vpop.f32.mrf.mxu0
  %v4571 = vadd.f32 %v4542, %v4570
  %4572 = vmatmul.f32.gmra.mxu0 %v4401
  %v4573 = vpop.f32.mrf.mxu0
  %v4574 = vadd.f32 %v4545, %v4573
  %4575 = vmatmul.f32.gmra.mxu0 %v4403
  %v4576 = vpop.f32.mrf.mxu0
  %v4577 = vadd.f32 %v4548, %v4576
  %4578 = vdwg.mxu0
  %v4579 = vadd.f32 %v4239, %v4481
  %v4580 = vadd.f32 %v4240, %v4568
  %v4581 = vadd.f32 %v4241, %v4484
  %v4582 = vadd.f32 %v4242, %v4571
  %v4583 = vadd.f32 %v4243, %v4487
  %v4584 = vadd.f32 %v4244, %v4574
  %v4585 = vadd.f32 %v4245, %v4490
  %v4586 = vadd.f32 %v4246, %v4577
  %v4587 = vld [vmem:[#allocation2] sm:$0xc0]
  %v4588 = vld [vmem:[#allocation2 + $0x8] sm:$0xc0]
  %v4589 = vld [vmem:[#allocation2 + $0x10] sm:$0xc0]
  %v4590 = vld [vmem:[#allocation2 + $0x30] sm:$0x3f]
  %v4591 = vld [vmem:[#allocation2 + $0x38] sm:$0x3f]
  %v4592 = vld [vmem:[#allocation2 + $0x40] sm:$0x3f]
  %v4593 = vld [vmem:[#allocation2 + $0x48] sm:$0xc0]
  %v4594 = vld [vmem:[#allocation2 + $0x50] sm:$0xc0]
  %v4595 = vld [vmem:[#allocation2 + $0x58] sm:$0xc0]
  %v4596 = vld [vmem:[#allocation2 + $0x78] sm:$0x3f]
  %v4597 = vld [vmem:[#allocation2 + $0x80] sm:$0x3f]
  %v4598 = vld [vmem:[#allocation2 + $0x88] sm:$0x3f]
  %v4611 = vrot.slane %v4587, 6
  %v4612 = vrot.slane %v2608, 6
  %v4613 = vsel %vm2187, %v4611, %v4612
  %v4614 = vrot.slane %v4588, 6
  %v4615 = vrot.slane %v2609, 6
  %v4616 = vsel %vm2187, %v4614, %v4615
  %v4617 = vrot.slane %v4589, 6
  %v4618 = vrot.slane %v2610, 6
  %v4619 = vsel %vm2187, %v4617, %v4618
  %v4620 = vrot.slane %v4590, 6
  %v4621 = vsel %vm2187, %v4612, %v4620
  %v4622 = vrot.slane %v4591, 6
  %v4623 = vsel %vm2187, %v4615, %v4622
  %v4624 = vrot.slane %v4592, 6
  %v4625 = vsel %vm2187, %v4618, %v4624
  %v4626 = vrot.slane %v4593, 6
  %v4627 = vrot.slane %v2614, 6
  %v4628 = vsel %vm2187, %v4626, %v4627
  %v4629 = vrot.slane %v4594, 6
  %v4630 = vrot.slane %v2615, 6
  %v4631 = vsel %vm2187, %v4629, %v4630
  %v4632 = vrot.slane %v4595, 6
  %v4633 = vrot.slane %v2616, 6
  %v4634 = vsel %vm2187, %v4632, %v4633
  %v4635 = vrot.slane %v4596, 6
  %v4636 = vsel %vm2187, %v4627, %v4635
  %v4637 = vrot.slane %v4597, 6
  %v4638 = vsel %vm2187, %v4630, %v4637
  %v4639 = vrot.slane %v4598, 6
  %v4640 = vsel %vm2187, %v4633, %v4639
  %v4649 = vld [vmem:[%s2226] sm:$0xff]
  %v4650 = vld [vmem:[%s2226 + $0x8] sm:$0xff]
  %v4651 = vld [vmem:[%s2226 + $0x10] sm:$0xff]
  %v4652 = vld [vmem:[%s2226 + $0x18] sm:$0xff]
  %v4653 = vld [vmem:[%s2226 + $0x20] sm:$0xff]
  %v4654 = vld [vmem:[%s2226 + $0x28] sm:$0xff]
  %v4655 = vld [vmem:[%s2226 + $0x30] sm:$0xff]
  %v4656 = vld [vmem:[%s2226 + $0x38] sm:$0xff]
  %v4657 = vld [vmem:[%s2226 + $0x40] sm:$0xff]
  %v4658 = vld [vmem:[%s2226 + $0x48] sm:$0xff]
  %v4659 = vld [vmem:[%s2226 + $0x50] sm:$0xff]
  %v4660 = vld [vmem:[%s2226 + $0x58] sm:$0xff]
  %v4661 = vld [vmem:[%s2226 + $0x60] sm:$0xff]
  %v4662 = vld [vmem:[%s2226 + $0x68] sm:$0xff]
  %v4663 = vld [vmem:[%s2226 + $0x70] sm:$0xff]
  %v4664 = vld [vmem:[%s2226 + $0x78] sm:$0xff]
  %v4665 = vld [vmem:[%s2226 + $0x80] sm:$0xff]
  %v4666 = vld [vmem:[%s2226 + $0x88] sm:$0xff]
  %v4667 = vld [vmem:[%s2226 + $0x90] sm:$0xff]
  %v4668 = vld [vmem:[%s2226 + $0x98] sm:$0xff]
  %v4669 = vld [vmem:[%s2226 + $0xa0] sm:$0xff]
  %v4670 = vld [vmem:[%s2226 + $0xa8] sm:$0xff]
  %v4671 = vld [vmem:[%s2226 + $0xb0] sm:$0xff]
  %v4672 = vld [vmem:[%s2226 + $0xb8] sm:$0xff]
  %v4673 = vld [vmem:[%s2226 + $0xc0] sm:$0xff]
  %v4674 = vld [vmem:[%s2226 + $0xc8] sm:$0xff]
  %v4675 = vld [vmem:[%s2226 + $0xd0] sm:$0xff]
  %v4676 = vld [vmem:[%s2226 + $0xd8] sm:$0xff]
  %v4677 = vld [vmem:[%s2226 + $0xe0] sm:$0xff]
  %v4678 = vld [vmem:[%s2226 + $0xe8] sm:$0xff]
  %v4679 = vld [vmem:[%s2226 + $0xf0] sm:$0xff]
  %v4680 = vld [vmem:[%s2226 + $0xf8] sm:$0xff]
  %v4681 = vld [vmem:[%s2226 + $0x100] sm:$0xff]
  %v4682 = vld [vmem:[%s2226 + $0x108] sm:$0xff]
  %v4683 = vld [vmem:[%s2226 + $0x110] sm:$0xff]
  %v4684 = vld [vmem:[%s2226 + $0x118] sm:$0xff]
  %v4685 = vld [vmem:[%s2226 + $0x120] sm:$0xff]
  %v4686 = vld [vmem:[%s2226 + $0x128] sm:$0xff]
  %v4687 = vld [vmem:[%s2226 + $0x130] sm:$0xff]
  %v4688 = vld [vmem:[%s2226 + $0x138] sm:$0xff]
  %v4689 = vld [vmem:[%s2226 + $0x140] sm:$0xff]
  %v4690 = vld [vmem:[%s2226 + $0x148] sm:$0xff]
  %v4691 = vld [vmem:[%s2226 + $0x150] sm:$0xff]
  %v4692 = vld [vmem:[%s2226 + $0x158] sm:$0xff]
  %v4693 = vld [vmem:[%s2226 + $0x160] sm:$0xff]
  %v4694 = vld [vmem:[%s2226 + $0x168] sm:$0xff]
  %v4695 = vld [vmem:[%s2226 + $0x170] sm:$0xff]
  %v4696 = vld [vmem:[%s2226 + $0x178] sm:$0xff]
  %v4697 = vld [vmem:[%s2226 + $0x180] sm:$0xff]
  %v4698 = vld [vmem:[%s2226 + $0x188] sm:$0xff]
  %v4699 = vld [vmem:[%s2226 + $0x190] sm:$0xff]
  %v4700 = vld [vmem:[%s2226 + $0x198] sm:$0xff]
  %v4701 = vld [vmem:[%s2226 + $0x1a0] sm:$0xff]
  %v4702 = vld [vmem:[%s2226 + $0x1a8] sm:$0xff]
  %v4703 = vld [vmem:[%s2226 + $0x1b0] sm:$0xff]
  %v4704 = vld [vmem:[%s2226 + $0x1b8] sm:$0xff]
  %v4705 = vld [vmem:[%s2226 + $0x1c0] sm:$0xff]
  %v4706 = vld [vmem:[%s2226 + $0x1c8] sm:$0xff]
  %v4707 = vld [vmem:[%s2226 + $0x1d0] sm:$0xff]
  %v4708 = vld [vmem:[%s2226 + $0x1d8] sm:$0xff]
  %v4709 = vld [vmem:[%s2226 + $0x1e0] sm:$0xff]
  %v4710 = vld [vmem:[%s2226 + $0x1e8] sm:$0xff]
  %v4711 = vld [vmem:[%s2226 + $0x1f0] sm:$0xff]
  %v4712 = vld [vmem:[%s2226 + $0x1f8] sm:$0xff]
  %v4713 = vld [vmem:[%s2226 + $0x200] sm:$0xff]
  %v4714 = vld [vmem:[%s2226 + $0x208] sm:$0xff]
  %v4715 = vld [vmem:[%s2226 + $0x210] sm:$0xff]
  %v4716 = vld [vmem:[%s2226 + $0x218] sm:$0xff]
  %v4717 = vld [vmem:[%s2226 + $0x220] sm:$0xff]
  %v4718 = vld [vmem:[%s2226 + $0x228] sm:$0xff]
  %v4719 = vld [vmem:[%s2226 + $0x230] sm:$0xff]
  %v4720 = vld [vmem:[%s2226 + $0x238] sm:$0xff]
  %v4721 = vld [vmem:[%s2226 + $0x240] sm:$0xff]
  %v4722 = vld [vmem:[%s2226 + $0x248] sm:$0xff]
  %v4723 = vld [vmem:[%s2226 + $0x250] sm:$0xff]
  %v4724 = vld [vmem:[%s2226 + $0x258] sm:$0xff]
  %v4725 = vld [vmem:[%s2226 + $0x260] sm:$0xff]
  %v4726 = vld [vmem:[%s2226 + $0x268] sm:$0xff]
  %v4727 = vld [vmem:[%s2226 + $0x270] sm:$0xff]
  %v4728 = vld [vmem:[%s2226 + $0x278] sm:$0xff]
  %v4729 = vld [vmem:[%s2226 + $0x280] sm:$0xff]
  %v4730 = vld [vmem:[%s2226 + $0x288] sm:$0xff]
  %v4731 = vld [vmem:[%s2226 + $0x290] sm:$0xff]
  %v4732 = vld [vmem:[%s2226 + $0x298] sm:$0xff]
  %v4733 = vld [vmem:[%s2226 + $0x2a0] sm:$0xff]
  %v4734 = vld [vmem:[%s2226 + $0x2a8] sm:$0xff]
  %v4735 = vld [vmem:[%s2226 + $0x2b0] sm:$0xff]
  %v4736 = vld [vmem:[%s2226 + $0x2b8] sm:$0xff]
  %v4737 = vsel %vm33, %v4619, 0
  %v4739 = vsel %vm33, %v4625, 0
  %v4741 = vsel %vm33, %v4634, 0
  %v4743 = vsel %vm33, %v4640, 0
  %4745 = vmatpush.msra.mxu0 %v4679
  %4746 = vmatpush.msra.mxu0 %v4677
  %4747 = vmatpush.msra.mxu0 %v4675
  %4748 = vmatpush.msra.mxu0 %v4673
  %4749 = vmatpush.msra.mxu0 %v4671
  %4750 = vmatpush.msra.mxu0 %v4669
  %4751 = vmatpush.msra.mxu0 %v4667
  %4752 = vmatpush.msra.mxu0 %v4665
  %4753 = vmatpush.msra.mxu0 %v4663
  %4754 = vmatpush.msra.mxu0 %v4661
  %4755 = vmatpush.msra.mxu0 %v4659
  %4756 = vmatpush.msra.mxu0 %v4657
  %4757 = vmatpush.msra.mxu0 %v4655
  %4758 = vmatpush.msra.mxu0 %v4653
  %4759 = vmatpush.msra.mxu0 %v4651
  %4760 = vmatpush.msra.mxu0 %v4649
  %4761 = vmatmul.f32.gmra.mxu0 %v4613
  %v4762 = vpop.f32.mrf.mxu0
  %v4763 = vadd.f32 0.0, %v4762
  %4764 = vmatmul.f32.gmra.mxu0 %v4621
  %v4765 = vpop.f32.mrf.mxu0
  %v4766 = vadd.f32 0.0, %v4765
  %4767 = vmatmul.f32.gmra.mxu0 %v4628
  %v4768 = vpop.f32.mrf.mxu0
  %v4769 = vadd.f32 0.0, %v4768
  %4770 = vmatmul.f32.gmra.mxu0 %v4636
  %v4771 = vpop.f32.mrf.mxu0
  %v4772 = vadd.f32 0.0, %v4771
  %4773 = vdwg.mxu0
  %4774 = vmatpush.msra.mxu0 %v4711
  %4775 = vmatpush.msra.mxu0 %v4709
  %4776 = vmatpush.msra.mxu0 %v4707
  %4777 = vmatpush.msra.mxu0 %v4705
  %4778 = vmatpush.msra.mxu0 %v4703
  %4779 = vmatpush.msra.mxu0 %v4701
  %4780 = vmatpush.msra.mxu0 %v4699
  %4781 = vmatpush.msra.mxu0 %v4697
  %4782 = vmatpush.msra.mxu0 %v4695
  %4783 = vmatpush.msra.mxu0 %v4693
  %4784 = vmatpush.msra.mxu0 %v4691
  %4785 = vmatpush.msra.mxu0 %v4689
  %4786 = vmatpush.msra.mxu0 %v4687
  %4787 = vmatpush.msra.mxu0 %v4685
  %4788 = vmatpush.msra.mxu0 %v4683
  %4789 = vmatpush.msra.mxu0 %v4681
  %4790 = vmatmul.f32.gmra.mxu0 %v4616
  %v4791 = vpop.f32.mrf.mxu0
  %v4792 = vadd.f32 %v4763, %v4791
  %4793 = vmatmul.f32.gmra.mxu0 %v4623
  %v4794 = vpop.f32.mrf.mxu0
  %v4795 = vadd.f32 %v4766, %v4794
  %4796 = vmatmul.f32.gmra.mxu0 %v4631
  %v4797 = vpop.f32.mrf.mxu0
  %v4798 = vadd.f32 %v4769, %v4797
  %4799 = vmatmul.f32.gmra.mxu0 %v4638
  %v4800 = vpop.f32.mrf.mxu0
  %v4801 = vadd.f32 %v4772, %v4800
  %4802 = vdwg.mxu0
  %4803 = vmatpush.msra.mxu0 0.0
  %4804 = vmatpush.msra.mxu0 0.0
  %4805 = vmatpush.msra.mxu0 0.0
  %4806 = vmatpush.msra.mxu0 0.0
  %4807 = vmatpush.msra.mxu0 %v4735
  %4808 = vmatpush.msra.mxu0 %v4733
  %4809 = vmatpush.msra.mxu0 %v4731
  %4810 = vmatpush.msra.mxu0 %v4729
  %4811 = vmatpush.msra.mxu0 %v4727
  %4812 = vmatpush.msra.mxu0 %v4725
  %4813 = vmatpush.msra.mxu0 %v4723
  %4814 = vmatpush.msra.mxu0 %v4721
  %4815 = vmatpush.msra.mxu0 %v4719
  %4816 = vmatpush.msra.mxu0 %v4717
  %4817 = vmatpush.msra.mxu0 %v4715
  %4818 = vmatpush.msra.mxu0 %v4713
  %4819 = vmatmul.f32.gmra.mxu0 %v4737
  %v4820 = vpop.f32.mrf.mxu0
  %v4821 = vadd.f32 %v4792, %v4820
  %4822 = vmatmul.f32.gmra.mxu0 %v4739
  %v4823 = vpop.f32.mrf.mxu0
  %v4824 = vadd.f32 %v4795, %v4823
  %4825 = vmatmul.f32.gmra.mxu0 %v4741
  %v4826 = vpop.f32.mrf.mxu0
  %v4827 = vadd.f32 %v4798, %v4826
  %4828 = vmatmul.f32.gmra.mxu0 %v4743
  %v4829 = vpop.f32.mrf.mxu0
  %v4830 = vadd.f32 %v4801, %v4829
  %4831 = vdwg.mxu0
  %4832 = vmatpush.msra.mxu0 %v4680
  %4833 = vmatpush.msra.mxu0 %v4678
  %4834 = vmatpush.msra.mxu0 %v4676
  %4835 = vmatpush.msra.mxu0 %v4674
  %4836 = vmatpush.msra.mxu0 %v4672
  %4837 = vmatpush.msra.mxu0 %v4670
  %4838 = vmatpush.msra.mxu0 %v4668
  %4839 = vmatpush.msra.mxu0 %v4666
  %4840 = vmatpush.msra.mxu0 %v4664
  %4841 = vmatpush.msra.mxu0 %v4662
  %4842 = vmatpush.msra.mxu0 %v4660
  %4843 = vmatpush.msra.mxu0 %v4658
  %4844 = vmatpush.msra.mxu0 %v4656
  %4845 = vmatpush.msra.mxu0 %v4654
  %4846 = vmatpush.msra.mxu0 %v4652
  %4847 = vmatpush.msra.mxu0 %v4650
  %4848 = vmatmul.f32.gmra.mxu0 %v4613
  %v4849 = vpop.f32.mrf.mxu0
  %v4850 = vadd.f32 0.0, %v4849
  %4851 = vmatmul.f32.gmra.mxu0 %v4621
  %v4852 = vpop.f32.mrf.mxu0
  %v4853 = vadd.f32 0.0, %v4852
  %4854 = vmatmul.f32.gmra.mxu0 %v4628
  %v4855 = vpop.f32.mrf.mxu0
  %v4856 = vadd.f32 0.0, %v4855
  %4857 = vmatmul.f32.gmra.mxu0 %v4636
  %v4858 = vpop.f32.mrf.mxu0
  %v4859 = vadd.f32 0.0, %v4858
  %4860 = vdwg.mxu0
  %4861 = vmatpush.msra.mxu0 %v4712
  %4862 = vmatpush.msra.mxu0 %v4710
  %4863 = vmatpush.msra.mxu0 %v4708
  %4864 = vmatpush.msra.mxu0 %v4706
  %4865 = vmatpush.msra.mxu0 %v4704
  %4866 = vmatpush.msra.mxu0 %v4702
  %4867 = vmatpush.msra.mxu0 %v4700
  %4868 = vmatpush.msra.mxu0 %v4698
  %4869 = vmatpush.msra.mxu0 %v4696
  %4870 = vmatpush.msra.mxu0 %v4694
  %4871 = vmatpush.msra.mxu0 %v4692
  %4872 = vmatpush.msra.mxu0 %v4690
  %4873 = vmatpush.msra.mxu0 %v4688
  %4874 = vmatpush.msra.mxu0 %v4686
  %4875 = vmatpush.msra.mxu0 %v4684
  %4876 = vmatpush.msra.mxu0 %v4682
  %4877 = vmatmul.f32.gmra.mxu0 %v4616
  %v4878 = vpop.f32.mrf.mxu0
  %v4879 = vadd.f32 %v4850, %v4878
  %4880 = vmatmul.f32.gmra.mxu0 %v4623
  %v4881 = vpop.f32.mrf.mxu0
  %v4882 = vadd.f32 %v4853, %v4881
  %4883 = vmatmul.f32.gmra.mxu0 %v4631
  %v4884 = vpop.f32.mrf.mxu0
  %v4885 = vadd.f32 %v4856, %v4884
  %4886 = vmatmul.f32.gmra.mxu0 %v4638
  %v4887 = vpop.f32.mrf.mxu0
  %v4888 = vadd.f32 %v4859, %v4887
  %4889 = vdwg.mxu0
  %4890 = vmatpush.msra.mxu0 0.0
  %4891 = vmatpush.msra.mxu0 0.0
  %4892 = vmatpush.msra.mxu0 0.0
  %4893 = vmatpush.msra.mxu0 0.0
  %4894 = vmatpush.msra.mxu0 %v4736
  %4895 = vmatpush.msra.mxu0 %v4734
  %4896 = vmatpush.msra.mxu0 %v4732
  %4897 = vmatpush.msra.mxu0 %v4730
  %4898 = vmatpush.msra.mxu0 %v4728
  %4899 = vmatpush.msra.mxu0 %v4726
  %4900 = vmatpush.msra.mxu0 %v4724
  %4901 = vmatpush.msra.mxu0 %v4722
  %4902 = vmatpush.msra.mxu0 %v4720
  %4903 = vmatpush.msra.mxu0 %v4718
  %4904 = vmatpush.msra.mxu0 %v4716
  %4905 = vmatpush.msra.mxu0 %v4714
  %4906 = vmatmul.f32.gmra.mxu0 %v4737
  %v4907 = vpop.f32.mrf.mxu0
  %v4908 = vadd.f32 %v4879, %v4907
  %4909 = vmatmul.f32.gmra.mxu0 %v4739
  %v4910 = vpop.f32.mrf.mxu0
  %v4911 = vadd.f32 %v4882, %v4910
  %4912 = vmatmul.f32.gmra.mxu0 %v4741
  %v4913 = vpop.f32.mrf.mxu0
  %v4914 = vadd.f32 %v4885, %v4913
  %4915 = vmatmul.f32.gmra.mxu0 %v4743
  %v4916 = vpop.f32.mrf.mxu0
  %v4917 = vadd.f32 %v4888, %v4916
  %4918 = vdwg.mxu0
  %v4919 = vadd.f32 %v4579, %v4821
  %v4920 = vadd.f32 %v4580, %v4908
  %v4921 = vadd.f32 %v4581, %v4824
  %v4922 = vadd.f32 %v4582, %v4911
  %v4923 = vadd.f32 %v4583, %v4827
  %v4924 = vadd.f32 %v4584, %v4914
  %v4925 = vadd.f32 %v4585, %v4830
  %v4926 = vadd.f32 %v4586, %v4917
  %v4927 = vld [vmem:[%s5] sm:$0x3]
  %v4929 = vperm.slane %v4927, 0
  %v4930 = vperm.slane %v4927, 1
  %v4933 = vadd.f32 %v4919, %v4929
  %v4934 = vadd.f32 %v4920, %v4930
  %v4935 = vadd.f32 %v4921, %v4929
  %v4936 = vadd.f32 %v4922, %v4930
  %v4937 = vadd.f32 %v4923, %v4929
  %v4938 = vadd.f32 %v4924, %v4930
  %v4939 = vadd.f32 %v4925, %v4929
  %v4940 = vadd.f32 %v4926, %v4930
  %v4941 = vld [vmem:[%s1] sm:$0xff]
  %v4942 = vld [vmem:[%s1 + $0x8] sm:$0xff]
  %v4943 = vld [vmem:[%s1 + $0x10] sm:$0xff]
  %v4944 = vld [vmem:[%s1 + $0x18] sm:$0xff]
  %v4945 = vld [vmem:[%s1 + $0x20] sm:$0xff]
  %v4946 = vld [vmem:[%s1 + $0x28] sm:$0xff]
  %v4947 = vld [vmem:[%s1 + $0x30] sm:$0xff]
  %v4948 = vld [vmem:[%s1 + $0x38] sm:$0xff]
  %v4949 = vadd.f32 %v2511, %v4941
  %v4950 = vadd.f32 %v2512, %v4942
  %v4951 = vadd.f32 %v2513, %v4943
  %v4952 = vadd.f32 %v2514, %v4944
  %v4953 = vadd.f32 %v2515, %v4945
  %v4954 = vadd.f32 %v2516, %v4946
  %v4955 = vadd.f32 %v2517, %v4947
  %v4956 = vadd.f32 %v2518, %v4948
  %v4957 = vmax.f32 %v4949, 0.0
  %v4958 = vmax.f32 %v4950, 0.0
  %v4959 = vmax.f32 %v4951, 0.0
  %v4960 = vmax.f32 %v4952, 0.0
  %v4961 = vmax.f32 %v4953, 0.0
  %v4962 = vmax.f32 %v4954, 0.0
  %v4963 = vmax.f32 %v4955, 0.0
  %v4964 = vmax.f32 %v4956, 0.0
  %v4965 = vadd.f32 %v4933, %v4957
  %v4966 = vadd.f32 %v4934, %v4958
  %v4967 = vadd.f32 %v4935, %v4959
  %v4968 = vadd.f32 %v4936, %v4960
  %v4969 = vadd.f32 %v4937, %v4961
  %v4970 = vadd.f32 %v4938, %v4962
  %v4971 = vadd.f32 %v4939, %v4963
  %v4972 = vadd.f32 %v4940, %v4964
  %v4973 = vmax.f32 %v4965, 0.0
  %v4974 = vmax.f32 %v4966, 0.0
  %v4975 = vmax.f32 %v4967, 0.0
  %v4976 = vmax.f32 %v4968, 0.0
  %v4977 = vmax.f32 %v4969, 0.0
  %v4978 = vmax.f32 %v4970, 0.0
  %v4979 = vmax.f32 %v4971, 0.0
  %v4980 = vmax.f32 %v4972, 0.0
  %vm4989 = vcmask 1040384
  %v4990 = vrot.slane %v4973, 7
  %v4991 = vrot.slane %v4974, 7
  %v4992 = vrot.slane %v4975, 7
  %v4993 = vsel %vm4989, %v4990, %v4992
  %v4994 = vrot.slane %v4976, 7
  %v4995 = vsel %vm4989, %v4991, %v4994
  %v4996 = vrot.slane %v4977, 7
  %v4997 = vrot.slane %v4978, 7
  %v4998 = vrot.slane %v4979, 7
  %v4999 = vsel %vm4989, %v4996, %v4998
  %v5000 = vrot.slane %v4980, 7
  %v5001 = vsel %vm4989, %v4997, %v5000
  %5002 = vrot.lane.b32.xlu0 %v4990, 16
  %v5003 = vpop.permute.xlu0 %5002
  %5004 = vrot.lane.b32.xlu0 %v4991, 16
  %v5005 = vpop.permute.xlu0 %5004
  %5006 = vrot.lane.b32.xlu0 %v4993, 16
  %v5007 = vpop.permute.xlu0 %5006
  %5008 = vrot.lane.b32.xlu0 %v4995, 16
  %v5009 = vpop.permute.xlu0 %5008
  %5010 = vrot.lane.b32.xlu0 %v4992, 16
  %v5011 = vpop.permute.xlu0 %5010
  %5012 = vrot.lane.b32.xlu0 %v4994, 16
  %v5013 = vpop.permute.xlu0 %5012
  %5014 = vrot.lane.b32.xlu0 %v4996, 16
  %v5015 = vpop.permute.xlu0 %5014
  %5016 = vrot.lane.b32.xlu0 %v4997, 16
  %v5017 = vpop.permute.xlu0 %5016
  %5018 = vrot.lane.b32.xlu0 %v4999, 16
  %v5019 = vpop.permute.xlu0 %5018
  %5020 = vrot.lane.b32.xlu0 %v5001, 16
  %v5021 = vpop.permute.xlu0 %5020
  %5022 = vrot.lane.b32.xlu0 %v4998, 16
  %v5023 = vpop.permute.xlu0 %5022
  %5024 = vrot.lane.b32.xlu0 %v5000, 16
  %v5025 = vpop.permute.xlu0 %5024
  %vm5026 = vcmask 130048
  %v5027 = vsel %vm5026, %v5003, %v5005
  %v5028 = vsel %vm5026, %v5007, %v5009
  %v5029 = vsel %vm5026, %v5011, %v5013
  %v5030 = vsel %vm5026, %v5015, %v5017
  %v5031 = vsel %vm5026, %v5019, %v5021
  %v5032 = vsel %vm5026, %v5023, %v5025
  %vm5051 = vcmask 1047681
  %5052 = vst.msk [vmem:[#allocation3] sm:$0xfe] %vm5051, %v5003
  %5053 = vst [vmem:[#allocation3 + $0x8] sm:$0xfe] %v5027
  %vm5054 = vcmask 130049
  %5055 = vst.msk [vmem:[#allocation3 + $0x10] sm:$0xfe] %vm5054, %v5005
  %vm5056 = vcmask 1047680
  %5057 = vst.msk [vmem:[#allocation3 + $0x18] sm:$0xff] %vm5056, %v5007
  %5058 = vst [vmem:[#allocation3 + $0x20] sm:$0xff] %v5028
  %5059 = vst.msk [vmem:[#allocation3 + $0x28] sm:$0xff] %vm5026, %v5009
  %vm5060 = vcmask 1040512
  %5061 = vst.msk [vmem:[#allocation3 + $0x30] sm:$0x1] %vm5060, %v5011
  %5062 = vst [vmem:[#allocation3 + $0x38] sm:$0x1] %v5029
  %vm5063 = vcmask 122880
  %5064 = vst.msk [vmem:[#allocation3 + $0x40] sm:$0x1] %vm5063, %v5013
  %5065 = vst.msk [vmem:[#allocation3 + $0x48] sm:$0xfe] %vm5051, %v5015
  %5066 = vst [vmem:[#allocation3 + $0x50] sm:$0xfe] %v5030
  %5067 = vst.msk [vmem:[#allocation3 + $0x58] sm:$0xfe] %vm5054, %v5017
  %5068 = vst.msk [vmem:[#allocation3 + $0x60] sm:$0xff] %vm5056, %v5019
  %5069 = vst [vmem:[#allocation3 + $0x68] sm:$0xff] %v5031
  %5070 = vst.msk [vmem:[#allocation3 + $0x70] sm:$0xff] %vm5026, %v5021
  %5071 = vst.msk [vmem:[#allocation3 + $0x78] sm:$0x1] %vm5060, %v5023
  %5072 = vst [vmem:[#allocation3 + $0x80] sm:$0x1] %v5032
  %5073 = vst.msk [vmem:[#allocation3 + $0x88] sm:$0x1] %vm5063, %v5025
  %v5074 = vld [vmem:[#allocation3] sm:$0xff]
  %v5075 = vld [vmem:[#allocation3 + $0x8] sm:$0xff]
  %v5076 = vld [vmem:[#allocation3 + $0x10] sm:$0xff]
  %v5077 = vld [vmem:[#allocation3 + $0x18] sm:$0xff]
  %v5078 = vld [vmem:[#allocation3 + $0x20] sm:$0xff]
  %v5079 = vld [vmem:[#allocation3 + $0x28] sm:$0xff]
  %v5080 = vld [vmem:[#allocation3 + $0x48] sm:$0xff]
  %v5081 = vld [vmem:[#allocation3 + $0x50] sm:$0xff]
  %v5082 = vld [vmem:[#allocation3 + $0x58] sm:$0xff]
  %v5083 = vld [vmem:[#allocation3 + $0x60] sm:$0xff]
  %v5084 = vld [vmem:[#allocation3 + $0x68] sm:$0xff]
  %v5085 = vld [vmem:[#allocation3 + $0x70] sm:$0xff]
  %v5086 = vld [vmem:[%s6] sm:$0xff]
  %v5087 = vld [vmem:[%s6 + $0x8] sm:$0xff]
  %v5088 = vld [vmem:[%s6 + $0x10] sm:$0xff]
  %v5089 = vld [vmem:[%s6 + $0x18] sm:$0xff]
  %v5090 = vld [vmem:[%s6 + $0x20] sm:$0xff]
  %v5091 = vld [vmem:[%s6 + $0x28] sm:$0xff]
  %v5092 = vld [vmem:[%s6 + $0x30] sm:$0xff]
  %v5093 = vld [vmem:[%s6 + $0x38] sm:$0xff]
  %v5094 = vld [vmem:[%s6 + $0x40] sm:$0xff]
  %v5095 = vld [vmem:[%s6 + $0x48] sm:$0xff]
  %v5096 = vld [vmem:[%s6 + $0x50] sm:$0xff]
  %v5097 = vld [vmem:[%s6 + $0x58] sm:$0xff]
  %v5098 = vld [vmem:[%s6 + $0x60] sm:$0xff]
  %v5099 = vld [vmem:[%s6 + $0x68] sm:$0xff]
  %v5100 = vld [vmem:[%s6 + $0x70] sm:$0xff]
  %v5101 = vld [vmem:[%s6 + $0x78] sm:$0xff]
  %v5102 = vld [vmem:[%s6 + $0x80] sm:$0xff]
  %v5103 = vld [vmem:[%s6 + $0x88] sm:$0xff]
  %v5104 = vld [vmem:[%s6 + $0x90] sm:$0xff]
  %v5105 = vld [vmem:[%s6 + $0x98] sm:$0xff]
  %v5106 = vld [vmem:[%s6 + $0xa0] sm:$0xff]
  %v5107 = vld [vmem:[%s6 + $0xa8] sm:$0xff]
  %v5108 = vld [vmem:[%s6 + $0xb0] sm:$0xff]
  %v5109 = vld [vmem:[%s6 + $0xb8] sm:$0xff]
  %v5110 = vld [vmem:[%s6 + $0xc0] sm:$0xff]
  %v5111 = vld [vmem:[%s6 + $0xc8] sm:$0xff]
  %v5112 = vld [vmem:[%s6 + $0xd0] sm:$0xff]
  %v5113 = vld [vmem:[%s6 + $0xd8] sm:$0xff]
  %v5114 = vld [vmem:[%s6 + $0xe0] sm:$0xff]
  %v5115 = vld [vmem:[%s6 + $0xe8] sm:$0xff]
  %v5116 = vld [vmem:[%s6 + $0xf0] sm:$0xff]
  %v5117 = vld [vmem:[%s6 + $0xf8] sm:$0xff]
  %v5118 = vld [vmem:[%s6 + $0x100] sm:$0xff]
  %v5119 = vld [vmem:[%s6 + $0x108] sm:$0xff]
  %v5120 = vld [vmem:[%s6 + $0x110] sm:$0xff]
  %v5121 = vld [vmem:[%s6 + $0x118] sm:$0xff]
  %v5122 = vld [vmem:[%s6 + $0x120] sm:$0xff]
  %v5123 = vld [vmem:[%s6 + $0x128] sm:$0xff]
  %v5124 = vld [vmem:[%s6 + $0x130] sm:$0xff]
  %v5125 = vld [vmem:[%s6 + $0x138] sm:$0xff]
  %v5126 = vld [vmem:[%s6 + $0x140] sm:$0xff]
  %v5127 = vld [vmem:[%s6 + $0x148] sm:$0xff]
  %v5128 = vld [vmem:[%s6 + $0x150] sm:$0xff]
  %v5129 = vld [vmem:[%s6 + $0x158] sm:$0xff]
  %v5130 = vld [vmem:[%s6 + $0x160] sm:$0xff]
  %v5131 = vld [vmem:[%s6 + $0x168] sm:$0xff]
  %v5132 = vld [vmem:[%s6 + $0x170] sm:$0xff]
  %v5133 = vld [vmem:[%s6 + $0x178] sm:$0xff]
  %v5134 = vld [vmem:[%s6 + $0x180] sm:$0xff]
  %v5135 = vld [vmem:[%s6 + $0x188] sm:$0xff]
  %v5136 = vld [vmem:[%s6 + $0x190] sm:$0xff]
  %v5137 = vld [vmem:[%s6 + $0x198] sm:$0xff]
  %v5138 = vld [vmem:[%s6 + $0x1a0] sm:$0xff]
  %v5139 = vld [vmem:[%s6 + $0x1a8] sm:$0xff]
  %v5140 = vld [vmem:[%s6 + $0x1b0] sm:$0xff]
  %v5141 = vld [vmem:[%s6 + $0x1b8] sm:$0xff]
  %v5142 = vld [vmem:[%s6 + $0x1c0] sm:$0xff]
  %v5143 = vld [vmem:[%s6 + $0x1c8] sm:$0xff]
  %v5144 = vld [vmem:[%s6 + $0x1d0] sm:$0xff]
  %v5145 = vld [vmem:[%s6 + $0x1d8] sm:$0xff]
  %v5146 = vld [vmem:[%s6 + $0x1e0] sm:$0xff]
  %v5147 = vld [vmem:[%s6 + $0x1e8] sm:$0xff]
  %v5148 = vld [vmem:[%s6 + $0x1f0] sm:$0xff]
  %v5149 = vld [vmem:[%s6 + $0x1f8] sm:$0xff]
  %v5150 = vld [vmem:[%s6 + $0x200] sm:$0xff]
  %v5151 = vld [vmem:[%s6 + $0x208] sm:$0xff]
  %v5152 = vld [vmem:[%s6 + $0x210] sm:$0xff]
  %v5153 = vld [vmem:[%s6 + $0x218] sm:$0xff]
  %v5154 = vld [vmem:[%s6 + $0x220] sm:$0xff]
  %v5155 = vld [vmem:[%s6 + $0x228] sm:$0xff]
  %v5156 = vld [vmem:[%s6 + $0x230] sm:$0xff]
  %v5157 = vld [vmem:[%s6 + $0x238] sm:$0xff]
  %v5158 = vld [vmem:[#allocation3] sm:$0xfe]
  %v5159 = vld [vmem:[#allocation3 + $0x8] sm:$0xfe]
  %v5160 = vld [vmem:[#allocation3 + $0x10] sm:$0xfe]
  %v5161 = vld [vmem:[#allocation3 + $0x30] sm:$0x1]
  %v5162 = vld [vmem:[#allocation3 + $0x38] sm:$0x1]
  %v5163 = vld [vmem:[#allocation3 + $0x40] sm:$0x1]
  %v5164 = vld [vmem:[#allocation3 + $0x48] sm:$0xfe]
  %v5165 = vld [vmem:[#allocation3 + $0x50] sm:$0xfe]
  %v5166 = vld [vmem:[#allocation3 + $0x58] sm:$0xfe]
  %v5167 = vld [vmem:[#allocation3 + $0x78] sm:$0x1]
  %v5168 = vld [vmem:[#allocation3 + $0x80] sm:$0x1]
  %v5169 = vld [vmem:[#allocation3 + $0x88] sm:$0x1]
  %v5188 = vrot.slane %v5158, 1
  %v5189 = vrot.slane %v5077, 1
  %v5190 = vsel %vm302, %v5188, %v5189
  %v5191 = vrot.slane %v5159, 1
  %v5192 = vrot.slane %v5078, 1
  %v5193 = vsel %vm302, %v5191, %v5192
  %v5194 = vrot.slane %v5160, 1
  %v5195 = vrot.slane %v5079, 1
  %v5196 = vsel %vm302, %v5194, %v5195
  %v5197 = vrot.slane %v5161, 1
  %v5198 = vsel %vm302, %v5189, %v5197
  %v5199 = vrot.slane %v5162, 1
  %v5200 = vsel %vm302, %v5192, %v5199
  %v5201 = vrot.slane %v5163, 1
  %v5202 = vsel %vm302, %v5195, %v5201
  %v5203 = vrot.slane %v5164, 1
  %v5204 = vrot.slane %v5083, 1
  %v5205 = vsel %vm302, %v5203, %v5204
  %v5206 = vrot.slane %v5165, 1
  %v5207 = vrot.slane %v5084, 1
  %v5208 = vsel %vm302, %v5206, %v5207
  %v5209 = vrot.slane %v5166, 1
  %v5210 = vrot.slane %v5085, 1
  %v5211 = vsel %vm302, %v5209, %v5210
  %v5212 = vrot.slane %v5167, 1
  %v5213 = vsel %vm302, %v5204, %v5212
  %v5214 = vrot.slane %v5168, 1
  %v5215 = vsel %vm302, %v5207, %v5214
  %v5216 = vrot.slane %v5169, 1
  %v5217 = vsel %vm302, %v5210, %v5216
  %s5226 = scalar_lea.vmem %s6, 576
  %v5227 = vld [vmem:[%s5226] sm:$0xff]
  %v5228 = vld [vmem:[%s5226 + $0x8] sm:$0xff]
  %v5229 = vld [vmem:[%s5226 + $0x10] sm:$0xff]
  %v5230 = vld [vmem:[%s5226 + $0x18] sm:$0xff]
  %v5231 = vld [vmem:[%s5226 + $0x20] sm:$0xff]
  %v5232 = vld [vmem:[%s5226 + $0x28] sm:$0xff]
  %v5233 = vld [vmem:[%s5226 + $0x30] sm:$0xff]
  %v5234 = vld [vmem:[%s5226 + $0x38] sm:$0xff]
  %v5235 = vld [vmem:[%s5226 + $0x40] sm:$0xff]
  %v5236 = vld [vmem:[%s5226 + $0x48] sm:$0xff]
  %v5237 = vld [vmem:[%s5226 + $0x50] sm:$0xff]
  %v5238 = vld [vmem:[%s5226 + $0x58] sm:$0xff]
  %v5239 = vld [vmem:[%s5226 + $0x60] sm:$0xff]
  %v5240 = vld [vmem:[%s5226 + $0x68] sm:$0xff]
  %v5241 = vld [vmem:[%s5226 + $0x70] sm:$0xff]
  %v5242 = vld [vmem:[%s5226 + $0x78] sm:$0xff]
  %v5243 = vld [vmem:[%s5226 + $0x80] sm:$0xff]
  %v5244 = vld [vmem:[%s5226 + $0x88] sm:$0xff]
  %v5245 = vld [vmem:[%s5226 + $0x90] sm:$0xff]
  %v5246 = vld [vmem:[%s5226 + $0x98] sm:$0xff]
  %v5247 = vld [vmem:[%s5226 + $0xa0] sm:$0xff]
  %v5248 = vld [vmem:[%s5226 + $0xa8] sm:$0xff]
  %v5249 = vld [vmem:[%s5226 + $0xb0] sm:$0xff]
  %v5250 = vld [vmem:[%s5226 + $0xb8] sm:$0xff]
  %v5251 = vld [vmem:[%s5226 + $0xc0] sm:$0xff]
  %v5252 = vld [vmem:[%s5226 + $0xc8] sm:$0xff]
  %v5253 = vld [vmem:[%s5226 + $0xd0] sm:$0xff]
  %v5254 = vld [vmem:[%s5226 + $0xd8] sm:$0xff]
  %v5255 = vld [vmem:[%s5226 + $0xe0] sm:$0xff]
  %v5256 = vld [vmem:[%s5226 + $0xe8] sm:$0xff]
  %v5257 = vld [vmem:[%s5226 + $0xf0] sm:$0xff]
  %v5258 = vld [vmem:[%s5226 + $0xf8] sm:$0xff]
  %v5259 = vld [vmem:[%s5226 + $0x100] sm:$0xff]
  %v5260 = vld [vmem:[%s5226 + $0x108] sm:$0xff]
  %v5261 = vld [vmem:[%s5226 + $0x110] sm:$0xff]
  %v5262 = vld [vmem:[%s5226 + $0x118] sm:$0xff]
  %v5263 = vld [vmem:[%s5226 + $0x120] sm:$0xff]
  %v5264 = vld [vmem:[%s5226 + $0x128] sm:$0xff]
  %v5265 = vld [vmem:[%s5226 + $0x130] sm:$0xff]
  %v5266 = vld [vmem:[%s5226 + $0x138] sm:$0xff]
  %v5267 = vld [vmem:[%s5226 + $0x140] sm:$0xff]
  %v5268 = vld [vmem:[%s5226 + $0x148] sm:$0xff]
  %v5269 = vld [vmem:[%s5226 + $0x150] sm:$0xff]
  %v5270 = vld [vmem:[%s5226 + $0x158] sm:$0xff]
  %v5271 = vld [vmem:[%s5226 + $0x160] sm:$0xff]
  %v5272 = vld [vmem:[%s5226 + $0x168] sm:$0xff]
  %v5273 = vld [vmem:[%s5226 + $0x170] sm:$0xff]
  %v5274 = vld [vmem:[%s5226 + $0x178] sm:$0xff]
  %v5275 = vld [vmem:[%s5226 + $0x180] sm:$0xff]
  %v5276 = vld [vmem:[%s5226 + $0x188] sm:$0xff]
  %v5277 = vld [vmem:[%s5226 + $0x190] sm:$0xff]
  %v5278 = vld [vmem:[%s5226 + $0x198] sm:$0xff]
  %v5279 = vld [vmem:[%s5226 + $0x1a0] sm:$0xff]
  %v5280 = vld [vmem:[%s5226 + $0x1a8] sm:$0xff]
  %v5281 = vld [vmem:[%s5226 + $0x1b0] sm:$0xff]
  %v5282 = vld [vmem:[%s5226 + $0x1b8] sm:$0xff]
  %v5283 = vld [vmem:[%s5226 + $0x1c0] sm:$0xff]
  %v5284 = vld [vmem:[%s5226 + $0x1c8] sm:$0xff]
  %v5285 = vld [vmem:[%s5226 + $0x1d0] sm:$0xff]
  %v5286 = vld [vmem:[%s5226 + $0x1d8] sm:$0xff]
  %v5287 = vld [vmem:[%s5226 + $0x1e0] sm:$0xff]
  %v5288 = vld [vmem:[%s5226 + $0x1e8] sm:$0xff]
  %v5289 = vld [vmem:[%s5226 + $0x1f0] sm:$0xff]
  %v5290 = vld [vmem:[%s5226 + $0x1f8] sm:$0xff]
  %v5291 = vld [vmem:[%s5226 + $0x200] sm:$0xff]
  %v5292 = vld [vmem:[%s5226 + $0x208] sm:$0xff]
  %v5293 = vld [vmem:[%s5226 + $0x210] sm:$0xff]
  %v5294 = vld [vmem:[%s5226 + $0x218] sm:$0xff]
  %v5295 = vld [vmem:[%s5226 + $0x220] sm:$0xff]
  %v5296 = vld [vmem:[%s5226 + $0x228] sm:$0xff]
  %v5297 = vld [vmem:[%s5226 + $0x230] sm:$0xff]
  %v5298 = vld [vmem:[%s5226 + $0x238] sm:$0xff]
  %v5299 = vsel %vm53, %v5196, 0
  %v5301 = vsel %vm53, %v5202, 0
  %v5303 = vsel %vm53, %v5211, 0
  %v5305 = vsel %vm53, %v5217, 0
  %5307 = vmatpush.msra.mxu0 %v5257
  %5308 = vmatpush.msra.mxu0 %v5255
  %5309 = vmatpush.msra.mxu0 %v5253
  %5310 = vmatpush.msra.mxu0 %v5251
  %5311 = vmatpush.msra.mxu0 %v5249
  %5312 = vmatpush.msra.mxu0 %v5247
  %5313 = vmatpush.msra.mxu0 %v5245
  %5314 = vmatpush.msra.mxu0 %v5243
  %5315 = vmatpush.msra.mxu0 %v5241
  %5316 = vmatpush.msra.mxu0 %v5239
  %5317 = vmatpush.msra.mxu0 %v5237
  %5318 = vmatpush.msra.mxu0 %v5235
  %5319 = vmatpush.msra.mxu0 %v5233
  %5320 = vmatpush.msra.mxu0 %v5231
  %5321 = vmatpush.msra.mxu0 %v5229
  %5322 = vmatpush.msra.mxu0 %v5227
  %5323 = vmatmul.f32.gmra.mxu0 %v5190
  %v5324 = vpop.f32.mrf.mxu0
  %v5325 = vadd.f32 0.0, %v5324
  %5326 = vmatmul.f32.gmra.mxu0 %v5198
  %v5327 = vpop.f32.mrf.mxu0
  %v5328 = vadd.f32 0.0, %v5327
  %5329 = vmatmul.f32.gmra.mxu0 %v5205
  %v5330 = vpop.f32.mrf.mxu0
  %v5331 = vadd.f32 0.0, %v5330
  %5332 = vmatmul.f32.gmra.mxu0 %v5213
  %v5333 = vpop.f32.mrf.mxu0
  %v5334 = vadd.f32 0.0, %v5333
  %5335 = vdwg.mxu0
  %5336 = vmatpush.msra.mxu0 %v5289
  %5337 = vmatpush.msra.mxu0 %v5287
  %5338 = vmatpush.msra.mxu0 %v5285
  %5339 = vmatpush.msra.mxu0 %v5283
  %5340 = vmatpush.msra.mxu0 %v5281
  %5341 = vmatpush.msra.mxu0 %v5279
  %5342 = vmatpush.msra.mxu0 %v5277
  %5343 = vmatpush.msra.mxu0 %v5275
  %5344 = vmatpush.msra.mxu0 %v5273
  %5345 = vmatpush.msra.mxu0 %v5271
  %5346 = vmatpush.msra.mxu0 %v5269
  %5347 = vmatpush.msra.mxu0 %v5267
  %5348 = vmatpush.msra.mxu0 %v5265
  %5349 = vmatpush.msra.mxu0 %v5263
  %5350 = vmatpush.msra.mxu0 %v5261
  %5351 = vmatpush.msra.mxu0 %v5259
  %5352 = vmatmul.f32.gmra.mxu0 %v5193
  %v5353 = vpop.f32.mrf.mxu0
  %v5354 = vadd.f32 %v5325, %v5353
  %5355 = vmatmul.f32.gmra.mxu0 %v5200
  %v5356 = vpop.f32.mrf.mxu0
  %v5357 = vadd.f32 %v5328, %v5356
  %5358 = vmatmul.f32.gmra.mxu0 %v5208
  %v5359 = vpop.f32.mrf.mxu0
  %v5360 = vadd.f32 %v5331, %v5359
  %5361 = vmatmul.f32.gmra.mxu0 %v5215
  %v5362 = vpop.f32.mrf.mxu0
  %v5363 = vadd.f32 %v5334, %v5362
  %5364 = vdwg.mxu0
  %5365 = vmatpush.msra.mxu0 0.0
  %5366 = vmatpush.msra.mxu0 0.0
  %5367 = vmatpush.msra.mxu0 0.0
  %5368 = vmatpush.msra.mxu0 0.0
  %5369 = vmatpush.msra.mxu0 0.0
  %5370 = vmatpush.msra.mxu0 0.0
  %5371 = vmatpush.msra.mxu0 0.0
  %5372 = vmatpush.msra.mxu0 0.0
  %5373 = vmatpush.msra.mxu0 0.0
  %5374 = vmatpush.msra.mxu0 0.0
  %5375 = vmatpush.msra.mxu0 0.0
  %5376 = vmatpush.msra.mxu0 0.0
  %5377 = vmatpush.msra.mxu0 %v5297
  %5378 = vmatpush.msra.mxu0 %v5295
  %5379 = vmatpush.msra.mxu0 %v5293
  %5380 = vmatpush.msra.mxu0 %v5291
  %5381 = vmatmul.f32.gmra.mxu0 %v5299
  %v5382 = vpop.f32.mrf.mxu0
  %v5383 = vadd.f32 %v5354, %v5382
  %5384 = vmatmul.f32.gmra.mxu0 %v5301
  %v5385 = vpop.f32.mrf.mxu0
  %v5386 = vadd.f32 %v5357, %v5385
  %5387 = vmatmul.f32.gmra.mxu0 %v5303
  %v5388 = vpop.f32.mrf.mxu0
  %v5389 = vadd.f32 %v5360, %v5388
  %5390 = vmatmul.f32.gmra.mxu0 %v5305
  %v5391 = vpop.f32.mrf.mxu0
  %v5392 = vadd.f32 %v5363, %v5391
  %5393 = vdwg.mxu0
  %5394 = vmatpush.msra.mxu0 %v5258
  %5395 = vmatpush.msra.mxu0 %v5256
  %5396 = vmatpush.msra.mxu0 %v5254
  %5397 = vmatpush.msra.mxu0 %v5252
  %5398 = vmatpush.msra.mxu0 %v5250
  %5399 = vmatpush.msra.mxu0 %v5248
  %5400 = vmatpush.msra.mxu0 %v5246
  %5401 = vmatpush.msra.mxu0 %v5244
  %5402 = vmatpush.msra.mxu0 %v5242
  %5403 = vmatpush.msra.mxu0 %v5240
  %5404 = vmatpush.msra.mxu0 %v5238
  %5405 = vmatpush.msra.mxu0 %v5236
  %5406 = vmatpush.msra.mxu0 %v5234
  %5407 = vmatpush.msra.mxu0 %v5232
  %5408 = vmatpush.msra.mxu0 %v5230
  %5409 = vmatpush.msra.mxu0 %v5228
  %5410 = vmatmul.f32.gmra.mxu0 %v5190
  %v5411 = vpop.f32.mrf.mxu0
  %v5412 = vadd.f32 0.0, %v5411
  %5413 = vmatmul.f32.gmra.mxu0 %v5198
  %v5414 = vpop.f32.mrf.mxu0
  %v5415 = vadd.f32 0.0, %v5414
  %5416 = vmatmul.f32.gmra.mxu0 %v5205
  %v5417 = vpop.f32.mrf.mxu0
  %v5418 = vadd.f32 0.0, %v5417
  %5419 = vmatmul.f32.gmra.mxu0 %v5213
  %v5420 = vpop.f32.mrf.mxu0
  %v5421 = vadd.f32 0.0, %v5420
  %5422 = vdwg.mxu0
  %5423 = vmatpush.msra.mxu0 %v5290
  %5424 = vmatpush.msra.mxu0 %v5288
  %5425 = vmatpush.msra.mxu0 %v5286
  %5426 = vmatpush.msra.mxu0 %v5284
  %5427 = vmatpush.msra.mxu0 %v5282
  %5428 = vmatpush.msra.mxu0 %v5280
  %5429 = vmatpush.msra.mxu0 %v5278
  %5430 = vmatpush.msra.mxu0 %v5276
  %5431 = vmatpush.msra.mxu0 %v5274
  %5432 = vmatpush.msra.mxu0 %v5272
  %5433 = vmatpush.msra.mxu0 %v5270
  %5434 = vmatpush.msra.mxu0 %v5268
  %5435 = vmatpush.msra.mxu0 %v5266
  %5436 = vmatpush.msra.mxu0 %v5264
  %5437 = vmatpush.msra.mxu0 %v5262
  %5438 = vmatpush.msra.mxu0 %v5260
  %5439 = vmatmul.f32.gmra.mxu0 %v5193
  %v5440 = vpop.f32.mrf.mxu0
  %v5441 = vadd.f32 %v5412, %v5440
  %5442 = vmatmul.f32.gmra.mxu0 %v5200
  %v5443 = vpop.f32.mrf.mxu0
  %v5444 = vadd.f32 %v5415, %v5443
  %5445 = vmatmul.f32.gmra.mxu0 %v5208
  %v5446 = vpop.f32.mrf.mxu0
  %v5447 = vadd.f32 %v5418, %v5446
  %5448 = vmatmul.f32.gmra.mxu0 %v5215
  %v5449 = vpop.f32.mrf.mxu0
  %v5450 = vadd.f32 %v5421, %v5449
  %5451 = vdwg.mxu0
  %5452 = vmatpush.msra.mxu0 0.0
  %5453 = vmatpush.msra.mxu0 0.0
  %5454 = vmatpush.msra.mxu0 0.0
  %5455 = vmatpush.msra.mxu0 0.0
  %5456 = vmatpush.msra.mxu0 0.0
  %5457 = vmatpush.msra.mxu0 0.0
  %5458 = vmatpush.msra.mxu0 0.0
  %5459 = vmatpush.msra.mxu0 0.0
  %5460 = vmatpush.msra.mxu0 0.0
  %5461 = vmatpush.msra.mxu0 0.0
  %5462 = vmatpush.msra.mxu0 0.0
  %5463 = vmatpush.msra.mxu0 0.0
  %5464 = vmatpush.msra.mxu0 %v5298
  %5465 = vmatpush.msra.mxu0 %v5296
  %5466 = vmatpush.msra.mxu0 %v5294
  %5467 = vmatpush.msra.mxu0 %v5292
  %5468 = vmatmul.f32.gmra.mxu0 %v5299
  %v5469 = vpop.f32.mrf.mxu0
  %v5470 = vadd.f32 %v5441, %v5469
  %5471 = vmatmul.f32.gmra.mxu0 %v5301
  %v5472 = vpop.f32.mrf.mxu0
  %v5473 = vadd.f32 %v5444, %v5472
  %5474 = vmatmul.f32.gmra.mxu0 %v5303
  %v5475 = vpop.f32.mrf.mxu0
  %v5476 = vadd.f32 %v5447, %v5475
  %5477 = vmatmul.f32.gmra.mxu0 %v5305
  %v5478 = vpop.f32.mrf.mxu0
  %v5479 = vadd.f32 %v5450, %v5478
  %5480 = vdwg.mxu0
  %v5482 = vsel %vm53, %v5076, 0
  %v5484 = vsel %vm53, %v5079, 0
  %v5487 = vsel %vm53, %v5082, 0
  %v5489 = vsel %vm53, %v5085, 0
  %5491 = vmatpush.msra.mxu0 %v5116
  %5492 = vmatpush.msra.mxu0 %v5114
  %5493 = vmatpush.msra.mxu0 %v5112
  %5494 = vmatpush.msra.mxu0 %v5110
  %5495 = vmatpush.msra.mxu0 %v5108
  %5496 = vmatpush.msra.mxu0 %v5106
  %5497 = vmatpush.msra.mxu0 %v5104
  %5498 = vmatpush.msra.mxu0 %v5102
  %5499 = vmatpush.msra.mxu0 %v5100
  %5500 = vmatpush.msra.mxu0 %v5098
  %5501 = vmatpush.msra.mxu0 %v5096
  %5502 = vmatpush.msra.mxu0 %v5094
  %5503 = vmatpush.msra.mxu0 %v5092
  %5504 = vmatpush.msra.mxu0 %v5090
  %5505 = vmatpush.msra.mxu0 %v5088
  %5506 = vmatpush.msra.mxu0 %v5086
  %5507 = vmatmul.f32.gmra.mxu0 %v5074
  %v5508 = vpop.f32.mrf.mxu0
  %v5509 = vadd.f32 %v5383, %v5508
  %5510 = vmatmul.f32.gmra.mxu0 %v5077
  %v5511 = vpop.f32.mrf.mxu0
  %v5512 = vadd.f32 %v5386, %v5511
  %5513 = vmatmul.f32.gmra.mxu0 %v5080
  %v5514 = vpop.f32.mrf.mxu0
  %v5515 = vadd.f32 %v5389, %v5514
  %5516 = vmatmul.f32.gmra.mxu0 %v5083
  %v5517 = vpop.f32.mrf.mxu0
  %v5518 = vadd.f32 %v5392, %v5517
  %5519 = vdwg.mxu0
  %5520 = vmatpush.msra.mxu0 %v5148
  %5521 = vmatpush.msra.mxu0 %v5146
  %5522 = vmatpush.msra.mxu0 %v5144
  %5523 = vmatpush.msra.mxu0 %v5142
  %5524 = vmatpush.msra.mxu0 %v5140
  %5525 = vmatpush.msra.mxu0 %v5138
  %5526 = vmatpush.msra.mxu0 %v5136
  %5527 = vmatpush.msra.mxu0 %v5134
  %5528 = vmatpush.msra.mxu0 %v5132
  %5529 = vmatpush.msra.mxu0 %v5130
  %5530 = vmatpush.msra.mxu0 %v5128
  %5531 = vmatpush.msra.mxu0 %v5126
  %5532 = vmatpush.msra.mxu0 %v5124
  %5533 = vmatpush.msra.mxu0 %v5122
  %5534 = vmatpush.msra.mxu0 %v5120
  %5535 = vmatpush.msra.mxu0 %v5118
  %5536 = vmatmul.f32.gmra.mxu0 %v5075
  %v5537 = vpop.f32.mrf.mxu0
  %v5538 = vadd.f32 %v5509, %v5537
  %5539 = vmatmul.f32.gmra.mxu0 %v5078
  %v5540 = vpop.f32.mrf.mxu0
  %v5541 = vadd.f32 %v5512, %v5540
  %5542 = vmatmul.f32.gmra.mxu0 %v5081
  %v5543 = vpop.f32.mrf.mxu0
  %v5544 = vadd.f32 %v5515, %v5543
  %5545 = vmatmul.f32.gmra.mxu0 %v5084
  %v5546 = vpop.f32.mrf.mxu0
  %v5547 = vadd.f32 %v5518, %v5546
  %5548 = vdwg.mxu0
  %5549 = vmatpush.msra.mxu0 0.0
  %5550 = vmatpush.msra.mxu0 0.0
  %5551 = vmatpush.msra.mxu0 0.0
  %5552 = vmatpush.msra.mxu0 0.0
  %5553 = vmatpush.msra.mxu0 0.0
  %5554 = vmatpush.msra.mxu0 0.0
  %5555 = vmatpush.msra.mxu0 0.0
  %5556 = vmatpush.msra.mxu0 0.0
  %5557 = vmatpush.msra.mxu0 0.0
  %5558 = vmatpush.msra.mxu0 0.0
  %5559 = vmatpush.msra.mxu0 0.0
  %5560 = vmatpush.msra.mxu0 0.0
  %5561 = vmatpush.msra.mxu0 %v5156
  %5562 = vmatpush.msra.mxu0 %v5154
  %5563 = vmatpush.msra.mxu0 %v5152
  %5564 = vmatpush.msra.mxu0 %v5150
  %5565 = vmatmul.f32.gmra.mxu0 %v5482
  %v5566 = vpop.f32.mrf.mxu0
  %v5567 = vadd.f32 %v5538, %v5566
  %5568 = vmatmul.f32.gmra.mxu0 %v5484
  %v5569 = vpop.f32.mrf.mxu0
  %v5570 = vadd.f32 %v5541, %v5569
  %5571 = vmatmul.f32.gmra.mxu0 %v5487
  %v5572 = vpop.f32.mrf.mxu0
  %v5573 = vadd.f32 %v5544, %v5572
  %5574 = vmatmul.f32.gmra.mxu0 %v5489
  %v5575 = vpop.f32.mrf.mxu0
  %v5576 = vadd.f32 %v5547, %v5575
  %5577 = vdwg.mxu0
  %5578 = vmatpush.msra.mxu0 %v5117
  %5579 = vmatpush.msra.mxu0 %v5115
  %5580 = vmatpush.msra.mxu0 %v5113
  %5581 = vmatpush.msra.mxu0 %v5111
  %5582 = vmatpush.msra.mxu0 %v5109
  %5583 = vmatpush.msra.mxu0 %v5107
  %5584 = vmatpush.msra.mxu0 %v5105
  %5585 = vmatpush.msra.mxu0 %v5103
  %5586 = vmatpush.msra.mxu0 %v5101
  %5587 = vmatpush.msra.mxu0 %v5099
  %5588 = vmatpush.msra.mxu0 %v5097
  %5589 = vmatpush.msra.mxu0 %v5095
  %5590 = vmatpush.msra.mxu0 %v5093
  %5591 = vmatpush.msra.mxu0 %v5091
  %5592 = vmatpush.msra.mxu0 %v5089
  %5593 = vmatpush.msra.mxu0 %v5087
  %5594 = vmatmul.f32.gmra.mxu0 %v5074
  %v5595 = vpop.f32.mrf.mxu0
  %v5596 = vadd.f32 %v5470, %v5595
  %5597 = vmatmul.f32.gmra.mxu0 %v5077
  %v5598 = vpop.f32.mrf.mxu0
  %v5599 = vadd.f32 %v5473, %v5598
  %5600 = vmatmul.f32.gmra.mxu0 %v5080
  %v5601 = vpop.f32.mrf.mxu0
  %v5602 = vadd.f32 %v5476, %v5601
  %5603 = vmatmul.f32.gmra.mxu0 %v5083
  %v5604 = vpop.f32.mrf.mxu0
  %v5605 = vadd.f32 %v5479, %v5604
  %5606 = vdwg.mxu0
  %5607 = vmatpush.msra.mxu0 %v5149
  %5608 = vmatpush.msra.mxu0 %v5147
  %5609 = vmatpush.msra.mxu0 %v5145
  %5610 = vmatpush.msra.mxu0 %v5143
  %5611 = vmatpush.msra.mxu0 %v5141
  %5612 = vmatpush.msra.mxu0 %v5139
  %5613 = vmatpush.msra.mxu0 %v5137
  %5614 = vmatpush.msra.mxu0 %v5135
  %5615 = vmatpush.msra.mxu0 %v5133
  %5616 = vmatpush.msra.mxu0 %v5131
  %5617 = vmatpush.msra.mxu0 %v5129
  %5618 = vmatpush.msra.mxu0 %v5127
  %5619 = vmatpush.msra.mxu0 %v5125
  %5620 = vmatpush.msra.mxu0 %v5123
  %5621 = vmatpush.msra.mxu0 %v5121
  %5622 = vmatpush.msra.mxu0 %v5119
  %5623 = vmatmul.f32.gmra.mxu0 %v5075
  %v5624 = vpop.f32.mrf.mxu0
  %v5625 = vadd.f32 %v5596, %v5624
  %5626 = vmatmul.f32.gmra.mxu0 %v5078
  %v5627 = vpop.f32.mrf.mxu0
  %v5628 = vadd.f32 %v5599, %v5627
  %5629 = vmatmul.f32.gmra.mxu0 %v5081
  %v5630 = vpop.f32.mrf.mxu0
  %v5631 = vadd.f32 %v5602, %v5630
  %5632 = vmatmul.f32.gmra.mxu0 %v5084
  %v5633 = vpop.f32.mrf.mxu0
  %v5634 = vadd.f32 %v5605, %v5633
  %5635 = vdwg.mxu0
  %5636 = vmatpush.msra.mxu0 0.0
  %5637 = vmatpush.msra.mxu0 0.0
  %5638 = vmatpush.msra.mxu0 0.0
  %5639 = vmatpush.msra.mxu0 0.0
  %5640 = vmatpush.msra.mxu0 0.0
  %5641 = vmatpush.msra.mxu0 0.0
  %5642 = vmatpush.msra.mxu0 0.0
  %5643 = vmatpush.msra.mxu0 0.0
  %5644 = vmatpush.msra.mxu0 0.0
  %5645 = vmatpush.msra.mxu0 0.0
  %5646 = vmatpush.msra.mxu0 0.0
  %5647 = vmatpush.msra.mxu0 0.0
  %5648 = vmatpush.msra.mxu0 %v5157
  %5649 = vmatpush.msra.mxu0 %v5155
  %5650 = vmatpush.msra.mxu0 %v5153
  %5651 = vmatpush.msra.mxu0 %v5151
  %5652 = vmatmul.f32.gmra.mxu0 %v5482
  %v5653 = vpop.f32.mrf.mxu0
  %v5654 = vadd.f32 %v5625, %v5653
  %5655 = vmatmul.f32.gmra.mxu0 %v5484
  %v5656 = vpop.f32.mrf.mxu0
  %v5657 = vadd.f32 %v5628, %v5656
  %5658 = vmatmul.f32.gmra.mxu0 %v5487
  %v5659 = vpop.f32.mrf.mxu0
  %v5660 = vadd.f32 %v5631, %v5659
  %5661 = vmatmul.f32.gmra.mxu0 %v5489
  %v5662 = vpop.f32.mrf.mxu0
  %v5663 = vadd.f32 %v5634, %v5662
  %5664 = vdwg.mxu0
  %v5665 = vld [vmem:[#allocation3] sm:$0xfc]
  %v5666 = vld [vmem:[#allocation3 + $0x8] sm:$0xfc]
  %v5667 = vld [vmem:[#allocation3 + $0x10] sm:$0xfc]
  %v5668 = vld [vmem:[#allocation3 + $0x30] sm:$0x3]
  %v5669 = vld [vmem:[#allocation3 + $0x38] sm:$0x3]
  %v5670 = vld [vmem:[#allocation3 + $0x40] sm:$0x3]
  %v5671 = vld [vmem:[#allocation3 + $0x48] sm:$0xfc]
  %v5672 = vld [vmem:[#allocation3 + $0x50] sm:$0xfc]
  %v5673 = vld [vmem:[#allocation3 + $0x58] sm:$0xfc]
  %v5674 = vld [vmem:[#allocation3 + $0x78] sm:$0x3]
  %v5675 = vld [vmem:[#allocation3 + $0x80] sm:$0x3]
  %v5676 = vld [vmem:[#allocation3 + $0x88] sm:$0x3]
  %v5689 = vrot.slane %v5665, 2
  %v5690 = vrot.slane %v5077, 2
  %v5691 = vsel %vm820, %v5689, %v5690
  %v5692 = vrot.slane %v5666, 2
  %v5693 = vrot.slane %v5078, 2
  %v5694 = vsel %vm820, %v5692, %v5693
  %v5695 = vrot.slane %v5667, 2
  %v5696 = vrot.slane %v5079, 2
  %v5697 = vsel %vm820, %v5695, %v5696
  %v5698 = vrot.slane %v5668, 2
  %v5699 = vsel %vm820, %v5690, %v5698
  %v5700 = vrot.slane %v5669, 2
  %v5701 = vsel %vm820, %v5693, %v5700
  %v5702 = vrot.slane %v5670, 2
  %v5703 = vsel %vm820, %v5696, %v5702
  %v5704 = vrot.slane %v5671, 2
  %v5705 = vrot.slane %v5083, 2
  %v5706 = vsel %vm820, %v5704, %v5705
  %v5707 = vrot.slane %v5672, 2
  %v5708 = vrot.slane %v5084, 2
  %v5709 = vsel %vm820, %v5707, %v5708
  %v5710 = vrot.slane %v5673, 2
  %v5711 = vrot.slane %v5085, 2
  %v5712 = vsel %vm820, %v5710, %v5711
  %v5713 = vrot.slane %v5674, 2
  %v5714 = vsel %vm820, %v5705, %v5713
  %v5715 = vrot.slane %v5675, 2
  %v5716 = vsel %vm820, %v5708, %v5715
  %v5717 = vrot.slane %v5676, 2
  %v5718 = vsel %vm820, %v5711, %v5717
  %s5727 = scalar_lea.vmem %s6, 1152
  %v5728 = vld [vmem:[%s5727] sm:$0xff]
  %v5729 = vld [vmem:[%s5727 + $0x8] sm:$0xff]
  %v5730 = vld [vmem:[%s5727 + $0x10] sm:$0xff]
  %v5731 = vld [vmem:[%s5727 + $0x18] sm:$0xff]
  %v5732 = vld [vmem:[%s5727 + $0x20] sm:$0xff]
  %v5733 = vld [vmem:[%s5727 + $0x28] sm:$0xff]
  %v5734 = vld [vmem:[%s5727 + $0x30] sm:$0xff]
  %v5735 = vld [vmem:[%s5727 + $0x38] sm:$0xff]
  %v5736 = vld [vmem:[%s5727 + $0x40] sm:$0xff]
  %v5737 = vld [vmem:[%s5727 + $0x48] sm:$0xff]
  %v5738 = vld [vmem:[%s5727 + $0x50] sm:$0xff]
  %v5739 = vld [vmem:[%s5727 + $0x58] sm:$0xff]
  %v5740 = vld [vmem:[%s5727 + $0x60] sm:$0xff]
  %v5741 = vld [vmem:[%s5727 + $0x68] sm:$0xff]
  %v5742 = vld [vmem:[%s5727 + $0x70] sm:$0xff]
  %v5743 = vld [vmem:[%s5727 + $0x78] sm:$0xff]
  %v5744 = vld [vmem:[%s5727 + $0x80] sm:$0xff]
  %v5745 = vld [vmem:[%s5727 + $0x88] sm:$0xff]
  %v5746 = vld [vmem:[%s5727 + $0x90] sm:$0xff]
  %v5747 = vld [vmem:[%s5727 + $0x98] sm:$0xff]
  %v5748 = vld [vmem:[%s5727 + $0xa0] sm:$0xff]
  %v5749 = vld [vmem:[%s5727 + $0xa8] sm:$0xff]
  %v5750 = vld [vmem:[%s5727 + $0xb0] sm:$0xff]
  %v5751 = vld [vmem:[%s5727 + $0xb8] sm:$0xff]
  %v5752 = vld [vmem:[%s5727 + $0xc0] sm:$0xff]
  %v5753 = vld [vmem:[%s5727 + $0xc8] sm:$0xff]
  %v5754 = vld [vmem:[%s5727 + $0xd0] sm:$0xff]
  %v5755 = vld [vmem:[%s5727 + $0xd8] sm:$0xff]
  %v5756 = vld [vmem:[%s5727 + $0xe0] sm:$0xff]
  %v5757 = vld [vmem:[%s5727 + $0xe8] sm:$0xff]
  %v5758 = vld [vmem:[%s5727 + $0xf0] sm:$0xff]
  %v5759 = vld [vmem:[%s5727 + $0xf8] sm:$0xff]
  %v5760 = vld [vmem:[%s5727 + $0x100] sm:$0xff]
  %v5761 = vld [vmem:[%s5727 + $0x108] sm:$0xff]
  %v5762 = vld [vmem:[%s5727 + $0x110] sm:$0xff]
  %v5763 = vld [vmem:[%s5727 + $0x118] sm:$0xff]
  %v5764 = vld [vmem:[%s5727 + $0x120] sm:$0xff]
  %v5765 = vld [vmem:[%s5727 + $0x128] sm:$0xff]
  %v5766 = vld [vmem:[%s5727 + $0x130] sm:$0xff]
  %v5767 = vld [vmem:[%s5727 + $0x138] sm:$0xff]
  %v5768 = vld [vmem:[%s5727 + $0x140] sm:$0xff]
  %v5769 = vld [vmem:[%s5727 + $0x148] sm:$0xff]
  %v5770 = vld [vmem:[%s5727 + $0x150] sm:$0xff]
  %v5771 = vld [vmem:[%s5727 + $0x158] sm:$0xff]
  %v5772 = vld [vmem:[%s5727 + $0x160] sm:$0xff]
  %v5773 = vld [vmem:[%s5727 + $0x168] sm:$0xff]
  %v5774 = vld [vmem:[%s5727 + $0x170] sm:$0xff]
  %v5775 = vld [vmem:[%s5727 + $0x178] sm:$0xff]
  %v5776 = vld [vmem:[%s5727 + $0x180] sm:$0xff]
  %v5777 = vld [vmem:[%s5727 + $0x188] sm:$0xff]
  %v5778 = vld [vmem:[%s5727 + $0x190] sm:$0xff]
  %v5779 = vld [vmem:[%s5727 + $0x198] sm:$0xff]
  %v5780 = vld [vmem:[%s5727 + $0x1a0] sm:$0xff]
  %v5781 = vld [vmem:[%s5727 + $0x1a8] sm:$0xff]
  %v5782 = vld [vmem:[%s5727 + $0x1b0] sm:$0xff]
  %v5783 = vld [vmem:[%s5727 + $0x1b8] sm:$0xff]
  %v5784 = vld [vmem:[%s5727 + $0x1c0] sm:$0xff]
  %v5785 = vld [vmem:[%s5727 + $0x1c8] sm:$0xff]
  %v5786 = vld [vmem:[%s5727 + $0x1d0] sm:$0xff]
  %v5787 = vld [vmem:[%s5727 + $0x1d8] sm:$0xff]
  %v5788 = vld [vmem:[%s5727 + $0x1e0] sm:$0xff]
  %v5789 = vld [vmem:[%s5727 + $0x1e8] sm:$0xff]
  %v5790 = vld [vmem:[%s5727 + $0x1f0] sm:$0xff]
  %v5791 = vld [vmem:[%s5727 + $0x1f8] sm:$0xff]
  %v5792 = vld [vmem:[%s5727 + $0x200] sm:$0xff]
  %v5793 = vld [vmem:[%s5727 + $0x208] sm:$0xff]
  %v5794 = vld [vmem:[%s5727 + $0x210] sm:$0xff]
  %v5795 = vld [vmem:[%s5727 + $0x218] sm:$0xff]
  %v5796 = vld [vmem:[%s5727 + $0x220] sm:$0xff]
  %v5797 = vld [vmem:[%s5727 + $0x228] sm:$0xff]
  %v5798 = vld [vmem:[%s5727 + $0x230] sm:$0xff]
  %v5799 = vld [vmem:[%s5727 + $0x238] sm:$0xff]
  %v5800 = vsel %vm53, %v5697, 0
  %v5802 = vsel %vm53, %v5703, 0
  %v5804 = vsel %vm53, %v5712, 0
  %v5806 = vsel %vm53, %v5718, 0
  %5808 = vmatpush.msra.mxu0 %v5758
  %5809 = vmatpush.msra.mxu0 %v5756
  %5810 = vmatpush.msra.mxu0 %v5754
  %5811 = vmatpush.msra.mxu0 %v5752
  %5812 = vmatpush.msra.mxu0 %v5750
  %5813 = vmatpush.msra.mxu0 %v5748
  %5814 = vmatpush.msra.mxu0 %v5746
  %5815 = vmatpush.msra.mxu0 %v5744
  %5816 = vmatpush.msra.mxu0 %v5742
  %5817 = vmatpush.msra.mxu0 %v5740
  %5818 = vmatpush.msra.mxu0 %v5738
  %5819 = vmatpush.msra.mxu0 %v5736
  %5820 = vmatpush.msra.mxu0 %v5734
  %5821 = vmatpush.msra.mxu0 %v5732
  %5822 = vmatpush.msra.mxu0 %v5730
  %5823 = vmatpush.msra.mxu0 %v5728
  %5824 = vmatmul.f32.gmra.mxu0 %v5691
  %v5825 = vpop.f32.mrf.mxu0
  %v5826 = vadd.f32 0.0, %v5825
  %5827 = vmatmul.f32.gmra.mxu0 %v5699
  %v5828 = vpop.f32.mrf.mxu0
  %v5829 = vadd.f32 0.0, %v5828
  %5830 = vmatmul.f32.gmra.mxu0 %v5706
  %v5831 = vpop.f32.mrf.mxu0
  %v5832 = vadd.f32 0.0, %v5831
  %5833 = vmatmul.f32.gmra.mxu0 %v5714
  %v5834 = vpop.f32.mrf.mxu0
  %v5835 = vadd.f32 0.0, %v5834
  %5836 = vdwg.mxu0
  %5837 = vmatpush.msra.mxu0 %v5790
  %5838 = vmatpush.msra.mxu0 %v5788
  %5839 = vmatpush.msra.mxu0 %v5786
  %5840 = vmatpush.msra.mxu0 %v5784
  %5841 = vmatpush.msra.mxu0 %v5782
  %5842 = vmatpush.msra.mxu0 %v5780
  %5843 = vmatpush.msra.mxu0 %v5778
  %5844 = vmatpush.msra.mxu0 %v5776
  %5845 = vmatpush.msra.mxu0 %v5774
  %5846 = vmatpush.msra.mxu0 %v5772
  %5847 = vmatpush.msra.mxu0 %v5770
  %5848 = vmatpush.msra.mxu0 %v5768
  %5849 = vmatpush.msra.mxu0 %v5766
  %5850 = vmatpush.msra.mxu0 %v5764
  %5851 = vmatpush.msra.mxu0 %v5762
  %5852 = vmatpush.msra.mxu0 %v5760
  %5853 = vmatmul.f32.gmra.mxu0 %v5694
  %v5854 = vpop.f32.mrf.mxu0
  %v5855 = vadd.f32 %v5826, %v5854
  %5856 = vmatmul.f32.gmra.mxu0 %v5701
  %v5857 = vpop.f32.mrf.mxu0
  %v5858 = vadd.f32 %v5829, %v5857
  %5859 = vmatmul.f32.gmra.mxu0 %v5709
  %v5860 = vpop.f32.mrf.mxu0
  %v5861 = vadd.f32 %v5832, %v5860
  %5862 = vmatmul.f32.gmra.mxu0 %v5716
  %v5863 = vpop.f32.mrf.mxu0
  %v5864 = vadd.f32 %v5835, %v5863
  %5865 = vdwg.mxu0
  %5866 = vmatpush.msra.mxu0 0.0
  %5867 = vmatpush.msra.mxu0 0.0
  %5868 = vmatpush.msra.mxu0 0.0
  %5869 = vmatpush.msra.mxu0 0.0
  %5870 = vmatpush.msra.mxu0 0.0
  %5871 = vmatpush.msra.mxu0 0.0
  %5872 = vmatpush.msra.mxu0 0.0
  %5873 = vmatpush.msra.mxu0 0.0
  %5874 = vmatpush.msra.mxu0 0.0
  %5875 = vmatpush.msra.mxu0 0.0
  %5876 = vmatpush.msra.mxu0 0.0
  %5877 = vmatpush.msra.mxu0 0.0
  %5878 = vmatpush.msra.mxu0 %v5798
  %5879 = vmatpush.msra.mxu0 %v5796
  %5880 = vmatpush.msra.mxu0 %v5794
  %5881 = vmatpush.msra.mxu0 %v5792
  %5882 = vmatmul.f32.gmra.mxu0 %v5800
  %v5883 = vpop.f32.mrf.mxu0
  %v5884 = vadd.f32 %v5855, %v5883
  %5885 = vmatmul.f32.gmra.mxu0 %v5802
  %v5886 = vpop.f32.mrf.mxu0
  %v5887 = vadd.f32 %v5858, %v5886
  %5888 = vmatmul.f32.gmra.mxu0 %v5804
  %v5889 = vpop.f32.mrf.mxu0
  %v5890 = vadd.f32 %v5861, %v5889
  %5891 = vmatmul.f32.gmra.mxu0 %v5806
  %v5892 = vpop.f32.mrf.mxu0
  %v5893 = vadd.f32 %v5864, %v5892
  %5894 = vdwg.mxu0
  %5895 = vmatpush.msra.mxu0 %v5759
  %5896 = vmatpush.msra.mxu0 %v5757
  %5897 = vmatpush.msra.mxu0 %v5755
  %5898 = vmatpush.msra.mxu0 %v5753
  %5899 = vmatpush.msra.mxu0 %v5751
  %5900 = vmatpush.msra.mxu0 %v5749
  %5901 = vmatpush.msra.mxu0 %v5747
  %5902 = vmatpush.msra.mxu0 %v5745
  %5903 = vmatpush.msra.mxu0 %v5743
  %5904 = vmatpush.msra.mxu0 %v5741
  %5905 = vmatpush.msra.mxu0 %v5739
  %5906 = vmatpush.msra.mxu0 %v5737
  %5907 = vmatpush.msra.mxu0 %v5735
  %5908 = vmatpush.msra.mxu0 %v5733
  %5909 = vmatpush.msra.mxu0 %v5731
  %5910 = vmatpush.msra.mxu0 %v5729
  %5911 = vmatmul.f32.gmra.mxu0 %v5691
  %v5912 = vpop.f32.mrf.mxu0
  %v5913 = vadd.f32 0.0, %v5912
  %5914 = vmatmul.f32.gmra.mxu0 %v5699
  %v5915 = vpop.f32.mrf.mxu0
  %v5916 = vadd.f32 0.0, %v5915
  %5917 = vmatmul.f32.gmra.mxu0 %v5706
  %v5918 = vpop.f32.mrf.mxu0
  %v5919 = vadd.f32 0.0, %v5918
  %5920 = vmatmul.f32.gmra.mxu0 %v5714
  %v5921 = vpop.f32.mrf.mxu0
  %v5922 = vadd.f32 0.0, %v5921
  %5923 = vdwg.mxu0
  %5924 = vmatpush.msra.mxu0 %v5791
  %5925 = vmatpush.msra.mxu0 %v5789
  %5926 = vmatpush.msra.mxu0 %v5787
  %5927 = vmatpush.msra.mxu0 %v5785
  %5928 = vmatpush.msra.mxu0 %v5783
  %5929 = vmatpush.msra.mxu0 %v5781
  %5930 = vmatpush.msra.mxu0 %v5779
  %5931 = vmatpush.msra.mxu0 %v5777
  %5932 = vmatpush.msra.mxu0 %v5775
  %5933 = vmatpush.msra.mxu0 %v5773
  %5934 = vmatpush.msra.mxu0 %v5771
  %5935 = vmatpush.msra.mxu0 %v5769
  %5936 = vmatpush.msra.mxu0 %v5767
  %5937 = vmatpush.msra.mxu0 %v5765
  %5938 = vmatpush.msra.mxu0 %v5763
  %5939 = vmatpush.msra.mxu0 %v5761
  %5940 = vmatmul.f32.gmra.mxu0 %v5694
  %v5941 = vpop.f32.mrf.mxu0
  %v5942 = vadd.f32 %v5913, %v5941
  %5943 = vmatmul.f32.gmra.mxu0 %v5701
  %v5944 = vpop.f32.mrf.mxu0
  %v5945 = vadd.f32 %v5916, %v5944
  %5946 = vmatmul.f32.gmra.mxu0 %v5709
  %v5947 = vpop.f32.mrf.mxu0
  %v5948 = vadd.f32 %v5919, %v5947
  %5949 = vmatmul.f32.gmra.mxu0 %v5716
  %v5950 = vpop.f32.mrf.mxu0
  %v5951 = vadd.f32 %v5922, %v5950
  %5952 = vdwg.mxu0
  %5953 = vmatpush.msra.mxu0 0.0
  %5954 = vmatpush.msra.mxu0 0.0
  %5955 = vmatpush.msra.mxu0 0.0
  %5956 = vmatpush.msra.mxu0 0.0
  %5957 = vmatpush.msra.mxu0 0.0
  %5958 = vmatpush.msra.mxu0 0.0
  %5959 = vmatpush.msra.mxu0 0.0
  %5960 = vmatpush.msra.mxu0 0.0
  %5961 = vmatpush.msra.mxu0 0.0
  %5962 = vmatpush.msra.mxu0 0.0
  %5963 = vmatpush.msra.mxu0 0.0
  %5964 = vmatpush.msra.mxu0 0.0
  %5965 = vmatpush.msra.mxu0 %v5799
  %5966 = vmatpush.msra.mxu0 %v5797
  %5967 = vmatpush.msra.mxu0 %v5795
  %5968 = vmatpush.msra.mxu0 %v5793
  %5969 = vmatmul.f32.gmra.mxu0 %v5800
  %v5970 = vpop.f32.mrf.mxu0
  %v5971 = vadd.f32 %v5942, %v5970
  %5972 = vmatmul.f32.gmra.mxu0 %v5802
  %v5973 = vpop.f32.mrf.mxu0
  %v5974 = vadd.f32 %v5945, %v5973
  %5975 = vmatmul.f32.gmra.mxu0 %v5804
  %v5976 = vpop.f32.mrf.mxu0
  %v5977 = vadd.f32 %v5948, %v5976
  %5978 = vmatmul.f32.gmra.mxu0 %v5806
  %v5979 = vpop.f32.mrf.mxu0
  %v5980 = vadd.f32 %v5951, %v5979
  %5981 = vdwg.mxu0
  %v5982 = vadd.f32 %v5567, %v5884
  %v5983 = vadd.f32 %v5654, %v5971
  %v5984 = vadd.f32 %v5570, %v5887
  %v5985 = vadd.f32 %v5657, %v5974
  %v5986 = vadd.f32 %v5573, %v5890
  %v5987 = vadd.f32 %v5660, %v5977
  %v5988 = vadd.f32 %v5576, %v5893
  %v5989 = vadd.f32 %v5663, %v5980
  %v5990 = vld [vmem:[%s7] sm:$0x3]
  %v5992 = vperm.slane %v5990, 0
  %v5993 = vperm.slane %v5990, 1
  %v5996 = vadd.f32 %v5982, %v5992
  %v5997 = vadd.f32 %v5983, %v5993
  %v5998 = vadd.f32 %v5984, %v5992
  %v5999 = vadd.f32 %v5985, %v5993
  %v6000 = vadd.f32 %v5986, %v5992
  %v6001 = vadd.f32 %v5987, %v5993
  %v6002 = vadd.f32 %v5988, %v5992
  %v6003 = vadd.f32 %v5989, %v5993
  %v6004 = vld [vmem:[%s2] sm:$0xff]
  %v6005 = vld [vmem:[%s2 + $0x8] sm:$0xff]
  %v6006 = vld [vmem:[%s2 + $0x10] sm:$0xff]
  %v6007 = vld [vmem:[%s2 + $0x18] sm:$0xff]
  %v6008 = vld [vmem:[%s2 + $0x20] sm:$0xff]
  %v6009 = vld [vmem:[%s2 + $0x28] sm:$0xff]
  %v6010 = vld [vmem:[%s2 + $0x30] sm:$0xff]
  %v6011 = vld [vmem:[%s2 + $0x38] sm:$0xff]
  %v6012 = vadd.f32 %v5996, %v6004
  %v6013 = vadd.f32 %v5997, %v6005
  %v6014 = vadd.f32 %v5998, %v6006
  %v6015 = vadd.f32 %v5999, %v6007
  %v6016 = vadd.f32 %v6000, %v6008
  %v6017 = vadd.f32 %v6001, %v6009
  %v6018 = vadd.f32 %v6002, %v6010
  %v6019 = vadd.f32 %v6003, %v6011
  %v6020 = vmax.f32 %v6012, 0.0
  %v6021 = vmax.f32 %v6013, 0.0
  %v6022 = vmax.f32 %v6014, 0.0
  %v6023 = vmax.f32 %v6015, 0.0
  %v6024 = vmax.f32 %v6016, 0.0
  %v6025 = vmax.f32 %v6017, 0.0
  %v6026 = vmax.f32 %v6018, 0.0
  %v6027 = vmax.f32 %v6019, 0.0
  %6028 = vst [vmem:[%s8] sm:$0xff] %v6020
  %6029 = vst [vmem:[%s8 + $0x8] sm:$0xff] %v6021
  %6030 = vst [vmem:[%s8 + $0x10] sm:$0xff] %v6022
  %6031 = vst [vmem:[%s8 + $0x18] sm:$0xff] %v6023
  %6032 = vst [vmem:[%s8 + $0x20] sm:$0xff] %v6024
  %6033 = vst [vmem:[%s8 + $0x28] sm:$0xff] %v6025
  %6034 = vst [vmem:[%s8 + $0x30] sm:$0xff] %v6026
  %6035 = vst [vmem:[%s8 + $0x38] sm:$0xff] %v6027
  %v6036 = vld [vmem:[%s3] sm:$0xff]
  %v6037 = vld [vmem:[%s3 + $0x8] sm:$0xff]
  %v6038 = vld [vmem:[%s3 + $0x10] sm:$0xff]
  %v6039 = vld [vmem:[%s3 + $0x18] sm:$0xff]
  %v6040 = vld [vmem:[%s3 + $0x20] sm:$0xff]
  %v6041 = vld [vmem:[%s3 + $0x28] sm:$0xff]
  %v6042 = vld [vmem:[%s3 + $0x30] sm:$0xff]
  %v6043 = vld [vmem:[%s3 + $0x38] sm:$0xff]
  %v6044 = vadd.f32 %v5996, %v6036
  %v6045 = vadd.f32 %v5997, %v6037
  %v6046 = vadd.f32 %v5998, %v6038
  %v6047 = vadd.f32 %v5999, %v6039
  %v6048 = vadd.f32 %v6000, %v6040
  %v6049 = vadd.f32 %v6001, %v6041
  %v6050 = vadd.f32 %v6002, %v6042
  %v6051 = vadd.f32 %v6003, %v6043
  %v6052 = vmax.f32 %v6044, 0.0
  %v6053 = vmax.f32 %v6045, 0.0
  %v6054 = vmax.f32 %v6046, 0.0
  %v6055 = vmax.f32 %v6047, 0.0
  %v6056 = vmax.f32 %v6048, 0.0
  %v6057 = vmax.f32 %v6049, 0.0
  %v6058 = vmax.f32 %v6050, 0.0
  %v6059 = vmax.f32 %v6051, 0.0
  %6060 = vst [vmem:[%s9] sm:$0xff] %v6052
  %6061 = vst [vmem:[%s9 + $0x8] sm:$0xff] %v6053
  %6062 = vst [vmem:[%s9 + $0x10] sm:$0xff] %v6054
  %6063 = vst [vmem:[%s9 + $0x18] sm:$0xff] %v6055
  %6064 = vst [vmem:[%s9 + $0x20] sm:$0xff] %v6056
  %6065 = vst [vmem:[%s9 + $0x28] sm:$0xff] %v6057
  %6066 = vst [vmem:[%s9 + $0x30] sm:$0xff] %v6058
  %6067 = vst [vmem:[%s9 + $0x38] sm:$0xff] %v6059
  // Predicated region
  $region34: #{model_forward.1} parent=0 // pred_check
    _
  $region35: #{model_forward.1} parent=0 // pred_check_branch
    %6069 = sbr.rel (0) target = $region37
  $region36: #{model_forward.1} parent=0 // pred_region
    _
  $region37: #{model_forward.1} parent=0 // pred_fallthru
    _
  // Predicated region
  $region38: #{model_forward.1} parent=0 // pred_check
    _
  $region39: #{model_forward.1} parent=0 // pred_check_branch
    %6071 = sbr.rel (0) target = $region41
  $region40: #{model_forward.1} parent=0 // pred_region
    _
  $region41: #{model_forward.1} parent=0 // pred_fallthru
    _
  // Predicated region
  $region42: #{model_forward.1} parent=0 // pred_check
    _
  $region43: #{model_forward.1} parent=0 // pred_check_branch
    %6073 = sbr.rel (0) target = $region45
  $region44: #{model_forward.1} parent=0 // pred_region
    _
  $region45: #{model_forward.1} parent=0 // pred_fallthru
    _
  // Predicated region
  $region46: #{model_forward.1} parent=0 // pred_check
    _
  $region47: #{model_forward.1} parent=0 // pred_check_branch
    %6075 = sbr.rel (0) target = $region49
  $region48: #{model_forward.1} parent=0 // pred_region
    _
  $region49: #{model_forward.1} parent=0 // pred_fallthru
    _

</llo_original>
